<compile_context>
chip_gen: v5e
topology: v5e:2x2
jax: 0.10.0
libtpu: 0.0.40
codegen_flags: <defaults>
</compile_context>

<pallas_src>
import jax
import jax.numpy as jnp
from jax import lax
from jax.experimental import pallas as pl
from jax.experimental.pallas import tpu as pltpu


# -------------------------------- Pallas kernel --------------------------------

def _msrb_kernel(xl_ref, xr_ref, wl_ref, bl_ref, wr_ref, br_ref,
                 wcl_ref, wcr_ref, bc_ref, o_ref, scr_l, scr_r):
    """Fused MSRB forward for one batch element (NHWC, channel halves split).

    xl_ref / xr_ref : (1, H+4, W+4, C/2)  left/right channel halves of x, zero-padded
                      by 2 spatially (enough halo for both the dil-1/pad-1 and
                      dil-2/pad-2 depthwise convs).
    wl_ref / wr_ref : (2, 3, 3, C/2)      depthwise weights [iteration, ky, kx, c]
    bl_ref / br_ref : (2, C/2)            depthwise biases
    wcl_ref/wcr_ref : (C/2, Cout)         final 1x1 conv weight split along Cin
    bc_ref          : (1, Cout)           final 1x1 conv bias
    o_ref           : (1, H, W, Cout)
    scr_l / scr_r   : (H+4, W+4, C/2) f32 VMEM scratch: out_1 with a zero border, so
                      iteration 2 reads its halo taps from VMEM (no HBM round trip).
    """
    H, W, Cout = o_ref.shape[1], o_ref.shape[2], o_ref.shape[3]
    half = xl_ref.shape[3]

    # Load weights/biases once into values.
    wl = wl_ref[...]
    bl = bl_ref[...]
    wr = wr_ref[...]
    br = br_ref[...]

    def dw3x3(src, w, b, it, dil):
        # Depthwise 3x3, stride 1, padding == dilation, reading from a pad-2 buffer:
        # out[y,x] = b + sum_{ky,kx} w[ky,kx] * src[y + (2-dil) + dil*ky,
        #                                           x + (2-dil) + dil*kx]
        off = 2 - dil
        acc = jnp.zeros((H, W, half), jnp.float32) + b[it]
        for ky in range(3):                                   # static unrolled taps
            for kx in range(3):
                y0 = off + dil * ky
                x0 = off + dil * kx
                acc = acc + src[y0:y0 + H, x0:x0 + W, :] * w[it, ky, kx]
        return acc

    xl_full = xl_ref[0]                       # (H+4, W+4, C/2) padded left half
    xr_full = xr_ref[0]                       # (H+4, W+4, C/2) padded right half
    xl = xl_full[2:2 + H, 2:2 + W, :]         # original (un-padded) x halves
    xr = xr_full[2:2 + H, 2:2 + W, :]

    # ---- iteration 1: taps come straight from the padded input (out_0 == x) ----
    out1_l = xl + dw3x3(xl_full, wl, bl, 0, 1)          # branch1: dilation 1
    out1_r = xr + dw3x3(xr_full, wr, br, 0, 2)          # branch2: dilation 2

    # Stage out_1 with a zero border in VMEM scratch for iteration 2's halo taps.
    scr_l[...] = jnp.zeros_like(scr_l)
    scr_r[...] = jnp.zeros_like(scr_r)
    scr_l[2:2 + H, 2:2 + W, :] = out1_l
    scr_r[2:2 + H, 2:2 + W, :] = out1_r
    s_l = scr_l[...]
    s_r = scr_r[...]

    # ---- iteration 2 ----
    out2_l = out1_l + dw3x3(s_l, wl, bl, 1, 1)
    out2_r = out1_r + dw3x3(s_r, wr, br, 1, 2)

    # ---- final RepConv 1x1 (+ReLU) on (out_2 + x): fused MXU matmul/bias/ReLU ----
    a_l = (out2_l + xl).reshape(H * W, half)
    a_r = (out2_r + xr).reshape(H * W, half)
    acc = jnp.dot(a_l, wcl_ref[...], preferred_element_type=jnp.float32)
    acc = acc + jnp.dot(a_r, wcr_ref[...], preferred_element_type=jnp.float32)
    acc = acc + bc_ref[...]
    acc = jnp.maximum(acc, 0.0)
    o_ref[0] = acc.reshape(H, W, Cout).astype(o_ref.dtype)


# -------------------------------- host wrapper ---------------------------------

def msrb_forward(x_nchw, p):
    """MSRB forward. Accepts/returns NCHW (PyTorch convention); kernel runs NHWC."""
    x = jnp.transpose(x_nchw, (0, 2, 3, 1))             # NCHW -> NHWC
    B, H, W, C = x.shape
    half = C // 2
    Cout = p['bc'].shape[0]

    xp = jnp.pad(x, ((0, 0), (2, 2), (2, 2), (0, 0)))   # shared pad-2 halo
    xl, xr = xp[..., :half], xp[..., half:]             # channel halves split on host
    wcl, wcr = p['wc'][:half], p['wc'][half:]           # 1x1 weight split along Cin

    out = pl.pallas_call(
        _msrb_kernel,
        out_shape=jax.ShapeDtypeStruct((B, H, W, Cout), x.dtype),
        grid=(B,),
        in_specs=[
            pl.BlockSpec((1, H + 4, W + 4, half), lambda b: (b, 0, 0, 0)),
            pl.BlockSpec((1, H + 4, W + 4, half), lambda b: (b, 0, 0, 0)),
            pl.BlockSpec((2, 3, 3, half), lambda b: (0, 0, 0, 0)),
            pl.BlockSpec((2, half), lambda b: (0, 0)),
            pl.BlockSpec((2, 3, 3, half), lambda b: (0, 0, 0, 0)),
            pl.BlockSpec((2, half), lambda b: (0, 0)),
            pl.BlockSpec((half, Cout), lambda b: (0, 0)),
            pl.BlockSpec((half, Cout), lambda b: (0, 0)),
            pl.BlockSpec((1, Cout), lambda b: (0, 0)),
        ],
        out_specs=pl.BlockSpec((1, H, W, Cout), lambda b: (b, 0, 0, 0)),
        scratch_shapes=[pltpu.VMEM((H + 4, W + 4, half), jnp.float32),
                        pltpu.VMEM((H + 4, W + 4, half), jnp.float32)],
        compiler_params=pltpu.CompilerParams(
            dimension_semantics=("parallel",),          # batch tiles across cores
            vmem_limit_bytes=64 * 1024 * 1024),
    )(xl, xr, p['wl'], p['bl'], p['wr'], p['br'], wcl, wcr,
      p['bc'].reshape(1, Cout))
    return jnp.transpose(out, (0, 3, 1, 2))             # NHWC -> NCHW


# ------------------------------- params / reference -----------------------------

def init_msrb_params(key, in_channels, out_channels):
    half = in_channels // 2
    ks = iter(jax.random.split(key, 8))

    def nrm(shape, scale=0.1):
        return scale * jax.random.normal(next(ks), shape, jnp.float32)

    return {
        # branch1 (dilation 1) / branch2 (dilation 2) depthwise 3x3: [iter, ky, kx, c]
        'wl': nrm((2, 3, 3, half)), 'bl': nrm((2, half)),
        'wr': nrm((2, 3, 3, half)), 'br': nrm((2, half)),
        # final 1x1 RepConv: stored (Cin, Cout) == PyTorch (Cout, Cin, 1, 1) transposed
        'wc': nrm((in_channels, out_channels)), 'bc': nrm((out_channels,)),
    }


def _ref_dwconv3x3(x_nhwc, w, b, dil):
    y = lax.conv_general_dilated(
        x_nhwc, w.reshape(3, 3, 1, -1),
        window_strides=(1, 1),
        padding=((dil, dil), (dil, dil)),
        rhs_dilation=(dil, dil),
        dimension_numbers=('NHWC', 'HWIO', 'NHWC'),
        feature_group_count=x_nhwc.shape[-1],
        precision=lax.Precision.HIGHEST)
    return y + b


def msrb_reference(x_nchw, p):
    """Pure-JAX reference of the same MSRB forward (correctness check)."""
    x = jnp.transpose(x_nchw, (0, 2, 3, 1))
    C = x.shape[-1]
    half = C // 2
    out = x
    for it in range(2):
        l = _ref_dwconv3x3(out[..., :half], p['wl'][it], p['bl'][it], 1)
        r = _ref_dwconv3x3(out[..., half:], p['wr'][it], p['br'][it], 2)
        out = out + jnp.concatenate([l, r], axis=-1)
    z = out + x
    y = jnp.einsum('bhwc,co->bhwo', z, p['wc'],
                   precision=lax.Precision.HIGHEST) + p['bc']
    y = jnp.maximum(y, 0.0)
    return jnp.transpose(y, (0, 3, 1, 2))


if __name__ == "__main__":
    key = jax.random.PRNGKey(0)
    kx, kp = jax.random.split(key)
    in_channels = out_channels = 64
    B, H, W = 2, 16, 16
    x = jax.random.normal(kx, (B, in_channels, H, W), jnp.float32)   # NCHW like PyTorch
    params = init_msrb_params(kp, in_channels, out_channels)

    fwd = jax.jit(msrb_forward)
    y = fwd(x, params)
    jax.block_until_ready(y)
    assert y.shape == (B, out_channels, H, W), y.shape
    assert bool(jnp.all(jnp.isfinite(y)))

    y_ref = msrb_reference(x, params)
    max_err = float(jnp.max(jnp.abs(y - y_ref)))
    assert max_err < 1e-3, f"max abs err vs reference: {max_err}"
    print("KERNEL_OK")
</pallas_src>

<mosaic_0001>
module attributes {stable_mosaic.version = 11 : i64} {
  func.func @_msrb_kernel(%arg0: i32, %arg1: memref<1x20x20x32xf32, #tpu.memory_space<vmem>>, %arg2: memref<1x20x20x32xf32, #tpu.memory_space<vmem>>, %arg3: memref<2x3x3x32xf32, #tpu.memory_space<vmem>>, %arg4: memref<2x32xf32, #tpu.memory_space<vmem>>, %arg5: memref<2x3x3x32xf32, #tpu.memory_space<vmem>>, %arg6: memref<2x32xf32, #tpu.memory_space<vmem>>, %arg7: memref<32x64xf32, #tpu.memory_space<vmem>>, %arg8: memref<32x64xf32, #tpu.memory_space<vmem>>, %arg9: memref<1x64xf32, #tpu.memory_space<vmem>>, %arg10: memref<1x16x16x64xf32, #tpu.memory_space<vmem>>, %arg11: memref<20x20x32xf32, #tpu.memory_space<vmem>>, %arg12: memref<20x20x32xf32, #tpu.memory_space<vmem>>) attributes {dimension_semantics = [#tpu.dimension_semantics<parallel>], iteration_bounds = array<i64: 2>, scalar_prefetch = 0 : i64, scratch_operands = 2 : i64, tpu.core_type = #tpu.core_type<tc>, window_params = [{transform_indices = @transform_0, window_bounds = array<i64: 1, 20, 20, 32>}, {transform_indices = @transform_1, window_bounds = array<i64: 1, 20, 20, 32>}, {pipeline_mode = #tpu.pipeline_mode<synchronous>, transform_indices = @transform_2, window_bounds = array<i64: 2, 3, 3, 32>}, {pipeline_mode = #tpu.pipeline_mode<synchronous>, transform_indices = @transform_3, window_bounds = array<i64: 2, 32>}, {pipeline_mode = #tpu.pipeline_mode<synchronous>, transform_indices = @transform_4, window_bounds = array<i64: 2, 3, 3, 32>}, {pipeline_mode = #tpu.pipeline_mode<synchronous>, transform_indices = @transform_5, window_bounds = array<i64: 2, 32>}, {pipeline_mode = #tpu.pipeline_mode<synchronous>, transform_indices = @transform_6, window_bounds = array<i64: 32, 64>}, {pipeline_mode = #tpu.pipeline_mode<synchronous>, transform_indices = @transform_7, window_bounds = array<i64: 32, 64>}, {pipeline_mode = #tpu.pipeline_mode<synchronous>, transform_indices = @transform_8, window_bounds = array<i64: 1, 64>}, {transform_indices = @transform_9, window_bounds = array<i64: 1, 16, 16, 64>}]} {
    %c0 = arith.constant 0 : index
    %c0_0 = arith.constant 0 : index
    %c0_1 = arith.constant 0 : index
    %c0_2 = arith.constant 0 : index
    %0 = vector.load %arg3[%c0, %c0_0, %c0_1, %c0_2] : memref<2x3x3x32xf32, #tpu.memory_space<vmem>>, vector<2x3x3x32xf32>
    %c0_3 = arith.constant 0 : index
    %c0_4 = arith.constant 0 : index
    %1 = vector.load %arg4[%c0_3, %c0_4] : memref<2x32xf32, #tpu.memory_space<vmem>>, vector<2x32xf32>
    %c0_5 = arith.constant 0 : index
    %c0_6 = arith.constant 0 : index
    %c0_7 = arith.constant 0 : index
    %c0_8 = arith.constant 0 : index
    %2 = vector.load %arg5[%c0_5, %c0_6, %c0_7, %c0_8] : memref<2x3x3x32xf32, #tpu.memory_space<vmem>>, vector<2x3x3x32xf32>
    %c0_9 = arith.constant 0 : index
    %c0_10 = arith.constant 0 : index
    %3 = vector.load %arg6[%c0_9, %c0_10] : memref<2x32xf32, #tpu.memory_space<vmem>>, vector<2x32xf32>
    %c0_11 = arith.constant 0 : index
    %c0_12 = arith.constant 0 : index
    %c0_13 = arith.constant 0 : index
    %c0_14 = arith.constant 0 : index
    %4 = vector.load %arg1[%c0_11, %c0_12, %c0_13, %c0_14] : memref<1x20x20x32xf32, #tpu.memory_space<vmem>>, vector<1x20x20x32xf32>
    %5 = vector.shape_cast %4 : vector<1x20x20x32xf32> to vector<20x20x32xf32>
    %c0_15 = arith.constant 0 : index
    %c0_16 = arith.constant 0 : index
    %c0_17 = arith.constant 0 : index
    %c0_18 = arith.constant 0 : index
    %6 = vector.load %arg2[%c0_15, %c0_16, %c0_17, %c0_18] : memref<1x20x20x32xf32, #tpu.memory_space<vmem>>, vector<1x20x20x32xf32>
    %7 = vector.shape_cast %6 : vector<1x20x20x32xf32> to vector<20x20x32xf32>
    %8 = vector.extract_strided_slice %5 {offsets = [2, 2, 0], sizes = [16, 16, 32], strides = [1, 1, 1]} : vector<20x20x32xf32> to vector<16x16x32xf32>
    %9 = vector.extract_strided_slice %7 {offsets = [2, 2, 0], sizes = [16, 16, 32], strides = [1, 1, 1]} : vector<20x20x32xf32> to vector<16x16x32xf32>
    %cst = arith.constant 0.000000e+00 : f32
    %10 = vector.broadcast %cst : f32 to vector<16x16x32xf32>
    %11 = vector.extract_strided_slice %1 {offsets = [0, 0], sizes = [1, 32], strides = [1, 1]} : vector<2x32xf32> to vector<1x32xf32>
    %12 = vector.shape_cast %11 : vector<1x32xf32> to vector<32xf32>
    %13 = vector.shape_cast %12 : vector<32xf32> to vector<1x1x32xf32>
    %14 = vector.broadcast %13 : vector<1x1x32xf32> to vector<16x16x32xf32>
    %15 = arith.addf %10, %14 : vector<16x16x32xf32>
    %16 = vector.extract_strided_slice %5 {offsets = [1, 1, 0], sizes = [16, 16, 32], strides = [1, 1, 1]} : vector<20x20x32xf32> to vector<16x16x32xf32>
    %17 = vector.extract_strided_slice %0 {offsets = [0, 0, 0, 0], sizes = [1, 1, 1, 32], strides = [1, 1, 1, 1]} : vector<2x3x3x32xf32> to vector<1x1x1x32xf32>
    %18 = vector.shape_cast %17 : vector<1x1x1x32xf32> to vector<32xf32>
    %19 = vector.shape_cast %18 : vector<32xf32> to vector<1x1x32xf32>
    %20 = vector.broadcast %19 : vector<1x1x32xf32> to vector<16x16x32xf32>
    %21 = arith.mulf %16, %20 : vector<16x16x32xf32>
    %22 = arith.addf %15, %21 : vector<16x16x32xf32>
    %23 = vector.extract_strided_slice %5 {offsets = [1, 2, 0], sizes = [16, 16, 32], strides = [1, 1, 1]} : vector<20x20x32xf32> to vector<16x16x32xf32>
    %24 = vector.extract_strided_slice %0 {offsets = [0, 0, 1, 0], sizes = [1, 1, 1, 32], strides = [1, 1, 1, 1]} : vector<2x3x3x32xf32> to vector<1x1x1x32xf32>
    %25 = vector.shape_cast %24 : vector<1x1x1x32xf32> to vector<32xf32>
    %26 = vector.shape_cast %25 : vector<32xf32> to vector<1x1x32xf32>
    %27 = vector.broadcast %26 : vector<1x1x32xf32> to vector<16x16x32xf32>
    %28 = arith.mulf %23, %27 : vector<16x16x32xf32>
    %29 = arith.addf %22, %28 : vector<16x16x32xf32>
    %30 = vector.extract_strided_slice %5 {offsets = [1, 3, 0], sizes = [16, 16, 32], strides = [1, 1, 1]} : vector<20x20x32xf32> to vector<16x16x32xf32>
    %31 = vector.extract_strided_slice %0 {offsets = [0, 0, 2, 0], sizes = [1, 1, 1, 32], strides = [1, 1, 1, 1]} : vector<2x3x3x32xf32> to vector<1x1x1x32xf32>
    %32 = vector.shape_cast %31 : vector<1x1x1x32xf32> to vector<32xf32>
    %33 = vector.shape_cast %32 : vector<32xf32> to vector<1x1x32xf32>
    %34 = vector.broadcast %33 : vector<1x1x32xf32> to vector<16x16x32xf32>
    %35 = arith.mulf %30, %34 : vector<16x16x32xf32>
    %36 = arith.addf %29, %35 : vector<16x16x32xf32>
    %37 = vector.extract_strided_slice %5 {offsets = [2, 1, 0], sizes = [16, 16, 32], strides = [1, 1, 1]} : vector<20x20x32xf32> to vector<16x16x32xf32>
    %38 = vector.extract_strided_slice %0 {offsets = [0, 1, 0, 0], sizes = [1, 1, 1, 32], strides = [1, 1, 1, 1]} : vector<2x3x3x32xf32> to vector<1x1x1x32xf32>
    %39 = vector.shape_cast %38 : vector<1x1x1x32xf32> to vector<32xf32>
    %40 = vector.shape_cast %39 : vector<32xf32> to vector<1x1x32xf32>
    %41 = vector.broadcast %40 : vector<1x1x32xf32> to vector<16x16x32xf32>
    %42 = arith.mulf %37, %41 : vector<16x16x32xf32>
    %43 = arith.addf %36, %42 : vector<16x16x32xf32>
    %44 = vector.extract_strided_slice %5 {offsets = [2, 2, 0], sizes = [16, 16, 32], strides = [1, 1, 1]} : vector<20x20x32xf32> to vector<16x16x32xf32>
    %45 = vector.extract_strided_slice %0 {offsets = [0, 1, 1, 0], sizes = [1, 1, 1, 32], strides = [1, 1, 1, 1]} : vector<2x3x3x32xf32> to vector<1x1x1x32xf32>
    %46 = vector.shape_cast %45 : vector<1x1x1x32xf32> to vector<32xf32>
    %47 = vector.shape_cast %46 : vector<32xf32> to vector<1x1x32xf32>
    %48 = vector.broadcast %47 : vector<1x1x32xf32> to vector<16x16x32xf32>
    %49 = arith.mulf %44, %48 : vector<16x16x32xf32>
    %50 = arith.addf %43, %49 : vector<16x16x32xf32>
    %51 = vector.extract_strided_slice %5 {offsets = [2, 3, 0], sizes = [16, 16, 32], strides = [1, 1, 1]} : vector<20x20x32xf32> to vector<16x16x32xf32>
    %52 = vector.extract_strided_slice %0 {offsets = [0, 1, 2, 0], sizes = [1, 1, 1, 32], strides = [1, 1, 1, 1]} : vector<2x3x3x32xf32> to vector<1x1x1x32xf32>
    %53 = vector.shape_cast %52 : vector<1x1x1x32xf32> to vector<32xf32>
    %54 = vector.shape_cast %53 : vector<32xf32> to vector<1x1x32xf32>
    %55 = vector.broadcast %54 : vector<1x1x32xf32> to vector<16x16x32xf32>
    %56 = arith.mulf %51, %55 : vector<16x16x32xf32>
    %57 = arith.addf %50, %56 : vector<16x16x32xf32>
    %58 = vector.extract_strided_slice %5 {offsets = [3, 1, 0], sizes = [16, 16, 32], strides = [1, 1, 1]} : vector<20x20x32xf32> to vector<16x16x32xf32>
    %59 = vector.extract_strided_slice %0 {offsets = [0, 2, 0, 0], sizes = [1, 1, 1, 32], strides = [1, 1, 1, 1]} : vector<2x3x3x32xf32> to vector<1x1x1x32xf32>
    %60 = vector.shape_cast %59 : vector<1x1x1x32xf32> to vector<32xf32>
    %61 = vector.shape_cast %60 : vector<32xf32> to vector<1x1x32xf32>
    %62 = vector.broadcast %61 : vector<1x1x32xf32> to vector<16x16x32xf32>
    %63 = arith.mulf %58, %62 : vector<16x16x32xf32>
    %64 = arith.addf %57, %63 : vector<16x16x32xf32>
    %65 = vector.extract_strided_slice %5 {offsets = [3, 2, 0], sizes = [16, 16, 32], strides = [1, 1, 1]} : vector<20x20x32xf32> to vector<16x16x32xf32>
    %66 = vector.extract_strided_slice %0 {offsets = [0, 2, 1, 0], sizes = [1, 1, 1, 32], strides = [1, 1, 1, 1]} : vector<2x3x3x32xf32> to vector<1x1x1x32xf32>
    %67 = vector.shape_cast %66 : vector<1x1x1x32xf32> to vector<32xf32>
    %68 = vector.shape_cast %67 : vector<32xf32> to vector<1x1x32xf32>
    %69 = vector.broadcast %68 : vector<1x1x32xf32> to vector<16x16x32xf32>
    %70 = arith.mulf %65, %69 : vector<16x16x32xf32>
    %71 = arith.addf %64, %70 : vector<16x16x32xf32>
    %72 = vector.extract_strided_slice %5 {offsets = [3, 3, 0], sizes = [16, 16, 32], strides = [1, 1, 1]} : vector<20x20x32xf32> to vector<16x16x32xf32>
    %73 = vector.extract_strided_slice %0 {offsets = [0, 2, 2, 0], sizes = [1, 1, 1, 32], strides = [1, 1, 1, 1]} : vector<2x3x3x32xf32> to vector<1x1x1x32xf32>
    %74 = vector.shape_cast %73 : vector<1x1x1x32xf32> to vector<32xf32>
    %75 = vector.shape_cast %74 : vector<32xf32> to vector<1x1x32xf32>
    %76 = vector.broadcast %75 : vector<1x1x32xf32> to vector<16x16x32xf32>
    %77 = arith.mulf %72, %76 : vector<16x16x32xf32>
    %78 = arith.addf %71, %77 : vector<16x16x32xf32>
    %79 = arith.addf %8, %78 : vector<16x16x32xf32>
    %cst_19 = arith.constant 0.000000e+00 : f32
    %80 = vector.broadcast %cst_19 : f32 to vector<16x16x32xf32>
    %81 = vector.extract_strided_slice %3 {offsets = [0, 0], sizes = [1, 32], strides = [1, 1]} : vector<2x32xf32> to vector<1x32xf32>
    %82 = vector.shape_cast %81 : vector<1x32xf32> to vector<32xf32>
    %83 = vector.shape_cast %82 : vector<32xf32> to vector<1x1x32xf32>
    %84 = vector.broadcast %83 : vector<1x1x32xf32> to vector<16x16x32xf32>
    %85 = arith.addf %80, %84 : vector<16x16x32xf32>
    %86 = vector.extract_strided_slice %7 {offsets = [0, 0, 0], sizes = [16, 16, 32], strides = [1, 1, 1]} : vector<20x20x32xf32> to vector<16x16x32xf32>
    %87 = vector.extract_strided_slice %2 {offsets = [0, 0, 0, 0], sizes = [1, 1, 1, 32], strides = [1, 1, 1, 1]} : vector<2x3x3x32xf32> to vector<1x1x1x32xf32>
    %88 = vector.shape_cast %87 : vector<1x1x1x32xf32> to vector<32xf32>
    %89 = vector.shape_cast %88 : vector<32xf32> to vector<1x1x32xf32>
    %90 = vector.broadcast %89 : vector<1x1x32xf32> to vector<16x16x32xf32>
    %91 = arith.mulf %86, %90 : vector<16x16x32xf32>
    %92 = arith.addf %85, %91 : vector<16x16x32xf32>
    %93 = vector.extract_strided_slice %7 {offsets = [0, 2, 0], sizes = [16, 16, 32], strides = [1, 1, 1]} : vector<20x20x32xf32> to vector<16x16x32xf32>
    %94 = vector.extract_strided_slice %2 {offsets = [0, 0, 1, 0], sizes = [1, 1, 1, 32], strides = [1, 1, 1, 1]} : vector<2x3x3x32xf32> to vector<1x1x1x32xf32>
    %95 = vector.shape_cast %94 : vector<1x1x1x32xf32> to vector<32xf32>
    %96 = vector.shape_cast %95 : vector<32xf32> to vector<1x1x32xf32>
    %97 = vector.broadcast %96 : vector<1x1x32xf32> to vector<16x16x32xf32>
    %98 = arith.mulf %93, %97 : vector<16x16x32xf32>
    %99 = arith.addf %92, %98 : vector<16x16x32xf32>
    %100 = vector.extract_strided_slice %7 {offsets = [0, 4, 0], sizes = [16, 16, 32], strides = [1, 1, 1]} : vector<20x20x32xf32> to vector<16x16x32xf32>
    %101 = vector.extract_strided_slice %2 {offsets = [0, 0, 2, 0], sizes = [1, 1, 1, 32], strides = [1, 1, 1, 1]} : vector<2x3x3x32xf32> to vector<1x1x1x32xf32>
    %102 = vector.shape_cast %101 : vector<1x1x1x32xf32> to vector<32xf32>
    %103 = vector.shape_cast %102 : vector<32xf32> to vector<1x1x32xf32>
    %104 = vector.broadcast %103 : vector<1x1x32xf32> to vector<16x16x32xf32>
    %105 = arith.mulf %100, %104 : vector<16x16x32xf32>
    %106 = arith.addf %99, %105 : vector<16x16x32xf32>
    %107 = vector.extract_strided_slice %7 {offsets = [2, 0, 0], sizes = [16, 16, 32], strides = [1, 1, 1]} : vector<20x20x32xf32> to vector<16x16x32xf32>
    %108 = vector.extract_strided_slice %2 {offsets = [0, 1, 0, 0], sizes = [1, 1, 1, 32], strides = [1, 1, 1, 1]} : vector<2x3x3x32xf32> to vector<1x1x1x32xf32>
    %109 = vector.shape_cast %108 : vector<1x1x1x32xf32> to vector<32xf32>
    %110 = vector.shape_cast %109 : vector<32xf32> to vector<1x1x32xf32>
    %111 = vector.broadcast %110 : vector<1x1x32xf32> to vector<16x16x32xf32>
    %112 = arith.mulf %107, %111 : vector<16x16x32xf32>
    %113 = arith.addf %106, %112 : vector<16x16x32xf32>
    %114 = vector.extract_strided_slice %7 {offsets = [2, 2, 0], sizes = [16, 16, 32], strides = [1, 1, 1]} : vector<20x20x32xf32> to vector<16x16x32xf32>
    %115 = vector.extract_strided_slice %2 {offsets = [0, 1, 1, 0], sizes = [1, 1, 1, 32], strides = [1, 1, 1, 1]} : vector<2x3x3x32xf32> to vector<1x1x1x32xf32>
    %116 = vector.shape_cast %115 : vector<1x1x1x32xf32> to vector<32xf32>
    %117 = vector.shape_cast %116 : vector<32xf32> to vector<1x1x32xf32>
    %118 = vector.broadcast %117 : vector<1x1x32xf32> to vector<16x16x32xf32>
    %119 = arith.mulf %114, %118 : vector<16x16x32xf32>
    %120 = arith.addf %113, %119 : vector<16x16x32xf32>
    %121 = vector.extract_strided_slice %7 {offsets = [2, 4, 0], sizes = [16, 16, 32], strides = [1, 1, 1]} : vector<20x20x32xf32> to vector<16x16x32xf32>
    %122 = vector.extract_strided_slice %2 {offsets = [0, 1, 2, 0], sizes = [1, 1, 1, 32], strides = [1, 1, 1, 1]} : vector<2x3x3x32xf32> to vector<1x1x1x32xf32>
    %123 = vector.shape_cast %122 : vector<1x1x1x32xf32> to vector<32xf32>
    %124 = vector.shape_cast %123 : vector<32xf32> to vector<1x1x32xf32>
    %125 = vector.broadcast %124 : vector<1x1x32xf32> to vector<16x16x32xf32>
    %126 = arith.mulf %121, %125 : vector<16x16x32xf32>
    %127 = arith.addf %120, %126 : vector<16x16x32xf32>
    %128 = vector.extract_strided_slice %7 {offsets = [4, 0, 0], sizes = [16, 16, 32], strides = [1, 1, 1]} : vector<20x20x32xf32> to vector<16x16x32xf32>
    %129 = vector.extract_strided_slice %2 {offsets = [0, 2, 0, 0], sizes = [1, 1, 1, 32], strides = [1, 1, 1, 1]} : vector<2x3x3x32xf32> to vector<1x1x1x32xf32>
    %130 = vector.shape_cast %129 : vector<1x1x1x32xf32> to vector<32xf32>
    %131 = vector.shape_cast %130 : vector<32xf32> to vector<1x1x32xf32>
    %132 = vector.broadcast %131 : vector<1x1x32xf32> to vector<16x16x32xf32>
    %133 = arith.mulf %128, %132 : vector<16x16x32xf32>
    %134 = arith.addf %127, %133 : vector<16x16x32xf32>
    %135 = vector.extract_strided_slice %7 {offsets = [4, 2, 0], sizes = [16, 16, 32], strides = [1, 1, 1]} : vector<20x20x32xf32> to vector<16x16x32xf32>
    %136 = vector.extract_strided_slice %2 {offsets = [0, 2, 1, 0], sizes = [1, 1, 1, 32], strides = [1, 1, 1, 1]} : vector<2x3x3x32xf32> to vector<1x1x1x32xf32>
    %137 = vector.shape_cast %136 : vector<1x1x1x32xf32> to vector<32xf32>
    %138 = vector.shape_cast %137 : vector<32xf32> to vector<1x1x32xf32>
    %139 = vector.broadcast %138 : vector<1x1x32xf32> to vector<16x16x32xf32>
    %140 = arith.mulf %135, %139 : vector<16x16x32xf32>
    %141 = arith.addf %134, %140 : vector<16x16x32xf32>
    %142 = vector.extract_strided_slice %7 {offsets = [4, 4, 0], sizes = [16, 16, 32], strides = [1, 1, 1]} : vector<20x20x32xf32> to vector<16x16x32xf32>
    %143 = vector.extract_strided_slice %2 {offsets = [0, 2, 2, 0], sizes = [1, 1, 1, 32], strides = [1, 1, 1, 1]} : vector<2x3x3x32xf32> to vector<1x1x1x32xf32>
    %144 = vector.shape_cast %143 : vector<1x1x1x32xf32> to vector<32xf32>
    %145 = vector.shape_cast %144 : vector<32xf32> to vector<1x1x32xf32>
    %146 = vector.broadcast %145 : vector<1x1x32xf32> to vector<16x16x32xf32>
    %147 = arith.mulf %142, %146 : vector<16x16x32xf32>
    %148 = arith.addf %141, %147 : vector<16x16x32xf32>
    %149 = arith.addf %9, %148 : vector<16x16x32xf32>
    %cst_20 = arith.constant 0.000000e+00 : f32
    %150 = vector.broadcast %cst_20 : f32 to vector<20x20x32xf32>
    %c0_21 = arith.constant 0 : index
    %c0_22 = arith.constant 0 : index
    %c0_23 = arith.constant 0 : index
    %151 = vector.load %arg11[%c0_21, %c0_22, %c0_23] : memref<20x20x32xf32, #tpu.memory_space<vmem>>, vector<20x20x32xf32>
    tpu.vector_store %arg11[%c0_21, %c0_22, %c0_23], %150 {strides = array<i32>} : memref<20x20x32xf32, #tpu.memory_space<vmem>>, vector<20x20x32xf32>,
    %cst_24 = arith.constant 0.000000e+00 : f32
    %152 = vector.broadcast %cst_24 : f32 to vector<20x20x32xf32>
    %c0_25 = arith.constant 0 : index
    %c0_26 = arith.constant 0 : index
    %c0_27 = arith.constant 0 : index
    %153 = vector.load %arg12[%c0_25, %c0_26, %c0_27] : memref<20x20x32xf32, #tpu.memory_space<vmem>>, vector<20x20x32xf32>
    tpu.vector_store %arg12[%c0_25, %c0_26, %c0_27], %152 {strides = array<i32>} : memref<20x20x32xf32, #tpu.memory_space<vmem>>, vector<20x20x32xf32>,
    %c2 = arith.constant 2 : index
    %c2_28 = arith.constant 2 : index
    %c0_29 = arith.constant 0 : index
    %154 = vector.load %arg11[%c2, %c2_28, %c0_29] : memref<20x20x32xf32, #tpu.memory_space<vmem>>, vector<16x16x32xf32>
    tpu.vector_store %arg11[%c2, %c2_28, %c0_29], %79 {strides = array<i32>} : memref<20x20x32xf32, #tpu.memory_space<vmem>>, vector<16x16x32xf32>,
    %c2_30 = arith.constant 2 : index
    %c2_31 = arith.constant 2 : index
    %c0_32 = arith.constant 0 : index
    %155 = vector.load %arg12[%c2_30, %c2_31, %c0_32] : memref<20x20x32xf32, #tpu.memory_space<vmem>>, vector<16x16x32xf32>
    tpu.vector_store %arg12[%c2_30, %c2_31, %c0_32], %149 {strides = array<i32>} : memref<20x20x32xf32, #tpu.memory_space<vmem>>, vector<16x16x32xf32>,
    %c0_33 = arith.constant 0 : index
    %c0_34 = arith.constant 0 : index
    %c0_35 = arith.constant 0 : index
    %156 = vector.load %arg11[%c0_33, %c0_34, %c0_35] : memref<20x20x32xf32, #tpu.memory_space<vmem>>, vector<20x20x32xf32>
    %c0_36 = arith.constant 0 : index
    %c0_37 = arith.constant 0 : index
    %c0_38 = arith.constant 0 : index
    %157 = vector.load %arg12[%c0_36, %c0_37, %c0_38] : memref<20x20x32xf32, #tpu.memory_space<vmem>>, vector<20x20x32xf32>
    %cst_39 = arith.constant 0.000000e+00 : f32
    %158 = vector.broadcast %cst_39 : f32 to vector<16x16x32xf32>
    %159 = vector.extract_strided_slice %1 {offsets = [1, 0], sizes = [1, 32], strides = [1, 1]} : vector<2x32xf32> to vector<1x32xf32>
    %160 = vector.shape_cast %159 : vector<1x32xf32> to vector<32xf32>
    %161 = vector.shape_cast %160 : vector<32xf32> to vector<1x1x32xf32>
    %162 = vector.broadcast %161 : vector<1x1x32xf32> to vector<16x16x32xf32>
    %163 = arith.addf %158, %162 : vector<16x16x32xf32>
    %164 = vector.extract_strided_slice %156 {offsets = [1, 1, 0], sizes = [16, 16, 32], strides = [1, 1, 1]} : vector<20x20x32xf32> to vector<16x16x32xf32>
    %165 = vector.extract_strided_slice %0 {offsets = [1, 0, 0, 0], sizes = [1, 1, 1, 32], strides = [1, 1, 1, 1]} : vector<2x3x3x32xf32> to vector<1x1x1x32xf32>
    %166 = vector.shape_cast %165 : vector<1x1x1x32xf32> to vector<32xf32>
    %167 = vector.shape_cast %166 : vector<32xf32> to vector<1x1x32xf32>
    %168 = vector.broadcast %167 : vector<1x1x32xf32> to vector<16x16x32xf32>
    %169 = arith.mulf %164, %168 : vector<16x16x32xf32>
    %170 = arith.addf %163, %169 : vector<16x16x32xf32>
    %171 = vector.extract_strided_slice %156 {offsets = [1, 2, 0], sizes = [16, 16, 32], strides = [1, 1, 1]} : vector<20x20x32xf32> to vector<16x16x32xf32>
    %172 = vector.extract_strided_slice %0 {offsets = [1, 0, 1, 0], sizes = [1, 1, 1, 32], strides = [1, 1, 1, 1]} : vector<2x3x3x32xf32> to vector<1x1x1x32xf32>
    %173 = vector.shape_cast %172 : vector<1x1x1x32xf32> to vector<32xf32>
    %174 = vector.shape_cast %173 : vector<32xf32> to vector<1x1x32xf32>
    %175 = vector.broadcast %174 : vector<1x1x32xf32> to vector<16x16x32xf32>
    %176 = arith.mulf %171, %175 : vector<16x16x32xf32>
    %177 = arith.addf %170, %176 : vector<16x16x32xf32>
    %178 = vector.extract_strided_slice %156 {offsets = [1, 3, 0], sizes = [16, 16, 32], strides = [1, 1, 1]} : vector<20x20x32xf32> to vector<16x16x32xf32>
    %179 = vector.extract_strided_slice %0 {offsets = [1, 0, 2, 0], sizes = [1, 1, 1, 32], strides = [1, 1, 1, 1]} : vector<2x3x3x32xf32> to vector<1x1x1x32xf32>
    %180 = vector.shape_cast %179 : vector<1x1x1x32xf32> to vector<32xf32>
    %181 = vector.shape_cast %180 : vector<32xf32> to vector<1x1x32xf32>
    %182 = vector.broadcast %181 : vector<1x1x32xf32> to vector<16x16x32xf32>
    %183 = arith.mulf %178, %182 : vector<16x16x32xf32>
    %184 = arith.addf %177, %183 : vector<16x16x32xf32>
    %185 = vector.extract_strided_slice %156 {offsets = [2, 1, 0], sizes = [16, 16, 32], strides = [1, 1, 1]} : vector<20x20x32xf32> to vector<16x16x32xf32>
    %186 = vector.extract_strided_slice %0 {offsets = [1, 1, 0, 0], sizes = [1, 1, 1, 32], strides = [1, 1, 1, 1]} : vector<2x3x3x32xf32> to vector<1x1x1x32xf32>
    %187 = vector.shape_cast %186 : vector<1x1x1x32xf32> to vector<32xf32>
    %188 = vector.shape_cast %187 : vector<32xf32> to vector<1x1x32xf32>
    %189 = vector.broadcast %188 : vector<1x1x32xf32> to vector<16x16x32xf32>
    %190 = arith.mulf %185, %189 : vector<16x16x32xf32>
    %191 = arith.addf %184, %190 : vector<16x16x32xf32>
    %192 = vector.extract_strided_slice %156 {offsets = [2, 2, 0], sizes = [16, 16, 32], strides = [1, 1, 1]} : vector<20x20x32xf32> to vector<16x16x32xf32>
    %193 = vector.extract_strided_slice %0 {offsets = [1, 1, 1, 0], sizes = [1, 1, 1, 32], strides = [1, 1, 1, 1]} : vector<2x3x3x32xf32> to vector<1x1x1x32xf32>
    %194 = vector.shape_cast %193 : vector<1x1x1x32xf32> to vector<32xf32>
    %195 = vector.shape_cast %194 : vector<32xf32> to vector<1x1x32xf32>
    %196 = vector.broadcast %195 : vector<1x1x32xf32> to vector<16x16x32xf32>
    %197 = arith.mulf %192, %196 : vector<16x16x32xf32>
    %198 = arith.addf %191, %197 : vector<16x16x32xf32>
    %199 = vector.extract_strided_slice %156 {offsets = [2, 3, 0], sizes = [16, 16, 32], strides = [1, 1, 1]} : vector<20x20x32xf32> to vector<16x16x32xf32>
    %200 = vector.extract_strided_slice %0 {offsets = [1, 1, 2, 0], sizes = [1, 1, 1, 32], strides = [1, 1, 1, 1]} : vector<2x3x3x32xf32> to vector<1x1x1x32xf32>
    %201 = vector.shape_cast %200 : vector<1x1x1x32xf32> to vector<32xf32>
    %202 = vector.shape_cast %201 : vector<32xf32> to vector<1x1x32xf32>
    %203 = vector.broadcast %202 : vector<1x1x32xf32> to vector<16x16x32xf32>
    %204 = arith.mulf %199, %203 : vector<16x16x32xf32>
    %205 = arith.addf %198, %204 : vector<16x16x32xf32>
    %206 = vector.extract_strided_slice %156 {offsets = [3, 1, 0], sizes = [16, 16, 32], strides = [1, 1, 1]} : vector<20x20x32xf32> to vector<16x16x32xf32>
    %207 = vector.extract_strided_slice %0 {offsets = [1, 2, 0, 0], sizes = [1, 1, 1, 32], strides = [1, 1, 1, 1]} : vector<2x3x3x32xf32> to vector<1x1x1x32xf32>
    %208 = vector.shape_cast %207 : vector<1x1x1x32xf32> to vector<32xf32>
    %209 = vector.shape_cast %208 : vector<32xf32> to vector<1x1x32xf32>
    %210 = vector.broadcast %209 : vector<1x1x32xf32> to vector<16x16x32xf32>
    %211 = arith.mulf %206, %210 : vector<16x16x32xf32>
    %212 = arith.addf %205, %211 : vector<16x16x32xf32>
    %213 = vector.extract_strided_slice %156 {offsets = [3, 2, 0], sizes = [16, 16, 32], strides = [1, 1, 1]} : vector<20x20x32xf32> to vector<16x16x32xf32>
    %214 = vector.extract_strided_slice %0 {offsets = [1, 2, 1, 0], sizes = [1, 1, 1, 32], strides = [1, 1, 1, 1]} : vector<2x3x3x32xf32> to vector<1x1x1x32xf32>
    %215 = vector.shape_cast %214 : vector<1x1x1x32xf32> to vector<32xf32>
    %216 = vector.shape_cast %215 : vector<32xf32> to vector<1x1x32xf32>
    %217 = vector.broadcast %216 : vector<1x1x32xf32> to vector<16x16x32xf32>
    %218 = arith.mulf %213, %217 : vector<16x16x32xf32>
    %219 = arith.addf %212, %218 : vector<16x16x32xf32>
    %220 = vector.extract_strided_slice %156 {offsets = [3, 3, 0], sizes = [16, 16, 32], strides = [1, 1, 1]} : vector<20x20x32xf32> to vector<16x16x32xf32>
    %221 = vector.extract_strided_slice %0 {offsets = [1, 2, 2, 0], sizes = [1, 1, 1, 32], strides = [1, 1, 1, 1]} : vector<2x3x3x32xf32> to vector<1x1x1x32xf32>
    %222 = vector.shape_cast %221 : vector<1x1x1x32xf32> to vector<32xf32>
    %223 = vector.shape_cast %222 : vector<32xf32> to vector<1x1x32xf32>
    %224 = vector.broadcast %223 : vector<1x1x32xf32> to vector<16x16x32xf32>
    %225 = arith.mulf %220, %224 : vector<16x16x32xf32>
    %226 = arith.addf %219, %225 : vector<16x16x32xf32>
    %227 = arith.addf %79, %226 : vector<16x16x32xf32>
    %cst_40 = arith.constant 0.000000e+00 : f32
    %228 = vector.broadcast %cst_40 : f32 to vector<16x16x32xf32>
    %229 = vector.extract_strided_slice %3 {offsets = [1, 0], sizes = [1, 32], strides = [1, 1]} : vector<2x32xf32> to vector<1x32xf32>
    %230 = vector.shape_cast %229 : vector<1x32xf32> to vector<32xf32>
    %231 = vector.shape_cast %230 : vector<32xf32> to vector<1x1x32xf32>
    %232 = vector.broadcast %231 : vector<1x1x32xf32> to vector<16x16x32xf32>
    %233 = arith.addf %228, %232 : vector<16x16x32xf32>
    %234 = vector.extract_strided_slice %157 {offsets = [0, 0, 0], sizes = [16, 16, 32], strides = [1, 1, 1]} : vector<20x20x32xf32> to vector<16x16x32xf32>
    %235 = vector.extract_strided_slice %2 {offsets = [1, 0, 0, 0], sizes = [1, 1, 1, 32], strides = [1, 1, 1, 1]} : vector<2x3x3x32xf32> to vector<1x1x1x32xf32>
    %236 = vector.shape_cast %235 : vector<1x1x1x32xf32> to vector<32xf32>
    %237 = vector.shape_cast %236 : vector<32xf32> to vector<1x1x32xf32>
    %238 = vector.broadcast %237 : vector<1x1x32xf32> to vector<16x16x32xf32>
    %239 = arith.mulf %234, %238 : vector<16x16x32xf32>
    %240 = arith.addf %233, %239 : vector<16x16x32xf32>
    %241 = vector.extract_strided_slice %157 {offsets = [0, 2, 0], sizes = [16, 16, 32], strides = [1, 1, 1]} : vector<20x20x32xf32> to vector<16x16x32xf32>
    %242 = vector.extract_strided_slice %2 {offsets = [1, 0, 1, 0], sizes = [1, 1, 1, 32], strides = [1, 1, 1, 1]} : vector<2x3x3x32xf32> to vector<1x1x1x32xf32>
    %243 = vector.shape_cast %242 : vector<1x1x1x32xf32> to vector<32xf32>
    %244 = vector.shape_cast %243 : vector<32xf32> to vector<1x1x32xf32>
    %245 = vector.broadcast %244 : vector<1x1x32xf32> to vector<16x16x32xf32>
    %246 = arith.mulf %241, %245 : vector<16x16x32xf32>
    %247 = arith.addf %240, %246 : vector<16x16x32xf32>
    %248 = vector.extract_strided_slice %157 {offsets = [0, 4, 0], sizes = [16, 16, 32], strides = [1, 1, 1]} : vector<20x20x32xf32> to vector<16x16x32xf32>
    %249 = vector.extract_strided_slice %2 {offsets = [1, 0, 2, 0], sizes = [1, 1, 1, 32], strides = [1, 1, 1, 1]} : vector<2x3x3x32xf32> to vector<1x1x1x32xf32>
    %250 = vector.shape_cast %249 : vector<1x1x1x32xf32> to vector<32xf32>
    %251 = vector.shape_cast %250 : vector<32xf32> to vector<1x1x32xf32>
    %252 = vector.broadcast %251 : vector<1x1x32xf32> to vector<16x16x32xf32>
    %253 = arith.mulf %248, %252 : vector<16x16x32xf32>
    %254 = arith.addf %247, %253 : vector<16x16x32xf32>
    %255 = vector.extract_strided_slice %157 {offsets = [2, 0, 0], sizes = [16, 16, 32], strides = [1, 1, 1]} : vector<20x20x32xf32> to vector<16x16x32xf32>
    %256 = vector.extract_strided_slice %2 {offsets = [1, 1, 0, 0], sizes = [1, 1, 1, 32], strides = [1, 1, 1, 1]} : vector<2x3x3x32xf32> to vector<1x1x1x32xf32>
    %257 = vector.shape_cast %256 : vector<1x1x1x32xf32> to vector<32xf32>
    %258 = vector.shape_cast %257 : vector<32xf32> to vector<1x1x32xf32>
    %259 = vector.broadcast %258 : vector<1x1x32xf32> to vector<16x16x32xf32>
    %260 = arith.mulf %255, %259 : vector<16x16x32xf32>
    %261 = arith.addf %254, %260 : vector<16x16x32xf32>
    %262 = vector.extract_strided_slice %157 {offsets = [2, 2, 0], sizes = [16, 16, 32], strides = [1, 1, 1]} : vector<20x20x32xf32> to vector<16x16x32xf32>
    %263 = vector.extract_strided_slice %2 {offsets = [1, 1, 1, 0], sizes = [1, 1, 1, 32], strides = [1, 1, 1, 1]} : vector<2x3x3x32xf32> to vector<1x1x1x32xf32>
    %264 = vector.shape_cast %263 : vector<1x1x1x32xf32> to vector<32xf32>
    %265 = vector.shape_cast %264 : vector<32xf32> to vector<1x1x32xf32>
    %266 = vector.broadcast %265 : vector<1x1x32xf32> to vector<16x16x32xf32>
    %267 = arith.mulf %262, %266 : vector<16x16x32xf32>
    %268 = arith.addf %261, %267 : vector<16x16x32xf32>
    %269 = vector.extract_strided_slice %157 {offsets = [2, 4, 0], sizes = [16, 16, 32], strides = [1, 1, 1]} : vector<20x20x32xf32> to vector<16x16x32xf32>
    %270 = vector.extract_strided_slice %2 {offsets = [1, 1, 2, 0], sizes = [1, 1, 1, 32], strides = [1, 1, 1, 1]} : vector<2x3x3x32xf32> to vector<1x1x1x32xf32>
    %271 = vector.shape_cast %270 : vector<1x1x1x32xf32> to vector<32xf32>
    %272 = vector.shape_cast %271 : vector<32xf32> to vector<1x1x32xf32>
    %273 = vector.broadcast %272 : vector<1x1x32xf32> to vector<16x16x32xf32>
    %274 = arith.mulf %269, %273 : vector<16x16x32xf32>
    %275 = arith.addf %268, %274 : vector<16x16x32xf32>
    %276 = vector.extract_strided_slice %157 {offsets = [4, 0, 0], sizes = [16, 16, 32], strides = [1, 1, 1]} : vector<20x20x32xf32> to vector<16x16x32xf32>
    %277 = vector.extract_strided_slice %2 {offsets = [1, 2, 0, 0], sizes = [1, 1, 1, 32], strides = [1, 1, 1, 1]} : vector<2x3x3x32xf32> to vector<1x1x1x32xf32>
    %278 = vector.shape_cast %277 : vector<1x1x1x32xf32> to vector<32xf32>
    %279 = vector.shape_cast %278 : vector<32xf32> to vector<1x1x32xf32>
    %280 = vector.broadcast %279 : vector<1x1x32xf32> to vector<16x16x32xf32>
    %281 = arith.mulf %276, %280 : vector<16x16x32xf32>
    %282 = arith.addf %275, %281 : vector<16x16x32xf32>
    %283 = vector.extract_strided_slice %157 {offsets = [4, 2, 0], sizes = [16, 16, 32], strides = [1, 1, 1]} : vector<20x20x32xf32> to vector<16x16x32xf32>
    %284 = vector.extract_strided_slice %2 {offsets = [1, 2, 1, 0], sizes = [1, 1, 1, 32], strides = [1, 1, 1, 1]} : vector<2x3x3x32xf32> to vector<1x1x1x32xf32>
    %285 = vector.shape_cast %284 : vector<1x1x1x32xf32> to vector<32xf32>
    %286 = vector.shape_cast %285 : vector<32xf32> to vector<1x1x32xf32>
    %287 = vector.broadcast %286 : vector<1x1x32xf32> to vector<16x16x32xf32>
    %288 = arith.mulf %283, %287 : vector<16x16x32xf32>
    %289 = arith.addf %282, %288 : vector<16x16x32xf32>
    %290 = vector.extract_strided_slice %157 {offsets = [4, 4, 0], sizes = [16, 16, 32], strides = [1, 1, 1]} : vector<20x20x32xf32> to vector<16x16x32xf32>
    %291 = vector.extract_strided_slice %2 {offsets = [1, 2, 2, 0], sizes = [1, 1, 1, 32], strides = [1, 1, 1, 1]} : vector<2x3x3x32xf32> to vector<1x1x1x32xf32>
    %292 = vector.shape_cast %291 : vector<1x1x1x32xf32> to vector<32xf32>
    %293 = vector.shape_cast %292 : vector<32xf32> to vector<1x1x32xf32>
    %294 = vector.broadcast %293 : vector<1x1x32xf32> to vector<16x16x32xf32>
    %295 = arith.mulf %290, %294 : vector<16x16x32xf32>
    %296 = arith.addf %289, %295 : vector<16x16x32xf32>
    %297 = arith.addf %149, %296 : vector<16x16x32xf32>
    %298 = arith.addf %227, %8 : vector<16x16x32xf32>
    %299 = vector.shape_cast %298 : vector<16x16x32xf32> to vector<256x32xf32>
    %300 = arith.addf %297, %9 : vector<16x16x32xf32>
    %301 = vector.shape_cast %300 : vector<16x16x32xf32> to vector<256x32xf32>
    %c0_41 = arith.constant 0 : index
    %c0_42 = arith.constant 0 : index
    %302 = vector.load %arg7[%c0_41, %c0_42] : memref<32x64xf32, #tpu.memory_space<vmem>>, vector<32x64xf32>
    %cst_43 = arith.constant dense<0.000000e+00> : vector<256x64xf32>
    %303 = tpu.matmul %299, %302, %cst_43 {dimension_numbers = #tpu.dot_dimension_numbers<[1], [0], [0], [1], [0, 0, 1, 1], [], []>} : vector<256x32xf32>, vector<32x64xf32>, vector<256x64xf32> -> vector<256x64xf32>
    %c0_44 = arith.constant 0 : index
    %c0_45 = arith.constant 0 : index
    %304 = vector.load %arg8[%c0_44, %c0_45] : memref<32x64xf32, #tpu.memory_space<vmem>>, vector<32x64xf32>
    %cst_46 = arith.constant dense<0.000000e+00> : vector<256x64xf32>
    %305 = tpu.matmul %301, %304, %cst_46 {dimension_numbers = #tpu.dot_dimension_numbers<[1], [0], [0], [1], [0, 0, 1, 1], [], []>} : vector<256x32xf32>, vector<32x64xf32>, vector<256x64xf32> -> vector<256x64xf32>
    %306 = arith.addf %303, %305 : vector<256x64xf32>
    %c0_47 = arith.constant 0 : index
    %c0_48 = arith.constant 0 : index
    %307 = vector.load %arg9[%c0_47, %c0_48] : memref<1x64xf32, #tpu.memory_space<vmem>>, vector<1x64xf32>
    %308 = vector.broadcast %307 : vector<1x64xf32> to vector<256x64xf32>
    %309 = arith.addf %306, %308 : vector<256x64xf32>
    %cst_49 = arith.constant 0.000000e+00 : f32
    %310 = vector.broadcast %cst_49 : f32 to vector<256x64xf32>
    %311 = arith.maximumf %309, %310 : vector<256x64xf32>
    %312 = vector.shape_cast %311 : vector<256x64xf32> to vector<16x16x64xf32>
    %c0_50 = arith.constant 0 : index
    %c0_51 = arith.constant 0 : index
    %c0_52 = arith.constant 0 : index
    %c0_53 = arith.constant 0 : index
    %313 = vector.load %arg10[%c0_50, %c0_51, %c0_52, %c0_53] : memref<1x16x16x64xf32, #tpu.memory_space<vmem>>, vector<1x16x16x64xf32>
    %314 = vector.shape_cast %313 : vector<1x16x16x64xf32> to vector<16x16x64xf32>
    %315 = vector.shape_cast %312 : vector<16x16x64xf32> to vector<1x16x16x64xf32>
    tpu.vector_store %arg10[%c0_50, %c0_51, %c0_52, %c0_53], %315 {strides = array<i32>} : memref<1x16x16x64xf32, #tpu.memory_space<vmem>>, vector<1x16x16x64xf32>,
    return
  }
  func.func @transform_0(%arg0: i32) -> (i32, i32, i32, i32) {
    %c0_i32 = arith.constant 0 : i32
    %c0_i32_0 = arith.constant 0 : i32
    %c0_i32_1 = arith.constant 0 : i32
    %c0_i32_2 = arith.constant 0 : i32
    return %arg0, %c0_i32, %c0_i32_0, %c0_i32_1 : i32, i32, i32, i32
  }
  func.func @transform_1(%arg0: i32) -> (i32, i32, i32, i32) {
    %c0_i32 = arith.constant 0 : i32
    %c0_i32_0 = arith.constant 0 : i32
    %c0_i32_1 = arith.constant 0 : i32
    %c0_i32_2 = arith.constant 0 : i32
    return %arg0, %c0_i32, %c0_i32_0, %c0_i32_1 : i32, i32, i32, i32
  }
  func.func @transform_2(%arg0: i32) -> (i32, i32, i32, i32) {
    %c0_i32 = arith.constant 0 : i32
    %c0_i32_0 = arith.constant 0 : i32
    %c0_i32_1 = arith.constant 0 : i32
    %c0_i32_2 = arith.constant 0 : i32
    %c0_i32_3 = arith.constant 0 : i32
    return %c0_i32, %c0_i32_0, %c0_i32_1, %c0_i32_2 : i32, i32, i32, i32
  }
  func.func @transform_3(%arg0: i32) -> (i32, i32) {
    %c0_i32 = arith.constant 0 : i32
    %c0_i32_0 = arith.constant 0 : i32
    %c0_i32_1 = arith.constant 0 : i32
    return %c0_i32, %c0_i32_0 : i32, i32
  }
  func.func @transform_4(%arg0: i32) -> (i32, i32, i32, i32) {
    %c0_i32 = arith.constant 0 : i32
    %c0_i32_0 = arith.constant 0 : i32
    %c0_i32_1 = arith.constant 0 : i32
    %c0_i32_2 = arith.constant 0 : i32
    %c0_i32_3 = arith.constant 0 : i32
    return %c0_i32, %c0_i32_0, %c0_i32_1, %c0_i32_2 : i32, i32, i32, i32
  }
  func.func @transform_5(%arg0: i32) -> (i32, i32) {
    %c0_i32 = arith.constant 0 : i32
    %c0_i32_0 = arith.constant 0 : i32
    %c0_i32_1 = arith.constant 0 : i32
    return %c0_i32, %c0_i32_0 : i32, i32
  }
  func.func @transform_6(%arg0: i32) -> (i32, i32) {
    %c0_i32 = arith.constant 0 : i32
    %c0_i32_0 = arith.constant 0 : i32
    %c0_i32_1 = arith.constant 0 : i32
    return %c0_i32, %c0_i32_0 : i32, i32
  }
  func.func @transform_7(%arg0: i32) -> (i32, i32) {
    %c0_i32 = arith.constant 0 : i32
    %c0_i32_0 = arith.constant 0 : i32
    %c0_i32_1 = arith.constant 0 : i32
    return %c0_i32, %c0_i32_0 : i32, i32
  }
  func.func @transform_8(%arg0: i32) -> (i32, i32) {
    %c0_i32 = arith.constant 0 : i32
    %c0_i32_0 = arith.constant 0 : i32
    %c0_i32_1 = arith.constant 0 : i32
    return %c0_i32, %c0_i32_0 : i32, i32
  }
  func.func @transform_9(%arg0: i32) -> (i32, i32, i32, i32) {
    %c0_i32 = arith.constant 0 : i32
    %c0_i32_0 = arith.constant 0 : i32
    %c0_i32_1 = arith.constant 0 : i32
    %c0_i32_2 = arith.constant 0 : i32
    return %arg0, %c0_i32, %c0_i32_0, %c0_i32_1 : i32, i32, i32, i32
  }
}

</mosaic_0001>

<llo_original>
// kernel: msrb_forward.1
$region0: #{msrb_forward.1}
  #allocation0 [shape = 'u32[]', space=smem, size = 0x4, offset = 0x4, fixed_abs, tag = 'smem constant byte address 0x4 - core index']
  #allocation1 [shape = 'u32[72,128]{1,0:T(1,128)}', space=vmem, size = 0x9000, scoped, tag = 'internal scratch']
  #allocation2 [shape = 'f32[20,20,32]{2,1,0:T(8,128)}', space=vmem, size = 0x3c000, scoped, tag = 'scratch operand']
  #allocation3 [shape = 'f32[20,20,32]{2,1,0:T(8,128)}', space=vmem, size = 0x3c000, scoped, tag = 'scratch operand']
  %s0 = inlined_call_operand.vmem [shape: f32[2,20,20,32], index: 0, kind: input, shape index: {}]
  %s1 = inlined_call_operand.vmem [shape: f32[2,20,20,32], index: 1, kind: input, shape index: {}]
  %s2 = inlined_call_operand.vmem [shape: f32[2,3,3,32], index: 2, kind: input, shape index: {}]
  %s3 = inlined_call_operand.vmem [shape: f32[2,32], index: 3, kind: input, shape index: {}]
  %s4 = inlined_call_operand.vmem [shape: f32[2,3,3,32], index: 4, kind: input, shape index: {}]
  %s5 = inlined_call_operand.vmem [shape: f32[2,32], index: 5, kind: input, shape index: {}]
  %s6 = inlined_call_operand.vmem [shape: f32[32,64], index: 6, kind: input, shape index: {}]
  %s7 = inlined_call_operand.vmem [shape: f32[32,64], index: 7, kind: input, shape index: {}]
  %s8 = inlined_call_operand.vmem [shape: f32[1,64], index: 8, kind: input, shape index: {}]
  %s9 = inlined_call_operand.hbm [shape: f32[2,16,16,64], index: 9, kind: output, shape index: {}]
  %s10 = sld [smem:[#allocation0]]
  $region69: #{msrb_forward.1} parent=0
    _
  %s12 = ssub.s32 1, %s10
  %s13 = scalar_select 0, %s12, %s10
  $region1: #{msrb_forward.1} parent=0
    #allocation4 [shape = 'u8[262144]{0}', space=vmem, size = 0x40000, scoped, tag = 'output window, operand 0']
    #allocation5 [shape = 's32[2]{0}', space=sflag, size = 0x8, scoped, tag = 'scoped memory for msrb_forward.1']
    %14 = vsyncpa [#allocation5], 0
    %s15 = scalar_lea.sflag [#allocation5], 1
    %16 = vsyncpa %s15, 0
    loop: start=0, step=1, limit=4
    $region2: #{msrb_forward.1} parent=1 // loop_pre_header
      _
    $region3: #{msrb_forward.1} parent=1 // loop_header
      %s18 = sphi 0, %s22
      %p19 = scmp.ge.s32.totalorder %s18, 4
      %s28 = sphi 0, %s30
      %s31 = sphi 0, %s28
      %s32 = sphi 0, %s31
      %s48 = sphi 0, %s32
      %s54 = sphi 0, %s56
      %s57 = sphi 0, %s54
      %s58 = sphi 0, %s57
      %s74 = sphi 0, %s58
      %s78 = sphi 0, %s78
      %s80 = sphi 0, %s78
      %s81 = sphi 0, %s80
      %s95 = sphi 0, %s81
      %s99 = sphi 0, %s99
      %s101 = sphi 0, %s99
      %s102 = sphi 0, %s101
      %s116 = sphi 0, %s102
      %s120 = sphi 0, %s120
      %s122 = sphi 0, %s120
      %s123 = sphi 0, %s122
      %s137 = sphi 0, %s123
      %s141 = sphi 0, %s141
      %s143 = sphi 0, %s141
      %s144 = sphi 0, %s143
      %s158 = sphi 0, %s144
      %s162 = sphi 0, %s162
      %s164 = sphi 0, %s162
      %s165 = sphi 0, %s164
      %s179 = sphi 0, %s165
      %s183 = sphi 0, %s183
      %s185 = sphi 0, %s183
      %s186 = sphi 0, %s185
      %s200 = sphi 0, %s186
      %s204 = sphi 0, %s204
      %s206 = sphi 0, %s204
      %s207 = sphi 0, %s206
      %s221 = sphi 0, %s207
      %s227 = sphi 0, %s229
      %s230 = sphi 0, %s227
      %s231 = sphi 0, %s230
      %s247 = sphi 0, %s231
    $region4: #{msrb_forward.1} parent=1 // loop_header_branch
      %21 = sbr.rel (%p19) target = $region8
    $region5: #{msrb_forward.1} parent=1 // loop_body
      %s23 = ssub.s32 %s18, 1
      %s24 = ssub.s32 %s18, 2
      %s25 = sadd.s32 %s18, 1
      %s26 = ssub.s32 %s18, %s25
      %p27 = scmp.eq.s32.totalorder %s26, 0
      %s29 = sadd.s32 %s28, 1
      %s30 = scalar_select %p27, %s28, %s29
      %p33 = pneg %p27
      %p34 = scmp.eq.s32.totalorder %s18, 1
      %p35 = por %p33, %p34
      %p36 = scmp.ne.s32.totalorder %s28, %s31
      %p37 = scmp.eq.s32.totalorder %s18, 0
      %p38 = por %p36, %p37
      %p39 = scmp.ne.s32.totalorder %s28, %s31
      %p40 = scmp.eq.s32.totalorder %s23, 1
      %p41 = por %p39, %p40
      %p42 = scmp.ne.s32.totalorder %s31, %s32
      %p43 = scmp.eq.s32.totalorder %s23, 0
      %p44 = por %p42, %p43
      %p45 = scmp.ne.s32.totalorder %s31, %s32
      %p46 = scmp.eq.s32.totalorder %s24, 1
      %p47 = por %p45, %p46
      %p49 = scmp.ne.s32.totalorder %s32, %s48
      %p50 = scmp.eq.s32.totalorder %s24, 0
      %p51 = por %p49, %p50
      %s52 = ssub.s32 %s18, %s25
      %p53 = scmp.eq.s32.totalorder %s52, 0
      %s55 = sadd.s32 %s54, 1
      %s56 = scalar_select %p53, %s54, %s55
      %p59 = pneg %p53
      %p60 = scmp.eq.s32.totalorder %s18, 1
      %p61 = por %p59, %p60
      %p62 = scmp.ne.s32.totalorder %s54, %s57
      %p63 = scmp.eq.s32.totalorder %s18, 0
      %p64 = por %p62, %p63
      %p65 = scmp.ne.s32.totalorder %s54, %s57
      %p66 = scmp.eq.s32.totalorder %s23, 1
      %p67 = por %p65, %p66
      %p68 = scmp.ne.s32.totalorder %s57, %s58
      %p69 = scmp.eq.s32.totalorder %s23, 0
      %p70 = por %p68, %p69
      %p71 = scmp.ne.s32.totalorder %s57, %s58
      %p72 = scmp.eq.s32.totalorder %s24, 1
      %p73 = por %p71, %p72
      %p75 = scmp.ne.s32.totalorder %s58, %s74
      %p76 = scmp.eq.s32.totalorder %s24, 0
      %p77 = por %p75, %p76
      %s79 = sadd.s32 %s78, 1
      %p82 = scmp.eq.s32.totalorder %s18, 1
      %p83 = scmp.ne.s32.totalorder %s78, %s80
      %p84 = scmp.eq.s32.totalorder %s18, 0
      %p85 = por %p83, %p84
      %p86 = scmp.ne.s32.totalorder %s78, %s80
      %p87 = scmp.eq.s32.totalorder %s23, 1
      %p88 = por %p86, %p87
      %p89 = scmp.ne.s32.totalorder %s80, %s81
      %p90 = scmp.eq.s32.totalorder %s23, 0
      %p91 = por %p89, %p90
      %p92 = scmp.ne.s32.totalorder %s80, %s81
      %p93 = scmp.eq.s32.totalorder %s24, 1
      %p94 = por %p92, %p93
      %p96 = scmp.ne.s32.totalorder %s81, %s95
      %p97 = scmp.eq.s32.totalorder %s24, 0
      %p98 = por %p96, %p97
      %s100 = sadd.s32 %s99, 1
      %p103 = scmp.eq.s32.totalorder %s18, 1
      %p104 = scmp.ne.s32.totalorder %s99, %s101
      %p105 = scmp.eq.s32.totalorder %s18, 0
      %p106 = por %p104, %p105
      %p107 = scmp.ne.s32.totalorder %s99, %s101
      %p108 = scmp.eq.s32.totalorder %s23, 1
      %p109 = por %p107, %p108
      %p110 = scmp.ne.s32.totalorder %s101, %s102
      %p111 = scmp.eq.s32.totalorder %s23, 0
      %p112 = por %p110, %p111
      %p113 = scmp.ne.s32.totalorder %s101, %s102
      %p114 = scmp.eq.s32.totalorder %s24, 1
      %p115 = por %p113, %p114
      %p117 = scmp.ne.s32.totalorder %s102, %s116
      %p118 = scmp.eq.s32.totalorder %s24, 0
      %p119 = por %p117, %p118
      %s121 = sadd.s32 %s120, 1
      %p124 = scmp.eq.s32.totalorder %s18, 1
      %p125 = scmp.ne.s32.totalorder %s120, %s122
      %p126 = scmp.eq.s32.totalorder %s18, 0
      %p127 = por %p125, %p126
      %p128 = scmp.ne.s32.totalorder %s120, %s122
      %p129 = scmp.eq.s32.totalorder %s23, 1
      %p130 = por %p128, %p129
      %p131 = scmp.ne.s32.totalorder %s122, %s123
      %p132 = scmp.eq.s32.totalorder %s23, 0
      %p133 = por %p131, %p132
      %p134 = scmp.ne.s32.totalorder %s122, %s123
      %p135 = scmp.eq.s32.totalorder %s24, 1
      %p136 = por %p134, %p135
      %p138 = scmp.ne.s32.totalorder %s123, %s137
      %p139 = scmp.eq.s32.totalorder %s24, 0
      %p140 = por %p138, %p139
      %s142 = sadd.s32 %s141, 1
      %p145 = scmp.eq.s32.totalorder %s18, 1
      %p146 = scmp.ne.s32.totalorder %s141, %s143
      %p147 = scmp.eq.s32.totalorder %s18, 0
      %p148 = por %p146, %p147
      %p149 = scmp.ne.s32.totalorder %s141, %s143
      %p150 = scmp.eq.s32.totalorder %s23, 1
      %p151 = por %p149, %p150
      %p152 = scmp.ne.s32.totalorder %s143, %s144
      %p153 = scmp.eq.s32.totalorder %s23, 0
      %p154 = por %p152, %p153
      %p155 = scmp.ne.s32.totalorder %s143, %s144
      %p156 = scmp.eq.s32.totalorder %s24, 1
      %p157 = por %p155, %p156
      %p159 = scmp.ne.s32.totalorder %s144, %s158
      %p160 = scmp.eq.s32.totalorder %s24, 0
      %p161 = por %p159, %p160
      %s163 = sadd.s32 %s162, 1
      %p166 = scmp.eq.s32.totalorder %s18, 1
      %p167 = scmp.ne.s32.totalorder %s162, %s164
      %p168 = scmp.eq.s32.totalorder %s18, 0
      %p169 = por %p167, %p168
      %p170 = scmp.ne.s32.totalorder %s162, %s164
      %p171 = scmp.eq.s32.totalorder %s23, 1
      %p172 = por %p170, %p171
      %p173 = scmp.ne.s32.totalorder %s164, %s165
      %p174 = scmp.eq.s32.totalorder %s23, 0
      %p175 = por %p173, %p174
      %p176 = scmp.ne.s32.totalorder %s164, %s165
      %p177 = scmp.eq.s32.totalorder %s24, 1
      %p178 = por %p176, %p177
      %p180 = scmp.ne.s32.totalorder %s165, %s179
      %p181 = scmp.eq.s32.totalorder %s24, 0
      %p182 = por %p180, %p181
      %s184 = sadd.s32 %s183, 1
      %p187 = scmp.eq.s32.totalorder %s18, 1
      %p188 = scmp.ne.s32.totalorder %s183, %s185
      %p189 = scmp.eq.s32.totalorder %s18, 0
      %p190 = por %p188, %p189
      %p191 = scmp.ne.s32.totalorder %s183, %s185
      %p192 = scmp.eq.s32.totalorder %s23, 1
      %p193 = por %p191, %p192
      %p194 = scmp.ne.s32.totalorder %s185, %s186
      %p195 = scmp.eq.s32.totalorder %s23, 0
      %p196 = por %p194, %p195
      %p197 = scmp.ne.s32.totalorder %s185, %s186
      %p198 = scmp.eq.s32.totalorder %s24, 1
      %p199 = por %p197, %p198
      %p201 = scmp.ne.s32.totalorder %s186, %s200
      %p202 = scmp.eq.s32.totalorder %s24, 0
      %p203 = por %p201, %p202
      %s205 = sadd.s32 %s204, 1
      %p208 = scmp.eq.s32.totalorder %s18, 1
      %p209 = scmp.ne.s32.totalorder %s204, %s206
      %p210 = scmp.eq.s32.totalorder %s18, 0
      %p211 = por %p209, %p210
      %p212 = scmp.ne.s32.totalorder %s204, %s206
      %p213 = scmp.eq.s32.totalorder %s23, 1
      %p214 = por %p212, %p213
      %p215 = scmp.ne.s32.totalorder %s206, %s207
      %p216 = scmp.eq.s32.totalorder %s23, 0
      %p217 = por %p215, %p216
      %p218 = scmp.ne.s32.totalorder %s206, %s207
      %p219 = scmp.eq.s32.totalorder %s24, 1
      %p220 = por %p218, %p219
      %p222 = scmp.ne.s32.totalorder %s207, %s221
      %p223 = scmp.eq.s32.totalorder %s24, 0
      %p224 = por %p222, %p223
      %s225 = ssub.s32 %s18, %s25
      %p226 = scmp.eq.s32.totalorder %s225, 0
      %s228 = sadd.s32 %s227, 1
      %s229 = scalar_select %p226, %s227, %s228
      %p232 = pneg %p226
      %p233 = scmp.eq.s32.totalorder %s18, 1
      %p234 = por %p232, %p233
      %p235 = scmp.ne.s32.totalorder %s227, %s230
      %p236 = scmp.eq.s32.totalorder %s18, 0
      %p237 = por %p235, %p236
      %p238 = scmp.ne.s32.totalorder %s227, %s230
      %p239 = scmp.eq.s32.totalorder %s23, 1
      %p240 = por %p238, %p239
      %p241 = scmp.ne.s32.totalorder %s230, %s231
      %p242 = scmp.eq.s32.totalorder %s23, 0
      %p243 = por %p241, %p242
      %p244 = scmp.ne.s32.totalorder %s230, %s231
      %p245 = scmp.eq.s32.totalorder %s24, 1
      %p246 = por %p244, %p245
      %p248 = scmp.ne.s32.totalorder %s231, %s247
      %p249 = scmp.eq.s32.totalorder %s24, 0
      %p250 = por %p248, %p249
      %p251 = scmp.le.s32.totalorder 1, %s18
      %p252 = scmp.lt.s32.totalorder %s18, 3
      %p253 = pnand %p251, %p252
      %p254 = pneg %p253
      // Predicated region
      $region9: #{msrb_forward.1} parent=5 // pred_check
        _
      $region10: #{msrb_forward.1} parent=5 // pred_check_branch
        %256 = sbr.rel (%p253) target = $region12
      $region11: #{msrb_forward.1} parent=5 // pred_region
        %s257 = ssub.s32 %s18, 1
        // Predicated region
        $region13: #{msrb_forward.1} parent=11 // pred_check
          %p258 = pneg %p91
        $region14: #{msrb_forward.1} parent=11 // pred_check_branch
          %260 = sbr.rel (%p258) target = $region16
        $region15: #{msrb_forward.1} parent=11 // pred_region
          _
        $region16: #{msrb_forward.1} parent=11 // pred_fallthru
          _
        // Predicated region
        $region17: #{msrb_forward.1} parent=11 // pred_check
          %p261 = pneg %p112
        $region18: #{msrb_forward.1} parent=11 // pred_check_branch
          %263 = sbr.rel (%p261) target = $region20
        $region19: #{msrb_forward.1} parent=11 // pred_region
          _
        $region20: #{msrb_forward.1} parent=11 // pred_fallthru
          _
        // Predicated region
        $region21: #{msrb_forward.1} parent=11 // pred_check
          %p264 = pneg %p133
        $region22: #{msrb_forward.1} parent=11 // pred_check_branch
          %266 = sbr.rel (%p264) target = $region24
        $region23: #{msrb_forward.1} parent=11 // pred_region
          _
        $region24: #{msrb_forward.1} parent=11 // pred_fallthru
          _
        // Predicated region
        $region25: #{msrb_forward.1} parent=11 // pred_check
          %p267 = pneg %p154
        $region26: #{msrb_forward.1} parent=11 // pred_check_branch
          %269 = sbr.rel (%p267) target = $region28
        $region27: #{msrb_forward.1} parent=11 // pred_region
          _
        $region28: #{msrb_forward.1} parent=11 // pred_fallthru
          _
        // Predicated region
        $region29: #{msrb_forward.1} parent=11 // pred_check
          %p270 = pneg %p175
        $region30: #{msrb_forward.1} parent=11 // pred_check_branch
          %272 = sbr.rel (%p270) target = $region32
        $region31: #{msrb_forward.1} parent=11 // pred_region
          _
        $region32: #{msrb_forward.1} parent=11 // pred_fallthru
          _
        // Predicated region
        $region33: #{msrb_forward.1} parent=11 // pred_check
          %p273 = pneg %p196
        $region34: #{msrb_forward.1} parent=11 // pred_check_branch
          %275 = sbr.rel (%p273) target = $region36
        $region35: #{msrb_forward.1} parent=11 // pred_region
          _
        $region36: #{msrb_forward.1} parent=11 // pred_fallthru
          _
        // Predicated region
        $region37: #{msrb_forward.1} parent=11 // pred_check
          %p276 = pneg %p217
        $region38: #{msrb_forward.1} parent=11 // pred_check_branch
          %278 = sbr.rel (%p276) target = $region40
        $region39: #{msrb_forward.1} parent=11 // pred_region
          _
        $region40: #{msrb_forward.1} parent=11 // pred_fallthru
          _
      $region12: #{msrb_forward.1} parent=5 // pred_fallthru
        _
      %p279 = scmp.lt.s32.totalorder %s18, 2
      // Predicated region
      $region41: #{msrb_forward.1} parent=5 // pred_check
        %p280 = pneg %p279
      $region42: #{msrb_forward.1} parent=5 // pred_check_branch
        %282 = sbr.rel (%p280) target = $region44
      $region43: #{msrb_forward.1} parent=5 // pred_region
        // Predicated region
        $region45: #{msrb_forward.1} parent=43 // pred_check
          %p283 = pneg %p38
        $region46: #{msrb_forward.1} parent=43 // pred_check_branch
          %285 = sbr.rel (%p283) target = $region48
        $region47: #{msrb_forward.1} parent=43 // pred_region
          %p286 = scmp.lt.s32.totalorder %s18, 1
          %s287 = scalar_select %p286, %s18, 1
          %s288 = smul.addr %s287, 60
          %s289 = smul.addr %s288, 8
          %s290 = scalar_lea.vmem %s0, %s289
        $region48: #{msrb_forward.1} parent=43 // pred_fallthru
          _
        // Predicated region
        $region49: #{msrb_forward.1} parent=43 // pred_check
          %p291 = pneg %p64
        $region50: #{msrb_forward.1} parent=43 // pred_check_branch
          %293 = sbr.rel (%p291) target = $region52
        $region51: #{msrb_forward.1} parent=43 // pred_region
          %p294 = scmp.lt.s32.totalorder %s18, 1
          %s295 = scalar_select %p294, %s18, 1
          %s296 = smul.addr %s295, 60
          %s297 = smul.addr %s296, 8
          %s298 = scalar_lea.vmem %s1, %s297
        $region52: #{msrb_forward.1} parent=43 // pred_fallthru
          _
      $region44: #{msrb_forward.1} parent=5 // pred_fallthru
        _
      %p299 = scmp.le.s32.totalorder 1, %s18
      %p300 = scmp.lt.s32.totalorder %s18, 3
      %p301 = pnand %p299, %p300
      %p302 = pneg %p301
      // Predicated region
      $region53: #{msrb_forward.1} parent=5 // pred_check
        _
      $region54: #{msrb_forward.1} parent=5 // pred_check_branch
        %304 = sbr.rel (%p301) target = $region56
      $region55: #{msrb_forward.1} parent=5 // pred_region
        %s305 = ssub.s32 %s18, 1
        %p306 = scmp.lt.s32.totalorder %s23, 1
        %s307 = scalar_select %p306, %s23, 1
        %s308 = smul.addr %s307, 60
        %s309 = smul.addr %s308, 8
        %s310 = scalar_lea.vmem %s0, %s309
        %p311 = pneg %p44
        %p312 = pneg %p41
        %p313 = scmp.lt.s32.totalorder %s23, 1
        %s314 = scalar_select %p313, %s23, 1
        %s315 = smul.addr %s314, 60
        %s316 = smul.addr %s315, 8
        %s317 = scalar_lea.vmem %s1, %s316
        %p318 = pneg %p70
        %p319 = pneg %p67
        %p320 = pneg %p91
        %p321 = pneg %p88
        %p322 = pneg %p112
        %p323 = pneg %p109
        %p324 = pneg %p133
        %p325 = pneg %p130
        %p326 = pneg %p154
        %p327 = pneg %p151
        %p328 = pneg %p175
        %p329 = pneg %p172
        %p330 = pneg %p196
        %p331 = pneg %p193
        %p332 = pneg %p217
        %p333 = pneg %p214
        %p334 = pneg %p243
        %p335 = pneg %p240
        %s336 = sand.u32 %s230, 1
        %s337 = scalar_lea.sflag [#allocation5], %s336
        %s338 = sand.u32 %s230, 1
        %s339 = smul.addr %s338, 256
        %s340 = scalar_lea.vmem [#allocation4], %s339
        %p341 = scmp.lt.s32.totalorder %s23, 1
        %s342 = scalar_select %p341, %s23, 1
        %s343 = smul.addr %s342, 60
        %s344 = smul.addr %s343, 8
        %s345 = scalar_lea.vmem %s0, %s344
        %p346 = scmp.lt.s32.totalorder %s23, 1
        %s347 = scalar_select %p346, %s23, 1
        %s348 = smul.addr %s347, 60
        %s349 = smul.addr %s348, 8
        %s350 = scalar_lea.vmem %s1, %s349
        %v351 = vld [vmem:[%s2] sm:$0x7]
        %v352 = vld [vmem:[%s2 + $0x4] sm:$0x7]
        %v353 = vld [vmem:[%s2 + $0x8] sm:$0x7]
        %v354 = vld [vmem:[%s2 + $0xc] sm:$0x7]
        %v355 = vld [vmem:[%s2 + $0x10] sm:$0x7]
        %v356 = vld [vmem:[%s2 + $0x14] sm:$0x7]
        %v357 = vld [vmem:[%s3] sm:$0x3]
        %v358 = vld [vmem:[%s4] sm:$0x7]
        %v359 = vld [vmem:[%s4 + $0x4] sm:$0x7]
        %v360 = vld [vmem:[%s4 + $0x8] sm:$0x7]
        %v361 = vld [vmem:[%s4 + $0xc] sm:$0x7]
        %v362 = vld [vmem:[%s4 + $0x10] sm:$0x7]
        %v363 = vld [vmem:[%s4 + $0x14] sm:$0x7]
        %v364 = vld [vmem:[%s5] sm:$0x3]
        %v365 = vld [vmem:[%s345 + $0x18] sm:$0xff]
        %v366 = vld [vmem:[%s345 + $0x20] sm:$0xff]
        %v367 = vld [vmem:[%s345 + $0x28] sm:$0xf]
        %v368 = vld [vmem:[%s345 + $0x30] sm:$0xff]
        %v369 = vld [vmem:[%s345 + $0x38] sm:$0xff]
        %v370 = vld [vmem:[%s345 + $0x40] sm:$0xf]
        %v371 = vld [vmem:[%s345 + $0x48] sm:$0xff]
        %v372 = vld [vmem:[%s345 + $0x50] sm:$0xff]
        %v373 = vld [vmem:[%s345 + $0x58] sm:$0xf]
        %v374 = vld [vmem:[%s345 + $0x60] sm:$0xff]
        %v375 = vld [vmem:[%s345 + $0x68] sm:$0xff]
        %v376 = vld [vmem:[%s345 + $0x70] sm:$0xf]
        %v377 = vld [vmem:[%s345 + $0x78] sm:$0xff]
        %v378 = vld [vmem:[%s345 + $0x80] sm:$0xff]
        %v379 = vld [vmem:[%s345 + $0x88] sm:$0xf]
        %v380 = vld [vmem:[%s345 + $0x90] sm:$0xff]
        %v381 = vld [vmem:[%s345 + $0x98] sm:$0xff]
        %v382 = vld [vmem:[%s345 + $0xa0] sm:$0xf]
        %v383 = vld [vmem:[%s345 + $0xa8] sm:$0xff]
        %v384 = vld [vmem:[%s345 + $0xb0] sm:$0xff]
        %v385 = vld [vmem:[%s345 + $0xb8] sm:$0xf]
        %v386 = vld [vmem:[%s345 + $0xc0] sm:$0xff]
        %v387 = vld [vmem:[%s345 + $0xc8] sm:$0xff]
        %v388 = vld [vmem:[%s345 + $0xd0] sm:$0xf]
        %v389 = vld [vmem:[%s345 + $0xd8] sm:$0xff]
        %v390 = vld [vmem:[%s345 + $0xe0] sm:$0xff]
        %v391 = vld [vmem:[%s345 + $0xe8] sm:$0xf]
        %v392 = vld [vmem:[%s345 + $0xf0] sm:$0xff]
        %v393 = vld [vmem:[%s345 + $0xf8] sm:$0xff]
        %v394 = vld [vmem:[%s345 + $0x100] sm:$0xf]
        %v395 = vld [vmem:[%s345 + $0x108] sm:$0xff]
        %v396 = vld [vmem:[%s345 + $0x110] sm:$0xff]
        %v397 = vld [vmem:[%s345 + $0x118] sm:$0xf]
        %v398 = vld [vmem:[%s345 + $0x120] sm:$0xff]
        %v399 = vld [vmem:[%s345 + $0x128] sm:$0xff]
        %v400 = vld [vmem:[%s345 + $0x130] sm:$0xf]
        %v401 = vld [vmem:[%s345 + $0x138] sm:$0xff]
        %v402 = vld [vmem:[%s345 + $0x140] sm:$0xff]
        %v403 = vld [vmem:[%s345 + $0x148] sm:$0xf]
        %v404 = vld [vmem:[%s345 + $0x150] sm:$0xff]
        %v405 = vld [vmem:[%s345 + $0x158] sm:$0xff]
        %v406 = vld [vmem:[%s345 + $0x160] sm:$0xf]
        %v407 = vld [vmem:[%s345 + $0x168] sm:$0xff]
        %v408 = vld [vmem:[%s345 + $0x170] sm:$0xff]
        %v409 = vld [vmem:[%s345 + $0x178] sm:$0xf]
        %v410 = vld [vmem:[%s345 + $0x180] sm:$0xff]
        %v411 = vld [vmem:[%s345 + $0x188] sm:$0xff]
        %v412 = vld [vmem:[%s345 + $0x190] sm:$0xf]
        %v413 = vld [vmem:[%s345 + $0x198] sm:$0xff]
        %v414 = vld [vmem:[%s345 + $0x1a0] sm:$0xff]
        %v415 = vld [vmem:[%s345 + $0x1a8] sm:$0xf]
        %v416 = vld [vmem:[%s345 + $0x1b0] sm:$0xff]
        %v417 = vld [vmem:[%s345 + $0x1b8] sm:$0xff]
        %v418 = vld [vmem:[%s345 + $0x1c0] sm:$0xf]
        %v419 = vld [vmem:[%s350] sm:$0xff]
        %v420 = vld [vmem:[%s350 + $0x8] sm:$0xff]
        %v421 = vld [vmem:[%s350 + $0x10] sm:$0xf]
        %v422 = vld [vmem:[%s350 + $0x18] sm:$0xff]
        %v423 = vld [vmem:[%s350 + $0x20] sm:$0xff]
        %v424 = vld [vmem:[%s350 + $0x28] sm:$0xf]
        %v425 = vld [vmem:[%s350 + $0x30] sm:$0xff]
        %v426 = vld [vmem:[%s350 + $0x38] sm:$0xff]
        %v427 = vld [vmem:[%s350 + $0x40] sm:$0xf]
        %v428 = vld [vmem:[%s350 + $0x48] sm:$0xff]
        %v429 = vld [vmem:[%s350 + $0x50] sm:$0xff]
        %v430 = vld [vmem:[%s350 + $0x58] sm:$0xf]
        %v431 = vld [vmem:[%s350 + $0x60] sm:$0xff]
        %v432 = vld [vmem:[%s350 + $0x68] sm:$0xff]
        %v433 = vld [vmem:[%s350 + $0x70] sm:$0xf]
        %v434 = vld [vmem:[%s350 + $0x78] sm:$0xff]
        %v435 = vld [vmem:[%s350 + $0x80] sm:$0xff]
        %v436 = vld [vmem:[%s350 + $0x88] sm:$0xf]
        %v437 = vld [vmem:[%s350 + $0x90] sm:$0xff]
        %v438 = vld [vmem:[%s350 + $0x98] sm:$0xff]
        %v439 = vld [vmem:[%s350 + $0xa0] sm:$0xf]
        %v440 = vld [vmem:[%s350 + $0xa8] sm:$0xff]
        %v441 = vld [vmem:[%s350 + $0xb0] sm:$0xff]
        %v442 = vld [vmem:[%s350 + $0xb8] sm:$0xf]
        %v443 = vld [vmem:[%s350 + $0xc0] sm:$0xff]
        %v444 = vld [vmem:[%s350 + $0xc8] sm:$0xff]
        %v445 = vld [vmem:[%s350 + $0xd0] sm:$0xf]
        %v446 = vld [vmem:[%s350 + $0xd8] sm:$0xff]
        %v447 = vld [vmem:[%s350 + $0xe0] sm:$0xff]
        %v448 = vld [vmem:[%s350 + $0xe8] sm:$0xf]
        %v449 = vld [vmem:[%s350 + $0xf0] sm:$0xff]
        %v450 = vld [vmem:[%s350 + $0xf8] sm:$0xff]
        %v451 = vld [vmem:[%s350 + $0x100] sm:$0xf]
        %v452 = vld [vmem:[%s350 + $0x108] sm:$0xff]
        %v453 = vld [vmem:[%s350 + $0x110] sm:$0xff]
        %v454 = vld [vmem:[%s350 + $0x118] sm:$0xf]
        %v455 = vld [vmem:[%s350 + $0x120] sm:$0xff]
        %v456 = vld [vmem:[%s350 + $0x128] sm:$0xff]
        %v457 = vld [vmem:[%s350 + $0x130] sm:$0xf]
        %v458 = vld [vmem:[%s350 + $0x138] sm:$0xff]
        %v459 = vld [vmem:[%s350 + $0x140] sm:$0xff]
        %v460 = vld [vmem:[%s350 + $0x148] sm:$0xf]
        %v461 = vld [vmem:[%s350 + $0x150] sm:$0xff]
        %v462 = vld [vmem:[%s350 + $0x158] sm:$0xff]
        %v463 = vld [vmem:[%s350 + $0x160] sm:$0xf]
        %v464 = vld [vmem:[%s350 + $0x168] sm:$0xff]
        %v465 = vld [vmem:[%s350 + $0x170] sm:$0xff]
        %v466 = vld [vmem:[%s350 + $0x178] sm:$0xf]
        %v467 = vld [vmem:[%s350 + $0x180] sm:$0xff]
        %v468 = vld [vmem:[%s350 + $0x188] sm:$0xff]
        %v469 = vld [vmem:[%s350 + $0x190] sm:$0xf]
        %v470 = vld [vmem:[%s350 + $0x198] sm:$0xff]
        %v471 = vld [vmem:[%s350 + $0x1a0] sm:$0xff]
        %v472 = vld [vmem:[%s350 + $0x1a8] sm:$0xf]
        %v473 = vld [vmem:[%s350 + $0x1b0] sm:$0xff]
        %v474 = vld [vmem:[%s350 + $0x1b8] sm:$0xff]
        %v475 = vld [vmem:[%s350 + $0x1c0] sm:$0xf]
        %v476 = vld [vmem:[%s350 + $0x1c8] sm:$0xff]
        %v477 = vld [vmem:[%s350 + $0x1d0] sm:$0xff]
        %v478 = vld [vmem:[%s350 + $0x1d8] sm:$0xf]
        %v479 = vperm.slane %v357, 0
        %v480 = vadd.f32 %v479, 0.0
        %v481 = vperm.slane %v351, 0
        %v482 = vmul.f32 %v365, %v481
        %v483 = vmul.f32 %v366, %v481
        %v484 = vmul.f32 %v367, %v481
        %v485 = vmul.f32 %v368, %v481
        %v486 = vmul.f32 %v369, %v481
        %v487 = vmul.f32 %v370, %v481
        %v488 = vmul.f32 %v371, %v481
        %v489 = vmul.f32 %v372, %v481
        %v490 = vmul.f32 %v373, %v481
        %v491 = vmul.f32 %v374, %v481
        %v492 = vmul.f32 %v375, %v481
        %v493 = vmul.f32 %v376, %v481
        %v494 = vmul.f32 %v377, %v481
        %v495 = vmul.f32 %v378, %v481
        %v496 = vmul.f32 %v379, %v481
        %v497 = vmul.f32 %v380, %v481
        %v498 = vmul.f32 %v381, %v481
        %v499 = vmul.f32 %v382, %v481
        %v500 = vmul.f32 %v383, %v481
        %v501 = vmul.f32 %v384, %v481
        %v502 = vmul.f32 %v385, %v481
        %v503 = vmul.f32 %v386, %v481
        %v504 = vmul.f32 %v387, %v481
        %v505 = vmul.f32 %v388, %v481
        %v506 = vmul.f32 %v389, %v481
        %v507 = vmul.f32 %v390, %v481
        %v508 = vmul.f32 %v391, %v481
        %v509 = vmul.f32 %v392, %v481
        %v510 = vmul.f32 %v393, %v481
        %v511 = vmul.f32 %v394, %v481
        %v512 = vmul.f32 %v395, %v481
        %v513 = vmul.f32 %v396, %v481
        %v514 = vmul.f32 %v397, %v481
        %v515 = vmul.f32 %v398, %v481
        %v516 = vmul.f32 %v399, %v481
        %v517 = vmul.f32 %v400, %v481
        %v518 = vmul.f32 %v401, %v481
        %v519 = vmul.f32 %v402, %v481
        %v520 = vmul.f32 %v403, %v481
        %v521 = vmul.f32 %v404, %v481
        %v522 = vmul.f32 %v405, %v481
        %v523 = vmul.f32 %v406, %v481
        %v524 = vmul.f32 %v407, %v481
        %v525 = vmul.f32 %v408, %v481
        %v526 = vmul.f32 %v409, %v481
        %v527 = vmul.f32 %v410, %v481
        %v528 = vmul.f32 %v411, %v481
        %v529 = vmul.f32 %v412, %v481
        %v530 = vadd.f32 %v480, %v482
        %v531 = vadd.f32 %v480, %v483
        %v532 = vadd.f32 %v480, %v484
        %v533 = vadd.f32 %v480, %v485
        %v534 = vadd.f32 %v480, %v486
        %v535 = vadd.f32 %v480, %v487
        %v536 = vadd.f32 %v480, %v488
        %v537 = vadd.f32 %v480, %v489
        %v538 = vadd.f32 %v480, %v490
        %v539 = vadd.f32 %v480, %v491
        %v540 = vadd.f32 %v480, %v492
        %v541 = vadd.f32 %v480, %v493
        %v542 = vadd.f32 %v480, %v494
        %v543 = vadd.f32 %v480, %v495
        %v544 = vadd.f32 %v480, %v496
        %v545 = vadd.f32 %v480, %v497
        %v546 = vadd.f32 %v480, %v498
        %v547 = vadd.f32 %v480, %v499
        %v548 = vadd.f32 %v480, %v500
        %v549 = vadd.f32 %v480, %v501
        %v550 = vadd.f32 %v480, %v502
        %v551 = vadd.f32 %v480, %v503
        %v552 = vadd.f32 %v480, %v504
        %v553 = vadd.f32 %v480, %v505
        %v554 = vadd.f32 %v480, %v506
        %v555 = vadd.f32 %v480, %v507
        %v556 = vadd.f32 %v480, %v508
        %v557 = vadd.f32 %v480, %v509
        %v558 = vadd.f32 %v480, %v510
        %v559 = vadd.f32 %v480, %v511
        %v560 = vadd.f32 %v480, %v512
        %v561 = vadd.f32 %v480, %v513
        %v562 = vadd.f32 %v480, %v514
        %v563 = vadd.f32 %v480, %v515
        %v564 = vadd.f32 %v480, %v516
        %v565 = vadd.f32 %v480, %v517
        %v566 = vadd.f32 %v480, %v518
        %v567 = vadd.f32 %v480, %v519
        %v568 = vadd.f32 %v480, %v520
        %v569 = vadd.f32 %v480, %v521
        %v570 = vadd.f32 %v480, %v522
        %v571 = vadd.f32 %v480, %v523
        %v572 = vadd.f32 %v480, %v524
        %v573 = vadd.f32 %v480, %v525
        %v574 = vadd.f32 %v480, %v526
        %v575 = vadd.f32 %v480, %v527
        %v576 = vadd.f32 %v480, %v528
        %v577 = vadd.f32 %v480, %v529
        %v578 = vperm.slane %v351, 1
        %v579 = vmul.f32 %v365, %v578
        %v580 = vmul.f32 %v366, %v578
        %v581 = vmul.f32 %v367, %v578
        %v582 = vmul.f32 %v368, %v578
        %v583 = vmul.f32 %v369, %v578
        %v584 = vmul.f32 %v370, %v578
        %v585 = vmul.f32 %v371, %v578
        %v586 = vmul.f32 %v372, %v578
        %v587 = vmul.f32 %v373, %v578
        %v588 = vmul.f32 %v374, %v578
        %v589 = vmul.f32 %v375, %v578
        %v590 = vmul.f32 %v376, %v578
        %v591 = vmul.f32 %v377, %v578
        %v592 = vmul.f32 %v378, %v578
        %v593 = vmul.f32 %v379, %v578
        %v594 = vmul.f32 %v380, %v578
        %v595 = vmul.f32 %v381, %v578
        %v596 = vmul.f32 %v382, %v578
        %v597 = vmul.f32 %v383, %v578
        %v598 = vmul.f32 %v384, %v578
        %v599 = vmul.f32 %v385, %v578
        %v600 = vmul.f32 %v386, %v578
        %v601 = vmul.f32 %v387, %v578
        %v602 = vmul.f32 %v388, %v578
        %v603 = vmul.f32 %v389, %v578
        %v604 = vmul.f32 %v390, %v578
        %v605 = vmul.f32 %v391, %v578
        %v606 = vmul.f32 %v392, %v578
        %v607 = vmul.f32 %v393, %v578
        %v608 = vmul.f32 %v394, %v578
        %v609 = vmul.f32 %v395, %v578
        %v610 = vmul.f32 %v396, %v578
        %v611 = vmul.f32 %v397, %v578
        %v612 = vmul.f32 %v398, %v578
        %v613 = vmul.f32 %v399, %v578
        %v614 = vmul.f32 %v400, %v578
        %v615 = vmul.f32 %v401, %v578
        %v616 = vmul.f32 %v402, %v578
        %v617 = vmul.f32 %v403, %v578
        %v618 = vmul.f32 %v404, %v578
        %v619 = vmul.f32 %v405, %v578
        %v620 = vmul.f32 %v406, %v578
        %v621 = vmul.f32 %v407, %v578
        %v622 = vmul.f32 %v408, %v578
        %v623 = vmul.f32 %v409, %v578
        %v624 = vmul.f32 %v410, %v578
        %v625 = vmul.f32 %v411, %v578
        %v626 = vmul.f32 %v412, %v578
        %vm675 = vcmask 1046528
        %v676 = vrot.slane %v579, 1
        %v677 = vrot.slane %v580, 1
        %v678 = vsel %vm675, %v676, %v677
        %v679 = vrot.slane %v581, 1
        %v680 = vsel %vm675, %v677, %v679
        %v681 = vrot.slane %v582, 1
        %v682 = vrot.slane %v583, 1
        %v683 = vsel %vm675, %v681, %v682
        %v684 = vrot.slane %v584, 1
        %v685 = vsel %vm675, %v682, %v684
        %v686 = vrot.slane %v585, 1
        %v687 = vrot.slane %v586, 1
        %v688 = vsel %vm675, %v686, %v687
        %v689 = vrot.slane %v587, 1
        %v690 = vsel %vm675, %v687, %v689
        %v691 = vrot.slane %v588, 1
        %v692 = vrot.slane %v589, 1
        %v693 = vsel %vm675, %v691, %v692
        %v694 = vrot.slane %v590, 1
        %v695 = vsel %vm675, %v692, %v694
        %v696 = vrot.slane %v591, 1
        %v697 = vrot.slane %v592, 1
        %v698 = vsel %vm675, %v696, %v697
        %v699 = vrot.slane %v593, 1
        %v700 = vsel %vm675, %v697, %v699
        %v701 = vrot.slane %v594, 1
        %v702 = vrot.slane %v595, 1
        %v703 = vsel %vm675, %v701, %v702
        %v704 = vrot.slane %v596, 1
        %v705 = vsel %vm675, %v702, %v704
        %v706 = vrot.slane %v597, 1
        %v707 = vrot.slane %v598, 1
        %v708 = vsel %vm675, %v706, %v707
        %v709 = vrot.slane %v599, 1
        %v710 = vsel %vm675, %v707, %v709
        %v711 = vrot.slane %v600, 1
        %v712 = vrot.slane %v601, 1
        %v713 = vsel %vm675, %v711, %v712
        %v714 = vrot.slane %v602, 1
        %v715 = vsel %vm675, %v712, %v714
        %v716 = vrot.slane %v603, 1
        %v717 = vrot.slane %v604, 1
        %v718 = vsel %vm675, %v716, %v717
        %v719 = vrot.slane %v605, 1
        %v720 = vsel %vm675, %v717, %v719
        %v721 = vrot.slane %v606, 1
        %v722 = vrot.slane %v607, 1
        %v723 = vsel %vm675, %v721, %v722
        %v724 = vrot.slane %v608, 1
        %v725 = vsel %vm675, %v722, %v724
        %v726 = vrot.slane %v609, 1
        %v727 = vrot.slane %v610, 1
        %v728 = vsel %vm675, %v726, %v727
        %v729 = vrot.slane %v611, 1
        %v730 = vsel %vm675, %v727, %v729
        %v731 = vrot.slane %v612, 1
        %v732 = vrot.slane %v613, 1
        %v733 = vsel %vm675, %v731, %v732
        %v734 = vrot.slane %v614, 1
        %v735 = vsel %vm675, %v732, %v734
        %v736 = vrot.slane %v615, 1
        %v737 = vrot.slane %v616, 1
        %v738 = vsel %vm675, %v736, %v737
        %v739 = vrot.slane %v617, 1
        %v740 = vsel %vm675, %v737, %v739
        %v741 = vrot.slane %v618, 1
        %v742 = vrot.slane %v619, 1
        %v743 = vsel %vm675, %v741, %v742
        %v744 = vrot.slane %v620, 1
        %v745 = vsel %vm675, %v742, %v744
        %v746 = vrot.slane %v621, 1
        %v747 = vrot.slane %v622, 1
        %v748 = vsel %vm675, %v746, %v747
        %v749 = vrot.slane %v623, 1
        %v750 = vsel %vm675, %v747, %v749
        %v751 = vrot.slane %v624, 1
        %v752 = vrot.slane %v625, 1
        %v753 = vsel %vm675, %v751, %v752
        %v754 = vrot.slane %v626, 1
        %v755 = vsel %vm675, %v752, %v754
        %v804 = vadd.f32 %v530, %v678
        %v805 = vadd.f32 %v531, %v680
        %v806 = vadd.f32 %v532, %v679
        %v807 = vadd.f32 %v533, %v683
        %v808 = vadd.f32 %v534, %v685
        %v809 = vadd.f32 %v535, %v684
        %v810 = vadd.f32 %v536, %v688
        %v811 = vadd.f32 %v537, %v690
        %v812 = vadd.f32 %v538, %v689
        %v813 = vadd.f32 %v539, %v693
        %v814 = vadd.f32 %v540, %v695
        %v815 = vadd.f32 %v541, %v694
        %v816 = vadd.f32 %v542, %v698
        %v817 = vadd.f32 %v543, %v700
        %v818 = vadd.f32 %v544, %v699
        %v819 = vadd.f32 %v545, %v703
        %v820 = vadd.f32 %v546, %v705
        %v821 = vadd.f32 %v547, %v704
        %v822 = vadd.f32 %v548, %v708
        %v823 = vadd.f32 %v549, %v710
        %v824 = vadd.f32 %v550, %v709
        %v825 = vadd.f32 %v551, %v713
        %v826 = vadd.f32 %v552, %v715
        %v827 = vadd.f32 %v553, %v714
        %v828 = vadd.f32 %v554, %v718
        %v829 = vadd.f32 %v555, %v720
        %v830 = vadd.f32 %v556, %v719
        %v831 = vadd.f32 %v557, %v723
        %v832 = vadd.f32 %v558, %v725
        %v833 = vadd.f32 %v559, %v724
        %v834 = vadd.f32 %v560, %v728
        %v835 = vadd.f32 %v561, %v730
        %v836 = vadd.f32 %v562, %v729
        %v837 = vadd.f32 %v563, %v733
        %v838 = vadd.f32 %v564, %v735
        %v839 = vadd.f32 %v565, %v734
        %v840 = vadd.f32 %v566, %v738
        %v841 = vadd.f32 %v567, %v740
        %v842 = vadd.f32 %v568, %v739
        %v843 = vadd.f32 %v569, %v743
        %v844 = vadd.f32 %v570, %v745
        %v845 = vadd.f32 %v571, %v744
        %v846 = vadd.f32 %v572, %v748
        %v847 = vadd.f32 %v573, %v750
        %v848 = vadd.f32 %v574, %v749
        %v849 = vadd.f32 %v575, %v753
        %v850 = vadd.f32 %v576, %v755
        %v851 = vadd.f32 %v577, %v754
        %v852 = vperm.slane %v351, 2
        %v853 = vmul.f32 %v365, %v852
        %v854 = vmul.f32 %v366, %v852
        %v855 = vmul.f32 %v367, %v852
        %v856 = vmul.f32 %v368, %v852
        %v857 = vmul.f32 %v369, %v852
        %v858 = vmul.f32 %v370, %v852
        %v859 = vmul.f32 %v371, %v852
        %v860 = vmul.f32 %v372, %v852
        %v861 = vmul.f32 %v373, %v852
        %v862 = vmul.f32 %v374, %v852
        %v863 = vmul.f32 %v375, %v852
        %v864 = vmul.f32 %v376, %v852
        %v865 = vmul.f32 %v377, %v852
        %v866 = vmul.f32 %v378, %v852
        %v867 = vmul.f32 %v379, %v852
        %v868 = vmul.f32 %v380, %v852
        %v869 = vmul.f32 %v381, %v852
        %v870 = vmul.f32 %v382, %v852
        %v871 = vmul.f32 %v383, %v852
        %v872 = vmul.f32 %v384, %v852
        %v873 = vmul.f32 %v385, %v852
        %v874 = vmul.f32 %v386, %v852
        %v875 = vmul.f32 %v387, %v852
        %v876 = vmul.f32 %v388, %v852
        %v877 = vmul.f32 %v389, %v852
        %v878 = vmul.f32 %v390, %v852
        %v879 = vmul.f32 %v391, %v852
        %v880 = vmul.f32 %v392, %v852
        %v881 = vmul.f32 %v393, %v852
        %v882 = vmul.f32 %v394, %v852
        %v883 = vmul.f32 %v395, %v852
        %v884 = vmul.f32 %v396, %v852
        %v885 = vmul.f32 %v397, %v852
        %v886 = vmul.f32 %v398, %v852
        %v887 = vmul.f32 %v399, %v852
        %v888 = vmul.f32 %v400, %v852
        %v889 = vmul.f32 %v401, %v852
        %v890 = vmul.f32 %v402, %v852
        %v891 = vmul.f32 %v403, %v852
        %v892 = vmul.f32 %v404, %v852
        %v893 = vmul.f32 %v405, %v852
        %v894 = vmul.f32 %v406, %v852
        %v895 = vmul.f32 %v407, %v852
        %v896 = vmul.f32 %v408, %v852
        %v897 = vmul.f32 %v409, %v852
        %v898 = vmul.f32 %v410, %v852
        %v899 = vmul.f32 %v411, %v852
        %v900 = vmul.f32 %v412, %v852
        %vm949 = vcmask 1045504
        %v950 = vrot.slane %v853, 2
        %v951 = vrot.slane %v854, 2
        %v952 = vsel %vm949, %v950, %v951
        %v953 = vrot.slane %v855, 2
        %v954 = vsel %vm949, %v951, %v953
        %v955 = vrot.slane %v856, 2
        %v956 = vrot.slane %v857, 2
        %v957 = vsel %vm949, %v955, %v956
        %v958 = vrot.slane %v858, 2
        %v959 = vsel %vm949, %v956, %v958
        %v960 = vrot.slane %v859, 2
        %v961 = vrot.slane %v860, 2
        %v962 = vsel %vm949, %v960, %v961
        %v963 = vrot.slane %v861, 2
        %v964 = vsel %vm949, %v961, %v963
        %v965 = vrot.slane %v862, 2
        %v966 = vrot.slane %v863, 2
        %v967 = vsel %vm949, %v965, %v966
        %v968 = vrot.slane %v864, 2
        %v969 = vsel %vm949, %v966, %v968
        %v970 = vrot.slane %v865, 2
        %v971 = vrot.slane %v866, 2
        %v972 = vsel %vm949, %v970, %v971
        %v973 = vrot.slane %v867, 2
        %v974 = vsel %vm949, %v971, %v973
        %v975 = vrot.slane %v868, 2
        %v976 = vrot.slane %v869, 2
        %v977 = vsel %vm949, %v975, %v976
        %v978 = vrot.slane %v870, 2
        %v979 = vsel %vm949, %v976, %v978
        %v980 = vrot.slane %v871, 2
        %v981 = vrot.slane %v872, 2
        %v982 = vsel %vm949, %v980, %v981
        %v983 = vrot.slane %v873, 2
        %v984 = vsel %vm949, %v981, %v983
        %v985 = vrot.slane %v874, 2
        %v986 = vrot.slane %v875, 2
        %v987 = vsel %vm949, %v985, %v986
        %v988 = vrot.slane %v876, 2
        %v989 = vsel %vm949, %v986, %v988
        %v990 = vrot.slane %v877, 2
        %v991 = vrot.slane %v878, 2
        %v992 = vsel %vm949, %v990, %v991
        %v993 = vrot.slane %v879, 2
        %v994 = vsel %vm949, %v991, %v993
        %v995 = vrot.slane %v880, 2
        %v996 = vrot.slane %v881, 2
        %v997 = vsel %vm949, %v995, %v996
        %v998 = vrot.slane %v882, 2
        %v999 = vsel %vm949, %v996, %v998
        %v1000 = vrot.slane %v883, 2
        %v1001 = vrot.slane %v884, 2
        %v1002 = vsel %vm949, %v1000, %v1001
        %v1003 = vrot.slane %v885, 2
        %v1004 = vsel %vm949, %v1001, %v1003
        %v1005 = vrot.slane %v886, 2
        %v1006 = vrot.slane %v887, 2
        %v1007 = vsel %vm949, %v1005, %v1006
        %v1008 = vrot.slane %v888, 2
        %v1009 = vsel %vm949, %v1006, %v1008
        %v1010 = vrot.slane %v889, 2
        %v1011 = vrot.slane %v890, 2
        %v1012 = vsel %vm949, %v1010, %v1011
        %v1013 = vrot.slane %v891, 2
        %v1014 = vsel %vm949, %v1011, %v1013
        %v1015 = vrot.slane %v892, 2
        %v1016 = vrot.slane %v893, 2
        %v1017 = vsel %vm949, %v1015, %v1016
        %v1018 = vrot.slane %v894, 2
        %v1019 = vsel %vm949, %v1016, %v1018
        %v1020 = vrot.slane %v895, 2
        %v1021 = vrot.slane %v896, 2
        %v1022 = vsel %vm949, %v1020, %v1021
        %v1023 = vrot.slane %v897, 2
        %v1024 = vsel %vm949, %v1021, %v1023
        %v1025 = vrot.slane %v898, 2
        %v1026 = vrot.slane %v899, 2
        %v1027 = vsel %vm949, %v1025, %v1026
        %v1028 = vrot.slane %v900, 2
        %v1029 = vsel %vm949, %v1026, %v1028
        %v1078 = vadd.f32 %v804, %v952
        %v1079 = vadd.f32 %v805, %v954
        %v1080 = vadd.f32 %v806, %v953
        %v1081 = vadd.f32 %v807, %v957
        %v1082 = vadd.f32 %v808, %v959
        %v1083 = vadd.f32 %v809, %v958
        %v1084 = vadd.f32 %v810, %v962
        %v1085 = vadd.f32 %v811, %v964
        %v1086 = vadd.f32 %v812, %v963
        %v1087 = vadd.f32 %v813, %v967
        %v1088 = vadd.f32 %v814, %v969
        %v1089 = vadd.f32 %v815, %v968
        %v1090 = vadd.f32 %v816, %v972
        %v1091 = vadd.f32 %v817, %v974
        %v1092 = vadd.f32 %v818, %v973
        %v1093 = vadd.f32 %v819, %v977
        %v1094 = vadd.f32 %v820, %v979
        %v1095 = vadd.f32 %v821, %v978
        %v1096 = vadd.f32 %v822, %v982
        %v1097 = vadd.f32 %v823, %v984
        %v1098 = vadd.f32 %v824, %v983
        %v1099 = vadd.f32 %v825, %v987
        %v1100 = vadd.f32 %v826, %v989
        %v1101 = vadd.f32 %v827, %v988
        %v1102 = vadd.f32 %v828, %v992
        %v1103 = vadd.f32 %v829, %v994
        %v1104 = vadd.f32 %v830, %v993
        %v1105 = vadd.f32 %v831, %v997
        %v1106 = vadd.f32 %v832, %v999
        %v1107 = vadd.f32 %v833, %v998
        %v1108 = vadd.f32 %v834, %v1002
        %v1109 = vadd.f32 %v835, %v1004
        %v1110 = vadd.f32 %v836, %v1003
        %v1111 = vadd.f32 %v837, %v1007
        %v1112 = vadd.f32 %v838, %v1009
        %v1113 = vadd.f32 %v839, %v1008
        %v1114 = vadd.f32 %v840, %v1012
        %v1115 = vadd.f32 %v841, %v1014
        %v1116 = vadd.f32 %v842, %v1013
        %v1117 = vadd.f32 %v843, %v1017
        %v1118 = vadd.f32 %v844, %v1019
        %v1119 = vadd.f32 %v845, %v1018
        %v1120 = vadd.f32 %v846, %v1022
        %v1121 = vadd.f32 %v847, %v1024
        %v1122 = vadd.f32 %v848, %v1023
        %v1123 = vadd.f32 %v849, %v1027
        %v1124 = vadd.f32 %v850, %v1029
        %v1125 = vadd.f32 %v851, %v1028
        %v1126 = vperm.slane %v352, 0
        %v1127 = vmul.f32 %v368, %v1126
        %v1128 = vmul.f32 %v369, %v1126
        %v1129 = vmul.f32 %v370, %v1126
        %v1130 = vmul.f32 %v371, %v1126
        %v1131 = vmul.f32 %v372, %v1126
        %v1132 = vmul.f32 %v373, %v1126
        %v1133 = vmul.f32 %v374, %v1126
        %v1134 = vmul.f32 %v375, %v1126
        %v1135 = vmul.f32 %v376, %v1126
        %v1136 = vmul.f32 %v377, %v1126
        %v1137 = vmul.f32 %v378, %v1126
        %v1138 = vmul.f32 %v379, %v1126
        %v1139 = vmul.f32 %v380, %v1126
        %v1140 = vmul.f32 %v381, %v1126
        %v1141 = vmul.f32 %v382, %v1126
        %v1142 = vmul.f32 %v383, %v1126
        %v1143 = vmul.f32 %v384, %v1126
        %v1144 = vmul.f32 %v385, %v1126
        %v1145 = vmul.f32 %v386, %v1126
        %v1146 = vmul.f32 %v387, %v1126
        %v1147 = vmul.f32 %v388, %v1126
        %v1148 = vmul.f32 %v389, %v1126
        %v1149 = vmul.f32 %v390, %v1126
        %v1150 = vmul.f32 %v391, %v1126
        %v1151 = vmul.f32 %v392, %v1126
        %v1152 = vmul.f32 %v393, %v1126
        %v1153 = vmul.f32 %v394, %v1126
        %v1154 = vmul.f32 %v395, %v1126
        %v1155 = vmul.f32 %v396, %v1126
        %v1156 = vmul.f32 %v397, %v1126
        %v1157 = vmul.f32 %v398, %v1126
        %v1158 = vmul.f32 %v399, %v1126
        %v1159 = vmul.f32 %v400, %v1126
        %v1160 = vmul.f32 %v401, %v1126
        %v1161 = vmul.f32 %v402, %v1126
        %v1162 = vmul.f32 %v403, %v1126
        %v1163 = vmul.f32 %v404, %v1126
        %v1164 = vmul.f32 %v405, %v1126
        %v1165 = vmul.f32 %v406, %v1126
        %v1166 = vmul.f32 %v407, %v1126
        %v1167 = vmul.f32 %v408, %v1126
        %v1168 = vmul.f32 %v409, %v1126
        %v1169 = vmul.f32 %v410, %v1126
        %v1170 = vmul.f32 %v411, %v1126
        %v1171 = vmul.f32 %v412, %v1126
        %v1172 = vmul.f32 %v413, %v1126
        %v1173 = vmul.f32 %v414, %v1126
        %v1174 = vmul.f32 %v415, %v1126
        %v1175 = vadd.f32 %v1078, %v1127
        %v1176 = vadd.f32 %v1079, %v1128
        %v1177 = vadd.f32 %v1080, %v1129
        %v1178 = vadd.f32 %v1081, %v1130
        %v1179 = vadd.f32 %v1082, %v1131
        %v1180 = vadd.f32 %v1083, %v1132
        %v1181 = vadd.f32 %v1084, %v1133
        %v1182 = vadd.f32 %v1085, %v1134
        %v1183 = vadd.f32 %v1086, %v1135
        %v1184 = vadd.f32 %v1087, %v1136
        %v1185 = vadd.f32 %v1088, %v1137
        %v1186 = vadd.f32 %v1089, %v1138
        %v1187 = vadd.f32 %v1090, %v1139
        %v1188 = vadd.f32 %v1091, %v1140
        %v1189 = vadd.f32 %v1092, %v1141
        %v1190 = vadd.f32 %v1093, %v1142
        %v1191 = vadd.f32 %v1094, %v1143
        %v1192 = vadd.f32 %v1095, %v1144
        %v1193 = vadd.f32 %v1096, %v1145
        %v1194 = vadd.f32 %v1097, %v1146
        %v1195 = vadd.f32 %v1098, %v1147
        %v1196 = vadd.f32 %v1099, %v1148
        %v1197 = vadd.f32 %v1100, %v1149
        %v1198 = vadd.f32 %v1101, %v1150
        %v1199 = vadd.f32 %v1102, %v1151
        %v1200 = vadd.f32 %v1103, %v1152
        %v1201 = vadd.f32 %v1104, %v1153
        %v1202 = vadd.f32 %v1105, %v1154
        %v1203 = vadd.f32 %v1106, %v1155
        %v1204 = vadd.f32 %v1107, %v1156
        %v1205 = vadd.f32 %v1108, %v1157
        %v1206 = vadd.f32 %v1109, %v1158
        %v1207 = vadd.f32 %v1110, %v1159
        %v1208 = vadd.f32 %v1111, %v1160
        %v1209 = vadd.f32 %v1112, %v1161
        %v1210 = vadd.f32 %v1113, %v1162
        %v1211 = vadd.f32 %v1114, %v1163
        %v1212 = vadd.f32 %v1115, %v1164
        %v1213 = vadd.f32 %v1116, %v1165
        %v1214 = vadd.f32 %v1117, %v1166
        %v1215 = vadd.f32 %v1118, %v1167
        %v1216 = vadd.f32 %v1119, %v1168
        %v1217 = vadd.f32 %v1120, %v1169
        %v1218 = vadd.f32 %v1121, %v1170
        %v1219 = vadd.f32 %v1122, %v1171
        %v1220 = vadd.f32 %v1123, %v1172
        %v1221 = vadd.f32 %v1124, %v1173
        %v1222 = vadd.f32 %v1125, %v1174
        %v1223 = vperm.slane %v352, 1
        %v1224 = vmul.f32 %v368, %v1223
        %v1225 = vmul.f32 %v369, %v1223
        %v1226 = vmul.f32 %v370, %v1223
        %v1227 = vmul.f32 %v371, %v1223
        %v1228 = vmul.f32 %v372, %v1223
        %v1229 = vmul.f32 %v373, %v1223
        %v1230 = vmul.f32 %v374, %v1223
        %v1231 = vmul.f32 %v375, %v1223
        %v1232 = vmul.f32 %v376, %v1223
        %v1233 = vmul.f32 %v377, %v1223
        %v1234 = vmul.f32 %v378, %v1223
        %v1235 = vmul.f32 %v379, %v1223
        %v1236 = vmul.f32 %v380, %v1223
        %v1237 = vmul.f32 %v381, %v1223
        %v1238 = vmul.f32 %v382, %v1223
        %v1239 = vmul.f32 %v383, %v1223
        %v1240 = vmul.f32 %v384, %v1223
        %v1241 = vmul.f32 %v385, %v1223
        %v1242 = vmul.f32 %v386, %v1223
        %v1243 = vmul.f32 %v387, %v1223
        %v1244 = vmul.f32 %v388, %v1223
        %v1245 = vmul.f32 %v389, %v1223
        %v1246 = vmul.f32 %v390, %v1223
        %v1247 = vmul.f32 %v391, %v1223
        %v1248 = vmul.f32 %v392, %v1223
        %v1249 = vmul.f32 %v393, %v1223
        %v1250 = vmul.f32 %v394, %v1223
        %v1251 = vmul.f32 %v395, %v1223
        %v1252 = vmul.f32 %v396, %v1223
        %v1253 = vmul.f32 %v397, %v1223
        %v1254 = vmul.f32 %v398, %v1223
        %v1255 = vmul.f32 %v399, %v1223
        %v1256 = vmul.f32 %v400, %v1223
        %v1257 = vmul.f32 %v401, %v1223
        %v1258 = vmul.f32 %v402, %v1223
        %v1259 = vmul.f32 %v403, %v1223
        %v1260 = vmul.f32 %v404, %v1223
        %v1261 = vmul.f32 %v405, %v1223
        %v1262 = vmul.f32 %v406, %v1223
        %v1263 = vmul.f32 %v407, %v1223
        %v1264 = vmul.f32 %v408, %v1223
        %v1265 = vmul.f32 %v409, %v1223
        %v1266 = vmul.f32 %v410, %v1223
        %v1267 = vmul.f32 %v411, %v1223
        %v1268 = vmul.f32 %v412, %v1223
        %v1269 = vmul.f32 %v413, %v1223
        %v1270 = vmul.f32 %v414, %v1223
        %v1271 = vmul.f32 %v415, %v1223
        %v1320 = vrot.slane %v1224, 1
        %v1321 = vrot.slane %v1225, 1
        %v1322 = vsel %vm675, %v1320, %v1321
        %v1323 = vrot.slane %v1226, 1
        %v1324 = vsel %vm675, %v1321, %v1323
        %v1325 = vrot.slane %v1227, 1
        %v1326 = vrot.slane %v1228, 1
        %v1327 = vsel %vm675, %v1325, %v1326
        %v1328 = vrot.slane %v1229, 1
        %v1329 = vsel %vm675, %v1326, %v1328
        %v1330 = vrot.slane %v1230, 1
        %v1331 = vrot.slane %v1231, 1
        %v1332 = vsel %vm675, %v1330, %v1331
        %v1333 = vrot.slane %v1232, 1
        %v1334 = vsel %vm675, %v1331, %v1333
        %v1335 = vrot.slane %v1233, 1
        %v1336 = vrot.slane %v1234, 1
        %v1337 = vsel %vm675, %v1335, %v1336
        %v1338 = vrot.slane %v1235, 1
        %v1339 = vsel %vm675, %v1336, %v1338
        %v1340 = vrot.slane %v1236, 1
        %v1341 = vrot.slane %v1237, 1
        %v1342 = vsel %vm675, %v1340, %v1341
        %v1343 = vrot.slane %v1238, 1
        %v1344 = vsel %vm675, %v1341, %v1343
        %v1345 = vrot.slane %v1239, 1
        %v1346 = vrot.slane %v1240, 1
        %v1347 = vsel %vm675, %v1345, %v1346
        %v1348 = vrot.slane %v1241, 1
        %v1349 = vsel %vm675, %v1346, %v1348
        %v1350 = vrot.slane %v1242, 1
        %v1351 = vrot.slane %v1243, 1
        %v1352 = vsel %vm675, %v1350, %v1351
        %v1353 = vrot.slane %v1244, 1
        %v1354 = vsel %vm675, %v1351, %v1353
        %v1355 = vrot.slane %v1245, 1
        %v1356 = vrot.slane %v1246, 1
        %v1357 = vsel %vm675, %v1355, %v1356
        %v1358 = vrot.slane %v1247, 1
        %v1359 = vsel %vm675, %v1356, %v1358
        %v1360 = vrot.slane %v1248, 1
        %v1361 = vrot.slane %v1249, 1
        %v1362 = vsel %vm675, %v1360, %v1361
        %v1363 = vrot.slane %v1250, 1
        %v1364 = vsel %vm675, %v1361, %v1363
        %v1365 = vrot.slane %v1251, 1
        %v1366 = vrot.slane %v1252, 1
        %v1367 = vsel %vm675, %v1365, %v1366
        %v1368 = vrot.slane %v1253, 1
        %v1369 = vsel %vm675, %v1366, %v1368
        %v1370 = vrot.slane %v1254, 1
        %v1371 = vrot.slane %v1255, 1
        %v1372 = vsel %vm675, %v1370, %v1371
        %v1373 = vrot.slane %v1256, 1
        %v1374 = vsel %vm675, %v1371, %v1373
        %v1375 = vrot.slane %v1257, 1
        %v1376 = vrot.slane %v1258, 1
        %v1377 = vsel %vm675, %v1375, %v1376
        %v1378 = vrot.slane %v1259, 1
        %v1379 = vsel %vm675, %v1376, %v1378
        %v1380 = vrot.slane %v1260, 1
        %v1381 = vrot.slane %v1261, 1
        %v1382 = vsel %vm675, %v1380, %v1381
        %v1383 = vrot.slane %v1262, 1
        %v1384 = vsel %vm675, %v1381, %v1383
        %v1385 = vrot.slane %v1263, 1
        %v1386 = vrot.slane %v1264, 1
        %v1387 = vsel %vm675, %v1385, %v1386
        %v1388 = vrot.slane %v1265, 1
        %v1389 = vsel %vm675, %v1386, %v1388
        %v1390 = vrot.slane %v1266, 1
        %v1391 = vrot.slane %v1267, 1
        %v1392 = vsel %vm675, %v1390, %v1391
        %v1393 = vrot.slane %v1268, 1
        %v1394 = vsel %vm675, %v1391, %v1393
        %v1395 = vrot.slane %v1269, 1
        %v1396 = vrot.slane %v1270, 1
        %v1397 = vsel %vm675, %v1395, %v1396
        %v1398 = vrot.slane %v1271, 1
        %v1399 = vsel %vm675, %v1396, %v1398
        %v1448 = vadd.f32 %v1175, %v1322
        %v1449 = vadd.f32 %v1176, %v1324
        %v1450 = vadd.f32 %v1177, %v1323
        %v1451 = vadd.f32 %v1178, %v1327
        %v1452 = vadd.f32 %v1179, %v1329
        %v1453 = vadd.f32 %v1180, %v1328
        %v1454 = vadd.f32 %v1181, %v1332
        %v1455 = vadd.f32 %v1182, %v1334
        %v1456 = vadd.f32 %v1183, %v1333
        %v1457 = vadd.f32 %v1184, %v1337
        %v1458 = vadd.f32 %v1185, %v1339
        %v1459 = vadd.f32 %v1186, %v1338
        %v1460 = vadd.f32 %v1187, %v1342
        %v1461 = vadd.f32 %v1188, %v1344
        %v1462 = vadd.f32 %v1189, %v1343
        %v1463 = vadd.f32 %v1190, %v1347
        %v1464 = vadd.f32 %v1191, %v1349
        %v1465 = vadd.f32 %v1192, %v1348
        %v1466 = vadd.f32 %v1193, %v1352
        %v1467 = vadd.f32 %v1194, %v1354
        %v1468 = vadd.f32 %v1195, %v1353
        %v1469 = vadd.f32 %v1196, %v1357
        %v1470 = vadd.f32 %v1197, %v1359
        %v1471 = vadd.f32 %v1198, %v1358
        %v1472 = vadd.f32 %v1199, %v1362
        %v1473 = vadd.f32 %v1200, %v1364
        %v1474 = vadd.f32 %v1201, %v1363
        %v1475 = vadd.f32 %v1202, %v1367
        %v1476 = vadd.f32 %v1203, %v1369
        %v1477 = vadd.f32 %v1204, %v1368
        %v1478 = vadd.f32 %v1205, %v1372
        %v1479 = vadd.f32 %v1206, %v1374
        %v1480 = vadd.f32 %v1207, %v1373
        %v1481 = vadd.f32 %v1208, %v1377
        %v1482 = vadd.f32 %v1209, %v1379
        %v1483 = vadd.f32 %v1210, %v1378
        %v1484 = vadd.f32 %v1211, %v1382
        %v1485 = vadd.f32 %v1212, %v1384
        %v1486 = vadd.f32 %v1213, %v1383
        %v1487 = vadd.f32 %v1214, %v1387
        %v1488 = vadd.f32 %v1215, %v1389
        %v1489 = vadd.f32 %v1216, %v1388
        %v1490 = vadd.f32 %v1217, %v1392
        %v1491 = vadd.f32 %v1218, %v1394
        %v1492 = vadd.f32 %v1219, %v1393
        %v1493 = vadd.f32 %v1220, %v1397
        %v1494 = vadd.f32 %v1221, %v1399
        %v1495 = vadd.f32 %v1222, %v1398
        %v1496 = vperm.slane %v352, 2
        %v1497 = vmul.f32 %v368, %v1496
        %v1498 = vmul.f32 %v369, %v1496
        %v1499 = vmul.f32 %v370, %v1496
        %v1500 = vmul.f32 %v371, %v1496
        %v1501 = vmul.f32 %v372, %v1496
        %v1502 = vmul.f32 %v373, %v1496
        %v1503 = vmul.f32 %v374, %v1496
        %v1504 = vmul.f32 %v375, %v1496
        %v1505 = vmul.f32 %v376, %v1496
        %v1506 = vmul.f32 %v377, %v1496
        %v1507 = vmul.f32 %v378, %v1496
        %v1508 = vmul.f32 %v379, %v1496
        %v1509 = vmul.f32 %v380, %v1496
        %v1510 = vmul.f32 %v381, %v1496
        %v1511 = vmul.f32 %v382, %v1496
        %v1512 = vmul.f32 %v383, %v1496
        %v1513 = vmul.f32 %v384, %v1496
        %v1514 = vmul.f32 %v385, %v1496
        %v1515 = vmul.f32 %v386, %v1496
        %v1516 = vmul.f32 %v387, %v1496
        %v1517 = vmul.f32 %v388, %v1496
        %v1518 = vmul.f32 %v389, %v1496
        %v1519 = vmul.f32 %v390, %v1496
        %v1520 = vmul.f32 %v391, %v1496
        %v1521 = vmul.f32 %v392, %v1496
        %v1522 = vmul.f32 %v393, %v1496
        %v1523 = vmul.f32 %v394, %v1496
        %v1524 = vmul.f32 %v395, %v1496
        %v1525 = vmul.f32 %v396, %v1496
        %v1526 = vmul.f32 %v397, %v1496
        %v1527 = vmul.f32 %v398, %v1496
        %v1528 = vmul.f32 %v399, %v1496
        %v1529 = vmul.f32 %v400, %v1496
        %v1530 = vmul.f32 %v401, %v1496
        %v1531 = vmul.f32 %v402, %v1496
        %v1532 = vmul.f32 %v403, %v1496
        %v1533 = vmul.f32 %v404, %v1496
        %v1534 = vmul.f32 %v405, %v1496
        %v1535 = vmul.f32 %v406, %v1496
        %v1536 = vmul.f32 %v407, %v1496
        %v1537 = vmul.f32 %v408, %v1496
        %v1538 = vmul.f32 %v409, %v1496
        %v1539 = vmul.f32 %v410, %v1496
        %v1540 = vmul.f32 %v411, %v1496
        %v1541 = vmul.f32 %v412, %v1496
        %v1542 = vmul.f32 %v413, %v1496
        %v1543 = vmul.f32 %v414, %v1496
        %v1544 = vmul.f32 %v415, %v1496
        %v1593 = vrot.slane %v1497, 2
        %v1594 = vrot.slane %v1498, 2
        %v1595 = vsel %vm949, %v1593, %v1594
        %v1596 = vrot.slane %v1499, 2
        %v1597 = vsel %vm949, %v1594, %v1596
        %v1598 = vrot.slane %v1500, 2
        %v1599 = vrot.slane %v1501, 2
        %v1600 = vsel %vm949, %v1598, %v1599
        %v1601 = vrot.slane %v1502, 2
        %v1602 = vsel %vm949, %v1599, %v1601
        %v1603 = vrot.slane %v1503, 2
        %v1604 = vrot.slane %v1504, 2
        %v1605 = vsel %vm949, %v1603, %v1604
        %v1606 = vrot.slane %v1505, 2
        %v1607 = vsel %vm949, %v1604, %v1606
        %v1608 = vrot.slane %v1506, 2
        %v1609 = vrot.slane %v1507, 2
        %v1610 = vsel %vm949, %v1608, %v1609
        %v1611 = vrot.slane %v1508, 2
        %v1612 = vsel %vm949, %v1609, %v1611
        %v1613 = vrot.slane %v1509, 2
        %v1614 = vrot.slane %v1510, 2
        %v1615 = vsel %vm949, %v1613, %v1614
        %v1616 = vrot.slane %v1511, 2
        %v1617 = vsel %vm949, %v1614, %v1616
        %v1618 = vrot.slane %v1512, 2
        %v1619 = vrot.slane %v1513, 2
        %v1620 = vsel %vm949, %v1618, %v1619
        %v1621 = vrot.slane %v1514, 2
        %v1622 = vsel %vm949, %v1619, %v1621
        %v1623 = vrot.slane %v1515, 2
        %v1624 = vrot.slane %v1516, 2
        %v1625 = vsel %vm949, %v1623, %v1624
        %v1626 = vrot.slane %v1517, 2
        %v1627 = vsel %vm949, %v1624, %v1626
        %v1628 = vrot.slane %v1518, 2
        %v1629 = vrot.slane %v1519, 2
        %v1630 = vsel %vm949, %v1628, %v1629
        %v1631 = vrot.slane %v1520, 2
        %v1632 = vsel %vm949, %v1629, %v1631
        %v1633 = vrot.slane %v1521, 2
        %v1634 = vrot.slane %v1522, 2
        %v1635 = vsel %vm949, %v1633, %v1634
        %v1636 = vrot.slane %v1523, 2
        %v1637 = vsel %vm949, %v1634, %v1636
        %v1638 = vrot.slane %v1524, 2
        %v1639 = vrot.slane %v1525, 2
        %v1640 = vsel %vm949, %v1638, %v1639
        %v1641 = vrot.slane %v1526, 2
        %v1642 = vsel %vm949, %v1639, %v1641
        %v1643 = vrot.slane %v1527, 2
        %v1644 = vrot.slane %v1528, 2
        %v1645 = vsel %vm949, %v1643, %v1644
        %v1646 = vrot.slane %v1529, 2
        %v1647 = vsel %vm949, %v1644, %v1646
        %v1648 = vrot.slane %v1530, 2
        %v1649 = vrot.slane %v1531, 2
        %v1650 = vsel %vm949, %v1648, %v1649
        %v1651 = vrot.slane %v1532, 2
        %v1652 = vsel %vm949, %v1649, %v1651
        %v1653 = vrot.slane %v1533, 2
        %v1654 = vrot.slane %v1534, 2
        %v1655 = vsel %vm949, %v1653, %v1654
        %v1656 = vrot.slane %v1535, 2
        %v1657 = vsel %vm949, %v1654, %v1656
        %v1658 = vrot.slane %v1536, 2
        %v1659 = vrot.slane %v1537, 2
        %v1660 = vsel %vm949, %v1658, %v1659
        %v1661 = vrot.slane %v1538, 2
        %v1662 = vsel %vm949, %v1659, %v1661
        %v1663 = vrot.slane %v1539, 2
        %v1664 = vrot.slane %v1540, 2
        %v1665 = vsel %vm949, %v1663, %v1664
        %v1666 = vrot.slane %v1541, 2
        %v1667 = vsel %vm949, %v1664, %v1666
        %v1668 = vrot.slane %v1542, 2
        %v1669 = vrot.slane %v1543, 2
        %v1670 = vsel %vm949, %v1668, %v1669
        %v1671 = vrot.slane %v1544, 2
        %v1672 = vsel %vm949, %v1669, %v1671
        %v1721 = vadd.f32 %v1448, %v1595
        %v1722 = vadd.f32 %v1449, %v1597
        %v1723 = vadd.f32 %v1450, %v1596
        %v1724 = vadd.f32 %v1451, %v1600
        %v1725 = vadd.f32 %v1452, %v1602
        %v1726 = vadd.f32 %v1453, %v1601
        %v1727 = vadd.f32 %v1454, %v1605
        %v1728 = vadd.f32 %v1455, %v1607
        %v1729 = vadd.f32 %v1456, %v1606
        %v1730 = vadd.f32 %v1457, %v1610
        %v1731 = vadd.f32 %v1458, %v1612
        %v1732 = vadd.f32 %v1459, %v1611
        %v1733 = vadd.f32 %v1460, %v1615
        %v1734 = vadd.f32 %v1461, %v1617
        %v1735 = vadd.f32 %v1462, %v1616
        %v1736 = vadd.f32 %v1463, %v1620
        %v1737 = vadd.f32 %v1464, %v1622
        %v1738 = vadd.f32 %v1465, %v1621
        %v1739 = vadd.f32 %v1466, %v1625
        %v1740 = vadd.f32 %v1467, %v1627
        %v1741 = vadd.f32 %v1468, %v1626
        %v1742 = vadd.f32 %v1469, %v1630
        %v1743 = vadd.f32 %v1470, %v1632
        %v1744 = vadd.f32 %v1471, %v1631
        %v1745 = vadd.f32 %v1472, %v1635
        %v1746 = vadd.f32 %v1473, %v1637
        %v1747 = vadd.f32 %v1474, %v1636
        %v1748 = vadd.f32 %v1475, %v1640
        %v1749 = vadd.f32 %v1476, %v1642
        %v1750 = vadd.f32 %v1477, %v1641
        %v1751 = vadd.f32 %v1478, %v1645
        %v1752 = vadd.f32 %v1479, %v1647
        %v1753 = vadd.f32 %v1480, %v1646
        %v1754 = vadd.f32 %v1481, %v1650
        %v1755 = vadd.f32 %v1482, %v1652
        %v1756 = vadd.f32 %v1483, %v1651
        %v1757 = vadd.f32 %v1484, %v1655
        %v1758 = vadd.f32 %v1485, %v1657
        %v1759 = vadd.f32 %v1486, %v1656
        %v1760 = vadd.f32 %v1487, %v1660
        %v1761 = vadd.f32 %v1488, %v1662
        %v1762 = vadd.f32 %v1489, %v1661
        %v1763 = vadd.f32 %v1490, %v1665
        %v1764 = vadd.f32 %v1491, %v1667
        %v1765 = vadd.f32 %v1492, %v1666
        %v1766 = vadd.f32 %v1493, %v1670
        %v1767 = vadd.f32 %v1494, %v1672
        %v1768 = vadd.f32 %v1495, %v1671
        %v1769 = vperm.slane %v353, 0
        %v1770 = vmul.f32 %v371, %v1769
        %v1771 = vmul.f32 %v372, %v1769
        %v1772 = vmul.f32 %v373, %v1769
        %v1773 = vmul.f32 %v374, %v1769
        %v1774 = vmul.f32 %v375, %v1769
        %v1775 = vmul.f32 %v376, %v1769
        %v1776 = vmul.f32 %v377, %v1769
        %v1777 = vmul.f32 %v378, %v1769
        %v1778 = vmul.f32 %v379, %v1769
        %v1779 = vmul.f32 %v380, %v1769
        %v1780 = vmul.f32 %v381, %v1769
        %v1781 = vmul.f32 %v382, %v1769
        %v1782 = vmul.f32 %v383, %v1769
        %v1783 = vmul.f32 %v384, %v1769
        %v1784 = vmul.f32 %v385, %v1769
        %v1785 = vmul.f32 %v386, %v1769
        %v1786 = vmul.f32 %v387, %v1769
        %v1787 = vmul.f32 %v388, %v1769
        %v1788 = vmul.f32 %v389, %v1769
        %v1789 = vmul.f32 %v390, %v1769
        %v1790 = vmul.f32 %v391, %v1769
        %v1791 = vmul.f32 %v392, %v1769
        %v1792 = vmul.f32 %v393, %v1769
        %v1793 = vmul.f32 %v394, %v1769
        %v1794 = vmul.f32 %v395, %v1769
        %v1795 = vmul.f32 %v396, %v1769
        %v1796 = vmul.f32 %v397, %v1769
        %v1797 = vmul.f32 %v398, %v1769
        %v1798 = vmul.f32 %v399, %v1769
        %v1799 = vmul.f32 %v400, %v1769
        %v1800 = vmul.f32 %v401, %v1769
        %v1801 = vmul.f32 %v402, %v1769
        %v1802 = vmul.f32 %v403, %v1769
        %v1803 = vmul.f32 %v404, %v1769
        %v1804 = vmul.f32 %v405, %v1769
        %v1805 = vmul.f32 %v406, %v1769
        %v1806 = vmul.f32 %v407, %v1769
        %v1807 = vmul.f32 %v408, %v1769
        %v1808 = vmul.f32 %v409, %v1769
        %v1809 = vmul.f32 %v410, %v1769
        %v1810 = vmul.f32 %v411, %v1769
        %v1811 = vmul.f32 %v412, %v1769
        %v1812 = vmul.f32 %v413, %v1769
        %v1813 = vmul.f32 %v414, %v1769
        %v1814 = vmul.f32 %v415, %v1769
        %v1815 = vmul.f32 %v416, %v1769
        %v1816 = vmul.f32 %v417, %v1769
        %v1817 = vmul.f32 %v418, %v1769
        %v1818 = vadd.f32 %v1721, %v1770
        %v1819 = vadd.f32 %v1722, %v1771
        %v1820 = vadd.f32 %v1723, %v1772
        %v1821 = vadd.f32 %v1724, %v1773
        %v1822 = vadd.f32 %v1725, %v1774
        %v1823 = vadd.f32 %v1726, %v1775
        %v1824 = vadd.f32 %v1727, %v1776
        %v1825 = vadd.f32 %v1728, %v1777
        %v1826 = vadd.f32 %v1729, %v1778
        %v1827 = vadd.f32 %v1730, %v1779
        %v1828 = vadd.f32 %v1731, %v1780
        %v1829 = vadd.f32 %v1732, %v1781
        %v1830 = vadd.f32 %v1733, %v1782
        %v1831 = vadd.f32 %v1734, %v1783
        %v1832 = vadd.f32 %v1735, %v1784
        %v1833 = vadd.f32 %v1736, %v1785
        %v1834 = vadd.f32 %v1737, %v1786
        %v1835 = vadd.f32 %v1738, %v1787
        %v1836 = vadd.f32 %v1739, %v1788
        %v1837 = vadd.f32 %v1740, %v1789
        %v1838 = vadd.f32 %v1741, %v1790
        %v1839 = vadd.f32 %v1742, %v1791
        %v1840 = vadd.f32 %v1743, %v1792
        %v1841 = vadd.f32 %v1744, %v1793
        %v1842 = vadd.f32 %v1745, %v1794
        %v1843 = vadd.f32 %v1746, %v1795
        %v1844 = vadd.f32 %v1747, %v1796
        %v1845 = vadd.f32 %v1748, %v1797
        %v1846 = vadd.f32 %v1749, %v1798
        %v1847 = vadd.f32 %v1750, %v1799
        %v1848 = vadd.f32 %v1751, %v1800
        %v1849 = vadd.f32 %v1752, %v1801
        %v1850 = vadd.f32 %v1753, %v1802
        %v1851 = vadd.f32 %v1754, %v1803
        %v1852 = vadd.f32 %v1755, %v1804
        %v1853 = vadd.f32 %v1756, %v1805
        %v1854 = vadd.f32 %v1757, %v1806
        %v1855 = vadd.f32 %v1758, %v1807
        %v1856 = vadd.f32 %v1759, %v1808
        %v1857 = vadd.f32 %v1760, %v1809
        %v1858 = vadd.f32 %v1761, %v1810
        %v1859 = vadd.f32 %v1762, %v1811
        %v1860 = vadd.f32 %v1763, %v1812
        %v1861 = vadd.f32 %v1764, %v1813
        %v1862 = vadd.f32 %v1765, %v1814
        %v1863 = vadd.f32 %v1766, %v1815
        %v1864 = vadd.f32 %v1767, %v1816
        %v1865 = vadd.f32 %v1768, %v1817
        %v1866 = vperm.slane %v353, 1
        %v1867 = vmul.f32 %v371, %v1866
        %v1868 = vmul.f32 %v372, %v1866
        %v1869 = vmul.f32 %v373, %v1866
        %v1870 = vmul.f32 %v374, %v1866
        %v1871 = vmul.f32 %v375, %v1866
        %v1872 = vmul.f32 %v376, %v1866
        %v1873 = vmul.f32 %v377, %v1866
        %v1874 = vmul.f32 %v378, %v1866
        %v1875 = vmul.f32 %v379, %v1866
        %v1876 = vmul.f32 %v380, %v1866
        %v1877 = vmul.f32 %v381, %v1866
        %v1878 = vmul.f32 %v382, %v1866
        %v1879 = vmul.f32 %v383, %v1866
        %v1880 = vmul.f32 %v384, %v1866
        %v1881 = vmul.f32 %v385, %v1866
        %v1882 = vmul.f32 %v386, %v1866
        %v1883 = vmul.f32 %v387, %v1866
        %v1884 = vmul.f32 %v388, %v1866
        %v1885 = vmul.f32 %v389, %v1866
        %v1886 = vmul.f32 %v390, %v1866
        %v1887 = vmul.f32 %v391, %v1866
        %v1888 = vmul.f32 %v392, %v1866
        %v1889 = vmul.f32 %v393, %v1866
        %v1890 = vmul.f32 %v394, %v1866
        %v1891 = vmul.f32 %v395, %v1866
        %v1892 = vmul.f32 %v396, %v1866
        %v1893 = vmul.f32 %v397, %v1866
        %v1894 = vmul.f32 %v398, %v1866
        %v1895 = vmul.f32 %v399, %v1866
        %v1896 = vmul.f32 %v400, %v1866
        %v1897 = vmul.f32 %v401, %v1866
        %v1898 = vmul.f32 %v402, %v1866
        %v1899 = vmul.f32 %v403, %v1866
        %v1900 = vmul.f32 %v404, %v1866
        %v1901 = vmul.f32 %v405, %v1866
        %v1902 = vmul.f32 %v406, %v1866
        %v1903 = vmul.f32 %v407, %v1866
        %v1904 = vmul.f32 %v408, %v1866
        %v1905 = vmul.f32 %v409, %v1866
        %v1906 = vmul.f32 %v410, %v1866
        %v1907 = vmul.f32 %v411, %v1866
        %v1908 = vmul.f32 %v412, %v1866
        %v1909 = vmul.f32 %v413, %v1866
        %v1910 = vmul.f32 %v414, %v1866
        %v1911 = vmul.f32 %v415, %v1866
        %v1912 = vmul.f32 %v416, %v1866
        %v1913 = vmul.f32 %v417, %v1866
        %v1914 = vmul.f32 %v418, %v1866
        %v1963 = vrot.slane %v1867, 1
        %v1964 = vrot.slane %v1868, 1
        %v1965 = vsel %vm675, %v1963, %v1964
        %v1966 = vrot.slane %v1869, 1
        %v1967 = vsel %vm675, %v1964, %v1966
        %v1968 = vrot.slane %v1870, 1
        %v1969 = vrot.slane %v1871, 1
        %v1970 = vsel %vm675, %v1968, %v1969
        %v1971 = vrot.slane %v1872, 1
        %v1972 = vsel %vm675, %v1969, %v1971
        %v1973 = vrot.slane %v1873, 1
        %v1974 = vrot.slane %v1874, 1
        %v1975 = vsel %vm675, %v1973, %v1974
        %v1976 = vrot.slane %v1875, 1
        %v1977 = vsel %vm675, %v1974, %v1976
        %v1978 = vrot.slane %v1876, 1
        %v1979 = vrot.slane %v1877, 1
        %v1980 = vsel %vm675, %v1978, %v1979
        %v1981 = vrot.slane %v1878, 1
        %v1982 = vsel %vm675, %v1979, %v1981
        %v1983 = vrot.slane %v1879, 1
        %v1984 = vrot.slane %v1880, 1
        %v1985 = vsel %vm675, %v1983, %v1984
        %v1986 = vrot.slane %v1881, 1
        %v1987 = vsel %vm675, %v1984, %v1986
        %v1988 = vrot.slane %v1882, 1
        %v1989 = vrot.slane %v1883, 1
        %v1990 = vsel %vm675, %v1988, %v1989
        %v1991 = vrot.slane %v1884, 1
        %v1992 = vsel %vm675, %v1989, %v1991
        %v1993 = vrot.slane %v1885, 1
        %v1994 = vrot.slane %v1886, 1
        %v1995 = vsel %vm675, %v1993, %v1994
        %v1996 = vrot.slane %v1887, 1
        %v1997 = vsel %vm675, %v1994, %v1996
        %v1998 = vrot.slane %v1888, 1
        %v1999 = vrot.slane %v1889, 1
        %v2000 = vsel %vm675, %v1998, %v1999
        %v2001 = vrot.slane %v1890, 1
        %v2002 = vsel %vm675, %v1999, %v2001
        %v2003 = vrot.slane %v1891, 1
        %v2004 = vrot.slane %v1892, 1
        %v2005 = vsel %vm675, %v2003, %v2004
        %v2006 = vrot.slane %v1893, 1
        %v2007 = vsel %vm675, %v2004, %v2006
        %v2008 = vrot.slane %v1894, 1
        %v2009 = vrot.slane %v1895, 1
        %v2010 = vsel %vm675, %v2008, %v2009
        %v2011 = vrot.slane %v1896, 1
        %v2012 = vsel %vm675, %v2009, %v2011
        %v2013 = vrot.slane %v1897, 1
        %v2014 = vrot.slane %v1898, 1
        %v2015 = vsel %vm675, %v2013, %v2014
        %v2016 = vrot.slane %v1899, 1
        %v2017 = vsel %vm675, %v2014, %v2016
        %v2018 = vrot.slane %v1900, 1
        %v2019 = vrot.slane %v1901, 1
        %v2020 = vsel %vm675, %v2018, %v2019
        %v2021 = vrot.slane %v1902, 1
        %v2022 = vsel %vm675, %v2019, %v2021
        %v2023 = vrot.slane %v1903, 1
        %v2024 = vrot.slane %v1904, 1
        %v2025 = vsel %vm675, %v2023, %v2024
        %v2026 = vrot.slane %v1905, 1
        %v2027 = vsel %vm675, %v2024, %v2026
        %v2028 = vrot.slane %v1906, 1
        %v2029 = vrot.slane %v1907, 1
        %v2030 = vsel %vm675, %v2028, %v2029
        %v2031 = vrot.slane %v1908, 1
        %v2032 = vsel %vm675, %v2029, %v2031
        %v2033 = vrot.slane %v1909, 1
        %v2034 = vrot.slane %v1910, 1
        %v2035 = vsel %vm675, %v2033, %v2034
        %v2036 = vrot.slane %v1911, 1
        %v2037 = vsel %vm675, %v2034, %v2036
        %v2038 = vrot.slane %v1912, 1
        %v2039 = vrot.slane %v1913, 1
        %v2040 = vsel %vm675, %v2038, %v2039
        %v2041 = vrot.slane %v1914, 1
        %v2042 = vsel %vm675, %v2039, %v2041
        %v2091 = vadd.f32 %v1818, %v1965
        %v2092 = vadd.f32 %v1819, %v1967
        %v2093 = vadd.f32 %v1820, %v1966
        %v2094 = vadd.f32 %v1821, %v1970
        %v2095 = vadd.f32 %v1822, %v1972
        %v2096 = vadd.f32 %v1823, %v1971
        %v2097 = vadd.f32 %v1824, %v1975
        %v2098 = vadd.f32 %v1825, %v1977
        %v2099 = vadd.f32 %v1826, %v1976
        %v2100 = vadd.f32 %v1827, %v1980
        %v2101 = vadd.f32 %v1828, %v1982
        %v2102 = vadd.f32 %v1829, %v1981
        %v2103 = vadd.f32 %v1830, %v1985
        %v2104 = vadd.f32 %v1831, %v1987
        %v2105 = vadd.f32 %v1832, %v1986
        %v2106 = vadd.f32 %v1833, %v1990
        %v2107 = vadd.f32 %v1834, %v1992
        %v2108 = vadd.f32 %v1835, %v1991
        %v2109 = vadd.f32 %v1836, %v1995
        %v2110 = vadd.f32 %v1837, %v1997
        %v2111 = vadd.f32 %v1838, %v1996
        %v2112 = vadd.f32 %v1839, %v2000
        %v2113 = vadd.f32 %v1840, %v2002
        %v2114 = vadd.f32 %v1841, %v2001
        %v2115 = vadd.f32 %v1842, %v2005
        %v2116 = vadd.f32 %v1843, %v2007
        %v2117 = vadd.f32 %v1844, %v2006
        %v2118 = vadd.f32 %v1845, %v2010
        %v2119 = vadd.f32 %v1846, %v2012
        %v2120 = vadd.f32 %v1847, %v2011
        %v2121 = vadd.f32 %v1848, %v2015
        %v2122 = vadd.f32 %v1849, %v2017
        %v2123 = vadd.f32 %v1850, %v2016
        %v2124 = vadd.f32 %v1851, %v2020
        %v2125 = vadd.f32 %v1852, %v2022
        %v2126 = vadd.f32 %v1853, %v2021
        %v2127 = vadd.f32 %v1854, %v2025
        %v2128 = vadd.f32 %v1855, %v2027
        %v2129 = vadd.f32 %v1856, %v2026
        %v2130 = vadd.f32 %v1857, %v2030
        %v2131 = vadd.f32 %v1858, %v2032
        %v2132 = vadd.f32 %v1859, %v2031
        %v2133 = vadd.f32 %v1860, %v2035
        %v2134 = vadd.f32 %v1861, %v2037
        %v2135 = vadd.f32 %v1862, %v2036
        %v2136 = vadd.f32 %v1863, %v2040
        %v2137 = vadd.f32 %v1864, %v2042
        %v2138 = vadd.f32 %v1865, %v2041
        %v2139 = vperm.slane %v353, 2
        %v2140 = vmul.f32 %v371, %v2139
        %v2141 = vmul.f32 %v372, %v2139
        %v2142 = vmul.f32 %v373, %v2139
        %v2143 = vmul.f32 %v374, %v2139
        %v2144 = vmul.f32 %v375, %v2139
        %v2145 = vmul.f32 %v376, %v2139
        %v2146 = vmul.f32 %v377, %v2139
        %v2147 = vmul.f32 %v378, %v2139
        %v2148 = vmul.f32 %v379, %v2139
        %v2149 = vmul.f32 %v380, %v2139
        %v2150 = vmul.f32 %v381, %v2139
        %v2151 = vmul.f32 %v382, %v2139
        %v2152 = vmul.f32 %v383, %v2139
        %v2153 = vmul.f32 %v384, %v2139
        %v2154 = vmul.f32 %v385, %v2139
        %v2155 = vmul.f32 %v386, %v2139
        %v2156 = vmul.f32 %v387, %v2139
        %v2157 = vmul.f32 %v388, %v2139
        %v2158 = vmul.f32 %v389, %v2139
        %v2159 = vmul.f32 %v390, %v2139
        %v2160 = vmul.f32 %v391, %v2139
        %v2161 = vmul.f32 %v392, %v2139
        %v2162 = vmul.f32 %v393, %v2139
        %v2163 = vmul.f32 %v394, %v2139
        %v2164 = vmul.f32 %v395, %v2139
        %v2165 = vmul.f32 %v396, %v2139
        %v2166 = vmul.f32 %v397, %v2139
        %v2167 = vmul.f32 %v398, %v2139
        %v2168 = vmul.f32 %v399, %v2139
        %v2169 = vmul.f32 %v400, %v2139
        %v2170 = vmul.f32 %v401, %v2139
        %v2171 = vmul.f32 %v402, %v2139
        %v2172 = vmul.f32 %v403, %v2139
        %v2173 = vmul.f32 %v404, %v2139
        %v2174 = vmul.f32 %v405, %v2139
        %v2175 = vmul.f32 %v406, %v2139
        %v2176 = vmul.f32 %v407, %v2139
        %v2177 = vmul.f32 %v408, %v2139
        %v2178 = vmul.f32 %v409, %v2139
        %v2179 = vmul.f32 %v410, %v2139
        %v2180 = vmul.f32 %v411, %v2139
        %v2181 = vmul.f32 %v412, %v2139
        %v2182 = vmul.f32 %v413, %v2139
        %v2183 = vmul.f32 %v414, %v2139
        %v2184 = vmul.f32 %v415, %v2139
        %v2185 = vmul.f32 %v416, %v2139
        %v2186 = vmul.f32 %v417, %v2139
        %v2187 = vmul.f32 %v418, %v2139
        %v2236 = vrot.slane %v2140, 2
        %v2237 = vrot.slane %v2141, 2
        %v2238 = vsel %vm949, %v2236, %v2237
        %v2239 = vrot.slane %v2142, 2
        %v2240 = vsel %vm949, %v2237, %v2239
        %v2241 = vrot.slane %v2143, 2
        %v2242 = vrot.slane %v2144, 2
        %v2243 = vsel %vm949, %v2241, %v2242
        %v2244 = vrot.slane %v2145, 2
        %v2245 = vsel %vm949, %v2242, %v2244
        %v2246 = vrot.slane %v2146, 2
        %v2247 = vrot.slane %v2147, 2
        %v2248 = vsel %vm949, %v2246, %v2247
        %v2249 = vrot.slane %v2148, 2
        %v2250 = vsel %vm949, %v2247, %v2249
        %v2251 = vrot.slane %v2149, 2
        %v2252 = vrot.slane %v2150, 2
        %v2253 = vsel %vm949, %v2251, %v2252
        %v2254 = vrot.slane %v2151, 2
        %v2255 = vsel %vm949, %v2252, %v2254
        %v2256 = vrot.slane %v2152, 2
        %v2257 = vrot.slane %v2153, 2
        %v2258 = vsel %vm949, %v2256, %v2257
        %v2259 = vrot.slane %v2154, 2
        %v2260 = vsel %vm949, %v2257, %v2259
        %v2261 = vrot.slane %v2155, 2
        %v2262 = vrot.slane %v2156, 2
        %v2263 = vsel %vm949, %v2261, %v2262
        %v2264 = vrot.slane %v2157, 2
        %v2265 = vsel %vm949, %v2262, %v2264
        %v2266 = vrot.slane %v2158, 2
        %v2267 = vrot.slane %v2159, 2
        %v2268 = vsel %vm949, %v2266, %v2267
        %v2269 = vrot.slane %v2160, 2
        %v2270 = vsel %vm949, %v2267, %v2269
        %v2271 = vrot.slane %v2161, 2
        %v2272 = vrot.slane %v2162, 2
        %v2273 = vsel %vm949, %v2271, %v2272
        %v2274 = vrot.slane %v2163, 2
        %v2275 = vsel %vm949, %v2272, %v2274
        %v2276 = vrot.slane %v2164, 2
        %v2277 = vrot.slane %v2165, 2
        %v2278 = vsel %vm949, %v2276, %v2277
        %v2279 = vrot.slane %v2166, 2
        %v2280 = vsel %vm949, %v2277, %v2279
        %v2281 = vrot.slane %v2167, 2
        %v2282 = vrot.slane %v2168, 2
        %v2283 = vsel %vm949, %v2281, %v2282
        %v2284 = vrot.slane %v2169, 2
        %v2285 = vsel %vm949, %v2282, %v2284
        %v2286 = vrot.slane %v2170, 2
        %v2287 = vrot.slane %v2171, 2
        %v2288 = vsel %vm949, %v2286, %v2287
        %v2289 = vrot.slane %v2172, 2
        %v2290 = vsel %vm949, %v2287, %v2289
        %v2291 = vrot.slane %v2173, 2
        %v2292 = vrot.slane %v2174, 2
        %v2293 = vsel %vm949, %v2291, %v2292
        %v2294 = vrot.slane %v2175, 2
        %v2295 = vsel %vm949, %v2292, %v2294
        %v2296 = vrot.slane %v2176, 2
        %v2297 = vrot.slane %v2177, 2
        %v2298 = vsel %vm949, %v2296, %v2297
        %v2299 = vrot.slane %v2178, 2
        %v2300 = vsel %vm949, %v2297, %v2299
        %v2301 = vrot.slane %v2179, 2
        %v2302 = vrot.slane %v2180, 2
        %v2303 = vsel %vm949, %v2301, %v2302
        %v2304 = vrot.slane %v2181, 2
        %v2305 = vsel %vm949, %v2302, %v2304
        %v2306 = vrot.slane %v2182, 2
        %v2307 = vrot.slane %v2183, 2
        %v2308 = vsel %vm949, %v2306, %v2307
        %v2309 = vrot.slane %v2184, 2
        %v2310 = vsel %vm949, %v2307, %v2309
        %v2311 = vrot.slane %v2185, 2
        %v2312 = vrot.slane %v2186, 2
        %v2313 = vsel %vm949, %v2311, %v2312
        %v2314 = vrot.slane %v2187, 2
        %v2315 = vsel %vm949, %v2312, %v2314
        %v2364 = vadd.f32 %v2091, %v2238
        %v2365 = vadd.f32 %v2092, %v2240
        %v2366 = vadd.f32 %v2093, %v2239
        %v2367 = vadd.f32 %v2094, %v2243
        %v2368 = vadd.f32 %v2095, %v2245
        %v2369 = vadd.f32 %v2096, %v2244
        %v2370 = vadd.f32 %v2097, %v2248
        %v2371 = vadd.f32 %v2098, %v2250
        %v2372 = vadd.f32 %v2099, %v2249
        %v2373 = vadd.f32 %v2100, %v2253
        %v2374 = vadd.f32 %v2101, %v2255
        %v2375 = vadd.f32 %v2102, %v2254
        %v2376 = vadd.f32 %v2103, %v2258
        %v2377 = vadd.f32 %v2104, %v2260
        %v2378 = vadd.f32 %v2105, %v2259
        %v2379 = vadd.f32 %v2106, %v2263
        %v2380 = vadd.f32 %v2107, %v2265
        %v2381 = vadd.f32 %v2108, %v2264
        %v2382 = vadd.f32 %v2109, %v2268
        %v2383 = vadd.f32 %v2110, %v2270
        %v2384 = vadd.f32 %v2111, %v2269
        %v2385 = vadd.f32 %v2112, %v2273
        %v2386 = vadd.f32 %v2113, %v2275
        %v2387 = vadd.f32 %v2114, %v2274
        %v2388 = vadd.f32 %v2115, %v2278
        %v2389 = vadd.f32 %v2116, %v2280
        %v2390 = vadd.f32 %v2117, %v2279
        %v2391 = vadd.f32 %v2118, %v2283
        %v2392 = vadd.f32 %v2119, %v2285
        %v2393 = vadd.f32 %v2120, %v2284
        %v2394 = vadd.f32 %v2121, %v2288
        %v2395 = vadd.f32 %v2122, %v2290
        %v2396 = vadd.f32 %v2123, %v2289
        %v2397 = vadd.f32 %v2124, %v2293
        %v2398 = vadd.f32 %v2125, %v2295
        %v2399 = vadd.f32 %v2126, %v2294
        %v2400 = vadd.f32 %v2127, %v2298
        %v2401 = vadd.f32 %v2128, %v2300
        %v2402 = vadd.f32 %v2129, %v2299
        %v2403 = vadd.f32 %v2130, %v2303
        %v2404 = vadd.f32 %v2131, %v2305
        %v2405 = vadd.f32 %v2132, %v2304
        %v2406 = vadd.f32 %v2133, %v2308
        %v2407 = vadd.f32 %v2134, %v2310
        %v2408 = vadd.f32 %v2135, %v2309
        %v2409 = vadd.f32 %v2136, %v2313
        %v2410 = vadd.f32 %v2137, %v2315
        %v2411 = vadd.f32 %v2138, %v2314
        %vm2460 = vcmask 1040384
        %v2461 = vrot.slane %v2364, 7
        %v2462 = vrot.slane %v2365, 7
        %v2463 = vsel %vm2460, %v2461, %v2462
        %v2464 = vrot.slane %v2366, 7
        %v2465 = vsel %vm2460, %v2462, %v2464
        %v2466 = vrot.slane %v2367, 7
        %v2467 = vrot.slane %v2368, 7
        %v2468 = vsel %vm2460, %v2466, %v2467
        %v2469 = vrot.slane %v2369, 7
        %v2470 = vsel %vm2460, %v2467, %v2469
        %v2471 = vrot.slane %v2370, 7
        %v2472 = vrot.slane %v2371, 7
        %v2473 = vsel %vm2460, %v2471, %v2472
        %v2474 = vrot.slane %v2372, 7
        %v2475 = vsel %vm2460, %v2472, %v2474
        %v2476 = vrot.slane %v2373, 7
        %v2477 = vrot.slane %v2374, 7
        %v2478 = vsel %vm2460, %v2476, %v2477
        %v2479 = vrot.slane %v2375, 7
        %v2480 = vsel %vm2460, %v2477, %v2479
        %v2481 = vrot.slane %v2376, 7
        %v2482 = vrot.slane %v2377, 7
        %v2483 = vsel %vm2460, %v2481, %v2482
        %v2484 = vrot.slane %v2378, 7
        %v2485 = vsel %vm2460, %v2482, %v2484
        %v2486 = vrot.slane %v2379, 7
        %v2487 = vrot.slane %v2380, 7
        %v2488 = vsel %vm2460, %v2486, %v2487
        %v2489 = vrot.slane %v2381, 7
        %v2490 = vsel %vm2460, %v2487, %v2489
        %v2491 = vrot.slane %v2382, 7
        %v2492 = vrot.slane %v2383, 7
        %v2493 = vsel %vm2460, %v2491, %v2492
        %v2494 = vrot.slane %v2384, 7
        %v2495 = vsel %vm2460, %v2492, %v2494
        %v2496 = vrot.slane %v2385, 7
        %v2497 = vrot.slane %v2386, 7
        %v2498 = vsel %vm2460, %v2496, %v2497
        %v2499 = vrot.slane %v2387, 7
        %v2500 = vsel %vm2460, %v2497, %v2499
        %v2501 = vrot.slane %v2388, 7
        %v2502 = vrot.slane %v2389, 7
        %v2503 = vsel %vm2460, %v2501, %v2502
        %v2504 = vrot.slane %v2390, 7
        %v2505 = vsel %vm2460, %v2502, %v2504
        %v2506 = vrot.slane %v2391, 7
        %v2507 = vrot.slane %v2392, 7
        %v2508 = vsel %vm2460, %v2506, %v2507
        %v2509 = vrot.slane %v2393, 7
        %v2510 = vsel %vm2460, %v2507, %v2509
        %v2511 = vrot.slane %v2394, 7
        %v2512 = vrot.slane %v2395, 7
        %v2513 = vsel %vm2460, %v2511, %v2512
        %v2514 = vrot.slane %v2396, 7
        %v2515 = vsel %vm2460, %v2512, %v2514
        %v2516 = vrot.slane %v2397, 7
        %v2517 = vrot.slane %v2398, 7
        %v2518 = vsel %vm2460, %v2516, %v2517
        %v2519 = vrot.slane %v2399, 7
        %v2520 = vsel %vm2460, %v2517, %v2519
        %v2521 = vrot.slane %v2400, 7
        %v2522 = vrot.slane %v2401, 7
        %v2523 = vsel %vm2460, %v2521, %v2522
        %v2524 = vrot.slane %v2402, 7
        %v2525 = vsel %vm2460, %v2522, %v2524
        %v2526 = vrot.slane %v2403, 7
        %v2527 = vrot.slane %v2404, 7
        %v2528 = vsel %vm2460, %v2526, %v2527
        %v2529 = vrot.slane %v2405, 7
        %v2530 = vsel %vm2460, %v2527, %v2529
        %v2531 = vrot.slane %v2406, 7
        %v2532 = vrot.slane %v2407, 7
        %v2533 = vsel %vm2460, %v2531, %v2532
        %v2534 = vrot.slane %v2408, 7
        %v2535 = vsel %vm2460, %v2532, %v2534
        %v2536 = vrot.slane %v2409, 7
        %v2537 = vrot.slane %v2410, 7
        %v2538 = vsel %vm2460, %v2536, %v2537
        %v2539 = vrot.slane %v2411, 7
        %v2540 = vsel %vm2460, %v2537, %v2539
        %v2589 = vadd.f32 %v368, %v2461
        %v2590 = vadd.f32 %v369, %v2463
        %v2591 = vadd.f32 %v370, %v2465
        %v2592 = vadd.f32 %v371, %v2466
        %v2593 = vadd.f32 %v372, %v2468
        %v2594 = vadd.f32 %v373, %v2470
        %v2595 = vadd.f32 %v374, %v2471
        %v2596 = vadd.f32 %v375, %v2473
        %v2597 = vadd.f32 %v376, %v2475
        %v2598 = vadd.f32 %v377, %v2476
        %v2599 = vadd.f32 %v378, %v2478
        %v2600 = vadd.f32 %v379, %v2480
        %v2601 = vadd.f32 %v380, %v2481
        %v2602 = vadd.f32 %v381, %v2483
        %v2603 = vadd.f32 %v382, %v2485
        %v2604 = vadd.f32 %v383, %v2486
        %v2605 = vadd.f32 %v384, %v2488
        %v2606 = vadd.f32 %v385, %v2490
        %v2607 = vadd.f32 %v386, %v2491
        %v2608 = vadd.f32 %v387, %v2493
        %v2609 = vadd.f32 %v388, %v2495
        %v2610 = vadd.f32 %v389, %v2496
        %v2611 = vadd.f32 %v390, %v2498
        %v2612 = vadd.f32 %v391, %v2500
        %v2613 = vadd.f32 %v392, %v2501
        %v2614 = vadd.f32 %v393, %v2503
        %v2615 = vadd.f32 %v394, %v2505
        %v2616 = vadd.f32 %v395, %v2506
        %v2617 = vadd.f32 %v396, %v2508
        %v2618 = vadd.f32 %v397, %v2510
        %v2619 = vadd.f32 %v398, %v2511
        %v2620 = vadd.f32 %v399, %v2513
        %v2621 = vadd.f32 %v400, %v2515
        %v2622 = vadd.f32 %v401, %v2516
        %v2623 = vadd.f32 %v402, %v2518
        %v2624 = vadd.f32 %v403, %v2520
        %v2625 = vadd.f32 %v404, %v2521
        %v2626 = vadd.f32 %v405, %v2523
        %v2627 = vadd.f32 %v406, %v2525
        %v2628 = vadd.f32 %v407, %v2526
        %v2629 = vadd.f32 %v408, %v2528
        %v2630 = vadd.f32 %v409, %v2530
        %v2631 = vadd.f32 %v410, %v2531
        %v2632 = vadd.f32 %v411, %v2533
        %v2633 = vadd.f32 %v412, %v2535
        %v2634 = vadd.f32 %v413, %v2536
        %v2635 = vadd.f32 %v414, %v2538
        %v2636 = vadd.f32 %v415, %v2540
        %v2637 = vperm.slane %v364, 0
        %v2638 = vadd.f32 %v2637, 0.0
        %v2639 = vperm.slane %v358, 0
        %v2640 = vmul.f32 %v419, %v2639
        %v2641 = vmul.f32 %v420, %v2639
        %v2642 = vmul.f32 %v422, %v2639
        %v2643 = vmul.f32 %v423, %v2639
        %v2644 = vmul.f32 %v425, %v2639
        %v2645 = vmul.f32 %v426, %v2639
        %v2646 = vmul.f32 %v428, %v2639
        %v2647 = vmul.f32 %v429, %v2639
        %v2648 = vmul.f32 %v431, %v2639
        %v2649 = vmul.f32 %v432, %v2639
        %v2650 = vmul.f32 %v434, %v2639
        %v2651 = vmul.f32 %v435, %v2639
        %v2652 = vmul.f32 %v437, %v2639
        %v2653 = vmul.f32 %v438, %v2639
        %v2654 = vmul.f32 %v440, %v2639
        %v2655 = vmul.f32 %v441, %v2639
        %v2656 = vmul.f32 %v443, %v2639
        %v2657 = vmul.f32 %v444, %v2639
        %v2658 = vmul.f32 %v446, %v2639
        %v2659 = vmul.f32 %v447, %v2639
        %v2660 = vmul.f32 %v449, %v2639
        %v2661 = vmul.f32 %v450, %v2639
        %v2662 = vmul.f32 %v452, %v2639
        %v2663 = vmul.f32 %v453, %v2639
        %v2664 = vmul.f32 %v455, %v2639
        %v2665 = vmul.f32 %v456, %v2639
        %v2666 = vmul.f32 %v458, %v2639
        %v2667 = vmul.f32 %v459, %v2639
        %v2668 = vmul.f32 %v461, %v2639
        %v2669 = vmul.f32 %v462, %v2639
        %v2670 = vmul.f32 %v464, %v2639
        %v2671 = vmul.f32 %v465, %v2639
        %v2672 = vadd.f32 %v2638, %v2640
        %v2673 = vadd.f32 %v2638, %v2641
        %v2674 = vadd.f32 %v2638, %v2642
        %v2675 = vadd.f32 %v2638, %v2643
        %v2676 = vadd.f32 %v2638, %v2644
        %v2677 = vadd.f32 %v2638, %v2645
        %v2678 = vadd.f32 %v2638, %v2646
        %v2679 = vadd.f32 %v2638, %v2647
        %v2680 = vadd.f32 %v2638, %v2648
        %v2681 = vadd.f32 %v2638, %v2649
        %v2682 = vadd.f32 %v2638, %v2650
        %v2683 = vadd.f32 %v2638, %v2651
        %v2684 = vadd.f32 %v2638, %v2652
        %v2685 = vadd.f32 %v2638, %v2653
        %v2686 = vadd.f32 %v2638, %v2654
        %v2687 = vadd.f32 %v2638, %v2655
        %v2688 = vadd.f32 %v2638, %v2656
        %v2689 = vadd.f32 %v2638, %v2657
        %v2690 = vadd.f32 %v2638, %v2658
        %v2691 = vadd.f32 %v2638, %v2659
        %v2692 = vadd.f32 %v2638, %v2660
        %v2693 = vadd.f32 %v2638, %v2661
        %v2694 = vadd.f32 %v2638, %v2662
        %v2695 = vadd.f32 %v2638, %v2663
        %v2696 = vadd.f32 %v2638, %v2664
        %v2697 = vadd.f32 %v2638, %v2665
        %v2698 = vadd.f32 %v2638, %v2666
        %v2699 = vadd.f32 %v2638, %v2667
        %v2700 = vadd.f32 %v2638, %v2668
        %v2701 = vadd.f32 %v2638, %v2669
        %v2702 = vadd.f32 %v2638, %v2670
        %v2703 = vadd.f32 %v2638, %v2671
        %v2704 = vperm.slane %v358, 1
        %v2705 = vmul.f32 %v419, %v2704
        %v2706 = vmul.f32 %v420, %v2704
        %v2707 = vmul.f32 %v421, %v2704
        %v2708 = vmul.f32 %v422, %v2704
        %v2709 = vmul.f32 %v423, %v2704
        %v2710 = vmul.f32 %v424, %v2704
        %v2711 = vmul.f32 %v425, %v2704
        %v2712 = vmul.f32 %v426, %v2704
        %v2713 = vmul.f32 %v427, %v2704
        %v2714 = vmul.f32 %v428, %v2704
        %v2715 = vmul.f32 %v429, %v2704
        %v2716 = vmul.f32 %v430, %v2704
        %v2717 = vmul.f32 %v431, %v2704
        %v2718 = vmul.f32 %v432, %v2704
        %v2719 = vmul.f32 %v433, %v2704
        %v2720 = vmul.f32 %v434, %v2704
        %v2721 = vmul.f32 %v435, %v2704
        %v2722 = vmul.f32 %v436, %v2704
        %v2723 = vmul.f32 %v437, %v2704
        %v2724 = vmul.f32 %v438, %v2704
        %v2725 = vmul.f32 %v439, %v2704
        %v2726 = vmul.f32 %v440, %v2704
        %v2727 = vmul.f32 %v441, %v2704
        %v2728 = vmul.f32 %v442, %v2704
        %v2729 = vmul.f32 %v443, %v2704
        %v2730 = vmul.f32 %v444, %v2704
        %v2731 = vmul.f32 %v445, %v2704
        %v2732 = vmul.f32 %v446, %v2704
        %v2733 = vmul.f32 %v447, %v2704
        %v2734 = vmul.f32 %v448, %v2704
        %v2735 = vmul.f32 %v449, %v2704
        %v2736 = vmul.f32 %v450, %v2704
        %v2737 = vmul.f32 %v451, %v2704
        %v2738 = vmul.f32 %v452, %v2704
        %v2739 = vmul.f32 %v453, %v2704
        %v2740 = vmul.f32 %v454, %v2704
        %v2741 = vmul.f32 %v455, %v2704
        %v2742 = vmul.f32 %v456, %v2704
        %v2743 = vmul.f32 %v457, %v2704
        %v2744 = vmul.f32 %v458, %v2704
        %v2745 = vmul.f32 %v459, %v2704
        %v2746 = vmul.f32 %v460, %v2704
        %v2747 = vmul.f32 %v461, %v2704
        %v2748 = vmul.f32 %v462, %v2704
        %v2749 = vmul.f32 %v463, %v2704
        %v2750 = vmul.f32 %v464, %v2704
        %v2751 = vmul.f32 %v465, %v2704
        %v2752 = vmul.f32 %v466, %v2704
        %v2801 = vrot.slane %v2705, 2
        %v2802 = vrot.slane %v2706, 2
        %v2803 = vsel %vm949, %v2801, %v2802
        %v2804 = vrot.slane %v2707, 2
        %v2805 = vsel %vm949, %v2802, %v2804
        %v2806 = vrot.slane %v2708, 2
        %v2807 = vrot.slane %v2709, 2
        %v2808 = vsel %vm949, %v2806, %v2807
        %v2809 = vrot.slane %v2710, 2
        %v2810 = vsel %vm949, %v2807, %v2809
        %v2811 = vrot.slane %v2711, 2
        %v2812 = vrot.slane %v2712, 2
        %v2813 = vsel %vm949, %v2811, %v2812
        %v2814 = vrot.slane %v2713, 2
        %v2815 = vsel %vm949, %v2812, %v2814
        %v2816 = vrot.slane %v2714, 2
        %v2817 = vrot.slane %v2715, 2
        %v2818 = vsel %vm949, %v2816, %v2817
        %v2819 = vrot.slane %v2716, 2
        %v2820 = vsel %vm949, %v2817, %v2819
        %v2821 = vrot.slane %v2717, 2
        %v2822 = vrot.slane %v2718, 2
        %v2823 = vsel %vm949, %v2821, %v2822
        %v2824 = vrot.slane %v2719, 2
        %v2825 = vsel %vm949, %v2822, %v2824
        %v2826 = vrot.slane %v2720, 2
        %v2827 = vrot.slane %v2721, 2
        %v2828 = vsel %vm949, %v2826, %v2827
        %v2829 = vrot.slane %v2722, 2
        %v2830 = vsel %vm949, %v2827, %v2829
        %v2831 = vrot.slane %v2723, 2
        %v2832 = vrot.slane %v2724, 2
        %v2833 = vsel %vm949, %v2831, %v2832
        %v2834 = vrot.slane %v2725, 2
        %v2835 = vsel %vm949, %v2832, %v2834
        %v2836 = vrot.slane %v2726, 2
        %v2837 = vrot.slane %v2727, 2
        %v2838 = vsel %vm949, %v2836, %v2837
        %v2839 = vrot.slane %v2728, 2
        %v2840 = vsel %vm949, %v2837, %v2839
        %v2841 = vrot.slane %v2729, 2
        %v2842 = vrot.slane %v2730, 2
        %v2843 = vsel %vm949, %v2841, %v2842
        %v2844 = vrot.slane %v2731, 2
        %v2845 = vsel %vm949, %v2842, %v2844
        %v2846 = vrot.slane %v2732, 2
        %v2847 = vrot.slane %v2733, 2
        %v2848 = vsel %vm949, %v2846, %v2847
        %v2849 = vrot.slane %v2734, 2
        %v2850 = vsel %vm949, %v2847, %v2849
        %v2851 = vrot.slane %v2735, 2
        %v2852 = vrot.slane %v2736, 2
        %v2853 = vsel %vm949, %v2851, %v2852
        %v2854 = vrot.slane %v2737, 2
        %v2855 = vsel %vm949, %v2852, %v2854
        %v2856 = vrot.slane %v2738, 2
        %v2857 = vrot.slane %v2739, 2
        %v2858 = vsel %vm949, %v2856, %v2857
        %v2859 = vrot.slane %v2740, 2
        %v2860 = vsel %vm949, %v2857, %v2859
        %v2861 = vrot.slane %v2741, 2
        %v2862 = vrot.slane %v2742, 2
        %v2863 = vsel %vm949, %v2861, %v2862
        %v2864 = vrot.slane %v2743, 2
        %v2865 = vsel %vm949, %v2862, %v2864
        %v2866 = vrot.slane %v2744, 2
        %v2867 = vrot.slane %v2745, 2
        %v2868 = vsel %vm949, %v2866, %v2867
        %v2869 = vrot.slane %v2746, 2
        %v2870 = vsel %vm949, %v2867, %v2869
        %v2871 = vrot.slane %v2747, 2
        %v2872 = vrot.slane %v2748, 2
        %v2873 = vsel %vm949, %v2871, %v2872
        %v2874 = vrot.slane %v2749, 2
        %v2875 = vsel %vm949, %v2872, %v2874
        %v2876 = vrot.slane %v2750, 2
        %v2877 = vrot.slane %v2751, 2
        %v2878 = vsel %vm949, %v2876, %v2877
        %v2879 = vrot.slane %v2752, 2
        %v2880 = vsel %vm949, %v2877, %v2879
        %v2913 = vadd.f32 %v2672, %v2803
        %v2914 = vadd.f32 %v2673, %v2805
        %v2915 = vadd.f32 %v2674, %v2808
        %v2916 = vadd.f32 %v2675, %v2810
        %v2917 = vadd.f32 %v2676, %v2813
        %v2918 = vadd.f32 %v2677, %v2815
        %v2919 = vadd.f32 %v2678, %v2818
        %v2920 = vadd.f32 %v2679, %v2820
        %v2921 = vadd.f32 %v2680, %v2823
        %v2922 = vadd.f32 %v2681, %v2825
        %v2923 = vadd.f32 %v2682, %v2828
        %v2924 = vadd.f32 %v2683, %v2830
        %v2925 = vadd.f32 %v2684, %v2833
        %v2926 = vadd.f32 %v2685, %v2835
        %v2927 = vadd.f32 %v2686, %v2838
        %v2928 = vadd.f32 %v2687, %v2840
        %v2929 = vadd.f32 %v2688, %v2843
        %v2930 = vadd.f32 %v2689, %v2845
        %v2931 = vadd.f32 %v2690, %v2848
        %v2932 = vadd.f32 %v2691, %v2850
        %v2933 = vadd.f32 %v2692, %v2853
        %v2934 = vadd.f32 %v2693, %v2855
        %v2935 = vadd.f32 %v2694, %v2858
        %v2936 = vadd.f32 %v2695, %v2860
        %v2937 = vadd.f32 %v2696, %v2863
        %v2938 = vadd.f32 %v2697, %v2865
        %v2939 = vadd.f32 %v2698, %v2868
        %v2940 = vadd.f32 %v2699, %v2870
        %v2941 = vadd.f32 %v2700, %v2873
        %v2942 = vadd.f32 %v2701, %v2875
        %v2943 = vadd.f32 %v2702, %v2878
        %v2944 = vadd.f32 %v2703, %v2880
        %v2945 = vperm.slane %v358, 2
        %v2946 = vmul.f32 %v419, %v2945
        %v2947 = vmul.f32 %v420, %v2945
        %v2948 = vmul.f32 %v421, %v2945
        %v2949 = vmul.f32 %v422, %v2945
        %v2950 = vmul.f32 %v423, %v2945
        %v2951 = vmul.f32 %v424, %v2945
        %v2952 = vmul.f32 %v425, %v2945
        %v2953 = vmul.f32 %v426, %v2945
        %v2954 = vmul.f32 %v427, %v2945
        %v2955 = vmul.f32 %v428, %v2945
        %v2956 = vmul.f32 %v429, %v2945
        %v2957 = vmul.f32 %v430, %v2945
        %v2958 = vmul.f32 %v431, %v2945
        %v2959 = vmul.f32 %v432, %v2945
        %v2960 = vmul.f32 %v433, %v2945
        %v2961 = vmul.f32 %v434, %v2945
        %v2962 = vmul.f32 %v435, %v2945
        %v2963 = vmul.f32 %v436, %v2945
        %v2964 = vmul.f32 %v437, %v2945
        %v2965 = vmul.f32 %v438, %v2945
        %v2966 = vmul.f32 %v439, %v2945
        %v2967 = vmul.f32 %v440, %v2945
        %v2968 = vmul.f32 %v441, %v2945
        %v2969 = vmul.f32 %v442, %v2945
        %v2970 = vmul.f32 %v443, %v2945
        %v2971 = vmul.f32 %v444, %v2945
        %v2972 = vmul.f32 %v445, %v2945
        %v2973 = vmul.f32 %v446, %v2945
        %v2974 = vmul.f32 %v447, %v2945
        %v2975 = vmul.f32 %v448, %v2945
        %v2976 = vmul.f32 %v449, %v2945
        %v2977 = vmul.f32 %v450, %v2945
        %v2978 = vmul.f32 %v451, %v2945
        %v2979 = vmul.f32 %v452, %v2945
        %v2980 = vmul.f32 %v453, %v2945
        %v2981 = vmul.f32 %v454, %v2945
        %v2982 = vmul.f32 %v455, %v2945
        %v2983 = vmul.f32 %v456, %v2945
        %v2984 = vmul.f32 %v457, %v2945
        %v2985 = vmul.f32 %v458, %v2945
        %v2986 = vmul.f32 %v459, %v2945
        %v2987 = vmul.f32 %v460, %v2945
        %v2988 = vmul.f32 %v461, %v2945
        %v2989 = vmul.f32 %v462, %v2945
        %v2990 = vmul.f32 %v463, %v2945
        %v2991 = vmul.f32 %v464, %v2945
        %v2992 = vmul.f32 %v465, %v2945
        %v2993 = vmul.f32 %v466, %v2945
        %vm3042 = vcmask 1043456
        %v3043 = vrot.slane %v2946, 4
        %v3044 = vrot.slane %v2947, 4
        %v3045 = vsel %vm3042, %v3043, %v3044
        %v3046 = vrot.slane %v2948, 4
        %v3047 = vsel %vm3042, %v3044, %v3046
        %v3048 = vrot.slane %v2949, 4
        %v3049 = vrot.slane %v2950, 4
        %v3050 = vsel %vm3042, %v3048, %v3049
        %v3051 = vrot.slane %v2951, 4
        %v3052 = vsel %vm3042, %v3049, %v3051
        %v3053 = vrot.slane %v2952, 4
        %v3054 = vrot.slane %v2953, 4
        %v3055 = vsel %vm3042, %v3053, %v3054
        %v3056 = vrot.slane %v2954, 4
        %v3057 = vsel %vm3042, %v3054, %v3056
        %v3058 = vrot.slane %v2955, 4
        %v3059 = vrot.slane %v2956, 4
        %v3060 = vsel %vm3042, %v3058, %v3059
        %v3061 = vrot.slane %v2957, 4
        %v3062 = vsel %vm3042, %v3059, %v3061
        %v3063 = vrot.slane %v2958, 4
        %v3064 = vrot.slane %v2959, 4
        %v3065 = vsel %vm3042, %v3063, %v3064
        %v3066 = vrot.slane %v2960, 4
        %v3067 = vsel %vm3042, %v3064, %v3066
        %v3068 = vrot.slane %v2961, 4
        %v3069 = vrot.slane %v2962, 4
        %v3070 = vsel %vm3042, %v3068, %v3069
        %v3071 = vrot.slane %v2963, 4
        %v3072 = vsel %vm3042, %v3069, %v3071
        %v3073 = vrot.slane %v2964, 4
        %v3074 = vrot.slane %v2965, 4
        %v3075 = vsel %vm3042, %v3073, %v3074
        %v3076 = vrot.slane %v2966, 4
        %v3077 = vsel %vm3042, %v3074, %v3076
        %v3078 = vrot.slane %v2967, 4
        %v3079 = vrot.slane %v2968, 4
        %v3080 = vsel %vm3042, %v3078, %v3079
        %v3081 = vrot.slane %v2969, 4
        %v3082 = vsel %vm3042, %v3079, %v3081
        %v3083 = vrot.slane %v2970, 4
        %v3084 = vrot.slane %v2971, 4
        %v3085 = vsel %vm3042, %v3083, %v3084
        %v3086 = vrot.slane %v2972, 4
        %v3087 = vsel %vm3042, %v3084, %v3086
        %v3088 = vrot.slane %v2973, 4
        %v3089 = vrot.slane %v2974, 4
        %v3090 = vsel %vm3042, %v3088, %v3089
        %v3091 = vrot.slane %v2975, 4
        %v3092 = vsel %vm3042, %v3089, %v3091
        %v3093 = vrot.slane %v2976, 4
        %v3094 = vrot.slane %v2977, 4
        %v3095 = vsel %vm3042, %v3093, %v3094
        %v3096 = vrot.slane %v2978, 4
        %v3097 = vsel %vm3042, %v3094, %v3096
        %v3098 = vrot.slane %v2979, 4
        %v3099 = vrot.slane %v2980, 4
        %v3100 = vsel %vm3042, %v3098, %v3099
        %v3101 = vrot.slane %v2981, 4
        %v3102 = vsel %vm3042, %v3099, %v3101
        %v3103 = vrot.slane %v2982, 4
        %v3104 = vrot.slane %v2983, 4
        %v3105 = vsel %vm3042, %v3103, %v3104
        %v3106 = vrot.slane %v2984, 4
        %v3107 = vsel %vm3042, %v3104, %v3106
        %v3108 = vrot.slane %v2985, 4
        %v3109 = vrot.slane %v2986, 4
        %v3110 = vsel %vm3042, %v3108, %v3109
        %v3111 = vrot.slane %v2987, 4
        %v3112 = vsel %vm3042, %v3109, %v3111
        %v3113 = vrot.slane %v2988, 4
        %v3114 = vrot.slane %v2989, 4
        %v3115 = vsel %vm3042, %v3113, %v3114
        %v3116 = vrot.slane %v2990, 4
        %v3117 = vsel %vm3042, %v3114, %v3116
        %v3118 = vrot.slane %v2991, 4
        %v3119 = vrot.slane %v2992, 4
        %v3120 = vsel %vm3042, %v3118, %v3119
        %v3121 = vrot.slane %v2993, 4
        %v3122 = vsel %vm3042, %v3119, %v3121
        %v3155 = vadd.f32 %v2913, %v3045
        %v3156 = vadd.f32 %v2914, %v3047
        %v3157 = vadd.f32 %v2915, %v3050
        %v3158 = vadd.f32 %v2916, %v3052
        %v3159 = vadd.f32 %v2917, %v3055
        %v3160 = vadd.f32 %v2918, %v3057
        %v3161 = vadd.f32 %v2919, %v3060
        %v3162 = vadd.f32 %v2920, %v3062
        %v3163 = vadd.f32 %v2921, %v3065
        %v3164 = vadd.f32 %v2922, %v3067
        %v3165 = vadd.f32 %v2923, %v3070
        %v3166 = vadd.f32 %v2924, %v3072
        %v3167 = vadd.f32 %v2925, %v3075
        %v3168 = vadd.f32 %v2926, %v3077
        %v3169 = vadd.f32 %v2927, %v3080
        %v3170 = vadd.f32 %v2928, %v3082
        %v3171 = vadd.f32 %v2929, %v3085
        %v3172 = vadd.f32 %v2930, %v3087
        %v3173 = vadd.f32 %v2931, %v3090
        %v3174 = vadd.f32 %v2932, %v3092
        %v3175 = vadd.f32 %v2933, %v3095
        %v3176 = vadd.f32 %v2934, %v3097
        %v3177 = vadd.f32 %v2935, %v3100
        %v3178 = vadd.f32 %v2936, %v3102
        %v3179 = vadd.f32 %v2937, %v3105
        %v3180 = vadd.f32 %v2938, %v3107
        %v3181 = vadd.f32 %v2939, %v3110
        %v3182 = vadd.f32 %v2940, %v3112
        %v3183 = vadd.f32 %v2941, %v3115
        %v3184 = vadd.f32 %v2942, %v3117
        %v3185 = vadd.f32 %v2943, %v3120
        %v3186 = vadd.f32 %v2944, %v3122
        %v3187 = vperm.slane %v359, 0
        %v3188 = vmul.f32 %v425, %v3187
        %v3189 = vmul.f32 %v426, %v3187
        %v3190 = vmul.f32 %v428, %v3187
        %v3191 = vmul.f32 %v429, %v3187
        %v3192 = vmul.f32 %v431, %v3187
        %v3193 = vmul.f32 %v432, %v3187
        %v3194 = vmul.f32 %v434, %v3187
        %v3195 = vmul.f32 %v435, %v3187
        %v3196 = vmul.f32 %v437, %v3187
        %v3197 = vmul.f32 %v438, %v3187
        %v3198 = vmul.f32 %v440, %v3187
        %v3199 = vmul.f32 %v441, %v3187
        %v3200 = vmul.f32 %v443, %v3187
        %v3201 = vmul.f32 %v444, %v3187
        %v3202 = vmul.f32 %v446, %v3187
        %v3203 = vmul.f32 %v447, %v3187
        %v3204 = vmul.f32 %v449, %v3187
        %v3205 = vmul.f32 %v450, %v3187
        %v3206 = vmul.f32 %v452, %v3187
        %v3207 = vmul.f32 %v453, %v3187
        %v3208 = vmul.f32 %v455, %v3187
        %v3209 = vmul.f32 %v456, %v3187
        %v3210 = vmul.f32 %v458, %v3187
        %v3211 = vmul.f32 %v459, %v3187
        %v3212 = vmul.f32 %v461, %v3187
        %v3213 = vmul.f32 %v462, %v3187
        %v3214 = vmul.f32 %v464, %v3187
        %v3215 = vmul.f32 %v465, %v3187
        %v3216 = vmul.f32 %v467, %v3187
        %v3217 = vmul.f32 %v468, %v3187
        %v3218 = vmul.f32 %v470, %v3187
        %v3219 = vmul.f32 %v471, %v3187
        %v3220 = vadd.f32 %v3155, %v3188
        %v3221 = vadd.f32 %v3156, %v3189
        %v3222 = vadd.f32 %v3157, %v3190
        %v3223 = vadd.f32 %v3158, %v3191
        %v3224 = vadd.f32 %v3159, %v3192
        %v3225 = vadd.f32 %v3160, %v3193
        %v3226 = vadd.f32 %v3161, %v3194
        %v3227 = vadd.f32 %v3162, %v3195
        %v3228 = vadd.f32 %v3163, %v3196
        %v3229 = vadd.f32 %v3164, %v3197
        %v3230 = vadd.f32 %v3165, %v3198
        %v3231 = vadd.f32 %v3166, %v3199
        %v3232 = vadd.f32 %v3167, %v3200
        %v3233 = vadd.f32 %v3168, %v3201
        %v3234 = vadd.f32 %v3169, %v3202
        %v3235 = vadd.f32 %v3170, %v3203
        %v3236 = vadd.f32 %v3171, %v3204
        %v3237 = vadd.f32 %v3172, %v3205
        %v3238 = vadd.f32 %v3173, %v3206
        %v3239 = vadd.f32 %v3174, %v3207
        %v3240 = vadd.f32 %v3175, %v3208
        %v3241 = vadd.f32 %v3176, %v3209
        %v3242 = vadd.f32 %v3177, %v3210
        %v3243 = vadd.f32 %v3178, %v3211
        %v3244 = vadd.f32 %v3179, %v3212
        %v3245 = vadd.f32 %v3180, %v3213
        %v3246 = vadd.f32 %v3181, %v3214
        %v3247 = vadd.f32 %v3182, %v3215
        %v3248 = vadd.f32 %v3183, %v3216
        %v3249 = vadd.f32 %v3184, %v3217
        %v3250 = vadd.f32 %v3185, %v3218
        %v3251 = vadd.f32 %v3186, %v3219
        %v3252 = vperm.slane %v359, 1
        %v3253 = vmul.f32 %v425, %v3252
        %v3254 = vmul.f32 %v426, %v3252
        %v3255 = vmul.f32 %v427, %v3252
        %v3256 = vmul.f32 %v428, %v3252
        %v3257 = vmul.f32 %v429, %v3252
        %v3258 = vmul.f32 %v430, %v3252
        %v3259 = vmul.f32 %v431, %v3252
        %v3260 = vmul.f32 %v432, %v3252
        %v3261 = vmul.f32 %v433, %v3252
        %v3262 = vmul.f32 %v434, %v3252
        %v3263 = vmul.f32 %v435, %v3252
        %v3264 = vmul.f32 %v436, %v3252
        %v3265 = vmul.f32 %v437, %v3252
        %v3266 = vmul.f32 %v438, %v3252
        %v3267 = vmul.f32 %v439, %v3252
        %v3268 = vmul.f32 %v440, %v3252
        %v3269 = vmul.f32 %v441, %v3252
        %v3270 = vmul.f32 %v442, %v3252
        %v3271 = vmul.f32 %v443, %v3252
        %v3272 = vmul.f32 %v444, %v3252
        %v3273 = vmul.f32 %v445, %v3252
        %v3274 = vmul.f32 %v446, %v3252
        %v3275 = vmul.f32 %v447, %v3252
        %v3276 = vmul.f32 %v448, %v3252
        %v3277 = vmul.f32 %v449, %v3252
        %v3278 = vmul.f32 %v450, %v3252
        %v3279 = vmul.f32 %v451, %v3252
        %v3280 = vmul.f32 %v452, %v3252
        %v3281 = vmul.f32 %v453, %v3252
        %v3282 = vmul.f32 %v454, %v3252
        %v3283 = vmul.f32 %v455, %v3252
        %v3284 = vmul.f32 %v456, %v3252
        %v3285 = vmul.f32 %v457, %v3252
        %v3286 = vmul.f32 %v458, %v3252
        %v3287 = vmul.f32 %v459, %v3252
        %v3288 = vmul.f32 %v460, %v3252
        %v3289 = vmul.f32 %v461, %v3252
        %v3290 = vmul.f32 %v462, %v3252
        %v3291 = vmul.f32 %v463, %v3252
        %v3292 = vmul.f32 %v464, %v3252
        %v3293 = vmul.f32 %v465, %v3252
        %v3294 = vmul.f32 %v466, %v3252
        %v3295 = vmul.f32 %v467, %v3252
        %v3296 = vmul.f32 %v468, %v3252
        %v3297 = vmul.f32 %v469, %v3252
        %v3298 = vmul.f32 %v470, %v3252
        %v3299 = vmul.f32 %v471, %v3252
        %v3300 = vmul.f32 %v472, %v3252
        %v3349 = vrot.slane %v3253, 2
        %v3350 = vrot.slane %v3254, 2
        %v3351 = vsel %vm949, %v3349, %v3350
        %v3352 = vrot.slane %v3255, 2
        %v3353 = vsel %vm949, %v3350, %v3352
        %v3354 = vrot.slane %v3256, 2
        %v3355 = vrot.slane %v3257, 2
        %v3356 = vsel %vm949, %v3354, %v3355
        %v3357 = vrot.slane %v3258, 2
        %v3358 = vsel %vm949, %v3355, %v3357
        %v3359 = vrot.slane %v3259, 2
        %v3360 = vrot.slane %v3260, 2
        %v3361 = vsel %vm949, %v3359, %v3360
        %v3362 = vrot.slane %v3261, 2
        %v3363 = vsel %vm949, %v3360, %v3362
        %v3364 = vrot.slane %v3262, 2
        %v3365 = vrot.slane %v3263, 2
        %v3366 = vsel %vm949, %v3364, %v3365
        %v3367 = vrot.slane %v3264, 2
        %v3368 = vsel %vm949, %v3365, %v3367
        %v3369 = vrot.slane %v3265, 2
        %v3370 = vrot.slane %v3266, 2
        %v3371 = vsel %vm949, %v3369, %v3370
        %v3372 = vrot.slane %v3267, 2
        %v3373 = vsel %vm949, %v3370, %v3372
        %v3374 = vrot.slane %v3268, 2
        %v3375 = vrot.slane %v3269, 2
        %v3376 = vsel %vm949, %v3374, %v3375
        %v3377 = vrot.slane %v3270, 2
        %v3378 = vsel %vm949, %v3375, %v3377
        %v3379 = vrot.slane %v3271, 2
        %v3380 = vrot.slane %v3272, 2
        %v3381 = vsel %vm949, %v3379, %v3380
        %v3382 = vrot.slane %v3273, 2
        %v3383 = vsel %vm949, %v3380, %v3382
        %v3384 = vrot.slane %v3274, 2
        %v3385 = vrot.slane %v3275, 2
        %v3386 = vsel %vm949, %v3384, %v3385
        %v3387 = vrot.slane %v3276, 2
        %v3388 = vsel %vm949, %v3385, %v3387
        %v3389 = vrot.slane %v3277, 2
        %v3390 = vrot.slane %v3278, 2
        %v3391 = vsel %vm949, %v3389, %v3390
        %v3392 = vrot.slane %v3279, 2
        %v3393 = vsel %vm949, %v3390, %v3392
        %v3394 = vrot.slane %v3280, 2
        %v3395 = vrot.slane %v3281, 2
        %v3396 = vsel %vm949, %v3394, %v3395
        %v3397 = vrot.slane %v3282, 2
        %v3398 = vsel %vm949, %v3395, %v3397
        %v3399 = vrot.slane %v3283, 2
        %v3400 = vrot.slane %v3284, 2
        %v3401 = vsel %vm949, %v3399, %v3400
        %v3402 = vrot.slane %v3285, 2
        %v3403 = vsel %vm949, %v3400, %v3402
        %v3404 = vrot.slane %v3286, 2
        %v3405 = vrot.slane %v3287, 2
        %v3406 = vsel %vm949, %v3404, %v3405
        %v3407 = vrot.slane %v3288, 2
        %v3408 = vsel %vm949, %v3405, %v3407
        %v3409 = vrot.slane %v3289, 2
        %v3410 = vrot.slane %v3290, 2
        %v3411 = vsel %vm949, %v3409, %v3410
        %v3412 = vrot.slane %v3291, 2
        %v3413 = vsel %vm949, %v3410, %v3412
        %v3414 = vrot.slane %v3292, 2
        %v3415 = vrot.slane %v3293, 2
        %v3416 = vsel %vm949, %v3414, %v3415
        %v3417 = vrot.slane %v3294, 2
        %v3418 = vsel %vm949, %v3415, %v3417
        %v3419 = vrot.slane %v3295, 2
        %v3420 = vrot.slane %v3296, 2
        %v3421 = vsel %vm949, %v3419, %v3420
        %v3422 = vrot.slane %v3297, 2
        %v3423 = vsel %vm949, %v3420, %v3422
        %v3424 = vrot.slane %v3298, 2
        %v3425 = vrot.slane %v3299, 2
        %v3426 = vsel %vm949, %v3424, %v3425
        %v3427 = vrot.slane %v3300, 2
        %v3428 = vsel %vm949, %v3425, %v3427
        %v3461 = vadd.f32 %v3220, %v3351
        %v3462 = vadd.f32 %v3221, %v3353
        %v3463 = vadd.f32 %v3222, %v3356
        %v3464 = vadd.f32 %v3223, %v3358
        %v3465 = vadd.f32 %v3224, %v3361
        %v3466 = vadd.f32 %v3225, %v3363
        %v3467 = vadd.f32 %v3226, %v3366
        %v3468 = vadd.f32 %v3227, %v3368
        %v3469 = vadd.f32 %v3228, %v3371
        %v3470 = vadd.f32 %v3229, %v3373
        %v3471 = vadd.f32 %v3230, %v3376
        %v3472 = vadd.f32 %v3231, %v3378
        %v3473 = vadd.f32 %v3232, %v3381
        %v3474 = vadd.f32 %v3233, %v3383
        %v3475 = vadd.f32 %v3234, %v3386
        %v3476 = vadd.f32 %v3235, %v3388
        %v3477 = vadd.f32 %v3236, %v3391
        %v3478 = vadd.f32 %v3237, %v3393
        %v3479 = vadd.f32 %v3238, %v3396
        %v3480 = vadd.f32 %v3239, %v3398
        %v3481 = vadd.f32 %v3240, %v3401
        %v3482 = vadd.f32 %v3241, %v3403
        %v3483 = vadd.f32 %v3242, %v3406
        %v3484 = vadd.f32 %v3243, %v3408
        %v3485 = vadd.f32 %v3244, %v3411
        %v3486 = vadd.f32 %v3245, %v3413
        %v3487 = vadd.f32 %v3246, %v3416
        %v3488 = vadd.f32 %v3247, %v3418
        %v3489 = vadd.f32 %v3248, %v3421
        %v3490 = vadd.f32 %v3249, %v3423
        %v3491 = vadd.f32 %v3250, %v3426
        %v3492 = vadd.f32 %v3251, %v3428
        %v3493 = vperm.slane %v359, 2
        %v3494 = vmul.f32 %v425, %v3493
        %v3495 = vmul.f32 %v426, %v3493
        %v3496 = vmul.f32 %v427, %v3493
        %v3497 = vmul.f32 %v428, %v3493
        %v3498 = vmul.f32 %v429, %v3493
        %v3499 = vmul.f32 %v430, %v3493
        %v3500 = vmul.f32 %v431, %v3493
        %v3501 = vmul.f32 %v432, %v3493
        %v3502 = vmul.f32 %v433, %v3493
        %v3503 = vmul.f32 %v434, %v3493
        %v3504 = vmul.f32 %v435, %v3493
        %v3505 = vmul.f32 %v436, %v3493
        %v3506 = vmul.f32 %v437, %v3493
        %v3507 = vmul.f32 %v438, %v3493
        %v3508 = vmul.f32 %v439, %v3493
        %v3509 = vmul.f32 %v440, %v3493
        %v3510 = vmul.f32 %v441, %v3493
        %v3511 = vmul.f32 %v442, %v3493
        %v3512 = vmul.f32 %v443, %v3493
        %v3513 = vmul.f32 %v444, %v3493
        %v3514 = vmul.f32 %v445, %v3493
        %v3515 = vmul.f32 %v446, %v3493
        %v3516 = vmul.f32 %v447, %v3493
        %v3517 = vmul.f32 %v448, %v3493
        %v3518 = vmul.f32 %v449, %v3493
        %v3519 = vmul.f32 %v450, %v3493
        %v3520 = vmul.f32 %v451, %v3493
        %v3521 = vmul.f32 %v452, %v3493
        %v3522 = vmul.f32 %v453, %v3493
        %v3523 = vmul.f32 %v454, %v3493
        %v3524 = vmul.f32 %v455, %v3493
        %v3525 = vmul.f32 %v456, %v3493
        %v3526 = vmul.f32 %v457, %v3493
        %v3527 = vmul.f32 %v458, %v3493
        %v3528 = vmul.f32 %v459, %v3493
        %v3529 = vmul.f32 %v460, %v3493
        %v3530 = vmul.f32 %v461, %v3493
        %v3531 = vmul.f32 %v462, %v3493
        %v3532 = vmul.f32 %v463, %v3493
        %v3533 = vmul.f32 %v464, %v3493
        %v3534 = vmul.f32 %v465, %v3493
        %v3535 = vmul.f32 %v466, %v3493
        %v3536 = vmul.f32 %v467, %v3493
        %v3537 = vmul.f32 %v468, %v3493
        %v3538 = vmul.f32 %v469, %v3493
        %v3539 = vmul.f32 %v470, %v3493
        %v3540 = vmul.f32 %v471, %v3493
        %v3541 = vmul.f32 %v472, %v3493
        %v3590 = vrot.slane %v3494, 4
        %v3591 = vrot.slane %v3495, 4
        %v3592 = vsel %vm3042, %v3590, %v3591
        %v3593 = vrot.slane %v3496, 4
        %v3594 = vsel %vm3042, %v3591, %v3593
        %v3595 = vrot.slane %v3497, 4
        %v3596 = vrot.slane %v3498, 4
        %v3597 = vsel %vm3042, %v3595, %v3596
        %v3598 = vrot.slane %v3499, 4
        %v3599 = vsel %vm3042, %v3596, %v3598
        %v3600 = vrot.slane %v3500, 4
        %v3601 = vrot.slane %v3501, 4
        %v3602 = vsel %vm3042, %v3600, %v3601
        %v3603 = vrot.slane %v3502, 4
        %v3604 = vsel %vm3042, %v3601, %v3603
        %v3605 = vrot.slane %v3503, 4
        %v3606 = vrot.slane %v3504, 4
        %v3607 = vsel %vm3042, %v3605, %v3606
        %v3608 = vrot.slane %v3505, 4
        %v3609 = vsel %vm3042, %v3606, %v3608
        %v3610 = vrot.slane %v3506, 4
        %v3611 = vrot.slane %v3507, 4
        %v3612 = vsel %vm3042, %v3610, %v3611
        %v3613 = vrot.slane %v3508, 4
        %v3614 = vsel %vm3042, %v3611, %v3613
        %v3615 = vrot.slane %v3509, 4
        %v3616 = vrot.slane %v3510, 4
        %v3617 = vsel %vm3042, %v3615, %v3616
        %v3618 = vrot.slane %v3511, 4
        %v3619 = vsel %vm3042, %v3616, %v3618
        %v3620 = vrot.slane %v3512, 4
        %v3621 = vrot.slane %v3513, 4
        %v3622 = vsel %vm3042, %v3620, %v3621
        %v3623 = vrot.slane %v3514, 4
        %v3624 = vsel %vm3042, %v3621, %v3623
        %v3625 = vrot.slane %v3515, 4
        %v3626 = vrot.slane %v3516, 4
        %v3627 = vsel %vm3042, %v3625, %v3626
        %v3628 = vrot.slane %v3517, 4
        %v3629 = vsel %vm3042, %v3626, %v3628
        %v3630 = vrot.slane %v3518, 4
        %v3631 = vrot.slane %v3519, 4
        %v3632 = vsel %vm3042, %v3630, %v3631
        %v3633 = vrot.slane %v3520, 4
        %v3634 = vsel %vm3042, %v3631, %v3633
        %v3635 = vrot.slane %v3521, 4
        %v3636 = vrot.slane %v3522, 4
        %v3637 = vsel %vm3042, %v3635, %v3636
        %v3638 = vrot.slane %v3523, 4
        %v3639 = vsel %vm3042, %v3636, %v3638
        %v3640 = vrot.slane %v3524, 4
        %v3641 = vrot.slane %v3525, 4
        %v3642 = vsel %vm3042, %v3640, %v3641
        %v3643 = vrot.slane %v3526, 4
        %v3644 = vsel %vm3042, %v3641, %v3643
        %v3645 = vrot.slane %v3527, 4
        %v3646 = vrot.slane %v3528, 4
        %v3647 = vsel %vm3042, %v3645, %v3646
        %v3648 = vrot.slane %v3529, 4
        %v3649 = vsel %vm3042, %v3646, %v3648
        %v3650 = vrot.slane %v3530, 4
        %v3651 = vrot.slane %v3531, 4
        %v3652 = vsel %vm3042, %v3650, %v3651
        %v3653 = vrot.slane %v3532, 4
        %v3654 = vsel %vm3042, %v3651, %v3653
        %v3655 = vrot.slane %v3533, 4
        %v3656 = vrot.slane %v3534, 4
        %v3657 = vsel %vm3042, %v3655, %v3656
        %v3658 = vrot.slane %v3535, 4
        %v3659 = vsel %vm3042, %v3656, %v3658
        %v3660 = vrot.slane %v3536, 4
        %v3661 = vrot.slane %v3537, 4
        %v3662 = vsel %vm3042, %v3660, %v3661
        %v3663 = vrot.slane %v3538, 4
        %v3664 = vsel %vm3042, %v3661, %v3663
        %v3665 = vrot.slane %v3539, 4
        %v3666 = vrot.slane %v3540, 4
        %v3667 = vsel %vm3042, %v3665, %v3666
        %v3668 = vrot.slane %v3541, 4
        %v3669 = vsel %vm3042, %v3666, %v3668
        %v3702 = vadd.f32 %v3461, %v3592
        %v3703 = vadd.f32 %v3462, %v3594
        %v3704 = vadd.f32 %v3463, %v3597
        %v3705 = vadd.f32 %v3464, %v3599
        %v3706 = vadd.f32 %v3465, %v3602
        %v3707 = vadd.f32 %v3466, %v3604
        %v3708 = vadd.f32 %v3467, %v3607
        %v3709 = vadd.f32 %v3468, %v3609
        %v3710 = vadd.f32 %v3469, %v3612
        %v3711 = vadd.f32 %v3470, %v3614
        %v3712 = vadd.f32 %v3471, %v3617
        %v3713 = vadd.f32 %v3472, %v3619
        %v3714 = vadd.f32 %v3473, %v3622
        %v3715 = vadd.f32 %v3474, %v3624
        %v3716 = vadd.f32 %v3475, %v3627
        %v3717 = vadd.f32 %v3476, %v3629
        %v3718 = vadd.f32 %v3477, %v3632
        %v3719 = vadd.f32 %v3478, %v3634
        %v3720 = vadd.f32 %v3479, %v3637
        %v3721 = vadd.f32 %v3480, %v3639
        %v3722 = vadd.f32 %v3481, %v3642
        %v3723 = vadd.f32 %v3482, %v3644
        %v3724 = vadd.f32 %v3483, %v3647
        %v3725 = vadd.f32 %v3484, %v3649
        %v3726 = vadd.f32 %v3485, %v3652
        %v3727 = vadd.f32 %v3486, %v3654
        %v3728 = vadd.f32 %v3487, %v3657
        %v3729 = vadd.f32 %v3488, %v3659
        %v3730 = vadd.f32 %v3489, %v3662
        %v3731 = vadd.f32 %v3490, %v3664
        %v3732 = vadd.f32 %v3491, %v3667
        %v3733 = vadd.f32 %v3492, %v3669
        %v3734 = vperm.slane %v360, 0
        %v3735 = vmul.f32 %v431, %v3734
        %v3736 = vmul.f32 %v432, %v3734
        %v3737 = vmul.f32 %v434, %v3734
        %v3738 = vmul.f32 %v435, %v3734
        %v3739 = vmul.f32 %v437, %v3734
        %v3740 = vmul.f32 %v438, %v3734
        %v3741 = vmul.f32 %v440, %v3734
        %v3742 = vmul.f32 %v441, %v3734
        %v3743 = vmul.f32 %v443, %v3734
        %v3744 = vmul.f32 %v444, %v3734
        %v3745 = vmul.f32 %v446, %v3734
        %v3746 = vmul.f32 %v447, %v3734
        %v3747 = vmul.f32 %v449, %v3734
        %v3748 = vmul.f32 %v450, %v3734
        %v3749 = vmul.f32 %v452, %v3734
        %v3750 = vmul.f32 %v453, %v3734
        %v3751 = vmul.f32 %v455, %v3734
        %v3752 = vmul.f32 %v456, %v3734
        %v3753 = vmul.f32 %v458, %v3734
        %v3754 = vmul.f32 %v459, %v3734
        %v3755 = vmul.f32 %v461, %v3734
        %v3756 = vmul.f32 %v462, %v3734
        %v3757 = vmul.f32 %v464, %v3734
        %v3758 = vmul.f32 %v465, %v3734
        %v3759 = vmul.f32 %v467, %v3734
        %v3760 = vmul.f32 %v468, %v3734
        %v3761 = vmul.f32 %v470, %v3734
        %v3762 = vmul.f32 %v471, %v3734
        %v3763 = vmul.f32 %v473, %v3734
        %v3764 = vmul.f32 %v474, %v3734
        %v3765 = vmul.f32 %v476, %v3734
        %v3766 = vmul.f32 %v477, %v3734
        %v3767 = vadd.f32 %v3702, %v3735
        %v3768 = vadd.f32 %v3703, %v3736
        %v3769 = vadd.f32 %v3704, %v3737
        %v3770 = vadd.f32 %v3705, %v3738
        %v3771 = vadd.f32 %v3706, %v3739
        %v3772 = vadd.f32 %v3707, %v3740
        %v3773 = vadd.f32 %v3708, %v3741
        %v3774 = vadd.f32 %v3709, %v3742
        %v3775 = vadd.f32 %v3710, %v3743
        %v3776 = vadd.f32 %v3711, %v3744
        %v3777 = vadd.f32 %v3712, %v3745
        %v3778 = vadd.f32 %v3713, %v3746
        %v3779 = vadd.f32 %v3714, %v3747
        %v3780 = vadd.f32 %v3715, %v3748
        %v3781 = vadd.f32 %v3716, %v3749
        %v3782 = vadd.f32 %v3717, %v3750
        %v3783 = vadd.f32 %v3718, %v3751
        %v3784 = vadd.f32 %v3719, %v3752
        %v3785 = vadd.f32 %v3720, %v3753
        %v3786 = vadd.f32 %v3721, %v3754
        %v3787 = vadd.f32 %v3722, %v3755
        %v3788 = vadd.f32 %v3723, %v3756
        %v3789 = vadd.f32 %v3724, %v3757
        %v3790 = vadd.f32 %v3725, %v3758
        %v3791 = vadd.f32 %v3726, %v3759
        %v3792 = vadd.f32 %v3727, %v3760
        %v3793 = vadd.f32 %v3728, %v3761
        %v3794 = vadd.f32 %v3729, %v3762
        %v3795 = vadd.f32 %v3730, %v3763
        %v3796 = vadd.f32 %v3731, %v3764
        %v3797 = vadd.f32 %v3732, %v3765
        %v3798 = vadd.f32 %v3733, %v3766
        %v3799 = vperm.slane %v360, 1
        %v3800 = vmul.f32 %v431, %v3799
        %v3801 = vmul.f32 %v432, %v3799
        %v3802 = vmul.f32 %v433, %v3799
        %v3803 = vmul.f32 %v434, %v3799
        %v3804 = vmul.f32 %v435, %v3799
        %v3805 = vmul.f32 %v436, %v3799
        %v3806 = vmul.f32 %v437, %v3799
        %v3807 = vmul.f32 %v438, %v3799
        %v3808 = vmul.f32 %v439, %v3799
        %v3809 = vmul.f32 %v440, %v3799
        %v3810 = vmul.f32 %v441, %v3799
        %v3811 = vmul.f32 %v442, %v3799
        %v3812 = vmul.f32 %v443, %v3799
        %v3813 = vmul.f32 %v444, %v3799
        %v3814 = vmul.f32 %v445, %v3799
        %v3815 = vmul.f32 %v446, %v3799
        %v3816 = vmul.f32 %v447, %v3799
        %v3817 = vmul.f32 %v448, %v3799
        %v3818 = vmul.f32 %v449, %v3799
        %v3819 = vmul.f32 %v450, %v3799
        %v3820 = vmul.f32 %v451, %v3799
        %v3821 = vmul.f32 %v452, %v3799
        %v3822 = vmul.f32 %v453, %v3799
        %v3823 = vmul.f32 %v454, %v3799
        %v3824 = vmul.f32 %v455, %v3799
        %v3825 = vmul.f32 %v456, %v3799
        %v3826 = vmul.f32 %v457, %v3799
        %v3827 = vmul.f32 %v458, %v3799
        %v3828 = vmul.f32 %v459, %v3799
        %v3829 = vmul.f32 %v460, %v3799
        %v3830 = vmul.f32 %v461, %v3799
        %v3831 = vmul.f32 %v462, %v3799
        %v3832 = vmul.f32 %v463, %v3799
        %v3833 = vmul.f32 %v464, %v3799
        %v3834 = vmul.f32 %v465, %v3799
        %v3835 = vmul.f32 %v466, %v3799
        %v3836 = vmul.f32 %v467, %v3799
        %v3837 = vmul.f32 %v468, %v3799
        %v3838 = vmul.f32 %v469, %v3799
        %v3839 = vmul.f32 %v470, %v3799
        %v3840 = vmul.f32 %v471, %v3799
        %v3841 = vmul.f32 %v472, %v3799
        %v3842 = vmul.f32 %v473, %v3799
        %v3843 = vmul.f32 %v474, %v3799
        %v3844 = vmul.f32 %v475, %v3799
        %v3845 = vmul.f32 %v476, %v3799
        %v3846 = vmul.f32 %v477, %v3799
        %v3847 = vmul.f32 %v478, %v3799
        %v3896 = vrot.slane %v3800, 2
        %v3897 = vrot.slane %v3801, 2
        %v3898 = vsel %vm949, %v3896, %v3897
        %v3899 = vrot.slane %v3802, 2
        %v3900 = vsel %vm949, %v3897, %v3899
        %v3901 = vrot.slane %v3803, 2
        %v3902 = vrot.slane %v3804, 2
        %v3903 = vsel %vm949, %v3901, %v3902
        %v3904 = vrot.slane %v3805, 2
        %v3905 = vsel %vm949, %v3902, %v3904
        %v3906 = vrot.slane %v3806, 2
        %v3907 = vrot.slane %v3807, 2
        %v3908 = vsel %vm949, %v3906, %v3907
        %v3909 = vrot.slane %v3808, 2
        %v3910 = vsel %vm949, %v3907, %v3909
        %v3911 = vrot.slane %v3809, 2
        %v3912 = vrot.slane %v3810, 2
        %v3913 = vsel %vm949, %v3911, %v3912
        %v3914 = vrot.slane %v3811, 2
        %v3915 = vsel %vm949, %v3912, %v3914
        %v3916 = vrot.slane %v3812, 2
        %v3917 = vrot.slane %v3813, 2
        %v3918 = vsel %vm949, %v3916, %v3917
        %v3919 = vrot.slane %v3814, 2
        %v3920 = vsel %vm949, %v3917, %v3919
        %v3921 = vrot.slane %v3815, 2
        %v3922 = vrot.slane %v3816, 2
        %v3923 = vsel %vm949, %v3921, %v3922
        %v3924 = vrot.slane %v3817, 2
        %v3925 = vsel %vm949, %v3922, %v3924
        %v3926 = vrot.slane %v3818, 2
        %v3927 = vrot.slane %v3819, 2
        %v3928 = vsel %vm949, %v3926, %v3927
        %v3929 = vrot.slane %v3820, 2
        %v3930 = vsel %vm949, %v3927, %v3929
        %v3931 = vrot.slane %v3821, 2
        %v3932 = vrot.slane %v3822, 2
        %v3933 = vsel %vm949, %v3931, %v3932
        %v3934 = vrot.slane %v3823, 2
        %v3935 = vsel %vm949, %v3932, %v3934
        %v3936 = vrot.slane %v3824, 2
        %v3937 = vrot.slane %v3825, 2
        %v3938 = vsel %vm949, %v3936, %v3937
        %v3939 = vrot.slane %v3826, 2
        %v3940 = vsel %vm949, %v3937, %v3939
        %v3941 = vrot.slane %v3827, 2
        %v3942 = vrot.slane %v3828, 2
        %v3943 = vsel %vm949, %v3941, %v3942
        %v3944 = vrot.slane %v3829, 2
        %v3945 = vsel %vm949, %v3942, %v3944
        %v3946 = vrot.slane %v3830, 2
        %v3947 = vrot.slane %v3831, 2
        %v3948 = vsel %vm949, %v3946, %v3947
        %v3949 = vrot.slane %v3832, 2
        %v3950 = vsel %vm949, %v3947, %v3949
        %v3951 = vrot.slane %v3833, 2
        %v3952 = vrot.slane %v3834, 2
        %v3953 = vsel %vm949, %v3951, %v3952
        %v3954 = vrot.slane %v3835, 2
        %v3955 = vsel %vm949, %v3952, %v3954
        %v3956 = vrot.slane %v3836, 2
        %v3957 = vrot.slane %v3837, 2
        %v3958 = vsel %vm949, %v3956, %v3957
        %v3959 = vrot.slane %v3838, 2
        %v3960 = vsel %vm949, %v3957, %v3959
        %v3961 = vrot.slane %v3839, 2
        %v3962 = vrot.slane %v3840, 2
        %v3963 = vsel %vm949, %v3961, %v3962
        %v3964 = vrot.slane %v3841, 2
        %v3965 = vsel %vm949, %v3962, %v3964
        %v3966 = vrot.slane %v3842, 2
        %v3967 = vrot.slane %v3843, 2
        %v3968 = vsel %vm949, %v3966, %v3967
        %v3969 = vrot.slane %v3844, 2
        %v3970 = vsel %vm949, %v3967, %v3969
        %v3971 = vrot.slane %v3845, 2
        %v3972 = vrot.slane %v3846, 2
        %v3973 = vsel %vm949, %v3971, %v3972
        %v3974 = vrot.slane %v3847, 2
        %v3975 = vsel %vm949, %v3972, %v3974
        %v4008 = vadd.f32 %v3767, %v3898
        %v4009 = vadd.f32 %v3768, %v3900
        %v4010 = vadd.f32 %v3769, %v3903
        %v4011 = vadd.f32 %v3770, %v3905
        %v4012 = vadd.f32 %v3771, %v3908
        %v4013 = vadd.f32 %v3772, %v3910
        %v4014 = vadd.f32 %v3773, %v3913
        %v4015 = vadd.f32 %v3774, %v3915
        %v4016 = vadd.f32 %v3775, %v3918
        %v4017 = vadd.f32 %v3776, %v3920
        %v4018 = vadd.f32 %v3777, %v3923
        %v4019 = vadd.f32 %v3778, %v3925
        %v4020 = vadd.f32 %v3779, %v3928
        %v4021 = vadd.f32 %v3780, %v3930
        %v4022 = vadd.f32 %v3781, %v3933
        %v4023 = vadd.f32 %v3782, %v3935
        %v4024 = vadd.f32 %v3783, %v3938
        %v4025 = vadd.f32 %v3784, %v3940
        %v4026 = vadd.f32 %v3785, %v3943
        %v4027 = vadd.f32 %v3786, %v3945
        %v4028 = vadd.f32 %v3787, %v3948
        %v4029 = vadd.f32 %v3788, %v3950
        %v4030 = vadd.f32 %v3789, %v3953
        %v4031 = vadd.f32 %v3790, %v3955
        %v4032 = vadd.f32 %v3791, %v3958
        %v4033 = vadd.f32 %v3792, %v3960
        %v4034 = vadd.f32 %v3793, %v3963
        %v4035 = vadd.f32 %v3794, %v3965
        %v4036 = vadd.f32 %v3795, %v3968
        %v4037 = vadd.f32 %v3796, %v3970
        %v4038 = vadd.f32 %v3797, %v3973
        %v4039 = vadd.f32 %v3798, %v3975
        %v4040 = vperm.slane %v360, 2
        %v4041 = vmul.f32 %v431, %v4040
        %v4042 = vmul.f32 %v432, %v4040
        %v4043 = vmul.f32 %v433, %v4040
        %v4044 = vmul.f32 %v434, %v4040
        %v4045 = vmul.f32 %v435, %v4040
        %v4046 = vmul.f32 %v436, %v4040
        %v4047 = vmul.f32 %v437, %v4040
        %v4048 = vmul.f32 %v438, %v4040
        %v4049 = vmul.f32 %v439, %v4040
        %v4050 = vmul.f32 %v440, %v4040
        %v4051 = vmul.f32 %v441, %v4040
        %v4052 = vmul.f32 %v442, %v4040
        %v4053 = vmul.f32 %v443, %v4040
        %v4054 = vmul.f32 %v444, %v4040
        %v4055 = vmul.f32 %v445, %v4040
        %v4056 = vmul.f32 %v446, %v4040
        %v4057 = vmul.f32 %v447, %v4040
        %v4058 = vmul.f32 %v448, %v4040
        %v4059 = vmul.f32 %v449, %v4040
        %v4060 = vmul.f32 %v450, %v4040
        %v4061 = vmul.f32 %v451, %v4040
        %v4062 = vmul.f32 %v452, %v4040
        %v4063 = vmul.f32 %v453, %v4040
        %v4064 = vmul.f32 %v454, %v4040
        %v4065 = vmul.f32 %v455, %v4040
        %v4066 = vmul.f32 %v456, %v4040
        %v4067 = vmul.f32 %v457, %v4040
        %v4068 = vmul.f32 %v458, %v4040
        %v4069 = vmul.f32 %v459, %v4040
        %v4070 = vmul.f32 %v460, %v4040
        %v4071 = vmul.f32 %v461, %v4040
        %v4072 = vmul.f32 %v462, %v4040
        %v4073 = vmul.f32 %v463, %v4040
        %v4074 = vmul.f32 %v464, %v4040
        %v4075 = vmul.f32 %v465, %v4040
        %v4076 = vmul.f32 %v466, %v4040
        %v4077 = vmul.f32 %v467, %v4040
        %v4078 = vmul.f32 %v468, %v4040
        %v4079 = vmul.f32 %v469, %v4040
        %v4080 = vmul.f32 %v470, %v4040
        %v4081 = vmul.f32 %v471, %v4040
        %v4082 = vmul.f32 %v472, %v4040
        %v4083 = vmul.f32 %v473, %v4040
        %v4084 = vmul.f32 %v474, %v4040
        %v4085 = vmul.f32 %v475, %v4040
        %v4086 = vmul.f32 %v476, %v4040
        %v4087 = vmul.f32 %v477, %v4040
        %v4088 = vmul.f32 %v478, %v4040
        %v4137 = vrot.slane %v4041, 4
        %v4138 = vrot.slane %v4042, 4
        %v4139 = vsel %vm3042, %v4137, %v4138
        %v4140 = vrot.slane %v4043, 4
        %v4141 = vsel %vm3042, %v4138, %v4140
        %v4142 = vrot.slane %v4044, 4
        %v4143 = vrot.slane %v4045, 4
        %v4144 = vsel %vm3042, %v4142, %v4143
        %v4145 = vrot.slane %v4046, 4
        %v4146 = vsel %vm3042, %v4143, %v4145
        %v4147 = vrot.slane %v4047, 4
        %v4148 = vrot.slane %v4048, 4
        %v4149 = vsel %vm3042, %v4147, %v4148
        %v4150 = vrot.slane %v4049, 4
        %v4151 = vsel %vm3042, %v4148, %v4150
        %v4152 = vrot.slane %v4050, 4
        %v4153 = vrot.slane %v4051, 4
        %v4154 = vsel %vm3042, %v4152, %v4153
        %v4155 = vrot.slane %v4052, 4
        %v4156 = vsel %vm3042, %v4153, %v4155
        %v4157 = vrot.slane %v4053, 4
        %v4158 = vrot.slane %v4054, 4
        %v4159 = vsel %vm3042, %v4157, %v4158
        %v4160 = vrot.slane %v4055, 4
        %v4161 = vsel %vm3042, %v4158, %v4160
        %v4162 = vrot.slane %v4056, 4
        %v4163 = vrot.slane %v4057, 4
        %v4164 = vsel %vm3042, %v4162, %v4163
        %v4165 = vrot.slane %v4058, 4
        %v4166 = vsel %vm3042, %v4163, %v4165
        %v4167 = vrot.slane %v4059, 4
        %v4168 = vrot.slane %v4060, 4
        %v4169 = vsel %vm3042, %v4167, %v4168
        %v4170 = vrot.slane %v4061, 4
        %v4171 = vsel %vm3042, %v4168, %v4170
        %v4172 = vrot.slane %v4062, 4
        %v4173 = vrot.slane %v4063, 4
        %v4174 = vsel %vm3042, %v4172, %v4173
        %v4175 = vrot.slane %v4064, 4
        %v4176 = vsel %vm3042, %v4173, %v4175
        %v4177 = vrot.slane %v4065, 4
        %v4178 = vrot.slane %v4066, 4
        %v4179 = vsel %vm3042, %v4177, %v4178
        %v4180 = vrot.slane %v4067, 4
        %v4181 = vsel %vm3042, %v4178, %v4180
        %v4182 = vrot.slane %v4068, 4
        %v4183 = vrot.slane %v4069, 4
        %v4184 = vsel %vm3042, %v4182, %v4183
        %v4185 = vrot.slane %v4070, 4
        %v4186 = vsel %vm3042, %v4183, %v4185
        %v4187 = vrot.slane %v4071, 4
        %v4188 = vrot.slane %v4072, 4
        %v4189 = vsel %vm3042, %v4187, %v4188
        %v4190 = vrot.slane %v4073, 4
        %v4191 = vsel %vm3042, %v4188, %v4190
        %v4192 = vrot.slane %v4074, 4
        %v4193 = vrot.slane %v4075, 4
        %v4194 = vsel %vm3042, %v4192, %v4193
        %v4195 = vrot.slane %v4076, 4
        %v4196 = vsel %vm3042, %v4193, %v4195
        %v4197 = vrot.slane %v4077, 4
        %v4198 = vrot.slane %v4078, 4
        %v4199 = vsel %vm3042, %v4197, %v4198
        %v4200 = vrot.slane %v4079, 4
        %v4201 = vsel %vm3042, %v4198, %v4200
        %v4202 = vrot.slane %v4080, 4
        %v4203 = vrot.slane %v4081, 4
        %v4204 = vsel %vm3042, %v4202, %v4203
        %v4205 = vrot.slane %v4082, 4
        %v4206 = vsel %vm3042, %v4203, %v4205
        %v4207 = vrot.slane %v4083, 4
        %v4208 = vrot.slane %v4084, 4
        %v4209 = vsel %vm3042, %v4207, %v4208
        %v4210 = vrot.slane %v4085, 4
        %v4211 = vsel %vm3042, %v4208, %v4210
        %v4212 = vrot.slane %v4086, 4
        %v4213 = vrot.slane %v4087, 4
        %v4214 = vsel %vm3042, %v4212, %v4213
        %v4215 = vrot.slane %v4088, 4
        %v4216 = vsel %vm3042, %v4213, %v4215
        %v4249 = vadd.f32 %v4008, %v4139
        %v4250 = vadd.f32 %v4009, %v4141
        %v4251 = vadd.f32 %v4010, %v4144
        %v4252 = vadd.f32 %v4011, %v4146
        %v4253 = vadd.f32 %v4012, %v4149
        %v4254 = vadd.f32 %v4013, %v4151
        %v4255 = vadd.f32 %v4014, %v4154
        %v4256 = vadd.f32 %v4015, %v4156
        %v4257 = vadd.f32 %v4016, %v4159
        %v4258 = vadd.f32 %v4017, %v4161
        %v4259 = vadd.f32 %v4018, %v4164
        %v4260 = vadd.f32 %v4019, %v4166
        %v4261 = vadd.f32 %v4020, %v4169
        %v4262 = vadd.f32 %v4021, %v4171
        %v4263 = vadd.f32 %v4022, %v4174
        %v4264 = vadd.f32 %v4023, %v4176
        %v4265 = vadd.f32 %v4024, %v4179
        %v4266 = vadd.f32 %v4025, %v4181
        %v4267 = vadd.f32 %v4026, %v4184
        %v4268 = vadd.f32 %v4027, %v4186
        %v4269 = vadd.f32 %v4028, %v4189
        %v4270 = vadd.f32 %v4029, %v4191
        %v4271 = vadd.f32 %v4030, %v4194
        %v4272 = vadd.f32 %v4031, %v4196
        %v4273 = vadd.f32 %v4032, %v4199
        %v4274 = vadd.f32 %v4033, %v4201
        %v4275 = vadd.f32 %v4034, %v4204
        %v4276 = vadd.f32 %v4035, %v4206
        %v4277 = vadd.f32 %v4036, %v4209
        %v4278 = vadd.f32 %v4037, %v4211
        %v4279 = vadd.f32 %v4038, %v4214
        %v4280 = vadd.f32 %v4039, %v4216
        %vm4313 = vcmask 1041408
        %v4314 = vrot.slane %v4249, 6
        %v4315 = vrot.slane %v4250, 6
        %v4316 = vsel %vm4313, %v4314, %v4315
        %v4317 = vrot.slane %v4251, 6
        %v4318 = vrot.slane %v4252, 6
        %v4319 = vsel %vm4313, %v4317, %v4318
        %v4320 = vrot.slane %v4253, 6
        %v4321 = vrot.slane %v4254, 6
        %v4322 = vsel %vm4313, %v4320, %v4321
        %v4323 = vrot.slane %v4255, 6
        %v4324 = vrot.slane %v4256, 6
        %v4325 = vsel %vm4313, %v4323, %v4324
        %v4326 = vrot.slane %v4257, 6
        %v4327 = vrot.slane %v4258, 6
        %v4328 = vsel %vm4313, %v4326, %v4327
        %v4329 = vrot.slane %v4259, 6
        %v4330 = vrot.slane %v4260, 6
        %v4331 = vsel %vm4313, %v4329, %v4330
        %v4332 = vrot.slane %v4261, 6
        %v4333 = vrot.slane %v4262, 6
        %v4334 = vsel %vm4313, %v4332, %v4333
        %v4335 = vrot.slane %v4263, 6
        %v4336 = vrot.slane %v4264, 6
        %v4337 = vsel %vm4313, %v4335, %v4336
        %v4338 = vrot.slane %v4265, 6
        %v4339 = vrot.slane %v4266, 6
        %v4340 = vsel %vm4313, %v4338, %v4339
        %v4341 = vrot.slane %v4267, 6
        %v4342 = vrot.slane %v4268, 6
        %v4343 = vsel %vm4313, %v4341, %v4342
        %v4344 = vrot.slane %v4269, 6
        %v4345 = vrot.slane %v4270, 6
        %v4346 = vsel %vm4313, %v4344, %v4345
        %v4347 = vrot.slane %v4271, 6
        %v4348 = vrot.slane %v4272, 6
        %v4349 = vsel %vm4313, %v4347, %v4348
        %v4350 = vrot.slane %v4273, 6
        %v4351 = vrot.slane %v4274, 6
        %v4352 = vsel %vm4313, %v4350, %v4351
        %v4353 = vrot.slane %v4275, 6
        %v4354 = vrot.slane %v4276, 6
        %v4355 = vsel %vm4313, %v4353, %v4354
        %v4356 = vrot.slane %v4277, 6
        %v4357 = vrot.slane %v4278, 6
        %v4358 = vsel %vm4313, %v4356, %v4357
        %v4359 = vrot.slane %v4279, 6
        %v4360 = vrot.slane %v4280, 6
        %v4361 = vsel %vm4313, %v4359, %v4360
        %v4410 = vadd.f32 %v425, %v4314
        %v4411 = vadd.f32 %v426, %v4316
        %v4412 = vadd.f32 %v427, %v4315
        %v4413 = vadd.f32 %v428, %v4317
        %v4414 = vadd.f32 %v429, %v4319
        %v4415 = vadd.f32 %v430, %v4318
        %v4416 = vadd.f32 %v431, %v4320
        %v4417 = vadd.f32 %v432, %v4322
        %v4418 = vadd.f32 %v433, %v4321
        %v4419 = vadd.f32 %v434, %v4323
        %v4420 = vadd.f32 %v435, %v4325
        %v4421 = vadd.f32 %v436, %v4324
        %v4422 = vadd.f32 %v437, %v4326
        %v4423 = vadd.f32 %v438, %v4328
        %v4424 = vadd.f32 %v439, %v4327
        %v4425 = vadd.f32 %v440, %v4329
        %v4426 = vadd.f32 %v441, %v4331
        %v4427 = vadd.f32 %v442, %v4330
        %v4428 = vadd.f32 %v443, %v4332
        %v4429 = vadd.f32 %v444, %v4334
        %v4430 = vadd.f32 %v445, %v4333
        %v4431 = vadd.f32 %v446, %v4335
        %v4432 = vadd.f32 %v447, %v4337
        %v4433 = vadd.f32 %v448, %v4336
        %v4434 = vadd.f32 %v449, %v4338
        %v4435 = vadd.f32 %v450, %v4340
        %v4436 = vadd.f32 %v451, %v4339
        %v4437 = vadd.f32 %v452, %v4341
        %v4438 = vadd.f32 %v453, %v4343
        %v4439 = vadd.f32 %v454, %v4342
        %v4440 = vadd.f32 %v455, %v4344
        %v4441 = vadd.f32 %v456, %v4346
        %v4442 = vadd.f32 %v457, %v4345
        %v4443 = vadd.f32 %v458, %v4347
        %v4444 = vadd.f32 %v459, %v4349
        %v4445 = vadd.f32 %v460, %v4348
        %v4446 = vadd.f32 %v461, %v4350
        %v4447 = vadd.f32 %v462, %v4352
        %v4448 = vadd.f32 %v463, %v4351
        %v4449 = vadd.f32 %v464, %v4353
        %v4450 = vadd.f32 %v465, %v4355
        %v4451 = vadd.f32 %v466, %v4354
        %v4452 = vadd.f32 %v467, %v4356
        %v4453 = vadd.f32 %v468, %v4358
        %v4454 = vadd.f32 %v469, %v4357
        %v4455 = vadd.f32 %v470, %v4359
        %v4456 = vadd.f32 %v471, %v4361
        %v4457 = vadd.f32 %v472, %v4360
        %vm4458 = vcmask 261120
        %4459 = vst.msk [vmem:[#allocation2] sm:$0xff] %vm4458, 0.0
        %4460 = vst.msk [vmem:[#allocation2 + $0x8] sm:$0xff] %vm4458, 0.0
        %vm4461 = vcmask 257024
        %4462 = vst.msk [vmem:[#allocation2 + $0x10] sm:$0xf] %vm4461, 0.0
        %4463 = vst.msk [vmem:[#allocation2 + $0x18] sm:$0xff] %vm4458, 0.0
        %4464 = vst.msk [vmem:[#allocation2 + $0x20] sm:$0xff] %vm4458, 0.0
        %4465 = vst.msk [vmem:[#allocation2 + $0x28] sm:$0xf] %vm4461, 0.0
        %4466 = vst.msk [vmem:[#allocation2 + $0x30] sm:$0xff] %vm4458, 0.0
        %4467 = vst.msk [vmem:[#allocation2 + $0x38] sm:$0xff] %vm4458, 0.0
        %4468 = vst.msk [vmem:[#allocation2 + $0x40] sm:$0xf] %vm4461, 0.0
        %4469 = vst.msk [vmem:[#allocation2 + $0x48] sm:$0xff] %vm4458, 0.0
        %4470 = vst.msk [vmem:[#allocation2 + $0x50] sm:$0xff] %vm4458, 0.0
        %4471 = vst.msk [vmem:[#allocation2 + $0x58] sm:$0xf] %vm4461, 0.0
        %4472 = vst.msk [vmem:[#allocation2 + $0x60] sm:$0xff] %vm4458, 0.0
        %4473 = vst.msk [vmem:[#allocation2 + $0x68] sm:$0xff] %vm4458, 0.0
        %4474 = vst.msk [vmem:[#allocation2 + $0x70] sm:$0xf] %vm4461, 0.0
        %4475 = vst.msk [vmem:[#allocation2 + $0x78] sm:$0xff] %vm4458, 0.0
        %4476 = vst.msk [vmem:[#allocation2 + $0x80] sm:$0xff] %vm4458, 0.0
        %4477 = vst.msk [vmem:[#allocation2 + $0x88] sm:$0xf] %vm4461, 0.0
        %4478 = vst.msk [vmem:[#allocation2 + $0x90] sm:$0xff] %vm4458, 0.0
        %4479 = vst.msk [vmem:[#allocation2 + $0x98] sm:$0xff] %vm4458, 0.0
        %4480 = vst.msk [vmem:[#allocation2 + $0xa0] sm:$0xf] %vm4461, 0.0
        %4481 = vst.msk [vmem:[#allocation2 + $0xa8] sm:$0xff] %vm4458, 0.0
        %4482 = vst.msk [vmem:[#allocation2 + $0xb0] sm:$0xff] %vm4458, 0.0
        %4483 = vst.msk [vmem:[#allocation2 + $0xb8] sm:$0xf] %vm4461, 0.0
        %4484 = vst.msk [vmem:[#allocation2 + $0xc0] sm:$0xff] %vm4458, 0.0
        %4485 = vst.msk [vmem:[#allocation2 + $0xc8] sm:$0xff] %vm4458, 0.0
        %4486 = vst.msk [vmem:[#allocation2 + $0xd0] sm:$0xf] %vm4461, 0.0
        %4487 = vst.msk [vmem:[#allocation2 + $0xd8] sm:$0xff] %vm4458, 0.0
        %4488 = vst.msk [vmem:[#allocation2 + $0xe0] sm:$0xff] %vm4458, 0.0
        %4489 = vst.msk [vmem:[#allocation2 + $0xe8] sm:$0xf] %vm4461, 0.0
        %4490 = vst.msk [vmem:[#allocation2 + $0xf0] sm:$0xff] %vm4458, 0.0
        %4491 = vst.msk [vmem:[#allocation2 + $0xf8] sm:$0xff] %vm4458, 0.0
        %4492 = vst.msk [vmem:[#allocation2 + $0x100] sm:$0xf] %vm4461, 0.0
        %4493 = vst.msk [vmem:[#allocation2 + $0x108] sm:$0xff] %vm4458, 0.0
        %4494 = vst.msk [vmem:[#allocation2 + $0x110] sm:$0xff] %vm4458, 0.0
        %4495 = vst.msk [vmem:[#allocation2 + $0x118] sm:$0xf] %vm4461, 0.0
        %4496 = vst.msk [vmem:[#allocation2 + $0x120] sm:$0xff] %vm4458, 0.0
        %4497 = vst.msk [vmem:[#allocation2 + $0x128] sm:$0xff] %vm4458, 0.0
        %4498 = vst.msk [vmem:[#allocation2 + $0x130] sm:$0xf] %vm4461, 0.0
        %4499 = vst.msk [vmem:[#allocation2 + $0x138] sm:$0xff] %vm4458, 0.0
        %4500 = vst.msk [vmem:[#allocation2 + $0x140] sm:$0xff] %vm4458, 0.0
        %4501 = vst.msk [vmem:[#allocation2 + $0x148] sm:$0xf] %vm4461, 0.0
        %4502 = vst.msk [vmem:[#allocation2 + $0x150] sm:$0xff] %vm4458, 0.0
        %4503 = vst.msk [vmem:[#allocation2 + $0x158] sm:$0xff] %vm4458, 0.0
        %4504 = vst.msk [vmem:[#allocation2 + $0x160] sm:$0xf] %vm4461, 0.0
        %4505 = vst.msk [vmem:[#allocation2 + $0x168] sm:$0xff] %vm4458, 0.0
        %4506 = vst.msk [vmem:[#allocation2 + $0x170] sm:$0xff] %vm4458, 0.0
        %4507 = vst.msk [vmem:[#allocation2 + $0x178] sm:$0xf] %vm4461, 0.0
        %4508 = vst.msk [vmem:[#allocation2 + $0x180] sm:$0xff] %vm4458, 0.0
        %4509 = vst.msk [vmem:[#allocation2 + $0x188] sm:$0xff] %vm4458, 0.0
        %4510 = vst.msk [vmem:[#allocation2 + $0x190] sm:$0xf] %vm4461, 0.0
        %4511 = vst.msk [vmem:[#allocation2 + $0x198] sm:$0xff] %vm4458, 0.0
        %4512 = vst.msk [vmem:[#allocation2 + $0x1a0] sm:$0xff] %vm4458, 0.0
        %4513 = vst.msk [vmem:[#allocation2 + $0x1a8] sm:$0xf] %vm4461, 0.0
        %4514 = vst.msk [vmem:[#allocation2 + $0x1b0] sm:$0xff] %vm4458, 0.0
        %4515 = vst.msk [vmem:[#allocation2 + $0x1b8] sm:$0xff] %vm4458, 0.0
        %4516 = vst.msk [vmem:[#allocation2 + $0x1c0] sm:$0xf] %vm4461, 0.0
        %4517 = vst.msk [vmem:[#allocation2 + $0x1c8] sm:$0xff] %vm4458, 0.0
        %4518 = vst.msk [vmem:[#allocation2 + $0x1d0] sm:$0xff] %vm4458, 0.0
        %4519 = vst.msk [vmem:[#allocation2 + $0x1d8] sm:$0xf] %vm4461, 0.0
        %4520 = vst.msk [vmem:[#allocation3] sm:$0xff] %vm4458, 0.0
        %4521 = vst.msk [vmem:[#allocation3 + $0x8] sm:$0xff] %vm4458, 0.0
        %4522 = vst.msk [vmem:[#allocation3 + $0x10] sm:$0xf] %vm4461, 0.0
        %4523 = vst.msk [vmem:[#allocation3 + $0x18] sm:$0xff] %vm4458, 0.0
        %4524 = vst.msk [vmem:[#allocation3 + $0x20] sm:$0xff] %vm4458, 0.0
        %4525 = vst.msk [vmem:[#allocation3 + $0x28] sm:$0xf] %vm4461, 0.0
        %4526 = vst.msk [vmem:[#allocation3 + $0x30] sm:$0xff] %vm4458, 0.0
        %4527 = vst.msk [vmem:[#allocation3 + $0x38] sm:$0xff] %vm4458, 0.0
        %4528 = vst.msk [vmem:[#allocation3 + $0x40] sm:$0xf] %vm4461, 0.0
        %4529 = vst.msk [vmem:[#allocation3 + $0x48] sm:$0xff] %vm4458, 0.0
        %4530 = vst.msk [vmem:[#allocation3 + $0x50] sm:$0xff] %vm4458, 0.0
        %4531 = vst.msk [vmem:[#allocation3 + $0x58] sm:$0xf] %vm4461, 0.0
        %4532 = vst.msk [vmem:[#allocation3 + $0x60] sm:$0xff] %vm4458, 0.0
        %4533 = vst.msk [vmem:[#allocation3 + $0x68] sm:$0xff] %vm4458, 0.0
        %4534 = vst.msk [vmem:[#allocation3 + $0x70] sm:$0xf] %vm4461, 0.0
        %4535 = vst.msk [vmem:[#allocation3 + $0x78] sm:$0xff] %vm4458, 0.0
        %4536 = vst.msk [vmem:[#allocation3 + $0x80] sm:$0xff] %vm4458, 0.0
        %4537 = vst.msk [vmem:[#allocation3 + $0x88] sm:$0xf] %vm4461, 0.0
        %4538 = vst.msk [vmem:[#allocation3 + $0x90] sm:$0xff] %vm4458, 0.0
        %4539 = vst.msk [vmem:[#allocation3 + $0x98] sm:$0xff] %vm4458, 0.0
        %4540 = vst.msk [vmem:[#allocation3 + $0xa0] sm:$0xf] %vm4461, 0.0
        %4541 = vst.msk [vmem:[#allocation3 + $0xa8] sm:$0xff] %vm4458, 0.0
        %4542 = vst.msk [vmem:[#allocation3 + $0xb0] sm:$0xff] %vm4458, 0.0
        %4543 = vst.msk [vmem:[#allocation3 + $0xb8] sm:$0xf] %vm4461, 0.0
        %4544 = vst.msk [vmem:[#allocation3 + $0xc0] sm:$0xff] %vm4458, 0.0
        %4545 = vst.msk [vmem:[#allocation3 + $0xc8] sm:$0xff] %vm4458, 0.0
        %4546 = vst.msk [vmem:[#allocation3 + $0xd0] sm:$0xf] %vm4461, 0.0
        %4547 = vst.msk [vmem:[#allocation3 + $0xd8] sm:$0xff] %vm4458, 0.0
        %4548 = vst.msk [vmem:[#allocation3 + $0xe0] sm:$0xff] %vm4458, 0.0
        %4549 = vst.msk [vmem:[#allocation3 + $0xe8] sm:$0xf] %vm4461, 0.0
        %4550 = vst.msk [vmem:[#allocation3 + $0xf0] sm:$0xff] %vm4458, 0.0
        %4551 = vst.msk [vmem:[#allocation3 + $0xf8] sm:$0xff] %vm4458, 0.0
        %4552 = vst.msk [vmem:[#allocation3 + $0x100] sm:$0xf] %vm4461, 0.0
        %4553 = vst.msk [vmem:[#allocation3 + $0x108] sm:$0xff] %vm4458, 0.0
        %4554 = vst.msk [vmem:[#allocation3 + $0x110] sm:$0xff] %vm4458, 0.0
        %4555 = vst.msk [vmem:[#allocation3 + $0x118] sm:$0xf] %vm4461, 0.0
        %4556 = vst.msk [vmem:[#allocation3 + $0x120] sm:$0xff] %vm4458, 0.0
        %4557 = vst.msk [vmem:[#allocation3 + $0x128] sm:$0xff] %vm4458, 0.0
        %4558 = vst.msk [vmem:[#allocation3 + $0x130] sm:$0xf] %vm4461, 0.0
        %4559 = vst.msk [vmem:[#allocation3 + $0x138] sm:$0xff] %vm4458, 0.0
        %4560 = vst.msk [vmem:[#allocation3 + $0x140] sm:$0xff] %vm4458, 0.0
        %4561 = vst.msk [vmem:[#allocation3 + $0x148] sm:$0xf] %vm4461, 0.0
        %4562 = vst.msk [vmem:[#allocation3 + $0x150] sm:$0xff] %vm4458, 0.0
        %4563 = vst.msk [vmem:[#allocation3 + $0x158] sm:$0xff] %vm4458, 0.0
        %4564 = vst.msk [vmem:[#allocation3 + $0x160] sm:$0xf] %vm4461, 0.0
        %4565 = vst.msk [vmem:[#allocation3 + $0x168] sm:$0xff] %vm4458, 0.0
        %4566 = vst.msk [vmem:[#allocation3 + $0x170] sm:$0xff] %vm4458, 0.0
        %4567 = vst.msk [vmem:[#allocation3 + $0x178] sm:$0xf] %vm4461, 0.0
        %4568 = vst.msk [vmem:[#allocation3 + $0x180] sm:$0xff] %vm4458, 0.0
        %4569 = vst.msk [vmem:[#allocation3 + $0x188] sm:$0xff] %vm4458, 0.0
        %4570 = vst.msk [vmem:[#allocation3 + $0x190] sm:$0xf] %vm4461, 0.0
        %4571 = vst.msk [vmem:[#allocation3 + $0x198] sm:$0xff] %vm4458, 0.0
        %4572 = vst.msk [vmem:[#allocation3 + $0x1a0] sm:$0xff] %vm4458, 0.0
        %4573 = vst.msk [vmem:[#allocation3 + $0x1a8] sm:$0xf] %vm4461, 0.0
        %4574 = vst.msk [vmem:[#allocation3 + $0x1b0] sm:$0xff] %vm4458, 0.0
        %4575 = vst.msk [vmem:[#allocation3 + $0x1b8] sm:$0xff] %vm4458, 0.0
        %4576 = vst.msk [vmem:[#allocation3 + $0x1c0] sm:$0xf] %vm4461, 0.0
        %4577 = vst.msk [vmem:[#allocation3 + $0x1c8] sm:$0xff] %vm4458, 0.0
        %4578 = vst.msk [vmem:[#allocation3 + $0x1d0] sm:$0xff] %vm4458, 0.0
        %4579 = vst.msk [vmem:[#allocation3 + $0x1d8] sm:$0xf] %vm4461, 0.0
        %s4580 = scalar_lea.vmem [#allocation2], 48
        %vm4581 = vcmask 261122
        %4582 = vst.msk [vmem:[%s4580] sm:$0xfc] %vm4581, %v2589
        %4583 = vst.msk [vmem:[%s4580 + $0x8] sm:$0xff] %vm4458, %v2590
        %vm4584 = vcmask 254976
        %4585 = vst.msk [vmem:[%s4580 + $0x10] sm:$0x3] %vm4584, %v2591
        %4586 = vst.msk [vmem:[%s4580 + $0x18] sm:$0xfc] %vm4581, %v2592
        %4587 = vst.msk [vmem:[%s4580 + $0x20] sm:$0xff] %vm4458, %v2593
        %4588 = vst.msk [vmem:[%s4580 + $0x28] sm:$0x3] %vm4584, %v2594
        %4589 = vst.msk [vmem:[%s4580 + $0x30] sm:$0xfc] %vm4581, %v2595
        %4590 = vst.msk [vmem:[%s4580 + $0x38] sm:$0xff] %vm4458, %v2596
        %4591 = vst.msk [vmem:[%s4580 + $0x40] sm:$0x3] %vm4584, %v2597
        %4592 = vst.msk [vmem:[%s4580 + $0x48] sm:$0xfc] %vm4581, %v2598
        %4593 = vst.msk [vmem:[%s4580 + $0x50] sm:$0xff] %vm4458, %v2599
        %4594 = vst.msk [vmem:[%s4580 + $0x58] sm:$0x3] %vm4584, %v2600
        %4595 = vst.msk [vmem:[%s4580 + $0x60] sm:$0xfc] %vm4581, %v2601
        %4596 = vst.msk [vmem:[%s4580 + $0x68] sm:$0xff] %vm4458, %v2602
        %4597 = vst.msk [vmem:[%s4580 + $0x70] sm:$0x3] %vm4584, %v2603
        %4598 = vst.msk [vmem:[%s4580 + $0x78] sm:$0xfc] %vm4581, %v2604
        %4599 = vst.msk [vmem:[%s4580 + $0x80] sm:$0xff] %vm4458, %v2605
        %4600 = vst.msk [vmem:[%s4580 + $0x88] sm:$0x3] %vm4584, %v2606
        %4601 = vst.msk [vmem:[%s4580 + $0x90] sm:$0xfc] %vm4581, %v2607
        %4602 = vst.msk [vmem:[%s4580 + $0x98] sm:$0xff] %vm4458, %v2608
        %4603 = vst.msk [vmem:[%s4580 + $0xa0] sm:$0x3] %vm4584, %v2609
        %4604 = vst.msk [vmem:[%s4580 + $0xa8] sm:$0xfc] %vm4581, %v2610
        %4605 = vst.msk [vmem:[%s4580 + $0xb0] sm:$0xff] %vm4458, %v2611
        %4606 = vst.msk [vmem:[%s4580 + $0xb8] sm:$0x3] %vm4584, %v2612
        %4607 = vst.msk [vmem:[%s4580 + $0xc0] sm:$0xfc] %vm4581, %v2613
        %4608 = vst.msk [vmem:[%s4580 + $0xc8] sm:$0xff] %vm4458, %v2614
        %4609 = vst.msk [vmem:[%s4580 + $0xd0] sm:$0x3] %vm4584, %v2615
        %4610 = vst.msk [vmem:[%s4580 + $0xd8] sm:$0xfc] %vm4581, %v2616
        %4611 = vst.msk [vmem:[%s4580 + $0xe0] sm:$0xff] %vm4458, %v2617
        %4612 = vst.msk [vmem:[%s4580 + $0xe8] sm:$0x3] %vm4584, %v2618
        %4613 = vst.msk [vmem:[%s4580 + $0xf0] sm:$0xfc] %vm4581, %v2619
        %4614 = vst.msk [vmem:[%s4580 + $0xf8] sm:$0xff] %vm4458, %v2620
        %4615 = vst.msk [vmem:[%s4580 + $0x100] sm:$0x3] %vm4584, %v2621
        %4616 = vst.msk [vmem:[%s4580 + $0x108] sm:$0xfc] %vm4581, %v2622
        %4617 = vst.msk [vmem:[%s4580 + $0x110] sm:$0xff] %vm4458, %v2623
        %4618 = vst.msk [vmem:[%s4580 + $0x118] sm:$0x3] %vm4584, %v2624
        %4619 = vst.msk [vmem:[%s4580 + $0x120] sm:$0xfc] %vm4581, %v2625
        %4620 = vst.msk [vmem:[%s4580 + $0x128] sm:$0xff] %vm4458, %v2626
        %4621 = vst.msk [vmem:[%s4580 + $0x130] sm:$0x3] %vm4584, %v2627
        %4622 = vst.msk [vmem:[%s4580 + $0x138] sm:$0xfc] %vm4581, %v2628
        %4623 = vst.msk [vmem:[%s4580 + $0x140] sm:$0xff] %vm4458, %v2629
        %4624 = vst.msk [vmem:[%s4580 + $0x148] sm:$0x3] %vm4584, %v2630
        %4625 = vst.msk [vmem:[%s4580 + $0x150] sm:$0xfc] %vm4581, %v2631
        %4626 = vst.msk [vmem:[%s4580 + $0x158] sm:$0xff] %vm4458, %v2632
        %4627 = vst.msk [vmem:[%s4580 + $0x160] sm:$0x3] %vm4584, %v2633
        %4628 = vst.msk [vmem:[%s4580 + $0x168] sm:$0xfc] %vm4581, %v2634
        %4629 = vst.msk [vmem:[%s4580 + $0x170] sm:$0xff] %vm4458, %v2635
        %4630 = vst.msk [vmem:[%s4580 + $0x178] sm:$0x3] %vm4584, %v2636
        %s4631 = scalar_lea.vmem [#allocation3], 48
        %4632 = vst.msk [vmem:[%s4631] sm:$0xfc] %vm4581, %v4410
        %4633 = vst.msk [vmem:[%s4631 + $0x8] sm:$0xff] %vm4458, %v4411
        %4634 = vst.msk [vmem:[%s4631 + $0x10] sm:$0x3] %vm4584, %v4412
        %4635 = vst.msk [vmem:[%s4631 + $0x18] sm:$0xfc] %vm4581, %v4413
        %4636 = vst.msk [vmem:[%s4631 + $0x20] sm:$0xff] %vm4458, %v4414
        %4637 = vst.msk [vmem:[%s4631 + $0x28] sm:$0x3] %vm4584, %v4415
        %4638 = vst.msk [vmem:[%s4631 + $0x30] sm:$0xfc] %vm4581, %v4416
        %4639 = vst.msk [vmem:[%s4631 + $0x38] sm:$0xff] %vm4458, %v4417
        %4640 = vst.msk [vmem:[%s4631 + $0x40] sm:$0x3] %vm4584, %v4418
        %4641 = vst.msk [vmem:[%s4631 + $0x48] sm:$0xfc] %vm4581, %v4419
        %4642 = vst.msk [vmem:[%s4631 + $0x50] sm:$0xff] %vm4458, %v4420
        %4643 = vst.msk [vmem:[%s4631 + $0x58] sm:$0x3] %vm4584, %v4421
        %4644 = vst.msk [vmem:[%s4631 + $0x60] sm:$0xfc] %vm4581, %v4422
        %4645 = vst.msk [vmem:[%s4631 + $0x68] sm:$0xff] %vm4458, %v4423
        %4646 = vst.msk [vmem:[%s4631 + $0x70] sm:$0x3] %vm4584, %v4424
        %4647 = vst.msk [vmem:[%s4631 + $0x78] sm:$0xfc] %vm4581, %v4425
        %4648 = vst.msk [vmem:[%s4631 + $0x80] sm:$0xff] %vm4458, %v4426
        %4649 = vst.msk [vmem:[%s4631 + $0x88] sm:$0x3] %vm4584, %v4427
        %4650 = vst.msk [vmem:[%s4631 + $0x90] sm:$0xfc] %vm4581, %v4428
        %4651 = vst.msk [vmem:[%s4631 + $0x98] sm:$0xff] %vm4458, %v4429
        %4652 = vst.msk [vmem:[%s4631 + $0xa0] sm:$0x3] %vm4584, %v4430
        %4653 = vst.msk [vmem:[%s4631 + $0xa8] sm:$0xfc] %vm4581, %v4431
        %4654 = vst.msk [vmem:[%s4631 + $0xb0] sm:$0xff] %vm4458, %v4432
        %4655 = vst.msk [vmem:[%s4631 + $0xb8] sm:$0x3] %vm4584, %v4433
        %4656 = vst.msk [vmem:[%s4631 + $0xc0] sm:$0xfc] %vm4581, %v4434
        %4657 = vst.msk [vmem:[%s4631 + $0xc8] sm:$0xff] %vm4458, %v4435
        %4658 = vst.msk [vmem:[%s4631 + $0xd0] sm:$0x3] %vm4584, %v4436
        %4659 = vst.msk [vmem:[%s4631 + $0xd8] sm:$0xfc] %vm4581, %v4437
        %4660 = vst.msk [vmem:[%s4631 + $0xe0] sm:$0xff] %vm4458, %v4438
        %4661 = vst.msk [vmem:[%s4631 + $0xe8] sm:$0x3] %vm4584, %v4439
        %4662 = vst.msk [vmem:[%s4631 + $0xf0] sm:$0xfc] %vm4581, %v4440
        %4663 = vst.msk [vmem:[%s4631 + $0xf8] sm:$0xff] %vm4458, %v4441
        %4664 = vst.msk [vmem:[%s4631 + $0x100] sm:$0x3] %vm4584, %v4442
        %4665 = vst.msk [vmem:[%s4631 + $0x108] sm:$0xfc] %vm4581, %v4443
        %4666 = vst.msk [vmem:[%s4631 + $0x110] sm:$0xff] %vm4458, %v4444
        %4667 = vst.msk [vmem:[%s4631 + $0x118] sm:$0x3] %vm4584, %v4445
        %4668 = vst.msk [vmem:[%s4631 + $0x120] sm:$0xfc] %vm4581, %v4446
        %4669 = vst.msk [vmem:[%s4631 + $0x128] sm:$0xff] %vm4458, %v4447
        %4670 = vst.msk [vmem:[%s4631 + $0x130] sm:$0x3] %vm4584, %v4448
        %4671 = vst.msk [vmem:[%s4631 + $0x138] sm:$0xfc] %vm4581, %v4449
        %4672 = vst.msk [vmem:[%s4631 + $0x140] sm:$0xff] %vm4458, %v4450
        %4673 = vst.msk [vmem:[%s4631 + $0x148] sm:$0x3] %vm4584, %v4451
        %4674 = vst.msk [vmem:[%s4631 + $0x150] sm:$0xfc] %vm4581, %v4452
        %4675 = vst.msk [vmem:[%s4631 + $0x158] sm:$0xff] %vm4458, %v4453
        %4676 = vst.msk [vmem:[%s4631 + $0x160] sm:$0x3] %vm4584, %v4454
        %4677 = vst.msk [vmem:[%s4631 + $0x168] sm:$0xfc] %vm4581, %v4455
        %4678 = vst.msk [vmem:[%s4631 + $0x170] sm:$0xff] %vm4458, %v4456
        %4679 = vst.msk [vmem:[%s4631 + $0x178] sm:$0x3] %vm4584, %v4457
        %v4680 = vld [vmem:[#allocation2 + $0x18] sm:$0xff]
        %v4681 = vld [vmem:[#allocation2 + $0x20] sm:$0xff]
        %v4682 = vld [vmem:[#allocation2 + $0x28] sm:$0xf]
        %v4683 = vld [vmem:[#allocation2 + $0x30] sm:$0xff]
        %v4684 = vld [vmem:[#allocation2 + $0x38] sm:$0xff]
        %v4685 = vld [vmem:[#allocation2 + $0x40] sm:$0xf]
        %v4686 = vld [vmem:[#allocation2 + $0x48] sm:$0xff]
        %v4687 = vld [vmem:[#allocation2 + $0x50] sm:$0xff]
        %v4688 = vld [vmem:[#allocation2 + $0x58] sm:$0xf]
        %v4689 = vld [vmem:[#allocation2 + $0x60] sm:$0xff]
        %v4690 = vld [vmem:[#allocation2 + $0x68] sm:$0xff]
        %v4691 = vld [vmem:[#allocation2 + $0x70] sm:$0xf]
        %v4692 = vld [vmem:[#allocation2 + $0x78] sm:$0xff]
        %v4693 = vld [vmem:[#allocation2 + $0x80] sm:$0xff]
        %v4694 = vld [vmem:[#allocation2 + $0x88] sm:$0xf]
        %v4695 = vld [vmem:[#allocation2 + $0x90] sm:$0xff]
        %v4696 = vld [vmem:[#allocation2 + $0x98] sm:$0xff]
        %v4697 = vld [vmem:[#allocation2 + $0xa0] sm:$0xf]
        %v4698 = vld [vmem:[#allocation2 + $0xa8] sm:$0xff]
        %v4699 = vld [vmem:[#allocation2 + $0xb0] sm:$0xff]
        %v4700 = vld [vmem:[#allocation2 + $0xb8] sm:$0xf]
        %v4701 = vld [vmem:[#allocation2 + $0xc0] sm:$0xff]
        %v4702 = vld [vmem:[#allocation2 + $0xc8] sm:$0xff]
        %v4703 = vld [vmem:[#allocation2 + $0xd0] sm:$0xf]
        %v4704 = vld [vmem:[#allocation2 + $0xd8] sm:$0xff]
        %v4705 = vld [vmem:[#allocation2 + $0xe0] sm:$0xff]
        %v4706 = vld [vmem:[#allocation2 + $0xe8] sm:$0xf]
        %v4707 = vld [vmem:[#allocation2 + $0xf0] sm:$0xff]
        %v4708 = vld [vmem:[#allocation2 + $0xf8] sm:$0xff]
        %v4709 = vld [vmem:[#allocation2 + $0x100] sm:$0xf]
        %v4710 = vld [vmem:[#allocation2 + $0x108] sm:$0xff]
        %v4711 = vld [vmem:[#allocation2 + $0x110] sm:$0xff]
        %v4712 = vld [vmem:[#allocation2 + $0x118] sm:$0xf]
        %v4713 = vld [vmem:[#allocation2 + $0x120] sm:$0xff]
        %v4714 = vld [vmem:[#allocation2 + $0x128] sm:$0xff]
        %v4715 = vld [vmem:[#allocation2 + $0x130] sm:$0xf]
        %v4716 = vld [vmem:[#allocation2 + $0x138] sm:$0xff]
        %v4717 = vld [vmem:[#allocation2 + $0x140] sm:$0xff]
        %v4718 = vld [vmem:[#allocation2 + $0x148] sm:$0xf]
        %v4719 = vld [vmem:[#allocation2 + $0x150] sm:$0xff]
        %v4720 = vld [vmem:[#allocation2 + $0x158] sm:$0xff]
        %v4721 = vld [vmem:[#allocation2 + $0x160] sm:$0xf]
        %v4722 = vld [vmem:[#allocation2 + $0x168] sm:$0xff]
        %v4723 = vld [vmem:[#allocation2 + $0x170] sm:$0xff]
        %v4724 = vld [vmem:[#allocation2 + $0x178] sm:$0xf]
        %v4725 = vld [vmem:[#allocation2 + $0x180] sm:$0xff]
        %v4726 = vld [vmem:[#allocation2 + $0x188] sm:$0xff]
        %v4727 = vld [vmem:[#allocation2 + $0x190] sm:$0xf]
        %v4728 = vld [vmem:[#allocation2 + $0x198] sm:$0xff]
        %v4729 = vld [vmem:[#allocation2 + $0x1a0] sm:$0xff]
        %v4730 = vld [vmem:[#allocation2 + $0x1a8] sm:$0xf]
        %v4731 = vld [vmem:[#allocation2 + $0x1b0] sm:$0xff]
        %v4732 = vld [vmem:[#allocation2 + $0x1b8] sm:$0xff]
        %v4733 = vld [vmem:[#allocation2 + $0x1c0] sm:$0xf]
        %v4734 = vld [vmem:[#allocation3] sm:$0xff]
        %v4735 = vld [vmem:[#allocation3 + $0x8] sm:$0xff]
        %v4736 = vld [vmem:[#allocation3 + $0x10] sm:$0xf]
        %v4737 = vld [vmem:[#allocation3 + $0x18] sm:$0xff]
        %v4738 = vld [vmem:[#allocation3 + $0x20] sm:$0xff]
        %v4739 = vld [vmem:[#allocation3 + $0x28] sm:$0xf]
        %v4740 = vld [vmem:[#allocation3 + $0x30] sm:$0xff]
        %v4741 = vld [vmem:[#allocation3 + $0x38] sm:$0xff]
        %v4742 = vld [vmem:[#allocation3 + $0x40] sm:$0xf]
        %v4743 = vld [vmem:[#allocation3 + $0x48] sm:$0xff]
        %v4744 = vld [vmem:[#allocation3 + $0x50] sm:$0xff]
        %v4745 = vld [vmem:[#allocation3 + $0x58] sm:$0xf]
        %v4746 = vld [vmem:[#allocation3 + $0x60] sm:$0xff]
        %v4747 = vld [vmem:[#allocation3 + $0x68] sm:$0xff]
        %v4748 = vld [vmem:[#allocation3 + $0x70] sm:$0xf]
        %v4749 = vld [vmem:[#allocation3 + $0x78] sm:$0xff]
        %v4750 = vld [vmem:[#allocation3 + $0x80] sm:$0xff]
        %v4751 = vld [vmem:[#allocation3 + $0x88] sm:$0xf]
        %v4752 = vld [vmem:[#allocation3 + $0x90] sm:$0xff]
        %v4753 = vld [vmem:[#allocation3 + $0x98] sm:$0xff]
        %v4754 = vld [vmem:[#allocation3 + $0xa0] sm:$0xf]
        %v4755 = vld [vmem:[#allocation3 + $0xa8] sm:$0xff]
        %v4756 = vld [vmem:[#allocation3 + $0xb0] sm:$0xff]
        %v4757 = vld [vmem:[#allocation3 + $0xb8] sm:$0xf]
        %v4758 = vld [vmem:[#allocation3 + $0xc0] sm:$0xff]
        %v4759 = vld [vmem:[#allocation3 + $0xc8] sm:$0xff]
        %v4760 = vld [vmem:[#allocation3 + $0xd0] sm:$0xf]
        %v4761 = vld [vmem:[#allocation3 + $0xd8] sm:$0xff]
        %v4762 = vld [vmem:[#allocation3 + $0xe0] sm:$0xff]
        %v4763 = vld [vmem:[#allocation3 + $0xe8] sm:$0xf]
        %v4764 = vld [vmem:[#allocation3 + $0xf0] sm:$0xff]
        %v4765 = vld [vmem:[#allocation3 + $0xf8] sm:$0xff]
        %v4766 = vld [vmem:[#allocation3 + $0x100] sm:$0xf]
        %v4767 = vld [vmem:[#allocation3 + $0x108] sm:$0xff]
        %v4768 = vld [vmem:[#allocation3 + $0x110] sm:$0xff]
        %v4769 = vld [vmem:[#allocation3 + $0x118] sm:$0xf]
        %v4770 = vld [vmem:[#allocation3 + $0x120] sm:$0xff]
        %v4771 = vld [vmem:[#allocation3 + $0x128] sm:$0xff]
        %v4772 = vld [vmem:[#allocation3 + $0x130] sm:$0xf]
        %v4773 = vld [vmem:[#allocation3 + $0x138] sm:$0xff]
        %v4774 = vld [vmem:[#allocation3 + $0x140] sm:$0xff]
        %v4775 = vld [vmem:[#allocation3 + $0x148] sm:$0xf]
        %v4776 = vld [vmem:[#allocation3 + $0x150] sm:$0xff]
        %v4777 = vld [vmem:[#allocation3 + $0x158] sm:$0xff]
        %v4778 = vld [vmem:[#allocation3 + $0x160] sm:$0xf]
        %v4779 = vld [vmem:[#allocation3 + $0x168] sm:$0xff]
        %v4780 = vld [vmem:[#allocation3 + $0x170] sm:$0xff]
        %v4781 = vld [vmem:[#allocation3 + $0x178] sm:$0xf]
        %v4782 = vld [vmem:[#allocation3 + $0x180] sm:$0xff]
        %v4783 = vld [vmem:[#allocation3 + $0x188] sm:$0xff]
        %v4784 = vld [vmem:[#allocation3 + $0x190] sm:$0xf]
        %v4785 = vld [vmem:[#allocation3 + $0x198] sm:$0xff]
        %v4786 = vld [vmem:[#allocation3 + $0x1a0] sm:$0xff]
        %v4787 = vld [vmem:[#allocation3 + $0x1a8] sm:$0xf]
        %v4788 = vld [vmem:[#allocation3 + $0x1b0] sm:$0xff]
        %v4789 = vld [vmem:[#allocation3 + $0x1b8] sm:$0xff]
        %v4790 = vld [vmem:[#allocation3 + $0x1c0] sm:$0xf]
        %v4791 = vld [vmem:[#allocation3 + $0x1c8] sm:$0xff]
        %v4792 = vld [vmem:[#allocation3 + $0x1d0] sm:$0xff]
        %v4793 = vld [vmem:[#allocation3 + $0x1d8] sm:$0xf]
        %v4794 = vperm.slane %v357, 1
        %v4795 = vadd.f32 %v4794, 0.0
        %v4796 = vperm.slane %v354, 0
        %v4797 = vmul.f32 %v4680, %v4796
        %v4798 = vmul.f32 %v4681, %v4796
        %v4799 = vmul.f32 %v4682, %v4796
        %v4800 = vmul.f32 %v4683, %v4796
        %v4801 = vmul.f32 %v4684, %v4796
        %v4802 = vmul.f32 %v4685, %v4796
        %v4803 = vmul.f32 %v4686, %v4796
        %v4804 = vmul.f32 %v4687, %v4796
        %v4805 = vmul.f32 %v4688, %v4796
        %v4806 = vmul.f32 %v4689, %v4796
        %v4807 = vmul.f32 %v4690, %v4796
        %v4808 = vmul.f32 %v4691, %v4796
        %v4809 = vmul.f32 %v4692, %v4796
        %v4810 = vmul.f32 %v4693, %v4796
        %v4811 = vmul.f32 %v4694, %v4796
        %v4812 = vmul.f32 %v4695, %v4796
        %v4813 = vmul.f32 %v4696, %v4796
        %v4814 = vmul.f32 %v4697, %v4796
        %v4815 = vmul.f32 %v4698, %v4796
        %v4816 = vmul.f32 %v4699, %v4796
        %v4817 = vmul.f32 %v4700, %v4796
        %v4818 = vmul.f32 %v4701, %v4796
        %v4819 = vmul.f32 %v4702, %v4796
        %v4820 = vmul.f32 %v4703, %v4796
        %v4821 = vmul.f32 %v4704, %v4796
        %v4822 = vmul.f32 %v4705, %v4796
        %v4823 = vmul.f32 %v4706, %v4796
        %v4824 = vmul.f32 %v4707, %v4796
        %v4825 = vmul.f32 %v4708, %v4796
        %v4826 = vmul.f32 %v4709, %v4796
        %v4827 = vmul.f32 %v4710, %v4796
        %v4828 = vmul.f32 %v4711, %v4796
        %v4829 = vmul.f32 %v4712, %v4796
        %v4830 = vmul.f32 %v4713, %v4796
        %v4831 = vmul.f32 %v4714, %v4796
        %v4832 = vmul.f32 %v4715, %v4796
        %v4833 = vmul.f32 %v4716, %v4796
        %v4834 = vmul.f32 %v4717, %v4796
        %v4835 = vmul.f32 %v4718, %v4796
        %v4836 = vmul.f32 %v4719, %v4796
        %v4837 = vmul.f32 %v4720, %v4796
        %v4838 = vmul.f32 %v4721, %v4796
        %v4839 = vmul.f32 %v4722, %v4796
        %v4840 = vmul.f32 %v4723, %v4796
        %v4841 = vmul.f32 %v4724, %v4796
        %v4842 = vmul.f32 %v4725, %v4796
        %v4843 = vmul.f32 %v4726, %v4796
        %v4844 = vmul.f32 %v4727, %v4796
        %v4845 = vadd.f32 %v4795, %v4797
        %v4846 = vadd.f32 %v4795, %v4798
        %v4847 = vadd.f32 %v4795, %v4799
        %v4848 = vadd.f32 %v4795, %v4800
        %v4849 = vadd.f32 %v4795, %v4801
        %v4850 = vadd.f32 %v4795, %v4802
        %v4851 = vadd.f32 %v4795, %v4803
        %v4852 = vadd.f32 %v4795, %v4804
        %v4853 = vadd.f32 %v4795, %v4805
        %v4854 = vadd.f32 %v4795, %v4806
        %v4855 = vadd.f32 %v4795, %v4807
        %v4856 = vadd.f32 %v4795, %v4808
        %v4857 = vadd.f32 %v4795, %v4809
        %v4858 = vadd.f32 %v4795, %v4810
        %v4859 = vadd.f32 %v4795, %v4811
        %v4860 = vadd.f32 %v4795, %v4812
        %v4861 = vadd.f32 %v4795, %v4813
        %v4862 = vadd.f32 %v4795, %v4814
        %v4863 = vadd.f32 %v4795, %v4815
        %v4864 = vadd.f32 %v4795, %v4816
        %v4865 = vadd.f32 %v4795, %v4817
        %v4866 = vadd.f32 %v4795, %v4818
        %v4867 = vadd.f32 %v4795, %v4819
        %v4868 = vadd.f32 %v4795, %v4820
        %v4869 = vadd.f32 %v4795, %v4821
        %v4870 = vadd.f32 %v4795, %v4822
        %v4871 = vadd.f32 %v4795, %v4823
        %v4872 = vadd.f32 %v4795, %v4824
        %v4873 = vadd.f32 %v4795, %v4825
        %v4874 = vadd.f32 %v4795, %v4826
        %v4875 = vadd.f32 %v4795, %v4827
        %v4876 = vadd.f32 %v4795, %v4828
        %v4877 = vadd.f32 %v4795, %v4829
        %v4878 = vadd.f32 %v4795, %v4830
        %v4879 = vadd.f32 %v4795, %v4831
        %v4880 = vadd.f32 %v4795, %v4832
        %v4881 = vadd.f32 %v4795, %v4833
        %v4882 = vadd.f32 %v4795, %v4834
        %v4883 = vadd.f32 %v4795, %v4835
        %v4884 = vadd.f32 %v4795, %v4836
        %v4885 = vadd.f32 %v4795, %v4837
        %v4886 = vadd.f32 %v4795, %v4838
        %v4887 = vadd.f32 %v4795, %v4839
        %v4888 = vadd.f32 %v4795, %v4840
        %v4889 = vadd.f32 %v4795, %v4841
        %v4890 = vadd.f32 %v4795, %v4842
        %v4891 = vadd.f32 %v4795, %v4843
        %v4892 = vadd.f32 %v4795, %v4844
        %v4893 = vperm.slane %v354, 1
        %v4894 = vmul.f32 %v4680, %v4893
        %v4895 = vmul.f32 %v4681, %v4893
        %v4896 = vmul.f32 %v4682, %v4893
        %v4897 = vmul.f32 %v4683, %v4893
        %v4898 = vmul.f32 %v4684, %v4893
        %v4899 = vmul.f32 %v4685, %v4893
        %v4900 = vmul.f32 %v4686, %v4893
        %v4901 = vmul.f32 %v4687, %v4893
        %v4902 = vmul.f32 %v4688, %v4893
        %v4903 = vmul.f32 %v4689, %v4893
        %v4904 = vmul.f32 %v4690, %v4893
        %v4905 = vmul.f32 %v4691, %v4893
        %v4906 = vmul.f32 %v4692, %v4893
        %v4907 = vmul.f32 %v4693, %v4893
        %v4908 = vmul.f32 %v4694, %v4893
        %v4909 = vmul.f32 %v4695, %v4893
        %v4910 = vmul.f32 %v4696, %v4893
        %v4911 = vmul.f32 %v4697, %v4893
        %v4912 = vmul.f32 %v4698, %v4893
        %v4913 = vmul.f32 %v4699, %v4893
        %v4914 = vmul.f32 %v4700, %v4893
        %v4915 = vmul.f32 %v4701, %v4893
        %v4916 = vmul.f32 %v4702, %v4893
        %v4917 = vmul.f32 %v4703, %v4893
        %v4918 = vmul.f32 %v4704, %v4893
        %v4919 = vmul.f32 %v4705, %v4893
        %v4920 = vmul.f32 %v4706, %v4893
        %v4921 = vmul.f32 %v4707, %v4893
        %v4922 = vmul.f32 %v4708, %v4893
        %v4923 = vmul.f32 %v4709, %v4893
        %v4924 = vmul.f32 %v4710, %v4893
        %v4925 = vmul.f32 %v4711, %v4893
        %v4926 = vmul.f32 %v4712, %v4893
        %v4927 = vmul.f32 %v4713, %v4893
        %v4928 = vmul.f32 %v4714, %v4893
        %v4929 = vmul.f32 %v4715, %v4893
        %v4930 = vmul.f32 %v4716, %v4893
        %v4931 = vmul.f32 %v4717, %v4893
        %v4932 = vmul.f32 %v4718, %v4893
        %v4933 = vmul.f32 %v4719, %v4893
        %v4934 = vmul.f32 %v4720, %v4893
        %v4935 = vmul.f32 %v4721, %v4893
        %v4936 = vmul.f32 %v4722, %v4893
        %v4937 = vmul.f32 %v4723, %v4893
        %v4938 = vmul.f32 %v4724, %v4893
        %v4939 = vmul.f32 %v4725, %v4893
        %v4940 = vmul.f32 %v4726, %v4893
        %v4941 = vmul.f32 %v4727, %v4893
        %v4990 = vrot.slane %v4894, 1
        %v4991 = vrot.slane %v4895, 1
        %v4992 = vsel %vm675, %v4990, %v4991
        %v4993 = vrot.slane %v4896, 1
        %v4994 = vsel %vm675, %v4991, %v4993
        %v4995 = vrot.slane %v4897, 1
        %v4996 = vrot.slane %v4898, 1
        %v4997 = vsel %vm675, %v4995, %v4996
        %v4998 = vrot.slane %v4899, 1
        %v4999 = vsel %vm675, %v4996, %v4998
        %v5000 = vrot.slane %v4900, 1
        %v5001 = vrot.slane %v4901, 1
        %v5002 = vsel %vm675, %v5000, %v5001
        %v5003 = vrot.slane %v4902, 1
        %v5004 = vsel %vm675, %v5001, %v5003
        %v5005 = vrot.slane %v4903, 1
        %v5006 = vrot.slane %v4904, 1
        %v5007 = vsel %vm675, %v5005, %v5006
        %v5008 = vrot.slane %v4905, 1
        %v5009 = vsel %vm675, %v5006, %v5008
        %v5010 = vrot.slane %v4906, 1
        %v5011 = vrot.slane %v4907, 1
        %v5012 = vsel %vm675, %v5010, %v5011
        %v5013 = vrot.slane %v4908, 1
        %v5014 = vsel %vm675, %v5011, %v5013
        %v5015 = vrot.slane %v4909, 1
        %v5016 = vrot.slane %v4910, 1
        %v5017 = vsel %vm675, %v5015, %v5016
        %v5018 = vrot.slane %v4911, 1
        %v5019 = vsel %vm675, %v5016, %v5018
        %v5020 = vrot.slane %v4912, 1
        %v5021 = vrot.slane %v4913, 1
        %v5022 = vsel %vm675, %v5020, %v5021
        %v5023 = vrot.slane %v4914, 1
        %v5024 = vsel %vm675, %v5021, %v5023
        %v5025 = vrot.slane %v4915, 1
        %v5026 = vrot.slane %v4916, 1
        %v5027 = vsel %vm675, %v5025, %v5026
        %v5028 = vrot.slane %v4917, 1
        %v5029 = vsel %vm675, %v5026, %v5028
        %v5030 = vrot.slane %v4918, 1
        %v5031 = vrot.slane %v4919, 1
        %v5032 = vsel %vm675, %v5030, %v5031
        %v5033 = vrot.slane %v4920, 1
        %v5034 = vsel %vm675, %v5031, %v5033
        %v5035 = vrot.slane %v4921, 1
        %v5036 = vrot.slane %v4922, 1
        %v5037 = vsel %vm675, %v5035, %v5036
        %v5038 = vrot.slane %v4923, 1
        %v5039 = vsel %vm675, %v5036, %v5038
        %v5040 = vrot.slane %v4924, 1
        %v5041 = vrot.slane %v4925, 1
        %v5042 = vsel %vm675, %v5040, %v5041
        %v5043 = vrot.slane %v4926, 1
        %v5044 = vsel %vm675, %v5041, %v5043
        %v5045 = vrot.slane %v4927, 1
        %v5046 = vrot.slane %v4928, 1
        %v5047 = vsel %vm675, %v5045, %v5046
        %v5048 = vrot.slane %v4929, 1
        %v5049 = vsel %vm675, %v5046, %v5048
        %v5050 = vrot.slane %v4930, 1
        %v5051 = vrot.slane %v4931, 1
        %v5052 = vsel %vm675, %v5050, %v5051
        %v5053 = vrot.slane %v4932, 1
        %v5054 = vsel %vm675, %v5051, %v5053
        %v5055 = vrot.slane %v4933, 1
        %v5056 = vrot.slane %v4934, 1
        %v5057 = vsel %vm675, %v5055, %v5056
        %v5058 = vrot.slane %v4935, 1
        %v5059 = vsel %vm675, %v5056, %v5058
        %v5060 = vrot.slane %v4936, 1
        %v5061 = vrot.slane %v4937, 1
        %v5062 = vsel %vm675, %v5060, %v5061
        %v5063 = vrot.slane %v4938, 1
        %v5064 = vsel %vm675, %v5061, %v5063
        %v5065 = vrot.slane %v4939, 1
        %v5066 = vrot.slane %v4940, 1
        %v5067 = vsel %vm675, %v5065, %v5066
        %v5068 = vrot.slane %v4941, 1
        %v5069 = vsel %vm675, %v5066, %v5068
        %v5118 = vadd.f32 %v4845, %v4992
        %v5119 = vadd.f32 %v4846, %v4994
        %v5120 = vadd.f32 %v4847, %v4993
        %v5121 = vadd.f32 %v4848, %v4997
        %v5122 = vadd.f32 %v4849, %v4999
        %v5123 = vadd.f32 %v4850, %v4998
        %v5124 = vadd.f32 %v4851, %v5002
        %v5125 = vadd.f32 %v4852, %v5004
        %v5126 = vadd.f32 %v4853, %v5003
        %v5127 = vadd.f32 %v4854, %v5007
        %v5128 = vadd.f32 %v4855, %v5009
        %v5129 = vadd.f32 %v4856, %v5008
        %v5130 = vadd.f32 %v4857, %v5012
        %v5131 = vadd.f32 %v4858, %v5014
        %v5132 = vadd.f32 %v4859, %v5013
        %v5133 = vadd.f32 %v4860, %v5017
        %v5134 = vadd.f32 %v4861, %v5019
        %v5135 = vadd.f32 %v4862, %v5018
        %v5136 = vadd.f32 %v4863, %v5022
        %v5137 = vadd.f32 %v4864, %v5024
        %v5138 = vadd.f32 %v4865, %v5023
        %v5139 = vadd.f32 %v4866, %v5027
        %v5140 = vadd.f32 %v4867, %v5029
        %v5141 = vadd.f32 %v4868, %v5028
        %v5142 = vadd.f32 %v4869, %v5032
        %v5143 = vadd.f32 %v4870, %v5034
        %v5144 = vadd.f32 %v4871, %v5033
        %v5145 = vadd.f32 %v4872, %v5037
        %v5146 = vadd.f32 %v4873, %v5039
        %v5147 = vadd.f32 %v4874, %v5038
        %v5148 = vadd.f32 %v4875, %v5042
        %v5149 = vadd.f32 %v4876, %v5044
        %v5150 = vadd.f32 %v4877, %v5043
        %v5151 = vadd.f32 %v4878, %v5047
        %v5152 = vadd.f32 %v4879, %v5049
        %v5153 = vadd.f32 %v4880, %v5048
        %v5154 = vadd.f32 %v4881, %v5052
        %v5155 = vadd.f32 %v4882, %v5054
        %v5156 = vadd.f32 %v4883, %v5053
        %v5157 = vadd.f32 %v4884, %v5057
        %v5158 = vadd.f32 %v4885, %v5059
        %v5159 = vadd.f32 %v4886, %v5058
        %v5160 = vadd.f32 %v4887, %v5062
        %v5161 = vadd.f32 %v4888, %v5064
        %v5162 = vadd.f32 %v4889, %v5063
        %v5163 = vadd.f32 %v4890, %v5067
        %v5164 = vadd.f32 %v4891, %v5069
        %v5165 = vadd.f32 %v4892, %v5068
        %v5166 = vperm.slane %v354, 2
        %v5167 = vmul.f32 %v4680, %v5166
        %v5168 = vmul.f32 %v4681, %v5166
        %v5169 = vmul.f32 %v4682, %v5166
        %v5170 = vmul.f32 %v4683, %v5166
        %v5171 = vmul.f32 %v4684, %v5166
        %v5172 = vmul.f32 %v4685, %v5166
        %v5173 = vmul.f32 %v4686, %v5166
        %v5174 = vmul.f32 %v4687, %v5166
        %v5175 = vmul.f32 %v4688, %v5166
        %v5176 = vmul.f32 %v4689, %v5166
        %v5177 = vmul.f32 %v4690, %v5166
        %v5178 = vmul.f32 %v4691, %v5166
        %v5179 = vmul.f32 %v4692, %v5166
        %v5180 = vmul.f32 %v4693, %v5166
        %v5181 = vmul.f32 %v4694, %v5166
        %v5182 = vmul.f32 %v4695, %v5166
        %v5183 = vmul.f32 %v4696, %v5166
        %v5184 = vmul.f32 %v4697, %v5166
        %v5185 = vmul.f32 %v4698, %v5166
        %v5186 = vmul.f32 %v4699, %v5166
        %v5187 = vmul.f32 %v4700, %v5166
        %v5188 = vmul.f32 %v4701, %v5166
        %v5189 = vmul.f32 %v4702, %v5166
        %v5190 = vmul.f32 %v4703, %v5166
        %v5191 = vmul.f32 %v4704, %v5166
        %v5192 = vmul.f32 %v4705, %v5166
        %v5193 = vmul.f32 %v4706, %v5166
        %v5194 = vmul.f32 %v4707, %v5166
        %v5195 = vmul.f32 %v4708, %v5166
        %v5196 = vmul.f32 %v4709, %v5166
        %v5197 = vmul.f32 %v4710, %v5166
        %v5198 = vmul.f32 %v4711, %v5166
        %v5199 = vmul.f32 %v4712, %v5166
        %v5200 = vmul.f32 %v4713, %v5166
        %v5201 = vmul.f32 %v4714, %v5166
        %v5202 = vmul.f32 %v4715, %v5166
        %v5203 = vmul.f32 %v4716, %v5166
        %v5204 = vmul.f32 %v4717, %v5166
        %v5205 = vmul.f32 %v4718, %v5166
        %v5206 = vmul.f32 %v4719, %v5166
        %v5207 = vmul.f32 %v4720, %v5166
        %v5208 = vmul.f32 %v4721, %v5166
        %v5209 = vmul.f32 %v4722, %v5166
        %v5210 = vmul.f32 %v4723, %v5166
        %v5211 = vmul.f32 %v4724, %v5166
        %v5212 = vmul.f32 %v4725, %v5166
        %v5213 = vmul.f32 %v4726, %v5166
        %v5214 = vmul.f32 %v4727, %v5166
        %v5263 = vrot.slane %v5167, 2
        %v5264 = vrot.slane %v5168, 2
        %v5265 = vsel %vm949, %v5263, %v5264
        %v5266 = vrot.slane %v5169, 2
        %v5267 = vsel %vm949, %v5264, %v5266
        %v5268 = vrot.slane %v5170, 2
        %v5269 = vrot.slane %v5171, 2
        %v5270 = vsel %vm949, %v5268, %v5269
        %v5271 = vrot.slane %v5172, 2
        %v5272 = vsel %vm949, %v5269, %v5271
        %v5273 = vrot.slane %v5173, 2
        %v5274 = vrot.slane %v5174, 2
        %v5275 = vsel %vm949, %v5273, %v5274
        %v5276 = vrot.slane %v5175, 2
        %v5277 = vsel %vm949, %v5274, %v5276
        %v5278 = vrot.slane %v5176, 2
        %v5279 = vrot.slane %v5177, 2
        %v5280 = vsel %vm949, %v5278, %v5279
        %v5281 = vrot.slane %v5178, 2
        %v5282 = vsel %vm949, %v5279, %v5281
        %v5283 = vrot.slane %v5179, 2
        %v5284 = vrot.slane %v5180, 2
        %v5285 = vsel %vm949, %v5283, %v5284
        %v5286 = vrot.slane %v5181, 2
        %v5287 = vsel %vm949, %v5284, %v5286
        %v5288 = vrot.slane %v5182, 2
        %v5289 = vrot.slane %v5183, 2
        %v5290 = vsel %vm949, %v5288, %v5289
        %v5291 = vrot.slane %v5184, 2
        %v5292 = vsel %vm949, %v5289, %v5291
        %v5293 = vrot.slane %v5185, 2
        %v5294 = vrot.slane %v5186, 2
        %v5295 = vsel %vm949, %v5293, %v5294
        %v5296 = vrot.slane %v5187, 2
        %v5297 = vsel %vm949, %v5294, %v5296
        %v5298 = vrot.slane %v5188, 2
        %v5299 = vrot.slane %v5189, 2
        %v5300 = vsel %vm949, %v5298, %v5299
        %v5301 = vrot.slane %v5190, 2
        %v5302 = vsel %vm949, %v5299, %v5301
        %v5303 = vrot.slane %v5191, 2
        %v5304 = vrot.slane %v5192, 2
        %v5305 = vsel %vm949, %v5303, %v5304
        %v5306 = vrot.slane %v5193, 2
        %v5307 = vsel %vm949, %v5304, %v5306
        %v5308 = vrot.slane %v5194, 2
        %v5309 = vrot.slane %v5195, 2
        %v5310 = vsel %vm949, %v5308, %v5309
        %v5311 = vrot.slane %v5196, 2
        %v5312 = vsel %vm949, %v5309, %v5311
        %v5313 = vrot.slane %v5197, 2
        %v5314 = vrot.slane %v5198, 2
        %v5315 = vsel %vm949, %v5313, %v5314
        %v5316 = vrot.slane %v5199, 2
        %v5317 = vsel %vm949, %v5314, %v5316
        %v5318 = vrot.slane %v5200, 2
        %v5319 = vrot.slane %v5201, 2
        %v5320 = vsel %vm949, %v5318, %v5319
        %v5321 = vrot.slane %v5202, 2
        %v5322 = vsel %vm949, %v5319, %v5321
        %v5323 = vrot.slane %v5203, 2
        %v5324 = vrot.slane %v5204, 2
        %v5325 = vsel %vm949, %v5323, %v5324
        %v5326 = vrot.slane %v5205, 2
        %v5327 = vsel %vm949, %v5324, %v5326
        %v5328 = vrot.slane %v5206, 2
        %v5329 = vrot.slane %v5207, 2
        %v5330 = vsel %vm949, %v5328, %v5329
        %v5331 = vrot.slane %v5208, 2
        %v5332 = vsel %vm949, %v5329, %v5331
        %v5333 = vrot.slane %v5209, 2
        %v5334 = vrot.slane %v5210, 2
        %v5335 = vsel %vm949, %v5333, %v5334
        %v5336 = vrot.slane %v5211, 2
        %v5337 = vsel %vm949, %v5334, %v5336
        %v5338 = vrot.slane %v5212, 2
        %v5339 = vrot.slane %v5213, 2
        %v5340 = vsel %vm949, %v5338, %v5339
        %v5341 = vrot.slane %v5214, 2
        %v5342 = vsel %vm949, %v5339, %v5341
        %v5391 = vadd.f32 %v5118, %v5265
        %v5392 = vadd.f32 %v5119, %v5267
        %v5393 = vadd.f32 %v5120, %v5266
        %v5394 = vadd.f32 %v5121, %v5270
        %v5395 = vadd.f32 %v5122, %v5272
        %v5396 = vadd.f32 %v5123, %v5271
        %v5397 = vadd.f32 %v5124, %v5275
        %v5398 = vadd.f32 %v5125, %v5277
        %v5399 = vadd.f32 %v5126, %v5276
        %v5400 = vadd.f32 %v5127, %v5280
        %v5401 = vadd.f32 %v5128, %v5282
        %v5402 = vadd.f32 %v5129, %v5281
        %v5403 = vadd.f32 %v5130, %v5285
        %v5404 = vadd.f32 %v5131, %v5287
        %v5405 = vadd.f32 %v5132, %v5286
        %v5406 = vadd.f32 %v5133, %v5290
        %v5407 = vadd.f32 %v5134, %v5292
        %v5408 = vadd.f32 %v5135, %v5291
        %v5409 = vadd.f32 %v5136, %v5295
        %v5410 = vadd.f32 %v5137, %v5297
        %v5411 = vadd.f32 %v5138, %v5296
        %v5412 = vadd.f32 %v5139, %v5300
        %v5413 = vadd.f32 %v5140, %v5302
        %v5414 = vadd.f32 %v5141, %v5301
        %v5415 = vadd.f32 %v5142, %v5305
        %v5416 = vadd.f32 %v5143, %v5307
        %v5417 = vadd.f32 %v5144, %v5306
        %v5418 = vadd.f32 %v5145, %v5310
        %v5419 = vadd.f32 %v5146, %v5312
        %v5420 = vadd.f32 %v5147, %v5311
        %v5421 = vadd.f32 %v5148, %v5315
        %v5422 = vadd.f32 %v5149, %v5317
        %v5423 = vadd.f32 %v5150, %v5316
        %v5424 = vadd.f32 %v5151, %v5320
        %v5425 = vadd.f32 %v5152, %v5322
        %v5426 = vadd.f32 %v5153, %v5321
        %v5427 = vadd.f32 %v5154, %v5325
        %v5428 = vadd.f32 %v5155, %v5327
        %v5429 = vadd.f32 %v5156, %v5326
        %v5430 = vadd.f32 %v5157, %v5330
        %v5431 = vadd.f32 %v5158, %v5332
        %v5432 = vadd.f32 %v5159, %v5331
        %v5433 = vadd.f32 %v5160, %v5335
        %v5434 = vadd.f32 %v5161, %v5337
        %v5435 = vadd.f32 %v5162, %v5336
        %v5436 = vadd.f32 %v5163, %v5340
        %v5437 = vadd.f32 %v5164, %v5342
        %v5438 = vadd.f32 %v5165, %v5341
        %v5439 = vperm.slane %v355, 0
        %v5440 = vmul.f32 %v4683, %v5439
        %v5441 = vmul.f32 %v4684, %v5439
        %v5442 = vmul.f32 %v4685, %v5439
        %v5443 = vmul.f32 %v4686, %v5439
        %v5444 = vmul.f32 %v4687, %v5439
        %v5445 = vmul.f32 %v4688, %v5439
        %v5446 = vmul.f32 %v4689, %v5439
        %v5447 = vmul.f32 %v4690, %v5439
        %v5448 = vmul.f32 %v4691, %v5439
        %v5449 = vmul.f32 %v4692, %v5439
        %v5450 = vmul.f32 %v4693, %v5439
        %v5451 = vmul.f32 %v4694, %v5439
        %v5452 = vmul.f32 %v4695, %v5439
        %v5453 = vmul.f32 %v4696, %v5439
        %v5454 = vmul.f32 %v4697, %v5439
        %v5455 = vmul.f32 %v4698, %v5439
        %v5456 = vmul.f32 %v4699, %v5439
        %v5457 = vmul.f32 %v4700, %v5439
        %v5458 = vmul.f32 %v4701, %v5439
        %v5459 = vmul.f32 %v4702, %v5439
        %v5460 = vmul.f32 %v4703, %v5439
        %v5461 = vmul.f32 %v4704, %v5439
        %v5462 = vmul.f32 %v4705, %v5439
        %v5463 = vmul.f32 %v4706, %v5439
        %v5464 = vmul.f32 %v4707, %v5439
        %v5465 = vmul.f32 %v4708, %v5439
        %v5466 = vmul.f32 %v4709, %v5439
        %v5467 = vmul.f32 %v4710, %v5439
        %v5468 = vmul.f32 %v4711, %v5439
        %v5469 = vmul.f32 %v4712, %v5439
        %v5470 = vmul.f32 %v4713, %v5439
        %v5471 = vmul.f32 %v4714, %v5439
        %v5472 = vmul.f32 %v4715, %v5439
        %v5473 = vmul.f32 %v4716, %v5439
        %v5474 = vmul.f32 %v4717, %v5439
        %v5475 = vmul.f32 %v4718, %v5439
        %v5476 = vmul.f32 %v4719, %v5439
        %v5477 = vmul.f32 %v4720, %v5439
        %v5478 = vmul.f32 %v4721, %v5439
        %v5479 = vmul.f32 %v4722, %v5439
        %v5480 = vmul.f32 %v4723, %v5439
        %v5481 = vmul.f32 %v4724, %v5439
        %v5482 = vmul.f32 %v4725, %v5439
        %v5483 = vmul.f32 %v4726, %v5439
        %v5484 = vmul.f32 %v4727, %v5439
        %v5485 = vmul.f32 %v4728, %v5439
        %v5486 = vmul.f32 %v4729, %v5439
        %v5487 = vmul.f32 %v4730, %v5439
        %v5488 = vadd.f32 %v5391, %v5440
        %v5489 = vadd.f32 %v5392, %v5441
        %v5490 = vadd.f32 %v5393, %v5442
        %v5491 = vadd.f32 %v5394, %v5443
        %v5492 = vadd.f32 %v5395, %v5444
        %v5493 = vadd.f32 %v5396, %v5445
        %v5494 = vadd.f32 %v5397, %v5446
        %v5495 = vadd.f32 %v5398, %v5447
        %v5496 = vadd.f32 %v5399, %v5448
        %v5497 = vadd.f32 %v5400, %v5449
        %v5498 = vadd.f32 %v5401, %v5450
        %v5499 = vadd.f32 %v5402, %v5451
        %v5500 = vadd.f32 %v5403, %v5452
        %v5501 = vadd.f32 %v5404, %v5453
        %v5502 = vadd.f32 %v5405, %v5454
        %v5503 = vadd.f32 %v5406, %v5455
        %v5504 = vadd.f32 %v5407, %v5456
        %v5505 = vadd.f32 %v5408, %v5457
        %v5506 = vadd.f32 %v5409, %v5458
        %v5507 = vadd.f32 %v5410, %v5459
        %v5508 = vadd.f32 %v5411, %v5460
        %v5509 = vadd.f32 %v5412, %v5461
        %v5510 = vadd.f32 %v5413, %v5462
        %v5511 = vadd.f32 %v5414, %v5463
        %v5512 = vadd.f32 %v5415, %v5464
        %v5513 = vadd.f32 %v5416, %v5465
        %v5514 = vadd.f32 %v5417, %v5466
        %v5515 = vadd.f32 %v5418, %v5467
        %v5516 = vadd.f32 %v5419, %v5468
        %v5517 = vadd.f32 %v5420, %v5469
        %v5518 = vadd.f32 %v5421, %v5470
        %v5519 = vadd.f32 %v5422, %v5471
        %v5520 = vadd.f32 %v5423, %v5472
        %v5521 = vadd.f32 %v5424, %v5473
        %v5522 = vadd.f32 %v5425, %v5474
        %v5523 = vadd.f32 %v5426, %v5475
        %v5524 = vadd.f32 %v5427, %v5476
        %v5525 = vadd.f32 %v5428, %v5477
        %v5526 = vadd.f32 %v5429, %v5478
        %v5527 = vadd.f32 %v5430, %v5479
        %v5528 = vadd.f32 %v5431, %v5480
        %v5529 = vadd.f32 %v5432, %v5481
        %v5530 = vadd.f32 %v5433, %v5482
        %v5531 = vadd.f32 %v5434, %v5483
        %v5532 = vadd.f32 %v5435, %v5484
        %v5533 = vadd.f32 %v5436, %v5485
        %v5534 = vadd.f32 %v5437, %v5486
        %v5535 = vadd.f32 %v5438, %v5487
        %v5536 = vperm.slane %v355, 1
        %v5537 = vmul.f32 %v4683, %v5536
        %v5538 = vmul.f32 %v4684, %v5536
        %v5539 = vmul.f32 %v4685, %v5536
        %v5540 = vmul.f32 %v4686, %v5536
        %v5541 = vmul.f32 %v4687, %v5536
        %v5542 = vmul.f32 %v4688, %v5536
        %v5543 = vmul.f32 %v4689, %v5536
        %v5544 = vmul.f32 %v4690, %v5536
        %v5545 = vmul.f32 %v4691, %v5536
        %v5546 = vmul.f32 %v4692, %v5536
        %v5547 = vmul.f32 %v4693, %v5536
        %v5548 = vmul.f32 %v4694, %v5536
        %v5549 = vmul.f32 %v4695, %v5536
        %v5550 = vmul.f32 %v4696, %v5536
        %v5551 = vmul.f32 %v4697, %v5536
        %v5552 = vmul.f32 %v4698, %v5536
        %v5553 = vmul.f32 %v4699, %v5536
        %v5554 = vmul.f32 %v4700, %v5536
        %v5555 = vmul.f32 %v4701, %v5536
        %v5556 = vmul.f32 %v4702, %v5536
        %v5557 = vmul.f32 %v4703, %v5536
        %v5558 = vmul.f32 %v4704, %v5536
        %v5559 = vmul.f32 %v4705, %v5536
        %v5560 = vmul.f32 %v4706, %v5536
        %v5561 = vmul.f32 %v4707, %v5536
        %v5562 = vmul.f32 %v4708, %v5536
        %v5563 = vmul.f32 %v4709, %v5536
        %v5564 = vmul.f32 %v4710, %v5536
        %v5565 = vmul.f32 %v4711, %v5536
        %v5566 = vmul.f32 %v4712, %v5536
        %v5567 = vmul.f32 %v4713, %v5536
        %v5568 = vmul.f32 %v4714, %v5536
        %v5569 = vmul.f32 %v4715, %v5536
        %v5570 = vmul.f32 %v4716, %v5536
        %v5571 = vmul.f32 %v4717, %v5536
        %v5572 = vmul.f32 %v4718, %v5536
        %v5573 = vmul.f32 %v4719, %v5536
        %v5574 = vmul.f32 %v4720, %v5536
        %v5575 = vmul.f32 %v4721, %v5536
        %v5576 = vmul.f32 %v4722, %v5536
        %v5577 = vmul.f32 %v4723, %v5536
        %v5578 = vmul.f32 %v4724, %v5536
        %v5579 = vmul.f32 %v4725, %v5536
        %v5580 = vmul.f32 %v4726, %v5536
        %v5581 = vmul.f32 %v4727, %v5536
        %v5582 = vmul.f32 %v4728, %v5536
        %v5583 = vmul.f32 %v4729, %v5536
        %v5584 = vmul.f32 %v4730, %v5536
        %v5633 = vrot.slane %v5537, 1
        %v5634 = vrot.slane %v5538, 1
        %v5635 = vsel %vm675, %v5633, %v5634
        %v5636 = vrot.slane %v5539, 1
        %v5637 = vsel %vm675, %v5634, %v5636
        %v5638 = vrot.slane %v5540, 1
        %v5639 = vrot.slane %v5541, 1
        %v5640 = vsel %vm675, %v5638, %v5639
        %v5641 = vrot.slane %v5542, 1
        %v5642 = vsel %vm675, %v5639, %v5641
        %v5643 = vrot.slane %v5543, 1
        %v5644 = vrot.slane %v5544, 1
        %v5645 = vsel %vm675, %v5643, %v5644
        %v5646 = vrot.slane %v5545, 1
        %v5647 = vsel %vm675, %v5644, %v5646
        %v5648 = vrot.slane %v5546, 1
        %v5649 = vrot.slane %v5547, 1
        %v5650 = vsel %vm675, %v5648, %v5649
        %v5651 = vrot.slane %v5548, 1
        %v5652 = vsel %vm675, %v5649, %v5651
        %v5653 = vrot.slane %v5549, 1
        %v5654 = vrot.slane %v5550, 1
        %v5655 = vsel %vm675, %v5653, %v5654
        %v5656 = vrot.slane %v5551, 1
        %v5657 = vsel %vm675, %v5654, %v5656
        %v5658 = vrot.slane %v5552, 1
        %v5659 = vrot.slane %v5553, 1
        %v5660 = vsel %vm675, %v5658, %v5659
        %v5661 = vrot.slane %v5554, 1
        %v5662 = vsel %vm675, %v5659, %v5661
        %v5663 = vrot.slane %v5555, 1
        %v5664 = vrot.slane %v5556, 1
        %v5665 = vsel %vm675, %v5663, %v5664
        %v5666 = vrot.slane %v5557, 1
        %v5667 = vsel %vm675, %v5664, %v5666
        %v5668 = vrot.slane %v5558, 1
        %v5669 = vrot.slane %v5559, 1
        %v5670 = vsel %vm675, %v5668, %v5669
        %v5671 = vrot.slane %v5560, 1
        %v5672 = vsel %vm675, %v5669, %v5671
        %v5673 = vrot.slane %v5561, 1
        %v5674 = vrot.slane %v5562, 1
        %v5675 = vsel %vm675, %v5673, %v5674
        %v5676 = vrot.slane %v5563, 1
        %v5677 = vsel %vm675, %v5674, %v5676
        %v5678 = vrot.slane %v5564, 1
        %v5679 = vrot.slane %v5565, 1
        %v5680 = vsel %vm675, %v5678, %v5679
        %v5681 = vrot.slane %v5566, 1
        %v5682 = vsel %vm675, %v5679, %v5681
        %v5683 = vrot.slane %v5567, 1
        %v5684 = vrot.slane %v5568, 1
        %v5685 = vsel %vm675, %v5683, %v5684
        %v5686 = vrot.slane %v5569, 1
        %v5687 = vsel %vm675, %v5684, %v5686
        %v5688 = vrot.slane %v5570, 1
        %v5689 = vrot.slane %v5571, 1
        %v5690 = vsel %vm675, %v5688, %v5689
        %v5691 = vrot.slane %v5572, 1
        %v5692 = vsel %vm675, %v5689, %v5691
        %v5693 = vrot.slane %v5573, 1
        %v5694 = vrot.slane %v5574, 1
        %v5695 = vsel %vm675, %v5693, %v5694
        %v5696 = vrot.slane %v5575, 1
        %v5697 = vsel %vm675, %v5694, %v5696
        %v5698 = vrot.slane %v5576, 1
        %v5699 = vrot.slane %v5577, 1
        %v5700 = vsel %vm675, %v5698, %v5699
        %v5701 = vrot.slane %v5578, 1
        %v5702 = vsel %vm675, %v5699, %v5701
        %v5703 = vrot.slane %v5579, 1
        %v5704 = vrot.slane %v5580, 1
        %v5705 = vsel %vm675, %v5703, %v5704
        %v5706 = vrot.slane %v5581, 1
        %v5707 = vsel %vm675, %v5704, %v5706
        %v5708 = vrot.slane %v5582, 1
        %v5709 = vrot.slane %v5583, 1
        %v5710 = vsel %vm675, %v5708, %v5709
        %v5711 = vrot.slane %v5584, 1
        %v5712 = vsel %vm675, %v5709, %v5711
        %v5761 = vadd.f32 %v5488, %v5635
        %v5762 = vadd.f32 %v5489, %v5637
        %v5763 = vadd.f32 %v5490, %v5636
        %v5764 = vadd.f32 %v5491, %v5640
        %v5765 = vadd.f32 %v5492, %v5642
        %v5766 = vadd.f32 %v5493, %v5641
        %v5767 = vadd.f32 %v5494, %v5645
        %v5768 = vadd.f32 %v5495, %v5647
        %v5769 = vadd.f32 %v5496, %v5646
        %v5770 = vadd.f32 %v5497, %v5650
        %v5771 = vadd.f32 %v5498, %v5652
        %v5772 = vadd.f32 %v5499, %v5651
        %v5773 = vadd.f32 %v5500, %v5655
        %v5774 = vadd.f32 %v5501, %v5657
        %v5775 = vadd.f32 %v5502, %v5656
        %v5776 = vadd.f32 %v5503, %v5660
        %v5777 = vadd.f32 %v5504, %v5662
        %v5778 = vadd.f32 %v5505, %v5661
        %v5779 = vadd.f32 %v5506, %v5665
        %v5780 = vadd.f32 %v5507, %v5667
        %v5781 = vadd.f32 %v5508, %v5666
        %v5782 = vadd.f32 %v5509, %v5670
        %v5783 = vadd.f32 %v5510, %v5672
        %v5784 = vadd.f32 %v5511, %v5671
        %v5785 = vadd.f32 %v5512, %v5675
        %v5786 = vadd.f32 %v5513, %v5677
        %v5787 = vadd.f32 %v5514, %v5676
        %v5788 = vadd.f32 %v5515, %v5680
        %v5789 = vadd.f32 %v5516, %v5682
        %v5790 = vadd.f32 %v5517, %v5681
        %v5791 = vadd.f32 %v5518, %v5685
        %v5792 = vadd.f32 %v5519, %v5687
        %v5793 = vadd.f32 %v5520, %v5686
        %v5794 = vadd.f32 %v5521, %v5690
        %v5795 = vadd.f32 %v5522, %v5692
        %v5796 = vadd.f32 %v5523, %v5691
        %v5797 = vadd.f32 %v5524, %v5695
        %v5798 = vadd.f32 %v5525, %v5697
        %v5799 = vadd.f32 %v5526, %v5696
        %v5800 = vadd.f32 %v5527, %v5700
        %v5801 = vadd.f32 %v5528, %v5702
        %v5802 = vadd.f32 %v5529, %v5701
        %v5803 = vadd.f32 %v5530, %v5705
        %v5804 = vadd.f32 %v5531, %v5707
        %v5805 = vadd.f32 %v5532, %v5706
        %v5806 = vadd.f32 %v5533, %v5710
        %v5807 = vadd.f32 %v5534, %v5712
        %v5808 = vadd.f32 %v5535, %v5711
        %v5809 = vperm.slane %v355, 2
        %v5810 = vmul.f32 %v4683, %v5809
        %v5811 = vmul.f32 %v4684, %v5809
        %v5812 = vmul.f32 %v4685, %v5809
        %v5813 = vmul.f32 %v4686, %v5809
        %v5814 = vmul.f32 %v4687, %v5809
        %v5815 = vmul.f32 %v4688, %v5809
        %v5816 = vmul.f32 %v4689, %v5809
        %v5817 = vmul.f32 %v4690, %v5809
        %v5818 = vmul.f32 %v4691, %v5809
        %v5819 = vmul.f32 %v4692, %v5809
        %v5820 = vmul.f32 %v4693, %v5809
        %v5821 = vmul.f32 %v4694, %v5809
        %v5822 = vmul.f32 %v4695, %v5809
        %v5823 = vmul.f32 %v4696, %v5809
        %v5824 = vmul.f32 %v4697, %v5809
        %v5825 = vmul.f32 %v4698, %v5809
        %v5826 = vmul.f32 %v4699, %v5809
        %v5827 = vmul.f32 %v4700, %v5809
        %v5828 = vmul.f32 %v4701, %v5809
        %v5829 = vmul.f32 %v4702, %v5809
        %v5830 = vmul.f32 %v4703, %v5809
        %v5831 = vmul.f32 %v4704, %v5809
        %v5832 = vmul.f32 %v4705, %v5809
        %v5833 = vmul.f32 %v4706, %v5809
        %v5834 = vmul.f32 %v4707, %v5809
        %v5835 = vmul.f32 %v4708, %v5809
        %v5836 = vmul.f32 %v4709, %v5809
        %v5837 = vmul.f32 %v4710, %v5809
        %v5838 = vmul.f32 %v4711, %v5809
        %v5839 = vmul.f32 %v4712, %v5809
        %v5840 = vmul.f32 %v4713, %v5809
        %v5841 = vmul.f32 %v4714, %v5809
        %v5842 = vmul.f32 %v4715, %v5809
        %v5843 = vmul.f32 %v4716, %v5809
        %v5844 = vmul.f32 %v4717, %v5809
        %v5845 = vmul.f32 %v4718, %v5809
        %v5846 = vmul.f32 %v4719, %v5809
        %v5847 = vmul.f32 %v4720, %v5809
        %v5848 = vmul.f32 %v4721, %v5809
        %v5849 = vmul.f32 %v4722, %v5809
        %v5850 = vmul.f32 %v4723, %v5809
        %v5851 = vmul.f32 %v4724, %v5809
        %v5852 = vmul.f32 %v4725, %v5809
        %v5853 = vmul.f32 %v4726, %v5809
        %v5854 = vmul.f32 %v4727, %v5809
        %v5855 = vmul.f32 %v4728, %v5809
        %v5856 = vmul.f32 %v4729, %v5809
        %v5857 = vmul.f32 %v4730, %v5809
        %v5906 = vrot.slane %v5810, 2
        %v5907 = vrot.slane %v5811, 2
        %v5908 = vsel %vm949, %v5906, %v5907
        %v5909 = vrot.slane %v5812, 2
        %v5910 = vsel %vm949, %v5907, %v5909
        %v5911 = vrot.slane %v5813, 2
        %v5912 = vrot.slane %v5814, 2
        %v5913 = vsel %vm949, %v5911, %v5912
        %v5914 = vrot.slane %v5815, 2
        %v5915 = vsel %vm949, %v5912, %v5914
        %v5916 = vrot.slane %v5816, 2
        %v5917 = vrot.slane %v5817, 2
        %v5918 = vsel %vm949, %v5916, %v5917
        %v5919 = vrot.slane %v5818, 2
        %v5920 = vsel %vm949, %v5917, %v5919
        %v5921 = vrot.slane %v5819, 2
        %v5922 = vrot.slane %v5820, 2
        %v5923 = vsel %vm949, %v5921, %v5922
        %v5924 = vrot.slane %v5821, 2
        %v5925 = vsel %vm949, %v5922, %v5924
        %v5926 = vrot.slane %v5822, 2
        %v5927 = vrot.slane %v5823, 2
        %v5928 = vsel %vm949, %v5926, %v5927
        %v5929 = vrot.slane %v5824, 2
        %v5930 = vsel %vm949, %v5927, %v5929
        %v5931 = vrot.slane %v5825, 2
        %v5932 = vrot.slane %v5826, 2
        %v5933 = vsel %vm949, %v5931, %v5932
        %v5934 = vrot.slane %v5827, 2
        %v5935 = vsel %vm949, %v5932, %v5934
        %v5936 = vrot.slane %v5828, 2
        %v5937 = vrot.slane %v5829, 2
        %v5938 = vsel %vm949, %v5936, %v5937
        %v5939 = vrot.slane %v5830, 2
        %v5940 = vsel %vm949, %v5937, %v5939
        %v5941 = vrot.slane %v5831, 2
        %v5942 = vrot.slane %v5832, 2
        %v5943 = vsel %vm949, %v5941, %v5942
        %v5944 = vrot.slane %v5833, 2
        %v5945 = vsel %vm949, %v5942, %v5944
        %v5946 = vrot.slane %v5834, 2
        %v5947 = vrot.slane %v5835, 2
        %v5948 = vsel %vm949, %v5946, %v5947
        %v5949 = vrot.slane %v5836, 2
        %v5950 = vsel %vm949, %v5947, %v5949
        %v5951 = vrot.slane %v5837, 2
        %v5952 = vrot.slane %v5838, 2
        %v5953 = vsel %vm949, %v5951, %v5952
        %v5954 = vrot.slane %v5839, 2
        %v5955 = vsel %vm949, %v5952, %v5954
        %v5956 = vrot.slane %v5840, 2
        %v5957 = vrot.slane %v5841, 2
        %v5958 = vsel %vm949, %v5956, %v5957
        %v5959 = vrot.slane %v5842, 2
        %v5960 = vsel %vm949, %v5957, %v5959
        %v5961 = vrot.slane %v5843, 2
        %v5962 = vrot.slane %v5844, 2
        %v5963 = vsel %vm949, %v5961, %v5962
        %v5964 = vrot.slane %v5845, 2
        %v5965 = vsel %vm949, %v5962, %v5964
        %v5966 = vrot.slane %v5846, 2
        %v5967 = vrot.slane %v5847, 2
        %v5968 = vsel %vm949, %v5966, %v5967
        %v5969 = vrot.slane %v5848, 2
        %v5970 = vsel %vm949, %v5967, %v5969
        %v5971 = vrot.slane %v5849, 2
        %v5972 = vrot.slane %v5850, 2
        %v5973 = vsel %vm949, %v5971, %v5972
        %v5974 = vrot.slane %v5851, 2
        %v5975 = vsel %vm949, %v5972, %v5974
        %v5976 = vrot.slane %v5852, 2
        %v5977 = vrot.slane %v5853, 2
        %v5978 = vsel %vm949, %v5976, %v5977
        %v5979 = vrot.slane %v5854, 2
        %v5980 = vsel %vm949, %v5977, %v5979
        %v5981 = vrot.slane %v5855, 2
        %v5982 = vrot.slane %v5856, 2
        %v5983 = vsel %vm949, %v5981, %v5982
        %v5984 = vrot.slane %v5857, 2
        %v5985 = vsel %vm949, %v5982, %v5984
        %v6034 = vadd.f32 %v5761, %v5908
        %v6035 = vadd.f32 %v5762, %v5910
        %v6036 = vadd.f32 %v5763, %v5909
        %v6037 = vadd.f32 %v5764, %v5913
        %v6038 = vadd.f32 %v5765, %v5915
        %v6039 = vadd.f32 %v5766, %v5914
        %v6040 = vadd.f32 %v5767, %v5918
        %v6041 = vadd.f32 %v5768, %v5920
        %v6042 = vadd.f32 %v5769, %v5919
        %v6043 = vadd.f32 %v5770, %v5923
        %v6044 = vadd.f32 %v5771, %v5925
        %v6045 = vadd.f32 %v5772, %v5924
        %v6046 = vadd.f32 %v5773, %v5928
        %v6047 = vadd.f32 %v5774, %v5930
        %v6048 = vadd.f32 %v5775, %v5929
        %v6049 = vadd.f32 %v5776, %v5933
        %v6050 = vadd.f32 %v5777, %v5935
        %v6051 = vadd.f32 %v5778, %v5934
        %v6052 = vadd.f32 %v5779, %v5938
        %v6053 = vadd.f32 %v5780, %v5940
        %v6054 = vadd.f32 %v5781, %v5939
        %v6055 = vadd.f32 %v5782, %v5943
        %v6056 = vadd.f32 %v5783, %v5945
        %v6057 = vadd.f32 %v5784, %v5944
        %v6058 = vadd.f32 %v5785, %v5948
        %v6059 = vadd.f32 %v5786, %v5950
        %v6060 = vadd.f32 %v5787, %v5949
        %v6061 = vadd.f32 %v5788, %v5953
        %v6062 = vadd.f32 %v5789, %v5955
        %v6063 = vadd.f32 %v5790, %v5954
        %v6064 = vadd.f32 %v5791, %v5958
        %v6065 = vadd.f32 %v5792, %v5960
        %v6066 = vadd.f32 %v5793, %v5959
        %v6067 = vadd.f32 %v5794, %v5963
        %v6068 = vadd.f32 %v5795, %v5965
        %v6069 = vadd.f32 %v5796, %v5964
        %v6070 = vadd.f32 %v5797, %v5968
        %v6071 = vadd.f32 %v5798, %v5970
        %v6072 = vadd.f32 %v5799, %v5969
        %v6073 = vadd.f32 %v5800, %v5973
        %v6074 = vadd.f32 %v5801, %v5975
        %v6075 = vadd.f32 %v5802, %v5974
        %v6076 = vadd.f32 %v5803, %v5978
        %v6077 = vadd.f32 %v5804, %v5980
        %v6078 = vadd.f32 %v5805, %v5979
        %v6079 = vadd.f32 %v5806, %v5983
        %v6080 = vadd.f32 %v5807, %v5985
        %v6081 = vadd.f32 %v5808, %v5984
        %v6082 = vperm.slane %v356, 0
        %v6083 = vmul.f32 %v4686, %v6082
        %v6084 = vmul.f32 %v4687, %v6082
        %v6085 = vmul.f32 %v4688, %v6082
        %v6086 = vmul.f32 %v4689, %v6082
        %v6087 = vmul.f32 %v4690, %v6082
        %v6088 = vmul.f32 %v4691, %v6082
        %v6089 = vmul.f32 %v4692, %v6082
        %v6090 = vmul.f32 %v4693, %v6082
        %v6091 = vmul.f32 %v4694, %v6082
        %v6092 = vmul.f32 %v4695, %v6082
        %v6093 = vmul.f32 %v4696, %v6082
        %v6094 = vmul.f32 %v4697, %v6082
        %v6095 = vmul.f32 %v4698, %v6082
        %v6096 = vmul.f32 %v4699, %v6082
        %v6097 = vmul.f32 %v4700, %v6082
        %v6098 = vmul.f32 %v4701, %v6082
        %v6099 = vmul.f32 %v4702, %v6082
        %v6100 = vmul.f32 %v4703, %v6082
        %v6101 = vmul.f32 %v4704, %v6082
        %v6102 = vmul.f32 %v4705, %v6082
        %v6103 = vmul.f32 %v4706, %v6082
        %v6104 = vmul.f32 %v4707, %v6082
        %v6105 = vmul.f32 %v4708, %v6082
        %v6106 = vmul.f32 %v4709, %v6082
        %v6107 = vmul.f32 %v4710, %v6082
        %v6108 = vmul.f32 %v4711, %v6082
        %v6109 = vmul.f32 %v4712, %v6082
        %v6110 = vmul.f32 %v4713, %v6082
        %v6111 = vmul.f32 %v4714, %v6082
        %v6112 = vmul.f32 %v4715, %v6082
        %v6113 = vmul.f32 %v4716, %v6082
        %v6114 = vmul.f32 %v4717, %v6082
        %v6115 = vmul.f32 %v4718, %v6082
        %v6116 = vmul.f32 %v4719, %v6082
        %v6117 = vmul.f32 %v4720, %v6082
        %v6118 = vmul.f32 %v4721, %v6082
        %v6119 = vmul.f32 %v4722, %v6082
        %v6120 = vmul.f32 %v4723, %v6082
        %v6121 = vmul.f32 %v4724, %v6082
        %v6122 = vmul.f32 %v4725, %v6082
        %v6123 = vmul.f32 %v4726, %v6082
        %v6124 = vmul.f32 %v4727, %v6082
        %v6125 = vmul.f32 %v4728, %v6082
        %v6126 = vmul.f32 %v4729, %v6082
        %v6127 = vmul.f32 %v4730, %v6082
        %v6128 = vmul.f32 %v4731, %v6082
        %v6129 = vmul.f32 %v4732, %v6082
        %v6130 = vmul.f32 %v4733, %v6082
        %v6131 = vadd.f32 %v6034, %v6083
        %v6132 = vadd.f32 %v6035, %v6084
        %v6133 = vadd.f32 %v6036, %v6085
        %v6134 = vadd.f32 %v6037, %v6086
        %v6135 = vadd.f32 %v6038, %v6087
        %v6136 = vadd.f32 %v6039, %v6088
        %v6137 = vadd.f32 %v6040, %v6089
        %v6138 = vadd.f32 %v6041, %v6090
        %v6139 = vadd.f32 %v6042, %v6091
        %v6140 = vadd.f32 %v6043, %v6092
        %v6141 = vadd.f32 %v6044, %v6093
        %v6142 = vadd.f32 %v6045, %v6094
        %v6143 = vadd.f32 %v6046, %v6095
        %v6144 = vadd.f32 %v6047, %v6096
        %v6145 = vadd.f32 %v6048, %v6097
        %v6146 = vadd.f32 %v6049, %v6098
        %v6147 = vadd.f32 %v6050, %v6099
        %v6148 = vadd.f32 %v6051, %v6100
        %v6149 = vadd.f32 %v6052, %v6101
        %v6150 = vadd.f32 %v6053, %v6102
        %v6151 = vadd.f32 %v6054, %v6103
        %v6152 = vadd.f32 %v6055, %v6104
        %v6153 = vadd.f32 %v6056, %v6105
        %v6154 = vadd.f32 %v6057, %v6106
        %v6155 = vadd.f32 %v6058, %v6107
        %v6156 = vadd.f32 %v6059, %v6108
        %v6157 = vadd.f32 %v6060, %v6109
        %v6158 = vadd.f32 %v6061, %v6110
        %v6159 = vadd.f32 %v6062, %v6111
        %v6160 = vadd.f32 %v6063, %v6112
        %v6161 = vadd.f32 %v6064, %v6113
        %v6162 = vadd.f32 %v6065, %v6114
        %v6163 = vadd.f32 %v6066, %v6115
        %v6164 = vadd.f32 %v6067, %v6116
        %v6165 = vadd.f32 %v6068, %v6117
        %v6166 = vadd.f32 %v6069, %v6118
        %v6167 = vadd.f32 %v6070, %v6119
        %v6168 = vadd.f32 %v6071, %v6120
        %v6169 = vadd.f32 %v6072, %v6121
        %v6170 = vadd.f32 %v6073, %v6122
        %v6171 = vadd.f32 %v6074, %v6123
        %v6172 = vadd.f32 %v6075, %v6124
        %v6173 = vadd.f32 %v6076, %v6125
        %v6174 = vadd.f32 %v6077, %v6126
        %v6175 = vadd.f32 %v6078, %v6127
        %v6176 = vadd.f32 %v6079, %v6128
        %v6177 = vadd.f32 %v6080, %v6129
        %v6178 = vadd.f32 %v6081, %v6130
        %v6179 = vperm.slane %v356, 1
        %v6180 = vmul.f32 %v4686, %v6179
        %v6181 = vmul.f32 %v4687, %v6179
        %v6182 = vmul.f32 %v4688, %v6179
        %v6183 = vmul.f32 %v4689, %v6179
        %v6184 = vmul.f32 %v4690, %v6179
        %v6185 = vmul.f32 %v4691, %v6179
        %v6186 = vmul.f32 %v4692, %v6179
        %v6187 = vmul.f32 %v4693, %v6179
        %v6188 = vmul.f32 %v4694, %v6179
        %v6189 = vmul.f32 %v4695, %v6179
        %v6190 = vmul.f32 %v4696, %v6179
        %v6191 = vmul.f32 %v4697, %v6179
        %v6192 = vmul.f32 %v4698, %v6179
        %v6193 = vmul.f32 %v4699, %v6179
        %v6194 = vmul.f32 %v4700, %v6179
        %v6195 = vmul.f32 %v4701, %v6179
        %v6196 = vmul.f32 %v4702, %v6179
        %v6197 = vmul.f32 %v4703, %v6179
        %v6198 = vmul.f32 %v4704, %v6179
        %v6199 = vmul.f32 %v4705, %v6179
        %v6200 = vmul.f32 %v4706, %v6179
        %v6201 = vmul.f32 %v4707, %v6179
        %v6202 = vmul.f32 %v4708, %v6179
        %v6203 = vmul.f32 %v4709, %v6179
        %v6204 = vmul.f32 %v4710, %v6179
        %v6205 = vmul.f32 %v4711, %v6179
        %v6206 = vmul.f32 %v4712, %v6179
        %v6207 = vmul.f32 %v4713, %v6179
        %v6208 = vmul.f32 %v4714, %v6179
        %v6209 = vmul.f32 %v4715, %v6179
        %v6210 = vmul.f32 %v4716, %v6179
        %v6211 = vmul.f32 %v4717, %v6179
        %v6212 = vmul.f32 %v4718, %v6179
        %v6213 = vmul.f32 %v4719, %v6179
        %v6214 = vmul.f32 %v4720, %v6179
        %v6215 = vmul.f32 %v4721, %v6179
        %v6216 = vmul.f32 %v4722, %v6179
        %v6217 = vmul.f32 %v4723, %v6179
        %v6218 = vmul.f32 %v4724, %v6179
        %v6219 = vmul.f32 %v4725, %v6179
        %v6220 = vmul.f32 %v4726, %v6179
        %v6221 = vmul.f32 %v4727, %v6179
        %v6222 = vmul.f32 %v4728, %v6179
        %v6223 = vmul.f32 %v4729, %v6179
        %v6224 = vmul.f32 %v4730, %v6179
        %v6225 = vmul.f32 %v4731, %v6179
        %v6226 = vmul.f32 %v4732, %v6179
        %v6227 = vmul.f32 %v4733, %v6179
        %v6276 = vrot.slane %v6180, 1
        %v6277 = vrot.slane %v6181, 1
        %v6278 = vsel %vm675, %v6276, %v6277
        %v6279 = vrot.slane %v6182, 1
        %v6280 = vsel %vm675, %v6277, %v6279
        %v6281 = vrot.slane %v6183, 1
        %v6282 = vrot.slane %v6184, 1
        %v6283 = vsel %vm675, %v6281, %v6282
        %v6284 = vrot.slane %v6185, 1
        %v6285 = vsel %vm675, %v6282, %v6284
        %v6286 = vrot.slane %v6186, 1
        %v6287 = vrot.slane %v6187, 1
        %v6288 = vsel %vm675, %v6286, %v6287
        %v6289 = vrot.slane %v6188, 1
        %v6290 = vsel %vm675, %v6287, %v6289
        %v6291 = vrot.slane %v6189, 1
        %v6292 = vrot.slane %v6190, 1
        %v6293 = vsel %vm675, %v6291, %v6292
        %v6294 = vrot.slane %v6191, 1
        %v6295 = vsel %vm675, %v6292, %v6294
        %v6296 = vrot.slane %v6192, 1
        %v6297 = vrot.slane %v6193, 1
        %v6298 = vsel %vm675, %v6296, %v6297
        %v6299 = vrot.slane %v6194, 1
        %v6300 = vsel %vm675, %v6297, %v6299
        %v6301 = vrot.slane %v6195, 1
        %v6302 = vrot.slane %v6196, 1
        %v6303 = vsel %vm675, %v6301, %v6302
        %v6304 = vrot.slane %v6197, 1
        %v6305 = vsel %vm675, %v6302, %v6304
        %v6306 = vrot.slane %v6198, 1
        %v6307 = vrot.slane %v6199, 1
        %v6308 = vsel %vm675, %v6306, %v6307
        %v6309 = vrot.slane %v6200, 1
        %v6310 = vsel %vm675, %v6307, %v6309
        %v6311 = vrot.slane %v6201, 1
        %v6312 = vrot.slane %v6202, 1
        %v6313 = vsel %vm675, %v6311, %v6312
        %v6314 = vrot.slane %v6203, 1
        %v6315 = vsel %vm675, %v6312, %v6314
        %v6316 = vrot.slane %v6204, 1
        %v6317 = vrot.slane %v6205, 1
        %v6318 = vsel %vm675, %v6316, %v6317
        %v6319 = vrot.slane %v6206, 1
        %v6320 = vsel %vm675, %v6317, %v6319
        %v6321 = vrot.slane %v6207, 1
        %v6322 = vrot.slane %v6208, 1
        %v6323 = vsel %vm675, %v6321, %v6322
        %v6324 = vrot.slane %v6209, 1
        %v6325 = vsel %vm675, %v6322, %v6324
        %v6326 = vrot.slane %v6210, 1
        %v6327 = vrot.slane %v6211, 1
        %v6328 = vsel %vm675, %v6326, %v6327
        %v6329 = vrot.slane %v6212, 1
        %v6330 = vsel %vm675, %v6327, %v6329
        %v6331 = vrot.slane %v6213, 1
        %v6332 = vrot.slane %v6214, 1
        %v6333 = vsel %vm675, %v6331, %v6332
        %v6334 = vrot.slane %v6215, 1
        %v6335 = vsel %vm675, %v6332, %v6334
        %v6336 = vrot.slane %v6216, 1
        %v6337 = vrot.slane %v6217, 1
        %v6338 = vsel %vm675, %v6336, %v6337
        %v6339 = vrot.slane %v6218, 1
        %v6340 = vsel %vm675, %v6337, %v6339
        %v6341 = vrot.slane %v6219, 1
        %v6342 = vrot.slane %v6220, 1
        %v6343 = vsel %vm675, %v6341, %v6342
        %v6344 = vrot.slane %v6221, 1
        %v6345 = vsel %vm675, %v6342, %v6344
        %v6346 = vrot.slane %v6222, 1
        %v6347 = vrot.slane %v6223, 1
        %v6348 = vsel %vm675, %v6346, %v6347
        %v6349 = vrot.slane %v6224, 1
        %v6350 = vsel %vm675, %v6347, %v6349
        %v6351 = vrot.slane %v6225, 1
        %v6352 = vrot.slane %v6226, 1
        %v6353 = vsel %vm675, %v6351, %v6352
        %v6354 = vrot.slane %v6227, 1
        %v6355 = vsel %vm675, %v6352, %v6354
        %v6404 = vadd.f32 %v6131, %v6278
        %v6405 = vadd.f32 %v6132, %v6280
        %v6406 = vadd.f32 %v6133, %v6279
        %v6407 = vadd.f32 %v6134, %v6283
        %v6408 = vadd.f32 %v6135, %v6285
        %v6409 = vadd.f32 %v6136, %v6284
        %v6410 = vadd.f32 %v6137, %v6288
        %v6411 = vadd.f32 %v6138, %v6290
        %v6412 = vadd.f32 %v6139, %v6289
        %v6413 = vadd.f32 %v6140, %v6293
        %v6414 = vadd.f32 %v6141, %v6295
        %v6415 = vadd.f32 %v6142, %v6294
        %v6416 = vadd.f32 %v6143, %v6298
        %v6417 = vadd.f32 %v6144, %v6300
        %v6418 = vadd.f32 %v6145, %v6299
        %v6419 = vadd.f32 %v6146, %v6303
        %v6420 = vadd.f32 %v6147, %v6305
        %v6421 = vadd.f32 %v6148, %v6304
        %v6422 = vadd.f32 %v6149, %v6308
        %v6423 = vadd.f32 %v6150, %v6310
        %v6424 = vadd.f32 %v6151, %v6309
        %v6425 = vadd.f32 %v6152, %v6313
        %v6426 = vadd.f32 %v6153, %v6315
        %v6427 = vadd.f32 %v6154, %v6314
        %v6428 = vadd.f32 %v6155, %v6318
        %v6429 = vadd.f32 %v6156, %v6320
        %v6430 = vadd.f32 %v6157, %v6319
        %v6431 = vadd.f32 %v6158, %v6323
        %v6432 = vadd.f32 %v6159, %v6325
        %v6433 = vadd.f32 %v6160, %v6324
        %v6434 = vadd.f32 %v6161, %v6328
        %v6435 = vadd.f32 %v6162, %v6330
        %v6436 = vadd.f32 %v6163, %v6329
        %v6437 = vadd.f32 %v6164, %v6333
        %v6438 = vadd.f32 %v6165, %v6335
        %v6439 = vadd.f32 %v6166, %v6334
        %v6440 = vadd.f32 %v6167, %v6338
        %v6441 = vadd.f32 %v6168, %v6340
        %v6442 = vadd.f32 %v6169, %v6339
        %v6443 = vadd.f32 %v6170, %v6343
        %v6444 = vadd.f32 %v6171, %v6345
        %v6445 = vadd.f32 %v6172, %v6344
        %v6446 = vadd.f32 %v6173, %v6348
        %v6447 = vadd.f32 %v6174, %v6350
        %v6448 = vadd.f32 %v6175, %v6349
        %v6449 = vadd.f32 %v6176, %v6353
        %v6450 = vadd.f32 %v6177, %v6355
        %v6451 = vadd.f32 %v6178, %v6354
        %v6452 = vperm.slane %v356, 2
        %v6453 = vmul.f32 %v4686, %v6452
        %v6454 = vmul.f32 %v4687, %v6452
        %v6455 = vmul.f32 %v4688, %v6452
        %v6456 = vmul.f32 %v4689, %v6452
        %v6457 = vmul.f32 %v4690, %v6452
        %v6458 = vmul.f32 %v4691, %v6452
        %v6459 = vmul.f32 %v4692, %v6452
        %v6460 = vmul.f32 %v4693, %v6452
        %v6461 = vmul.f32 %v4694, %v6452
        %v6462 = vmul.f32 %v4695, %v6452
        %v6463 = vmul.f32 %v4696, %v6452
        %v6464 = vmul.f32 %v4697, %v6452
        %v6465 = vmul.f32 %v4698, %v6452
        %v6466 = vmul.f32 %v4699, %v6452
        %v6467 = vmul.f32 %v4700, %v6452
        %v6468 = vmul.f32 %v4701, %v6452
        %v6469 = vmul.f32 %v4702, %v6452
        %v6470 = vmul.f32 %v4703, %v6452
        %v6471 = vmul.f32 %v4704, %v6452
        %v6472 = vmul.f32 %v4705, %v6452
        %v6473 = vmul.f32 %v4706, %v6452
        %v6474 = vmul.f32 %v4707, %v6452
        %v6475 = vmul.f32 %v4708, %v6452
        %v6476 = vmul.f32 %v4709, %v6452
        %v6477 = vmul.f32 %v4710, %v6452
        %v6478 = vmul.f32 %v4711, %v6452
        %v6479 = vmul.f32 %v4712, %v6452
        %v6480 = vmul.f32 %v4713, %v6452
        %v6481 = vmul.f32 %v4714, %v6452
        %v6482 = vmul.f32 %v4715, %v6452
        %v6483 = vmul.f32 %v4716, %v6452
        %v6484 = vmul.f32 %v4717, %v6452
        %v6485 = vmul.f32 %v4718, %v6452
        %v6486 = vmul.f32 %v4719, %v6452
        %v6487 = vmul.f32 %v4720, %v6452
        %v6488 = vmul.f32 %v4721, %v6452
        %v6489 = vmul.f32 %v4722, %v6452
        %v6490 = vmul.f32 %v4723, %v6452
        %v6491 = vmul.f32 %v4724, %v6452
        %v6492 = vmul.f32 %v4725, %v6452
        %v6493 = vmul.f32 %v4726, %v6452
        %v6494 = vmul.f32 %v4727, %v6452
        %v6495 = vmul.f32 %v4728, %v6452
        %v6496 = vmul.f32 %v4729, %v6452
        %v6497 = vmul.f32 %v4730, %v6452
        %v6498 = vmul.f32 %v4731, %v6452
        %v6499 = vmul.f32 %v4732, %v6452
        %v6500 = vmul.f32 %v4733, %v6452
        %v6549 = vrot.slane %v6453, 2
        %v6550 = vrot.slane %v6454, 2
        %v6551 = vsel %vm949, %v6549, %v6550
        %v6552 = vrot.slane %v6455, 2
        %v6553 = vsel %vm949, %v6550, %v6552
        %v6554 = vrot.slane %v6456, 2
        %v6555 = vrot.slane %v6457, 2
        %v6556 = vsel %vm949, %v6554, %v6555
        %v6557 = vrot.slane %v6458, 2
        %v6558 = vsel %vm949, %v6555, %v6557
        %v6559 = vrot.slane %v6459, 2
        %v6560 = vrot.slane %v6460, 2
        %v6561 = vsel %vm949, %v6559, %v6560
        %v6562 = vrot.slane %v6461, 2
        %v6563 = vsel %vm949, %v6560, %v6562
        %v6564 = vrot.slane %v6462, 2
        %v6565 = vrot.slane %v6463, 2
        %v6566 = vsel %vm949, %v6564, %v6565
        %v6567 = vrot.slane %v6464, 2
        %v6568 = vsel %vm949, %v6565, %v6567
        %v6569 = vrot.slane %v6465, 2
        %v6570 = vrot.slane %v6466, 2
        %v6571 = vsel %vm949, %v6569, %v6570
        %v6572 = vrot.slane %v6467, 2
        %v6573 = vsel %vm949, %v6570, %v6572
        %v6574 = vrot.slane %v6468, 2
        %v6575 = vrot.slane %v6469, 2
        %v6576 = vsel %vm949, %v6574, %v6575
        %v6577 = vrot.slane %v6470, 2
        %v6578 = vsel %vm949, %v6575, %v6577
        %v6579 = vrot.slane %v6471, 2
        %v6580 = vrot.slane %v6472, 2
        %v6581 = vsel %vm949, %v6579, %v6580
        %v6582 = vrot.slane %v6473, 2
        %v6583 = vsel %vm949, %v6580, %v6582
        %v6584 = vrot.slane %v6474, 2
        %v6585 = vrot.slane %v6475, 2
        %v6586 = vsel %vm949, %v6584, %v6585
        %v6587 = vrot.slane %v6476, 2
        %v6588 = vsel %vm949, %v6585, %v6587
        %v6589 = vrot.slane %v6477, 2
        %v6590 = vrot.slane %v6478, 2
        %v6591 = vsel %vm949, %v6589, %v6590
        %v6592 = vrot.slane %v6479, 2
        %v6593 = vsel %vm949, %v6590, %v6592
        %v6594 = vrot.slane %v6480, 2
        %v6595 = vrot.slane %v6481, 2
        %v6596 = vsel %vm949, %v6594, %v6595
        %v6597 = vrot.slane %v6482, 2
        %v6598 = vsel %vm949, %v6595, %v6597
        %v6599 = vrot.slane %v6483, 2
        %v6600 = vrot.slane %v6484, 2
        %v6601 = vsel %vm949, %v6599, %v6600
        %v6602 = vrot.slane %v6485, 2
        %v6603 = vsel %vm949, %v6600, %v6602
        %v6604 = vrot.slane %v6486, 2
        %v6605 = vrot.slane %v6487, 2
        %v6606 = vsel %vm949, %v6604, %v6605
        %v6607 = vrot.slane %v6488, 2
        %v6608 = vsel %vm949, %v6605, %v6607
        %v6609 = vrot.slane %v6489, 2
        %v6610 = vrot.slane %v6490, 2
        %v6611 = vsel %vm949, %v6609, %v6610
        %v6612 = vrot.slane %v6491, 2
        %v6613 = vsel %vm949, %v6610, %v6612
        %v6614 = vrot.slane %v6492, 2
        %v6615 = vrot.slane %v6493, 2
        %v6616 = vsel %vm949, %v6614, %v6615
        %v6617 = vrot.slane %v6494, 2
        %v6618 = vsel %vm949, %v6615, %v6617
        %v6619 = vrot.slane %v6495, 2
        %v6620 = vrot.slane %v6496, 2
        %v6621 = vsel %vm949, %v6619, %v6620
        %v6622 = vrot.slane %v6497, 2
        %v6623 = vsel %vm949, %v6620, %v6622
        %v6624 = vrot.slane %v6498, 2
        %v6625 = vrot.slane %v6499, 2
        %v6626 = vsel %vm949, %v6624, %v6625
        %v6627 = vrot.slane %v6500, 2
        %v6628 = vsel %vm949, %v6625, %v6627
        %v6677 = vadd.f32 %v6404, %v6551
        %v6678 = vadd.f32 %v6405, %v6553
        %v6679 = vadd.f32 %v6406, %v6552
        %v6680 = vadd.f32 %v6407, %v6556
        %v6681 = vadd.f32 %v6408, %v6558
        %v6682 = vadd.f32 %v6409, %v6557
        %v6683 = vadd.f32 %v6410, %v6561
        %v6684 = vadd.f32 %v6411, %v6563
        %v6685 = vadd.f32 %v6412, %v6562
        %v6686 = vadd.f32 %v6413, %v6566
        %v6687 = vadd.f32 %v6414, %v6568
        %v6688 = vadd.f32 %v6415, %v6567
        %v6689 = vadd.f32 %v6416, %v6571
        %v6690 = vadd.f32 %v6417, %v6573
        %v6691 = vadd.f32 %v6418, %v6572
        %v6692 = vadd.f32 %v6419, %v6576
        %v6693 = vadd.f32 %v6420, %v6578
        %v6694 = vadd.f32 %v6421, %v6577
        %v6695 = vadd.f32 %v6422, %v6581
        %v6696 = vadd.f32 %v6423, %v6583
        %v6697 = vadd.f32 %v6424, %v6582
        %v6698 = vadd.f32 %v6425, %v6586
        %v6699 = vadd.f32 %v6426, %v6588
        %v6700 = vadd.f32 %v6427, %v6587
        %v6701 = vadd.f32 %v6428, %v6591
        %v6702 = vadd.f32 %v6429, %v6593
        %v6703 = vadd.f32 %v6430, %v6592
        %v6704 = vadd.f32 %v6431, %v6596
        %v6705 = vadd.f32 %v6432, %v6598
        %v6706 = vadd.f32 %v6433, %v6597
        %v6707 = vadd.f32 %v6434, %v6601
        %v6708 = vadd.f32 %v6435, %v6603
        %v6709 = vadd.f32 %v6436, %v6602
        %v6710 = vadd.f32 %v6437, %v6606
        %v6711 = vadd.f32 %v6438, %v6608
        %v6712 = vadd.f32 %v6439, %v6607
        %v6713 = vadd.f32 %v6440, %v6611
        %v6714 = vadd.f32 %v6441, %v6613
        %v6715 = vadd.f32 %v6442, %v6612
        %v6716 = vadd.f32 %v6443, %v6616
        %v6717 = vadd.f32 %v6444, %v6618
        %v6718 = vadd.f32 %v6445, %v6617
        %v6719 = vadd.f32 %v6446, %v6621
        %v6720 = vadd.f32 %v6447, %v6623
        %v6721 = vadd.f32 %v6448, %v6622
        %v6722 = vadd.f32 %v6449, %v6626
        %v6723 = vadd.f32 %v6450, %v6628
        %v6724 = vadd.f32 %v6451, %v6627
        %v6773 = vrot.slane %v6677, 7
        %v6774 = vrot.slane %v6678, 7
        %v6775 = vsel %vm2460, %v6773, %v6774
        %v6776 = vrot.slane %v6679, 7
        %v6777 = vsel %vm2460, %v6774, %v6776
        %v6778 = vrot.slane %v6680, 7
        %v6779 = vrot.slane %v6681, 7
        %v6780 = vsel %vm2460, %v6778, %v6779
        %v6781 = vrot.slane %v6682, 7
        %v6782 = vsel %vm2460, %v6779, %v6781
        %v6783 = vrot.slane %v6683, 7
        %v6784 = vrot.slane %v6684, 7
        %v6785 = vsel %vm2460, %v6783, %v6784
        %v6786 = vrot.slane %v6685, 7
        %v6787 = vsel %vm2460, %v6784, %v6786
        %v6788 = vrot.slane %v6686, 7
        %v6789 = vrot.slane %v6687, 7
        %v6790 = vsel %vm2460, %v6788, %v6789
        %v6791 = vrot.slane %v6688, 7
        %v6792 = vsel %vm2460, %v6789, %v6791
        %v6793 = vrot.slane %v6689, 7
        %v6794 = vrot.slane %v6690, 7
        %v6795 = vsel %vm2460, %v6793, %v6794
        %v6796 = vrot.slane %v6691, 7
        %v6797 = vsel %vm2460, %v6794, %v6796
        %v6798 = vrot.slane %v6692, 7
        %v6799 = vrot.slane %v6693, 7
        %v6800 = vsel %vm2460, %v6798, %v6799
        %v6801 = vrot.slane %v6694, 7
        %v6802 = vsel %vm2460, %v6799, %v6801
        %v6803 = vrot.slane %v6695, 7
        %v6804 = vrot.slane %v6696, 7
        %v6805 = vsel %vm2460, %v6803, %v6804
        %v6806 = vrot.slane %v6697, 7
        %v6807 = vsel %vm2460, %v6804, %v6806
        %v6808 = vrot.slane %v6698, 7
        %v6809 = vrot.slane %v6699, 7
        %v6810 = vsel %vm2460, %v6808, %v6809
        %v6811 = vrot.slane %v6700, 7
        %v6812 = vsel %vm2460, %v6809, %v6811
        %v6813 = vrot.slane %v6701, 7
        %v6814 = vrot.slane %v6702, 7
        %v6815 = vsel %vm2460, %v6813, %v6814
        %v6816 = vrot.slane %v6703, 7
        %v6817 = vsel %vm2460, %v6814, %v6816
        %v6818 = vrot.slane %v6704, 7
        %v6819 = vrot.slane %v6705, 7
        %v6820 = vsel %vm2460, %v6818, %v6819
        %v6821 = vrot.slane %v6706, 7
        %v6822 = vsel %vm2460, %v6819, %v6821
        %v6823 = vrot.slane %v6707, 7
        %v6824 = vrot.slane %v6708, 7
        %v6825 = vsel %vm2460, %v6823, %v6824
        %v6826 = vrot.slane %v6709, 7
        %v6827 = vsel %vm2460, %v6824, %v6826
        %v6828 = vrot.slane %v6710, 7
        %v6829 = vrot.slane %v6711, 7
        %v6830 = vsel %vm2460, %v6828, %v6829
        %v6831 = vrot.slane %v6712, 7
        %v6832 = vsel %vm2460, %v6829, %v6831
        %v6833 = vrot.slane %v6713, 7
        %v6834 = vrot.slane %v6714, 7
        %v6835 = vsel %vm2460, %v6833, %v6834
        %v6836 = vrot.slane %v6715, 7
        %v6837 = vsel %vm2460, %v6834, %v6836
        %v6838 = vrot.slane %v6716, 7
        %v6839 = vrot.slane %v6717, 7
        %v6840 = vsel %vm2460, %v6838, %v6839
        %v6841 = vrot.slane %v6718, 7
        %v6842 = vsel %vm2460, %v6839, %v6841
        %v6843 = vrot.slane %v6719, 7
        %v6844 = vrot.slane %v6720, 7
        %v6845 = vsel %vm2460, %v6843, %v6844
        %v6846 = vrot.slane %v6721, 7
        %v6847 = vsel %vm2460, %v6844, %v6846
        %v6848 = vrot.slane %v6722, 7
        %v6849 = vrot.slane %v6723, 7
        %v6850 = vsel %vm2460, %v6848, %v6849
        %v6851 = vrot.slane %v6724, 7
        %v6852 = vsel %vm2460, %v6849, %v6851
        %v6901 = vadd.f32 %v2589, %v6773
        %v6902 = vadd.f32 %v2590, %v6775
        %v6903 = vadd.f32 %v2591, %v6777
        %v6904 = vadd.f32 %v2592, %v6778
        %v6905 = vadd.f32 %v2593, %v6780
        %v6906 = vadd.f32 %v2594, %v6782
        %v6907 = vadd.f32 %v2595, %v6783
        %v6908 = vadd.f32 %v2596, %v6785
        %v6909 = vadd.f32 %v2597, %v6787
        %v6910 = vadd.f32 %v2598, %v6788
        %v6911 = vadd.f32 %v2599, %v6790
        %v6912 = vadd.f32 %v2600, %v6792
        %v6913 = vadd.f32 %v2601, %v6793
        %v6914 = vadd.f32 %v2602, %v6795
        %v6915 = vadd.f32 %v2603, %v6797
        %v6916 = vadd.f32 %v2604, %v6798
        %v6917 = vadd.f32 %v2605, %v6800
        %v6918 = vadd.f32 %v2606, %v6802
        %v6919 = vadd.f32 %v2607, %v6803
        %v6920 = vadd.f32 %v2608, %v6805
        %v6921 = vadd.f32 %v2609, %v6807
        %v6922 = vadd.f32 %v2610, %v6808
        %v6923 = vadd.f32 %v2611, %v6810
        %v6924 = vadd.f32 %v2612, %v6812
        %v6925 = vadd.f32 %v2613, %v6813
        %v6926 = vadd.f32 %v2614, %v6815
        %v6927 = vadd.f32 %v2615, %v6817
        %v6928 = vadd.f32 %v2616, %v6818
        %v6929 = vadd.f32 %v2617, %v6820
        %v6930 = vadd.f32 %v2618, %v6822
        %v6931 = vadd.f32 %v2619, %v6823
        %v6932 = vadd.f32 %v2620, %v6825
        %v6933 = vadd.f32 %v2621, %v6827
        %v6934 = vadd.f32 %v2622, %v6828
        %v6935 = vadd.f32 %v2623, %v6830
        %v6936 = vadd.f32 %v2624, %v6832
        %v6937 = vadd.f32 %v2625, %v6833
        %v6938 = vadd.f32 %v2626, %v6835
        %v6939 = vadd.f32 %v2627, %v6837
        %v6940 = vadd.f32 %v2628, %v6838
        %v6941 = vadd.f32 %v2629, %v6840
        %v6942 = vadd.f32 %v2630, %v6842
        %v6943 = vadd.f32 %v2631, %v6843
        %v6944 = vadd.f32 %v2632, %v6845
        %v6945 = vadd.f32 %v2633, %v6847
        %v6946 = vadd.f32 %v2634, %v6848
        %v6947 = vadd.f32 %v2635, %v6850
        %v6948 = vadd.f32 %v2636, %v6852
        %v6949 = vperm.slane %v364, 1
        %v6950 = vadd.f32 %v6949, 0.0
        %v6951 = vperm.slane %v361, 0
        %v6952 = vmul.f32 %v4734, %v6951
        %v6953 = vmul.f32 %v4735, %v6951
        %v6954 = vmul.f32 %v4737, %v6951
        %v6955 = vmul.f32 %v4738, %v6951
        %v6956 = vmul.f32 %v4740, %v6951
        %v6957 = vmul.f32 %v4741, %v6951
        %v6958 = vmul.f32 %v4743, %v6951
        %v6959 = vmul.f32 %v4744, %v6951
        %v6960 = vmul.f32 %v4746, %v6951
        %v6961 = vmul.f32 %v4747, %v6951
        %v6962 = vmul.f32 %v4749, %v6951
        %v6963 = vmul.f32 %v4750, %v6951
        %v6964 = vmul.f32 %v4752, %v6951
        %v6965 = vmul.f32 %v4753, %v6951
        %v6966 = vmul.f32 %v4755, %v6951
        %v6967 = vmul.f32 %v4756, %v6951
        %v6968 = vmul.f32 %v4758, %v6951
        %v6969 = vmul.f32 %v4759, %v6951
        %v6970 = vmul.f32 %v4761, %v6951
        %v6971 = vmul.f32 %v4762, %v6951
        %v6972 = vmul.f32 %v4764, %v6951
        %v6973 = vmul.f32 %v4765, %v6951
        %v6974 = vmul.f32 %v4767, %v6951
        %v6975 = vmul.f32 %v4768, %v6951
        %v6976 = vmul.f32 %v4770, %v6951
        %v6977 = vmul.f32 %v4771, %v6951
        %v6978 = vmul.f32 %v4773, %v6951
        %v6979 = vmul.f32 %v4774, %v6951
        %v6980 = vmul.f32 %v4776, %v6951
        %v6981 = vmul.f32 %v4777, %v6951
        %v6982 = vmul.f32 %v4779, %v6951
        %v6983 = vmul.f32 %v4780, %v6951
        %v6984 = vadd.f32 %v6950, %v6952
        %v6985 = vadd.f32 %v6950, %v6953
        %v6986 = vadd.f32 %v6950, %v6954
        %v6987 = vadd.f32 %v6950, %v6955
        %v6988 = vadd.f32 %v6950, %v6956
        %v6989 = vadd.f32 %v6950, %v6957
        %v6990 = vadd.f32 %v6950, %v6958
        %v6991 = vadd.f32 %v6950, %v6959
        %v6992 = vadd.f32 %v6950, %v6960
        %v6993 = vadd.f32 %v6950, %v6961
        %v6994 = vadd.f32 %v6950, %v6962
        %v6995 = vadd.f32 %v6950, %v6963
        %v6996 = vadd.f32 %v6950, %v6964
        %v6997 = vadd.f32 %v6950, %v6965
        %v6998 = vadd.f32 %v6950, %v6966
        %v6999 = vadd.f32 %v6950, %v6967
        %v7000 = vadd.f32 %v6950, %v6968
        %v7001 = vadd.f32 %v6950, %v6969
        %v7002 = vadd.f32 %v6950, %v6970
        %v7003 = vadd.f32 %v6950, %v6971
        %v7004 = vadd.f32 %v6950, %v6972
        %v7005 = vadd.f32 %v6950, %v6973
        %v7006 = vadd.f32 %v6950, %v6974
        %v7007 = vadd.f32 %v6950, %v6975
        %v7008 = vadd.f32 %v6950, %v6976
        %v7009 = vadd.f32 %v6950, %v6977
        %v7010 = vadd.f32 %v6950, %v6978
        %v7011 = vadd.f32 %v6950, %v6979
        %v7012 = vadd.f32 %v6950, %v6980
        %v7013 = vadd.f32 %v6950, %v6981
        %v7014 = vadd.f32 %v6950, %v6982
        %v7015 = vadd.f32 %v6950, %v6983
        %v7016 = vperm.slane %v361, 1
        %v7017 = vmul.f32 %v4734, %v7016
        %v7018 = vmul.f32 %v4735, %v7016
        %v7019 = vmul.f32 %v4736, %v7016
        %v7020 = vmul.f32 %v4737, %v7016
        %v7021 = vmul.f32 %v4738, %v7016
        %v7022 = vmul.f32 %v4739, %v7016
        %v7023 = vmul.f32 %v4740, %v7016
        %v7024 = vmul.f32 %v4741, %v7016
        %v7025 = vmul.f32 %v4742, %v7016
        %v7026 = vmul.f32 %v4743, %v7016
        %v7027 = vmul.f32 %v4744, %v7016
        %v7028 = vmul.f32 %v4745, %v7016
        %v7029 = vmul.f32 %v4746, %v7016
        %v7030 = vmul.f32 %v4747, %v7016
        %v7031 = vmul.f32 %v4748, %v7016
        %v7032 = vmul.f32 %v4749, %v7016
        %v7033 = vmul.f32 %v4750, %v7016
        %v7034 = vmul.f32 %v4751, %v7016
        %v7035 = vmul.f32 %v4752, %v7016
        %v7036 = vmul.f32 %v4753, %v7016
        %v7037 = vmul.f32 %v4754, %v7016
        %v7038 = vmul.f32 %v4755, %v7016
        %v7039 = vmul.f32 %v4756, %v7016
        %v7040 = vmul.f32 %v4757, %v7016
        %v7041 = vmul.f32 %v4758, %v7016
        %v7042 = vmul.f32 %v4759, %v7016
        %v7043 = vmul.f32 %v4760, %v7016
        %v7044 = vmul.f32 %v4761, %v7016
        %v7045 = vmul.f32 %v4762, %v7016
        %v7046 = vmul.f32 %v4763, %v7016
        %v7047 = vmul.f32 %v4764, %v7016
        %v7048 = vmul.f32 %v4765, %v7016
        %v7049 = vmul.f32 %v4766, %v7016
        %v7050 = vmul.f32 %v4767, %v7016
        %v7051 = vmul.f32 %v4768, %v7016
        %v7052 = vmul.f32 %v4769, %v7016
        %v7053 = vmul.f32 %v4770, %v7016
        %v7054 = vmul.f32 %v4771, %v7016
        %v7055 = vmul.f32 %v4772, %v7016
        %v7056 = vmul.f32 %v4773, %v7016
        %v7057 = vmul.f32 %v4774, %v7016
        %v7058 = vmul.f32 %v4775, %v7016
        %v7059 = vmul.f32 %v4776, %v7016
        %v7060 = vmul.f32 %v4777, %v7016
        %v7061 = vmul.f32 %v4778, %v7016
        %v7062 = vmul.f32 %v4779, %v7016
        %v7063 = vmul.f32 %v4780, %v7016
        %v7064 = vmul.f32 %v4781, %v7016
        %v7113 = vrot.slane %v7017, 2
        %v7114 = vrot.slane %v7018, 2
        %v7115 = vsel %vm949, %v7113, %v7114
        %v7116 = vrot.slane %v7019, 2
        %v7117 = vsel %vm949, %v7114, %v7116
        %v7118 = vrot.slane %v7020, 2
        %v7119 = vrot.slane %v7021, 2
        %v7120 = vsel %vm949, %v7118, %v7119
        %v7121 = vrot.slane %v7022, 2
        %v7122 = vsel %vm949, %v7119, %v7121
        %v7123 = vrot.slane %v7023, 2
        %v7124 = vrot.slane %v7024, 2
        %v7125 = vsel %vm949, %v7123, %v7124
        %v7126 = vrot.slane %v7025, 2
        %v7127 = vsel %vm949, %v7124, %v7126
        %v7128 = vrot.slane %v7026, 2
        %v7129 = vrot.slane %v7027, 2
        %v7130 = vsel %vm949, %v7128, %v7129
        %v7131 = vrot.slane %v7028, 2
        %v7132 = vsel %vm949, %v7129, %v7131
        %v7133 = vrot.slane %v7029, 2
        %v7134 = vrot.slane %v7030, 2
        %v7135 = vsel %vm949, %v7133, %v7134
        %v7136 = vrot.slane %v7031, 2
        %v7137 = vsel %vm949, %v7134, %v7136
        %v7138 = vrot.slane %v7032, 2
        %v7139 = vrot.slane %v7033, 2
        %v7140 = vsel %vm949, %v7138, %v7139
        %v7141 = vrot.slane %v7034, 2
        %v7142 = vsel %vm949, %v7139, %v7141
        %v7143 = vrot.slane %v7035, 2
        %v7144 = vrot.slane %v7036, 2
        %v7145 = vsel %vm949, %v7143, %v7144
        %v7146 = vrot.slane %v7037, 2
        %v7147 = vsel %vm949, %v7144, %v7146
        %v7148 = vrot.slane %v7038, 2
        %v7149 = vrot.slane %v7039, 2
        %v7150 = vsel %vm949, %v7148, %v7149
        %v7151 = vrot.slane %v7040, 2
        %v7152 = vsel %vm949, %v7149, %v7151
        %v7153 = vrot.slane %v7041, 2
        %v7154 = vrot.slane %v7042, 2
        %v7155 = vsel %vm949, %v7153, %v7154
        %v7156 = vrot.slane %v7043, 2
        %v7157 = vsel %vm949, %v7154, %v7156
        %v7158 = vrot.slane %v7044, 2
        %v7159 = vrot.slane %v7045, 2
        %v7160 = vsel %vm949, %v7158, %v7159
        %v7161 = vrot.slane %v7046, 2
        %v7162 = vsel %vm949, %v7159, %v7161
        %v7163 = vrot.slane %v7047, 2
        %v7164 = vrot.slane %v7048, 2
        %v7165 = vsel %vm949, %v7163, %v7164
        %v7166 = vrot.slane %v7049, 2
        %v7167 = vsel %vm949, %v7164, %v7166
        %v7168 = vrot.slane %v7050, 2
        %v7169 = vrot.slane %v7051, 2
        %v7170 = vsel %vm949, %v7168, %v7169
        %v7171 = vrot.slane %v7052, 2
        %v7172 = vsel %vm949, %v7169, %v7171
        %v7173 = vrot.slane %v7053, 2
        %v7174 = vrot.slane %v7054, 2
        %v7175 = vsel %vm949, %v7173, %v7174
        %v7176 = vrot.slane %v7055, 2
        %v7177 = vsel %vm949, %v7174, %v7176
        %v7178 = vrot.slane %v7056, 2
        %v7179 = vrot.slane %v7057, 2
        %v7180 = vsel %vm949, %v7178, %v7179
        %v7181 = vrot.slane %v7058, 2
        %v7182 = vsel %vm949, %v7179, %v7181
        %v7183 = vrot.slane %v7059, 2
        %v7184 = vrot.slane %v7060, 2
        %v7185 = vsel %vm949, %v7183, %v7184
        %v7186 = vrot.slane %v7061, 2
        %v7187 = vsel %vm949, %v7184, %v7186
        %v7188 = vrot.slane %v7062, 2
        %v7189 = vrot.slane %v7063, 2
        %v7190 = vsel %vm949, %v7188, %v7189
        %v7191 = vrot.slane %v7064, 2
        %v7192 = vsel %vm949, %v7189, %v7191
        %v7225 = vadd.f32 %v6984, %v7115
        %v7226 = vadd.f32 %v6985, %v7117
        %v7227 = vadd.f32 %v6986, %v7120
        %v7228 = vadd.f32 %v6987, %v7122
        %v7229 = vadd.f32 %v6988, %v7125
        %v7230 = vadd.f32 %v6989, %v7127
        %v7231 = vadd.f32 %v6990, %v7130
        %v7232 = vadd.f32 %v6991, %v7132
        %v7233 = vadd.f32 %v6992, %v7135
        %v7234 = vadd.f32 %v6993, %v7137
        %v7235 = vadd.f32 %v6994, %v7140
        %v7236 = vadd.f32 %v6995, %v7142
        %v7237 = vadd.f32 %v6996, %v7145
        %v7238 = vadd.f32 %v6997, %v7147
        %v7239 = vadd.f32 %v6998, %v7150
        %v7240 = vadd.f32 %v6999, %v7152
        %v7241 = vadd.f32 %v7000, %v7155
        %v7242 = vadd.f32 %v7001, %v7157
        %v7243 = vadd.f32 %v7002, %v7160
        %v7244 = vadd.f32 %v7003, %v7162
        %v7245 = vadd.f32 %v7004, %v7165
        %v7246 = vadd.f32 %v7005, %v7167
        %v7247 = vadd.f32 %v7006, %v7170
        %v7248 = vadd.f32 %v7007, %v7172
        %v7249 = vadd.f32 %v7008, %v7175
        %v7250 = vadd.f32 %v7009, %v7177
        %v7251 = vadd.f32 %v7010, %v7180
        %v7252 = vadd.f32 %v7011, %v7182
        %v7253 = vadd.f32 %v7012, %v7185
        %v7254 = vadd.f32 %v7013, %v7187
        %v7255 = vadd.f32 %v7014, %v7190
        %v7256 = vadd.f32 %v7015, %v7192
        %v7257 = vperm.slane %v361, 2
        %v7258 = vmul.f32 %v4734, %v7257
        %v7259 = vmul.f32 %v4735, %v7257
        %v7260 = vmul.f32 %v4736, %v7257
        %v7261 = vmul.f32 %v4737, %v7257
        %v7262 = vmul.f32 %v4738, %v7257
        %v7263 = vmul.f32 %v4739, %v7257
        %v7264 = vmul.f32 %v4740, %v7257
        %v7265 = vmul.f32 %v4741, %v7257
        %v7266 = vmul.f32 %v4742, %v7257
        %v7267 = vmul.f32 %v4743, %v7257
        %v7268 = vmul.f32 %v4744, %v7257
        %v7269 = vmul.f32 %v4745, %v7257
        %v7270 = vmul.f32 %v4746, %v7257
        %v7271 = vmul.f32 %v4747, %v7257
        %v7272 = vmul.f32 %v4748, %v7257
        %v7273 = vmul.f32 %v4749, %v7257
        %v7274 = vmul.f32 %v4750, %v7257
        %v7275 = vmul.f32 %v4751, %v7257
        %v7276 = vmul.f32 %v4752, %v7257
        %v7277 = vmul.f32 %v4753, %v7257
        %v7278 = vmul.f32 %v4754, %v7257
        %v7279 = vmul.f32 %v4755, %v7257
        %v7280 = vmul.f32 %v4756, %v7257
        %v7281 = vmul.f32 %v4757, %v7257
        %v7282 = vmul.f32 %v4758, %v7257
        %v7283 = vmul.f32 %v4759, %v7257
        %v7284 = vmul.f32 %v4760, %v7257
        %v7285 = vmul.f32 %v4761, %v7257
        %v7286 = vmul.f32 %v4762, %v7257
        %v7287 = vmul.f32 %v4763, %v7257
        %v7288 = vmul.f32 %v4764, %v7257
        %v7289 = vmul.f32 %v4765, %v7257
        %v7290 = vmul.f32 %v4766, %v7257
        %v7291 = vmul.f32 %v4767, %v7257
        %v7292 = vmul.f32 %v4768, %v7257
        %v7293 = vmul.f32 %v4769, %v7257
        %v7294 = vmul.f32 %v4770, %v7257
        %v7295 = vmul.f32 %v4771, %v7257
        %v7296 = vmul.f32 %v4772, %v7257
        %v7297 = vmul.f32 %v4773, %v7257
        %v7298 = vmul.f32 %v4774, %v7257
        %v7299 = vmul.f32 %v4775, %v7257
        %v7300 = vmul.f32 %v4776, %v7257
        %v7301 = vmul.f32 %v4777, %v7257
        %v7302 = vmul.f32 %v4778, %v7257
        %v7303 = vmul.f32 %v4779, %v7257
        %v7304 = vmul.f32 %v4780, %v7257
        %v7305 = vmul.f32 %v4781, %v7257
        %v7354 = vrot.slane %v7258, 4
        %v7355 = vrot.slane %v7259, 4
        %v7356 = vsel %vm3042, %v7354, %v7355
        %v7357 = vrot.slane %v7260, 4
        %v7358 = vsel %vm3042, %v7355, %v7357
        %v7359 = vrot.slane %v7261, 4
        %v7360 = vrot.slane %v7262, 4
        %v7361 = vsel %vm3042, %v7359, %v7360
        %v7362 = vrot.slane %v7263, 4
        %v7363 = vsel %vm3042, %v7360, %v7362
        %v7364 = vrot.slane %v7264, 4
        %v7365 = vrot.slane %v7265, 4
        %v7366 = vsel %vm3042, %v7364, %v7365
        %v7367 = vrot.slane %v7266, 4
        %v7368 = vsel %vm3042, %v7365, %v7367
        %v7369 = vrot.slane %v7267, 4
        %v7370 = vrot.slane %v7268, 4
        %v7371 = vsel %vm3042, %v7369, %v7370
        %v7372 = vrot.slane %v7269, 4
        %v7373 = vsel %vm3042, %v7370, %v7372
        %v7374 = vrot.slane %v7270, 4
        %v7375 = vrot.slane %v7271, 4
        %v7376 = vsel %vm3042, %v7374, %v7375
        %v7377 = vrot.slane %v7272, 4
        %v7378 = vsel %vm3042, %v7375, %v7377
        %v7379 = vrot.slane %v7273, 4
        %v7380 = vrot.slane %v7274, 4
        %v7381 = vsel %vm3042, %v7379, %v7380
        %v7382 = vrot.slane %v7275, 4
        %v7383 = vsel %vm3042, %v7380, %v7382
        %v7384 = vrot.slane %v7276, 4
        %v7385 = vrot.slane %v7277, 4
        %v7386 = vsel %vm3042, %v7384, %v7385
        %v7387 = vrot.slane %v7278, 4
        %v7388 = vsel %vm3042, %v7385, %v7387
        %v7389 = vrot.slane %v7279, 4
        %v7390 = vrot.slane %v7280, 4
        %v7391 = vsel %vm3042, %v7389, %v7390
        %v7392 = vrot.slane %v7281, 4
        %v7393 = vsel %vm3042, %v7390, %v7392
        %v7394 = vrot.slane %v7282, 4
        %v7395 = vrot.slane %v7283, 4
        %v7396 = vsel %vm3042, %v7394, %v7395
        %v7397 = vrot.slane %v7284, 4
        %v7398 = vsel %vm3042, %v7395, %v7397
        %v7399 = vrot.slane %v7285, 4
        %v7400 = vrot.slane %v7286, 4
        %v7401 = vsel %vm3042, %v7399, %v7400
        %v7402 = vrot.slane %v7287, 4
        %v7403 = vsel %vm3042, %v7400, %v7402
        %v7404 = vrot.slane %v7288, 4
        %v7405 = vrot.slane %v7289, 4
        %v7406 = vsel %vm3042, %v7404, %v7405
        %v7407 = vrot.slane %v7290, 4
        %v7408 = vsel %vm3042, %v7405, %v7407
        %v7409 = vrot.slane %v7291, 4
        %v7410 = vrot.slane %v7292, 4
        %v7411 = vsel %vm3042, %v7409, %v7410
        %v7412 = vrot.slane %v7293, 4
        %v7413 = vsel %vm3042, %v7410, %v7412
        %v7414 = vrot.slane %v7294, 4
        %v7415 = vrot.slane %v7295, 4
        %v7416 = vsel %vm3042, %v7414, %v7415
        %v7417 = vrot.slane %v7296, 4
        %v7418 = vsel %vm3042, %v7415, %v7417
        %v7419 = vrot.slane %v7297, 4
        %v7420 = vrot.slane %v7298, 4
        %v7421 = vsel %vm3042, %v7419, %v7420
        %v7422 = vrot.slane %v7299, 4
        %v7423 = vsel %vm3042, %v7420, %v7422
        %v7424 = vrot.slane %v7300, 4
        %v7425 = vrot.slane %v7301, 4
        %v7426 = vsel %vm3042, %v7424, %v7425
        %v7427 = vrot.slane %v7302, 4
        %v7428 = vsel %vm3042, %v7425, %v7427
        %v7429 = vrot.slane %v7303, 4
        %v7430 = vrot.slane %v7304, 4
        %v7431 = vsel %vm3042, %v7429, %v7430
        %v7432 = vrot.slane %v7305, 4
        %v7433 = vsel %vm3042, %v7430, %v7432
        %v7466 = vadd.f32 %v7225, %v7356
        %v7467 = vadd.f32 %v7226, %v7358
        %v7468 = vadd.f32 %v7227, %v7361
        %v7469 = vadd.f32 %v7228, %v7363
        %v7470 = vadd.f32 %v7229, %v7366
        %v7471 = vadd.f32 %v7230, %v7368
        %v7472 = vadd.f32 %v7231, %v7371
        %v7473 = vadd.f32 %v7232, %v7373
        %v7474 = vadd.f32 %v7233, %v7376
        %v7475 = vadd.f32 %v7234, %v7378
        %v7476 = vadd.f32 %v7235, %v7381
        %v7477 = vadd.f32 %v7236, %v7383
        %v7478 = vadd.f32 %v7237, %v7386
        %v7479 = vadd.f32 %v7238, %v7388
        %v7480 = vadd.f32 %v7239, %v7391
        %v7481 = vadd.f32 %v7240, %v7393
        %v7482 = vadd.f32 %v7241, %v7396
        %v7483 = vadd.f32 %v7242, %v7398
        %v7484 = vadd.f32 %v7243, %v7401
        %v7485 = vadd.f32 %v7244, %v7403
        %v7486 = vadd.f32 %v7245, %v7406
        %v7487 = vadd.f32 %v7246, %v7408
        %v7488 = vadd.f32 %v7247, %v7411
        %v7489 = vadd.f32 %v7248, %v7413
        %v7490 = vadd.f32 %v7249, %v7416
        %v7491 = vadd.f32 %v7250, %v7418
        %v7492 = vadd.f32 %v7251, %v7421
        %v7493 = vadd.f32 %v7252, %v7423
        %v7494 = vadd.f32 %v7253, %v7426
        %v7495 = vadd.f32 %v7254, %v7428
        %v7496 = vadd.f32 %v7255, %v7431
        %v7497 = vadd.f32 %v7256, %v7433
        %v7498 = vperm.slane %v362, 0
        %v7499 = vmul.f32 %v4740, %v7498
        %v7500 = vmul.f32 %v4741, %v7498
        %v7501 = vmul.f32 %v4743, %v7498
        %v7502 = vmul.f32 %v4744, %v7498
        %v7503 = vmul.f32 %v4746, %v7498
        %v7504 = vmul.f32 %v4747, %v7498
        %v7505 = vmul.f32 %v4749, %v7498
        %v7506 = vmul.f32 %v4750, %v7498
        %v7507 = vmul.f32 %v4752, %v7498
        %v7508 = vmul.f32 %v4753, %v7498
        %v7509 = vmul.f32 %v4755, %v7498
        %v7510 = vmul.f32 %v4756, %v7498
        %v7511 = vmul.f32 %v4758, %v7498
        %v7512 = vmul.f32 %v4759, %v7498
        %v7513 = vmul.f32 %v4761, %v7498
        %v7514 = vmul.f32 %v4762, %v7498
        %v7515 = vmul.f32 %v4764, %v7498
        %v7516 = vmul.f32 %v4765, %v7498
        %v7517 = vmul.f32 %v4767, %v7498
        %v7518 = vmul.f32 %v4768, %v7498
        %v7519 = vmul.f32 %v4770, %v7498
        %v7520 = vmul.f32 %v4771, %v7498
        %v7521 = vmul.f32 %v4773, %v7498
        %v7522 = vmul.f32 %v4774, %v7498
        %v7523 = vmul.f32 %v4776, %v7498
        %v7524 = vmul.f32 %v4777, %v7498
        %v7525 = vmul.f32 %v4779, %v7498
        %v7526 = vmul.f32 %v4780, %v7498
        %v7527 = vmul.f32 %v4782, %v7498
        %v7528 = vmul.f32 %v4783, %v7498
        %v7529 = vmul.f32 %v4785, %v7498
        %v7530 = vmul.f32 %v4786, %v7498
        %v7531 = vadd.f32 %v7466, %v7499
        %v7532 = vadd.f32 %v7467, %v7500
        %v7533 = vadd.f32 %v7468, %v7501
        %v7534 = vadd.f32 %v7469, %v7502
        %v7535 = vadd.f32 %v7470, %v7503
        %v7536 = vadd.f32 %v7471, %v7504
        %v7537 = vadd.f32 %v7472, %v7505
        %v7538 = vadd.f32 %v7473, %v7506
        %v7539 = vadd.f32 %v7474, %v7507
        %v7540 = vadd.f32 %v7475, %v7508
        %v7541 = vadd.f32 %v7476, %v7509
        %v7542 = vadd.f32 %v7477, %v7510
        %v7543 = vadd.f32 %v7478, %v7511
        %v7544 = vadd.f32 %v7479, %v7512
        %v7545 = vadd.f32 %v7480, %v7513
        %v7546 = vadd.f32 %v7481, %v7514
        %v7547 = vadd.f32 %v7482, %v7515
        %v7548 = vadd.f32 %v7483, %v7516
        %v7549 = vadd.f32 %v7484, %v7517
        %v7550 = vadd.f32 %v7485, %v7518
        %v7551 = vadd.f32 %v7486, %v7519
        %v7552 = vadd.f32 %v7487, %v7520
        %v7553 = vadd.f32 %v7488, %v7521
        %v7554 = vadd.f32 %v7489, %v7522
        %v7555 = vadd.f32 %v7490, %v7523
        %v7556 = vadd.f32 %v7491, %v7524
        %v7557 = vadd.f32 %v7492, %v7525
        %v7558 = vadd.f32 %v7493, %v7526
        %v7559 = vadd.f32 %v7494, %v7527
        %v7560 = vadd.f32 %v7495, %v7528
        %v7561 = vadd.f32 %v7496, %v7529
        %v7562 = vadd.f32 %v7497, %v7530
        %v7563 = vperm.slane %v362, 1
        %v7564 = vmul.f32 %v4740, %v7563
        %v7565 = vmul.f32 %v4741, %v7563
        %v7566 = vmul.f32 %v4742, %v7563
        %v7567 = vmul.f32 %v4743, %v7563
        %v7568 = vmul.f32 %v4744, %v7563
        %v7569 = vmul.f32 %v4745, %v7563
        %v7570 = vmul.f32 %v4746, %v7563
        %v7571 = vmul.f32 %v4747, %v7563
        %v7572 = vmul.f32 %v4748, %v7563
        %v7573 = vmul.f32 %v4749, %v7563
        %v7574 = vmul.f32 %v4750, %v7563
        %v7575 = vmul.f32 %v4751, %v7563
        %v7576 = vmul.f32 %v4752, %v7563
        %v7577 = vmul.f32 %v4753, %v7563
        %v7578 = vmul.f32 %v4754, %v7563
        %v7579 = vmul.f32 %v4755, %v7563
        %v7580 = vmul.f32 %v4756, %v7563
        %v7581 = vmul.f32 %v4757, %v7563
        %v7582 = vmul.f32 %v4758, %v7563
        %v7583 = vmul.f32 %v4759, %v7563
        %v7584 = vmul.f32 %v4760, %v7563
        %v7585 = vmul.f32 %v4761, %v7563
        %v7586 = vmul.f32 %v4762, %v7563
        %v7587 = vmul.f32 %v4763, %v7563
        %v7588 = vmul.f32 %v4764, %v7563
        %v7589 = vmul.f32 %v4765, %v7563
        %v7590 = vmul.f32 %v4766, %v7563
        %v7591 = vmul.f32 %v4767, %v7563
        %v7592 = vmul.f32 %v4768, %v7563
        %v7593 = vmul.f32 %v4769, %v7563
        %v7594 = vmul.f32 %v4770, %v7563
        %v7595 = vmul.f32 %v4771, %v7563
        %v7596 = vmul.f32 %v4772, %v7563
        %v7597 = vmul.f32 %v4773, %v7563
        %v7598 = vmul.f32 %v4774, %v7563
        %v7599 = vmul.f32 %v4775, %v7563
        %v7600 = vmul.f32 %v4776, %v7563
        %v7601 = vmul.f32 %v4777, %v7563
        %v7602 = vmul.f32 %v4778, %v7563
        %v7603 = vmul.f32 %v4779, %v7563
        %v7604 = vmul.f32 %v4780, %v7563
        %v7605 = vmul.f32 %v4781, %v7563
        %v7606 = vmul.f32 %v4782, %v7563
        %v7607 = vmul.f32 %v4783, %v7563
        %v7608 = vmul.f32 %v4784, %v7563
        %v7609 = vmul.f32 %v4785, %v7563
        %v7610 = vmul.f32 %v4786, %v7563
        %v7611 = vmul.f32 %v4787, %v7563
        %v7660 = vrot.slane %v7564, 2
        %v7661 = vrot.slane %v7565, 2
        %v7662 = vsel %vm949, %v7660, %v7661
        %v7663 = vrot.slane %v7566, 2
        %v7664 = vsel %vm949, %v7661, %v7663
        %v7665 = vrot.slane %v7567, 2
        %v7666 = vrot.slane %v7568, 2
        %v7667 = vsel %vm949, %v7665, %v7666
        %v7668 = vrot.slane %v7569, 2
        %v7669 = vsel %vm949, %v7666, %v7668
        %v7670 = vrot.slane %v7570, 2
        %v7671 = vrot.slane %v7571, 2
        %v7672 = vsel %vm949, %v7670, %v7671
        %v7673 = vrot.slane %v7572, 2
        %v7674 = vsel %vm949, %v7671, %v7673
        %v7675 = vrot.slane %v7573, 2
        %v7676 = vrot.slane %v7574, 2
        %v7677 = vsel %vm949, %v7675, %v7676
        %v7678 = vrot.slane %v7575, 2
        %v7679 = vsel %vm949, %v7676, %v7678
        %v7680 = vrot.slane %v7576, 2
        %v7681 = vrot.slane %v7577, 2
        %v7682 = vsel %vm949, %v7680, %v7681
        %v7683 = vrot.slane %v7578, 2
        %v7684 = vsel %vm949, %v7681, %v7683
        %v7685 = vrot.slane %v7579, 2
        %v7686 = vrot.slane %v7580, 2
        %v7687 = vsel %vm949, %v7685, %v7686
        %v7688 = vrot.slane %v7581, 2
        %v7689 = vsel %vm949, %v7686, %v7688
        %v7690 = vrot.slane %v7582, 2
        %v7691 = vrot.slane %v7583, 2
        %v7692 = vsel %vm949, %v7690, %v7691
        %v7693 = vrot.slane %v7584, 2
        %v7694 = vsel %vm949, %v7691, %v7693
        %v7695 = vrot.slane %v7585, 2
        %v7696 = vrot.slane %v7586, 2
        %v7697 = vsel %vm949, %v7695, %v7696
        %v7698 = vrot.slane %v7587, 2
        %v7699 = vsel %vm949, %v7696, %v7698
        %v7700 = vrot.slane %v7588, 2
        %v7701 = vrot.slane %v7589, 2
        %v7702 = vsel %vm949, %v7700, %v7701
        %v7703 = vrot.slane %v7590, 2
        %v7704 = vsel %vm949, %v7701, %v7703
        %v7705 = vrot.slane %v7591, 2
        %v7706 = vrot.slane %v7592, 2
        %v7707 = vsel %vm949, %v7705, %v7706
        %v7708 = vrot.slane %v7593, 2
        %v7709 = vsel %vm949, %v7706, %v7708
        %v7710 = vrot.slane %v7594, 2
        %v7711 = vrot.slane %v7595, 2
        %v7712 = vsel %vm949, %v7710, %v7711
        %v7713 = vrot.slane %v7596, 2
        %v7714 = vsel %vm949, %v7711, %v7713
        %v7715 = vrot.slane %v7597, 2
        %v7716 = vrot.slane %v7598, 2
        %v7717 = vsel %vm949, %v7715, %v7716
        %v7718 = vrot.slane %v7599, 2
        %v7719 = vsel %vm949, %v7716, %v7718
        %v7720 = vrot.slane %v7600, 2
        %v7721 = vrot.slane %v7601, 2
        %v7722 = vsel %vm949, %v7720, %v7721
        %v7723 = vrot.slane %v7602, 2
        %v7724 = vsel %vm949, %v7721, %v7723
        %v7725 = vrot.slane %v7603, 2
        %v7726 = vrot.slane %v7604, 2
        %v7727 = vsel %vm949, %v7725, %v7726
        %v7728 = vrot.slane %v7605, 2
        %v7729 = vsel %vm949, %v7726, %v7728
        %v7730 = vrot.slane %v7606, 2
        %v7731 = vrot.slane %v7607, 2
        %v7732 = vsel %vm949, %v7730, %v7731
        %v7733 = vrot.slane %v7608, 2
        %v7734 = vsel %vm949, %v7731, %v7733
        %v7735 = vrot.slane %v7609, 2
        %v7736 = vrot.slane %v7610, 2
        %v7737 = vsel %vm949, %v7735, %v7736
        %v7738 = vrot.slane %v7611, 2
        %v7739 = vsel %vm949, %v7736, %v7738
        %v7772 = vadd.f32 %v7531, %v7662
        %v7773 = vadd.f32 %v7532, %v7664
        %v7774 = vadd.f32 %v7533, %v7667
        %v7775 = vadd.f32 %v7534, %v7669
        %v7776 = vadd.f32 %v7535, %v7672
        %v7777 = vadd.f32 %v7536, %v7674
        %v7778 = vadd.f32 %v7537, %v7677
        %v7779 = vadd.f32 %v7538, %v7679
        %v7780 = vadd.f32 %v7539, %v7682
        %v7781 = vadd.f32 %v7540, %v7684
        %v7782 = vadd.f32 %v7541, %v7687
        %v7783 = vadd.f32 %v7542, %v7689
        %v7784 = vadd.f32 %v7543, %v7692
        %v7785 = vadd.f32 %v7544, %v7694
        %v7786 = vadd.f32 %v7545, %v7697
        %v7787 = vadd.f32 %v7546, %v7699
        %v7788 = vadd.f32 %v7547, %v7702
        %v7789 = vadd.f32 %v7548, %v7704
        %v7790 = vadd.f32 %v7549, %v7707
        %v7791 = vadd.f32 %v7550, %v7709
        %v7792 = vadd.f32 %v7551, %v7712
        %v7793 = vadd.f32 %v7552, %v7714
        %v7794 = vadd.f32 %v7553, %v7717
        %v7795 = vadd.f32 %v7554, %v7719
        %v7796 = vadd.f32 %v7555, %v7722
        %v7797 = vadd.f32 %v7556, %v7724
        %v7798 = vadd.f32 %v7557, %v7727
        %v7799 = vadd.f32 %v7558, %v7729
        %v7800 = vadd.f32 %v7559, %v7732
        %v7801 = vadd.f32 %v7560, %v7734
        %v7802 = vadd.f32 %v7561, %v7737
        %v7803 = vadd.f32 %v7562, %v7739
        %v7804 = vperm.slane %v362, 2
        %v7805 = vmul.f32 %v4740, %v7804
        %v7806 = vmul.f32 %v4741, %v7804
        %v7807 = vmul.f32 %v4742, %v7804
        %v7808 = vmul.f32 %v4743, %v7804
        %v7809 = vmul.f32 %v4744, %v7804
        %v7810 = vmul.f32 %v4745, %v7804
        %v7811 = vmul.f32 %v4746, %v7804
        %v7812 = vmul.f32 %v4747, %v7804
        %v7813 = vmul.f32 %v4748, %v7804
        %v7814 = vmul.f32 %v4749, %v7804
        %v7815 = vmul.f32 %v4750, %v7804
        %v7816 = vmul.f32 %v4751, %v7804
        %v7817 = vmul.f32 %v4752, %v7804
        %v7818 = vmul.f32 %v4753, %v7804
        %v7819 = vmul.f32 %v4754, %v7804
        %v7820 = vmul.f32 %v4755, %v7804
        %v7821 = vmul.f32 %v4756, %v7804
        %v7822 = vmul.f32 %v4757, %v7804
        %v7823 = vmul.f32 %v4758, %v7804
        %v7824 = vmul.f32 %v4759, %v7804
        %v7825 = vmul.f32 %v4760, %v7804
        %v7826 = vmul.f32 %v4761, %v7804
        %v7827 = vmul.f32 %v4762, %v7804
        %v7828 = vmul.f32 %v4763, %v7804
        %v7829 = vmul.f32 %v4764, %v7804
        %v7830 = vmul.f32 %v4765, %v7804
        %v7831 = vmul.f32 %v4766, %v7804
        %v7832 = vmul.f32 %v4767, %v7804
        %v7833 = vmul.f32 %v4768, %v7804
        %v7834 = vmul.f32 %v4769, %v7804
        %v7835 = vmul.f32 %v4770, %v7804
        %v7836 = vmul.f32 %v4771, %v7804
        %v7837 = vmul.f32 %v4772, %v7804
        %v7838 = vmul.f32 %v4773, %v7804
        %v7839 = vmul.f32 %v4774, %v7804
        %v7840 = vmul.f32 %v4775, %v7804
        %v7841 = vmul.f32 %v4776, %v7804
        %v7842 = vmul.f32 %v4777, %v7804
        %v7843 = vmul.f32 %v4778, %v7804
        %v7844 = vmul.f32 %v4779, %v7804
        %v7845 = vmul.f32 %v4780, %v7804
        %v7846 = vmul.f32 %v4781, %v7804
        %v7847 = vmul.f32 %v4782, %v7804
        %v7848 = vmul.f32 %v4783, %v7804
        %v7849 = vmul.f32 %v4784, %v7804
        %v7850 = vmul.f32 %v4785, %v7804
        %v7851 = vmul.f32 %v4786, %v7804
        %v7852 = vmul.f32 %v4787, %v7804
        %v7901 = vrot.slane %v7805, 4
        %v7902 = vrot.slane %v7806, 4
        %v7903 = vsel %vm3042, %v7901, %v7902
        %v7904 = vrot.slane %v7807, 4
        %v7905 = vsel %vm3042, %v7902, %v7904
        %v7906 = vrot.slane %v7808, 4
        %v7907 = vrot.slane %v7809, 4
        %v7908 = vsel %vm3042, %v7906, %v7907
        %v7909 = vrot.slane %v7810, 4
        %v7910 = vsel %vm3042, %v7907, %v7909
        %v7911 = vrot.slane %v7811, 4
        %v7912 = vrot.slane %v7812, 4
        %v7913 = vsel %vm3042, %v7911, %v7912
        %v7914 = vrot.slane %v7813, 4
        %v7915 = vsel %vm3042, %v7912, %v7914
        %v7916 = vrot.slane %v7814, 4
        %v7917 = vrot.slane %v7815, 4
        %v7918 = vsel %vm3042, %v7916, %v7917
        %v7919 = vrot.slane %v7816, 4
        %v7920 = vsel %vm3042, %v7917, %v7919
        %v7921 = vrot.slane %v7817, 4
        %v7922 = vrot.slane %v7818, 4
        %v7923 = vsel %vm3042, %v7921, %v7922
        %v7924 = vrot.slane %v7819, 4
        %v7925 = vsel %vm3042, %v7922, %v7924
        %v7926 = vrot.slane %v7820, 4
        %v7927 = vrot.slane %v7821, 4
        %v7928 = vsel %vm3042, %v7926, %v7927
        %v7929 = vrot.slane %v7822, 4
        %v7930 = vsel %vm3042, %v7927, %v7929
        %v7931 = vrot.slane %v7823, 4
        %v7932 = vrot.slane %v7824, 4
        %v7933 = vsel %vm3042, %v7931, %v7932
        %v7934 = vrot.slane %v7825, 4
        %v7935 = vsel %vm3042, %v7932, %v7934
        %v7936 = vrot.slane %v7826, 4
        %v7937 = vrot.slane %v7827, 4
        %v7938 = vsel %vm3042, %v7936, %v7937
        %v7939 = vrot.slane %v7828, 4
        %v7940 = vsel %vm3042, %v7937, %v7939
        %v7941 = vrot.slane %v7829, 4
        %v7942 = vrot.slane %v7830, 4
        %v7943 = vsel %vm3042, %v7941, %v7942
        %v7944 = vrot.slane %v7831, 4
        %v7945 = vsel %vm3042, %v7942, %v7944
        %v7946 = vrot.slane %v7832, 4
        %v7947 = vrot.slane %v7833, 4
        %v7948 = vsel %vm3042, %v7946, %v7947
        %v7949 = vrot.slane %v7834, 4
        %v7950 = vsel %vm3042, %v7947, %v7949
        %v7951 = vrot.slane %v7835, 4
        %v7952 = vrot.slane %v7836, 4
        %v7953 = vsel %vm3042, %v7951, %v7952
        %v7954 = vrot.slane %v7837, 4
        %v7955 = vsel %vm3042, %v7952, %v7954
        %v7956 = vrot.slane %v7838, 4
        %v7957 = vrot.slane %v7839, 4
        %v7958 = vsel %vm3042, %v7956, %v7957
        %v7959 = vrot.slane %v7840, 4
        %v7960 = vsel %vm3042, %v7957, %v7959
        %v7961 = vrot.slane %v7841, 4
        %v7962 = vrot.slane %v7842, 4
        %v7963 = vsel %vm3042, %v7961, %v7962
        %v7964 = vrot.slane %v7843, 4
        %v7965 = vsel %vm3042, %v7962, %v7964
        %v7966 = vrot.slane %v7844, 4
        %v7967 = vrot.slane %v7845, 4
        %v7968 = vsel %vm3042, %v7966, %v7967
        %v7969 = vrot.slane %v7846, 4
        %v7970 = vsel %vm3042, %v7967, %v7969
        %v7971 = vrot.slane %v7847, 4
        %v7972 = vrot.slane %v7848, 4
        %v7973 = vsel %vm3042, %v7971, %v7972
        %v7974 = vrot.slane %v7849, 4
        %v7975 = vsel %vm3042, %v7972, %v7974
        %v7976 = vrot.slane %v7850, 4
        %v7977 = vrot.slane %v7851, 4
        %v7978 = vsel %vm3042, %v7976, %v7977
        %v7979 = vrot.slane %v7852, 4
        %v7980 = vsel %vm3042, %v7977, %v7979
        %v8013 = vadd.f32 %v7772, %v7903
        %v8014 = vadd.f32 %v7773, %v7905
        %v8015 = vadd.f32 %v7774, %v7908
        %v8016 = vadd.f32 %v7775, %v7910
        %v8017 = vadd.f32 %v7776, %v7913
        %v8018 = vadd.f32 %v7777, %v7915
        %v8019 = vadd.f32 %v7778, %v7918
        %v8020 = vadd.f32 %v7779, %v7920
        %v8021 = vadd.f32 %v7780, %v7923
        %v8022 = vadd.f32 %v7781, %v7925
        %v8023 = vadd.f32 %v7782, %v7928
        %v8024 = vadd.f32 %v7783, %v7930
        %v8025 = vadd.f32 %v7784, %v7933
        %v8026 = vadd.f32 %v7785, %v7935
        %v8027 = vadd.f32 %v7786, %v7938
        %v8028 = vadd.f32 %v7787, %v7940
        %v8029 = vadd.f32 %v7788, %v7943
        %v8030 = vadd.f32 %v7789, %v7945
        %v8031 = vadd.f32 %v7790, %v7948
        %v8032 = vadd.f32 %v7791, %v7950
        %v8033 = vadd.f32 %v7792, %v7953
        %v8034 = vadd.f32 %v7793, %v7955
        %v8035 = vadd.f32 %v7794, %v7958
        %v8036 = vadd.f32 %v7795, %v7960
        %v8037 = vadd.f32 %v7796, %v7963
        %v8038 = vadd.f32 %v7797, %v7965
        %v8039 = vadd.f32 %v7798, %v7968
        %v8040 = vadd.f32 %v7799, %v7970
        %v8041 = vadd.f32 %v7800, %v7973
        %v8042 = vadd.f32 %v7801, %v7975
        %v8043 = vadd.f32 %v7802, %v7978
        %v8044 = vadd.f32 %v7803, %v7980
        %v8045 = vperm.slane %v363, 0
        %v8046 = vmul.f32 %v4746, %v8045
        %v8047 = vmul.f32 %v4747, %v8045
        %v8048 = vmul.f32 %v4749, %v8045
        %v8049 = vmul.f32 %v4750, %v8045
        %v8050 = vmul.f32 %v4752, %v8045
        %v8051 = vmul.f32 %v4753, %v8045
        %v8052 = vmul.f32 %v4755, %v8045
        %v8053 = vmul.f32 %v4756, %v8045
        %v8054 = vmul.f32 %v4758, %v8045
        %v8055 = vmul.f32 %v4759, %v8045
        %v8056 = vmul.f32 %v4761, %v8045
        %v8057 = vmul.f32 %v4762, %v8045
        %v8058 = vmul.f32 %v4764, %v8045
        %v8059 = vmul.f32 %v4765, %v8045
        %v8060 = vmul.f32 %v4767, %v8045
        %v8061 = vmul.f32 %v4768, %v8045
        %v8062 = vmul.f32 %v4770, %v8045
        %v8063 = vmul.f32 %v4771, %v8045
        %v8064 = vmul.f32 %v4773, %v8045
        %v8065 = vmul.f32 %v4774, %v8045
        %v8066 = vmul.f32 %v4776, %v8045
        %v8067 = vmul.f32 %v4777, %v8045
        %v8068 = vmul.f32 %v4779, %v8045
        %v8069 = vmul.f32 %v4780, %v8045
        %v8070 = vmul.f32 %v4782, %v8045
        %v8071 = vmul.f32 %v4783, %v8045
        %v8072 = vmul.f32 %v4785, %v8045
        %v8073 = vmul.f32 %v4786, %v8045
        %v8074 = vmul.f32 %v4788, %v8045
        %v8075 = vmul.f32 %v4789, %v8045
        %v8076 = vmul.f32 %v4791, %v8045
        %v8077 = vmul.f32 %v4792, %v8045
        %v8078 = vadd.f32 %v8013, %v8046
        %v8079 = vadd.f32 %v8014, %v8047
        %v8080 = vadd.f32 %v8015, %v8048
        %v8081 = vadd.f32 %v8016, %v8049
        %v8082 = vadd.f32 %v8017, %v8050
        %v8083 = vadd.f32 %v8018, %v8051
        %v8084 = vadd.f32 %v8019, %v8052
        %v8085 = vadd.f32 %v8020, %v8053
        %v8086 = vadd.f32 %v8021, %v8054
        %v8087 = vadd.f32 %v8022, %v8055
        %v8088 = vadd.f32 %v8023, %v8056
        %v8089 = vadd.f32 %v8024, %v8057
        %v8090 = vadd.f32 %v8025, %v8058
        %v8091 = vadd.f32 %v8026, %v8059
        %v8092 = vadd.f32 %v8027, %v8060
        %v8093 = vadd.f32 %v8028, %v8061
        %v8094 = vadd.f32 %v8029, %v8062
        %v8095 = vadd.f32 %v8030, %v8063
        %v8096 = vadd.f32 %v8031, %v8064
        %v8097 = vadd.f32 %v8032, %v8065
        %v8098 = vadd.f32 %v8033, %v8066
        %v8099 = vadd.f32 %v8034, %v8067
        %v8100 = vadd.f32 %v8035, %v8068
        %v8101 = vadd.f32 %v8036, %v8069
        %v8102 = vadd.f32 %v8037, %v8070
        %v8103 = vadd.f32 %v8038, %v8071
        %v8104 = vadd.f32 %v8039, %v8072
        %v8105 = vadd.f32 %v8040, %v8073
        %v8106 = vadd.f32 %v8041, %v8074
        %v8107 = vadd.f32 %v8042, %v8075
        %v8108 = vadd.f32 %v8043, %v8076
        %v8109 = vadd.f32 %v8044, %v8077
        %v8110 = vperm.slane %v363, 1
        %v8111 = vmul.f32 %v4746, %v8110
        %v8112 = vmul.f32 %v4747, %v8110
        %v8113 = vmul.f32 %v4748, %v8110
        %v8114 = vmul.f32 %v4749, %v8110
        %v8115 = vmul.f32 %v4750, %v8110
        %v8116 = vmul.f32 %v4751, %v8110
        %v8117 = vmul.f32 %v4752, %v8110
        %v8118 = vmul.f32 %v4753, %v8110
        %v8119 = vmul.f32 %v4754, %v8110
        %v8120 = vmul.f32 %v4755, %v8110
        %v8121 = vmul.f32 %v4756, %v8110
        %v8122 = vmul.f32 %v4757, %v8110
        %v8123 = vmul.f32 %v4758, %v8110
        %v8124 = vmul.f32 %v4759, %v8110
        %v8125 = vmul.f32 %v4760, %v8110
        %v8126 = vmul.f32 %v4761, %v8110
        %v8127 = vmul.f32 %v4762, %v8110
        %v8128 = vmul.f32 %v4763, %v8110
        %v8129 = vmul.f32 %v4764, %v8110
        %v8130 = vmul.f32 %v4765, %v8110
        %v8131 = vmul.f32 %v4766, %v8110
        %v8132 = vmul.f32 %v4767, %v8110
        %v8133 = vmul.f32 %v4768, %v8110
        %v8134 = vmul.f32 %v4769, %v8110
        %v8135 = vmul.f32 %v4770, %v8110
        %v8136 = vmul.f32 %v4771, %v8110
        %v8137 = vmul.f32 %v4772, %v8110
        %v8138 = vmul.f32 %v4773, %v8110
        %v8139 = vmul.f32 %v4774, %v8110
        %v8140 = vmul.f32 %v4775, %v8110
        %v8141 = vmul.f32 %v4776, %v8110
        %v8142 = vmul.f32 %v4777, %v8110
        %v8143 = vmul.f32 %v4778, %v8110
        %v8144 = vmul.f32 %v4779, %v8110
        %v8145 = vmul.f32 %v4780, %v8110
        %v8146 = vmul.f32 %v4781, %v8110
        %v8147 = vmul.f32 %v4782, %v8110
        %v8148 = vmul.f32 %v4783, %v8110
        %v8149 = vmul.f32 %v4784, %v8110
        %v8150 = vmul.f32 %v4785, %v8110
        %v8151 = vmul.f32 %v4786, %v8110
        %v8152 = vmul.f32 %v4787, %v8110
        %v8153 = vmul.f32 %v4788, %v8110
        %v8154 = vmul.f32 %v4789, %v8110
        %v8155 = vmul.f32 %v4790, %v8110
        %v8156 = vmul.f32 %v4791, %v8110
        %v8157 = vmul.f32 %v4792, %v8110
        %v8158 = vmul.f32 %v4793, %v8110
        %v8207 = vrot.slane %v8111, 2
        %v8208 = vrot.slane %v8112, 2
        %v8209 = vsel %vm949, %v8207, %v8208
        %v8210 = vrot.slane %v8113, 2
        %v8211 = vsel %vm949, %v8208, %v8210
        %v8212 = vrot.slane %v8114, 2
        %v8213 = vrot.slane %v8115, 2
        %v8214 = vsel %vm949, %v8212, %v8213
        %v8215 = vrot.slane %v8116, 2
        %v8216 = vsel %vm949, %v8213, %v8215
        %v8217 = vrot.slane %v8117, 2
        %v8218 = vrot.slane %v8118, 2
        %v8219 = vsel %vm949, %v8217, %v8218
        %v8220 = vrot.slane %v8119, 2
        %v8221 = vsel %vm949, %v8218, %v8220
        %v8222 = vrot.slane %v8120, 2
        %v8223 = vrot.slane %v8121, 2
        %v8224 = vsel %vm949, %v8222, %v8223
        %v8225 = vrot.slane %v8122, 2
        %v8226 = vsel %vm949, %v8223, %v8225
        %v8227 = vrot.slane %v8123, 2
        %v8228 = vrot.slane %v8124, 2
        %v8229 = vsel %vm949, %v8227, %v8228
        %v8230 = vrot.slane %v8125, 2
        %v8231 = vsel %vm949, %v8228, %v8230
        %v8232 = vrot.slane %v8126, 2
        %v8233 = vrot.slane %v8127, 2
        %v8234 = vsel %vm949, %v8232, %v8233
        %v8235 = vrot.slane %v8128, 2
        %v8236 = vsel %vm949, %v8233, %v8235
        %v8237 = vrot.slane %v8129, 2
        %v8238 = vrot.slane %v8130, 2
        %v8239 = vsel %vm949, %v8237, %v8238
        %v8240 = vrot.slane %v8131, 2
        %v8241 = vsel %vm949, %v8238, %v8240
        %v8242 = vrot.slane %v8132, 2
        %v8243 = vrot.slane %v8133, 2
        %v8244 = vsel %vm949, %v8242, %v8243
        %v8245 = vrot.slane %v8134, 2
        %v8246 = vsel %vm949, %v8243, %v8245
        %v8247 = vrot.slane %v8135, 2
        %v8248 = vrot.slane %v8136, 2
        %v8249 = vsel %vm949, %v8247, %v8248
        %v8250 = vrot.slane %v8137, 2
        %v8251 = vsel %vm949, %v8248, %v8250
        %v8252 = vrot.slane %v8138, 2
        %v8253 = vrot.slane %v8139, 2
        %v8254 = vsel %vm949, %v8252, %v8253
        %v8255 = vrot.slane %v8140, 2
        %v8256 = vsel %vm949, %v8253, %v8255
        %v8257 = vrot.slane %v8141, 2
        %v8258 = vrot.slane %v8142, 2
        %v8259 = vsel %vm949, %v8257, %v8258
        %v8260 = vrot.slane %v8143, 2
        %v8261 = vsel %vm949, %v8258, %v8260
        %v8262 = vrot.slane %v8144, 2
        %v8263 = vrot.slane %v8145, 2
        %v8264 = vsel %vm949, %v8262, %v8263
        %v8265 = vrot.slane %v8146, 2
        %v8266 = vsel %vm949, %v8263, %v8265
        %v8267 = vrot.slane %v8147, 2
        %v8268 = vrot.slane %v8148, 2
        %v8269 = vsel %vm949, %v8267, %v8268
        %v8270 = vrot.slane %v8149, 2
        %v8271 = vsel %vm949, %v8268, %v8270
        %v8272 = vrot.slane %v8150, 2
        %v8273 = vrot.slane %v8151, 2
        %v8274 = vsel %vm949, %v8272, %v8273
        %v8275 = vrot.slane %v8152, 2
        %v8276 = vsel %vm949, %v8273, %v8275
        %v8277 = vrot.slane %v8153, 2
        %v8278 = vrot.slane %v8154, 2
        %v8279 = vsel %vm949, %v8277, %v8278
        %v8280 = vrot.slane %v8155, 2
        %v8281 = vsel %vm949, %v8278, %v8280
        %v8282 = vrot.slane %v8156, 2
        %v8283 = vrot.slane %v8157, 2
        %v8284 = vsel %vm949, %v8282, %v8283
        %v8285 = vrot.slane %v8158, 2
        %v8286 = vsel %vm949, %v8283, %v8285
        %v8319 = vadd.f32 %v8078, %v8209
        %v8320 = vadd.f32 %v8079, %v8211
        %v8321 = vadd.f32 %v8080, %v8214
        %v8322 = vadd.f32 %v8081, %v8216
        %v8323 = vadd.f32 %v8082, %v8219
        %v8324 = vadd.f32 %v8083, %v8221
        %v8325 = vadd.f32 %v8084, %v8224
        %v8326 = vadd.f32 %v8085, %v8226
        %v8327 = vadd.f32 %v8086, %v8229
        %v8328 = vadd.f32 %v8087, %v8231
        %v8329 = vadd.f32 %v8088, %v8234
        %v8330 = vadd.f32 %v8089, %v8236
        %v8331 = vadd.f32 %v8090, %v8239
        %v8332 = vadd.f32 %v8091, %v8241
        %v8333 = vadd.f32 %v8092, %v8244
        %v8334 = vadd.f32 %v8093, %v8246
        %v8335 = vadd.f32 %v8094, %v8249
        %v8336 = vadd.f32 %v8095, %v8251
        %v8337 = vadd.f32 %v8096, %v8254
        %v8338 = vadd.f32 %v8097, %v8256
        %v8339 = vadd.f32 %v8098, %v8259
        %v8340 = vadd.f32 %v8099, %v8261
        %v8341 = vadd.f32 %v8100, %v8264
        %v8342 = vadd.f32 %v8101, %v8266
        %v8343 = vadd.f32 %v8102, %v8269
        %v8344 = vadd.f32 %v8103, %v8271
        %v8345 = vadd.f32 %v8104, %v8274
        %v8346 = vadd.f32 %v8105, %v8276
        %v8347 = vadd.f32 %v8106, %v8279
        %v8348 = vadd.f32 %v8107, %v8281
        %v8349 = vadd.f32 %v8108, %v8284
        %v8350 = vadd.f32 %v8109, %v8286
        %v8351 = vperm.slane %v363, 2
        %v8352 = vmul.f32 %v4746, %v8351
        %v8353 = vmul.f32 %v4747, %v8351
        %v8354 = vmul.f32 %v4748, %v8351
        %v8355 = vmul.f32 %v4749, %v8351
        %v8356 = vmul.f32 %v4750, %v8351
        %v8357 = vmul.f32 %v4751, %v8351
        %v8358 = vmul.f32 %v4752, %v8351
        %v8359 = vmul.f32 %v4753, %v8351
        %v8360 = vmul.f32 %v4754, %v8351
        %v8361 = vmul.f32 %v4755, %v8351
        %v8362 = vmul.f32 %v4756, %v8351
        %v8363 = vmul.f32 %v4757, %v8351
        %v8364 = vmul.f32 %v4758, %v8351
        %v8365 = vmul.f32 %v4759, %v8351
        %v8366 = vmul.f32 %v4760, %v8351
        %v8367 = vmul.f32 %v4761, %v8351
        %v8368 = vmul.f32 %v4762, %v8351
        %v8369 = vmul.f32 %v4763, %v8351
        %v8370 = vmul.f32 %v4764, %v8351
        %v8371 = vmul.f32 %v4765, %v8351
        %v8372 = vmul.f32 %v4766, %v8351
        %v8373 = vmul.f32 %v4767, %v8351
        %v8374 = vmul.f32 %v4768, %v8351
        %v8375 = vmul.f32 %v4769, %v8351
        %v8376 = vmul.f32 %v4770, %v8351
        %v8377 = vmul.f32 %v4771, %v8351
        %v8378 = vmul.f32 %v4772, %v8351
        %v8379 = vmul.f32 %v4773, %v8351
        %v8380 = vmul.f32 %v4774, %v8351
        %v8381 = vmul.f32 %v4775, %v8351
        %v8382 = vmul.f32 %v4776, %v8351
        %v8383 = vmul.f32 %v4777, %v8351
        %v8384 = vmul.f32 %v4778, %v8351
        %v8385 = vmul.f32 %v4779, %v8351
        %v8386 = vmul.f32 %v4780, %v8351
        %v8387 = vmul.f32 %v4781, %v8351
        %v8388 = vmul.f32 %v4782, %v8351
        %v8389 = vmul.f32 %v4783, %v8351
        %v8390 = vmul.f32 %v4784, %v8351
        %v8391 = vmul.f32 %v4785, %v8351
        %v8392 = vmul.f32 %v4786, %v8351
        %v8393 = vmul.f32 %v4787, %v8351
        %v8394 = vmul.f32 %v4788, %v8351
        %v8395 = vmul.f32 %v4789, %v8351
        %v8396 = vmul.f32 %v4790, %v8351
        %v8397 = vmul.f32 %v4791, %v8351
        %v8398 = vmul.f32 %v4792, %v8351
        %v8399 = vmul.f32 %v4793, %v8351
        %v8448 = vrot.slane %v8352, 4
        %v8449 = vrot.slane %v8353, 4
        %v8450 = vsel %vm3042, %v8448, %v8449
        %v8451 = vrot.slane %v8354, 4
        %v8452 = vsel %vm3042, %v8449, %v8451
        %v8453 = vrot.slane %v8355, 4
        %v8454 = vrot.slane %v8356, 4
        %v8455 = vsel %vm3042, %v8453, %v8454
        %v8456 = vrot.slane %v8357, 4
        %v8457 = vsel %vm3042, %v8454, %v8456
        %v8458 = vrot.slane %v8358, 4
        %v8459 = vrot.slane %v8359, 4
        %v8460 = vsel %vm3042, %v8458, %v8459
        %v8461 = vrot.slane %v8360, 4
        %v8462 = vsel %vm3042, %v8459, %v8461
        %v8463 = vrot.slane %v8361, 4
        %v8464 = vrot.slane %v8362, 4
        %v8465 = vsel %vm3042, %v8463, %v8464
        %v8466 = vrot.slane %v8363, 4
        %v8467 = vsel %vm3042, %v8464, %v8466
        %v8468 = vrot.slane %v8364, 4
        %v8469 = vrot.slane %v8365, 4
        %v8470 = vsel %vm3042, %v8468, %v8469
        %v8471 = vrot.slane %v8366, 4
        %v8472 = vsel %vm3042, %v8469, %v8471
        %v8473 = vrot.slane %v8367, 4
        %v8474 = vrot.slane %v8368, 4
        %v8475 = vsel %vm3042, %v8473, %v8474
        %v8476 = vrot.slane %v8369, 4
        %v8477 = vsel %vm3042, %v8474, %v8476
        %v8478 = vrot.slane %v8370, 4
        %v8479 = vrot.slane %v8371, 4
        %v8480 = vsel %vm3042, %v8478, %v8479
        %v8481 = vrot.slane %v8372, 4
        %v8482 = vsel %vm3042, %v8479, %v8481
        %v8483 = vrot.slane %v8373, 4
        %v8484 = vrot.slane %v8374, 4
        %v8485 = vsel %vm3042, %v8483, %v8484
        %v8486 = vrot.slane %v8375, 4
        %v8487 = vsel %vm3042, %v8484, %v8486
        %v8488 = vrot.slane %v8376, 4
        %v8489 = vrot.slane %v8377, 4
        %v8490 = vsel %vm3042, %v8488, %v8489
        %v8491 = vrot.slane %v8378, 4
        %v8492 = vsel %vm3042, %v8489, %v8491
        %v8493 = vrot.slane %v8379, 4
        %v8494 = vrot.slane %v8380, 4
        %v8495 = vsel %vm3042, %v8493, %v8494
        %v8496 = vrot.slane %v8381, 4
        %v8497 = vsel %vm3042, %v8494, %v8496
        %v8498 = vrot.slane %v8382, 4
        %v8499 = vrot.slane %v8383, 4
        %v8500 = vsel %vm3042, %v8498, %v8499
        %v8501 = vrot.slane %v8384, 4
        %v8502 = vsel %vm3042, %v8499, %v8501
        %v8503 = vrot.slane %v8385, 4
        %v8504 = vrot.slane %v8386, 4
        %v8505 = vsel %vm3042, %v8503, %v8504
        %v8506 = vrot.slane %v8387, 4
        %v8507 = vsel %vm3042, %v8504, %v8506
        %v8508 = vrot.slane %v8388, 4
        %v8509 = vrot.slane %v8389, 4
        %v8510 = vsel %vm3042, %v8508, %v8509
        %v8511 = vrot.slane %v8390, 4
        %v8512 = vsel %vm3042, %v8509, %v8511
        %v8513 = vrot.slane %v8391, 4
        %v8514 = vrot.slane %v8392, 4
        %v8515 = vsel %vm3042, %v8513, %v8514
        %v8516 = vrot.slane %v8393, 4
        %v8517 = vsel %vm3042, %v8514, %v8516
        %v8518 = vrot.slane %v8394, 4
        %v8519 = vrot.slane %v8395, 4
        %v8520 = vsel %vm3042, %v8518, %v8519
        %v8521 = vrot.slane %v8396, 4
        %v8522 = vsel %vm3042, %v8519, %v8521
        %v8523 = vrot.slane %v8397, 4
        %v8524 = vrot.slane %v8398, 4
        %v8525 = vsel %vm3042, %v8523, %v8524
        %v8526 = vrot.slane %v8399, 4
        %v8527 = vsel %vm3042, %v8524, %v8526
        %v8560 = vadd.f32 %v8319, %v8450
        %v8561 = vadd.f32 %v8320, %v8452
        %v8562 = vadd.f32 %v8321, %v8455
        %v8563 = vadd.f32 %v8322, %v8457
        %v8564 = vadd.f32 %v8323, %v8460
        %v8565 = vadd.f32 %v8324, %v8462
        %v8566 = vadd.f32 %v8325, %v8465
        %v8567 = vadd.f32 %v8326, %v8467
        %v8568 = vadd.f32 %v8327, %v8470
        %v8569 = vadd.f32 %v8328, %v8472
        %v8570 = vadd.f32 %v8329, %v8475
        %v8571 = vadd.f32 %v8330, %v8477
        %v8572 = vadd.f32 %v8331, %v8480
        %v8573 = vadd.f32 %v8332, %v8482
        %v8574 = vadd.f32 %v8333, %v8485
        %v8575 = vadd.f32 %v8334, %v8487
        %v8576 = vadd.f32 %v8335, %v8490
        %v8577 = vadd.f32 %v8336, %v8492
        %v8578 = vadd.f32 %v8337, %v8495
        %v8579 = vadd.f32 %v8338, %v8497
        %v8580 = vadd.f32 %v8339, %v8500
        %v8581 = vadd.f32 %v8340, %v8502
        %v8582 = vadd.f32 %v8341, %v8505
        %v8583 = vadd.f32 %v8342, %v8507
        %v8584 = vadd.f32 %v8343, %v8510
        %v8585 = vadd.f32 %v8344, %v8512
        %v8586 = vadd.f32 %v8345, %v8515
        %v8587 = vadd.f32 %v8346, %v8517
        %v8588 = vadd.f32 %v8347, %v8520
        %v8589 = vadd.f32 %v8348, %v8522
        %v8590 = vadd.f32 %v8349, %v8525
        %v8591 = vadd.f32 %v8350, %v8527
        %v8624 = vrot.slane %v8560, 6
        %v8625 = vrot.slane %v8561, 6
        %v8626 = vsel %vm4313, %v8624, %v8625
        %v8627 = vrot.slane %v8562, 6
        %v8628 = vrot.slane %v8563, 6
        %v8629 = vsel %vm4313, %v8627, %v8628
        %v8630 = vrot.slane %v8564, 6
        %v8631 = vrot.slane %v8565, 6
        %v8632 = vsel %vm4313, %v8630, %v8631
        %v8633 = vrot.slane %v8566, 6
        %v8634 = vrot.slane %v8567, 6
        %v8635 = vsel %vm4313, %v8633, %v8634
        %v8636 = vrot.slane %v8568, 6
        %v8637 = vrot.slane %v8569, 6
        %v8638 = vsel %vm4313, %v8636, %v8637
        %v8639 = vrot.slane %v8570, 6
        %v8640 = vrot.slane %v8571, 6
        %v8641 = vsel %vm4313, %v8639, %v8640
        %v8642 = vrot.slane %v8572, 6
        %v8643 = vrot.slane %v8573, 6
        %v8644 = vsel %vm4313, %v8642, %v8643
        %v8645 = vrot.slane %v8574, 6
        %v8646 = vrot.slane %v8575, 6
        %v8647 = vsel %vm4313, %v8645, %v8646
        %v8648 = vrot.slane %v8576, 6
        %v8649 = vrot.slane %v8577, 6
        %v8650 = vsel %vm4313, %v8648, %v8649
        %v8651 = vrot.slane %v8578, 6
        %v8652 = vrot.slane %v8579, 6
        %v8653 = vsel %vm4313, %v8651, %v8652
        %v8654 = vrot.slane %v8580, 6
        %v8655 = vrot.slane %v8581, 6
        %v8656 = vsel %vm4313, %v8654, %v8655
        %v8657 = vrot.slane %v8582, 6
        %v8658 = vrot.slane %v8583, 6
        %v8659 = vsel %vm4313, %v8657, %v8658
        %v8660 = vrot.slane %v8584, 6
        %v8661 = vrot.slane %v8585, 6
        %v8662 = vsel %vm4313, %v8660, %v8661
        %v8663 = vrot.slane %v8586, 6
        %v8664 = vrot.slane %v8587, 6
        %v8665 = vsel %vm4313, %v8663, %v8664
        %v8666 = vrot.slane %v8588, 6
        %v8667 = vrot.slane %v8589, 6
        %v8668 = vsel %vm4313, %v8666, %v8667
        %v8669 = vrot.slane %v8590, 6
        %v8670 = vrot.slane %v8591, 6
        %v8671 = vsel %vm4313, %v8669, %v8670
        %v8720 = vadd.f32 %v4410, %v8624
        %v8721 = vadd.f32 %v4411, %v8626
        %v8722 = vadd.f32 %v4412, %v8625
        %v8723 = vadd.f32 %v4413, %v8627
        %v8724 = vadd.f32 %v4414, %v8629
        %v8725 = vadd.f32 %v4415, %v8628
        %v8726 = vadd.f32 %v4416, %v8630
        %v8727 = vadd.f32 %v4417, %v8632
        %v8728 = vadd.f32 %v4418, %v8631
        %v8729 = vadd.f32 %v4419, %v8633
        %v8730 = vadd.f32 %v4420, %v8635
        %v8731 = vadd.f32 %v4421, %v8634
        %v8732 = vadd.f32 %v4422, %v8636
        %v8733 = vadd.f32 %v4423, %v8638
        %v8734 = vadd.f32 %v4424, %v8637
        %v8735 = vadd.f32 %v4425, %v8639
        %v8736 = vadd.f32 %v4426, %v8641
        %v8737 = vadd.f32 %v4427, %v8640
        %v8738 = vadd.f32 %v4428, %v8642
        %v8739 = vadd.f32 %v4429, %v8644
        %v8740 = vadd.f32 %v4430, %v8643
        %v8741 = vadd.f32 %v4431, %v8645
        %v8742 = vadd.f32 %v4432, %v8647
        %v8743 = vadd.f32 %v4433, %v8646
        %v8744 = vadd.f32 %v4434, %v8648
        %v8745 = vadd.f32 %v4435, %v8650
        %v8746 = vadd.f32 %v4436, %v8649
        %v8747 = vadd.f32 %v4437, %v8651
        %v8748 = vadd.f32 %v4438, %v8653
        %v8749 = vadd.f32 %v4439, %v8652
        %v8750 = vadd.f32 %v4440, %v8654
        %v8751 = vadd.f32 %v4441, %v8656
        %v8752 = vadd.f32 %v4442, %v8655
        %v8753 = vadd.f32 %v4443, %v8657
        %v8754 = vadd.f32 %v4444, %v8659
        %v8755 = vadd.f32 %v4445, %v8658
        %v8756 = vadd.f32 %v4446, %v8660
        %v8757 = vadd.f32 %v4447, %v8662
        %v8758 = vadd.f32 %v4448, %v8661
        %v8759 = vadd.f32 %v4449, %v8663
        %v8760 = vadd.f32 %v4450, %v8665
        %v8761 = vadd.f32 %v4451, %v8664
        %v8762 = vadd.f32 %v4452, %v8666
        %v8763 = vadd.f32 %v4453, %v8668
        %v8764 = vadd.f32 %v4454, %v8667
        %v8765 = vadd.f32 %v4455, %v8669
        %v8766 = vadd.f32 %v4456, %v8671
        %v8767 = vadd.f32 %v4457, %v8670
        %v8768 = vadd.f32 %v6901, %v368
        %v8769 = vadd.f32 %v6902, %v369
        %v8770 = vadd.f32 %v6903, %v370
        %v8771 = vadd.f32 %v6904, %v371
        %v8772 = vadd.f32 %v6905, %v372
        %v8773 = vadd.f32 %v6906, %v373
        %v8774 = vadd.f32 %v6907, %v374
        %v8775 = vadd.f32 %v6908, %v375
        %v8776 = vadd.f32 %v6909, %v376
        %v8777 = vadd.f32 %v6910, %v377
        %v8778 = vadd.f32 %v6911, %v378
        %v8779 = vadd.f32 %v6912, %v379
        %v8780 = vadd.f32 %v6913, %v380
        %v8781 = vadd.f32 %v6914, %v381
        %v8782 = vadd.f32 %v6915, %v382
        %v8783 = vadd.f32 %v6916, %v383
        %v8784 = vadd.f32 %v6917, %v384
        %v8785 = vadd.f32 %v6918, %v385
        %v8786 = vadd.f32 %v6919, %v386
        %v8787 = vadd.f32 %v6920, %v387
        %v8788 = vadd.f32 %v6921, %v388
        %v8789 = vadd.f32 %v6922, %v389
        %v8790 = vadd.f32 %v6923, %v390
        %v8791 = vadd.f32 %v6924, %v391
        %v8792 = vadd.f32 %v6925, %v392
        %v8793 = vadd.f32 %v6926, %v393
        %v8794 = vadd.f32 %v6927, %v394
        %v8795 = vadd.f32 %v6928, %v395
        %v8796 = vadd.f32 %v6929, %v396
        %v8797 = vadd.f32 %v6930, %v397
        %v8798 = vadd.f32 %v6931, %v398
        %v8799 = vadd.f32 %v6932, %v399
        %v8800 = vadd.f32 %v6933, %v400
        %v8801 = vadd.f32 %v6934, %v401
        %v8802 = vadd.f32 %v6935, %v402
        %v8803 = vadd.f32 %v6936, %v403
        %v8804 = vadd.f32 %v6937, %v404
        %v8805 = vadd.f32 %v6938, %v405
        %v8806 = vadd.f32 %v6939, %v406
        %v8807 = vadd.f32 %v6940, %v407
        %v8808 = vadd.f32 %v6941, %v408
        %v8809 = vadd.f32 %v6942, %v409
        %v8810 = vadd.f32 %v6943, %v410
        %v8811 = vadd.f32 %v6944, %v411
        %v8812 = vadd.f32 %v6945, %v412
        %v8813 = vadd.f32 %v6946, %v413
        %v8814 = vadd.f32 %v6947, %v414
        %v8815 = vadd.f32 %v6948, %v415
        %v8864 = vrot.slane %v8768, 2
        %v8865 = vrot.slane %v8769, 2
        %v8866 = vsel %vm949, %v8864, %v8865
        %v8867 = vrot.slane %v8770, 2
        %v8868 = vsel %vm949, %v8865, %v8867
        %v8869 = vrot.slane %v8771, 2
        %v8870 = vrot.slane %v8772, 2
        %v8871 = vsel %vm949, %v8869, %v8870
        %v8872 = vrot.slane %v8773, 2
        %v8873 = vsel %vm949, %v8870, %v8872
        %v8874 = vrot.slane %v8774, 2
        %v8875 = vrot.slane %v8775, 2
        %v8876 = vsel %vm949, %v8874, %v8875
        %v8877 = vrot.slane %v8776, 2
        %v8878 = vsel %vm949, %v8875, %v8877
        %v8879 = vrot.slane %v8777, 2
        %v8880 = vrot.slane %v8778, 2
        %v8881 = vsel %vm949, %v8879, %v8880
        %v8882 = vrot.slane %v8779, 2
        %v8883 = vsel %vm949, %v8880, %v8882
        %v8884 = vrot.slane %v8780, 2
        %v8885 = vrot.slane %v8781, 2
        %v8886 = vsel %vm949, %v8884, %v8885
        %v8887 = vrot.slane %v8782, 2
        %v8888 = vsel %vm949, %v8885, %v8887
        %v8889 = vrot.slane %v8783, 2
        %v8890 = vrot.slane %v8784, 2
        %v8891 = vsel %vm949, %v8889, %v8890
        %v8892 = vrot.slane %v8785, 2
        %v8893 = vsel %vm949, %v8890, %v8892
        %v8894 = vrot.slane %v8786, 2
        %v8895 = vrot.slane %v8787, 2
        %v8896 = vsel %vm949, %v8894, %v8895
        %v8897 = vrot.slane %v8788, 2
        %v8898 = vsel %vm949, %v8895, %v8897
        %v8899 = vrot.slane %v8789, 2
        %v8900 = vrot.slane %v8790, 2
        %v8901 = vsel %vm949, %v8899, %v8900
        %v8902 = vrot.slane %v8791, 2
        %v8903 = vsel %vm949, %v8900, %v8902
        %v8904 = vrot.slane %v8792, 2
        %v8905 = vrot.slane %v8793, 2
        %v8906 = vsel %vm949, %v8904, %v8905
        %v8907 = vrot.slane %v8794, 2
        %v8908 = vsel %vm949, %v8905, %v8907
        %v8909 = vrot.slane %v8795, 2
        %v8910 = vrot.slane %v8796, 2
        %v8911 = vsel %vm949, %v8909, %v8910
        %v8912 = vrot.slane %v8797, 2
        %v8913 = vsel %vm949, %v8910, %v8912
        %v8914 = vrot.slane %v8798, 2
        %v8915 = vrot.slane %v8799, 2
        %v8916 = vsel %vm949, %v8914, %v8915
        %v8917 = vrot.slane %v8800, 2
        %v8918 = vsel %vm949, %v8915, %v8917
        %v8919 = vrot.slane %v8801, 2
        %v8920 = vrot.slane %v8802, 2
        %v8921 = vsel %vm949, %v8919, %v8920
        %v8922 = vrot.slane %v8803, 2
        %v8923 = vsel %vm949, %v8920, %v8922
        %v8924 = vrot.slane %v8804, 2
        %v8925 = vrot.slane %v8805, 2
        %v8926 = vsel %vm949, %v8924, %v8925
        %v8927 = vrot.slane %v8806, 2
        %v8928 = vsel %vm949, %v8925, %v8927
        %v8929 = vrot.slane %v8807, 2
        %v8930 = vrot.slane %v8808, 2
        %v8931 = vsel %vm949, %v8929, %v8930
        %v8932 = vrot.slane %v8809, 2
        %v8933 = vsel %vm949, %v8930, %v8932
        %v8934 = vrot.slane %v8810, 2
        %v8935 = vrot.slane %v8811, 2
        %v8936 = vsel %vm949, %v8934, %v8935
        %v8937 = vrot.slane %v8812, 2
        %v8938 = vsel %vm949, %v8935, %v8937
        %v8939 = vrot.slane %v8813, 2
        %v8940 = vrot.slane %v8814, 2
        %v8941 = vsel %vm949, %v8939, %v8940
        %v8942 = vrot.slane %v8815, 2
        %v8943 = vsel %vm949, %v8940, %v8942
        %v8944 = vadd.f32 %v8720, %v425
        %v8945 = vadd.f32 %v8721, %v426
        %v8946 = vadd.f32 %v8722, %v427
        %v8947 = vadd.f32 %v8723, %v428
        %v8948 = vadd.f32 %v8724, %v429
        %v8949 = vadd.f32 %v8725, %v430
        %v8950 = vadd.f32 %v8726, %v431
        %v8951 = vadd.f32 %v8727, %v432
        %v8952 = vadd.f32 %v8728, %v433
        %v8953 = vadd.f32 %v8729, %v434
        %v8954 = vadd.f32 %v8730, %v435
        %v8955 = vadd.f32 %v8731, %v436
        %v8956 = vadd.f32 %v8732, %v437
        %v8957 = vadd.f32 %v8733, %v438
        %v8958 = vadd.f32 %v8734, %v439
        %v8959 = vadd.f32 %v8735, %v440
        %v8960 = vadd.f32 %v8736, %v441
        %v8961 = vadd.f32 %v8737, %v442
        %v8962 = vadd.f32 %v8738, %v443
        %v8963 = vadd.f32 %v8739, %v444
        %v8964 = vadd.f32 %v8740, %v445
        %v8965 = vadd.f32 %v8741, %v446
        %v8966 = vadd.f32 %v8742, %v447
        %v8967 = vadd.f32 %v8743, %v448
        %v8968 = vadd.f32 %v8744, %v449
        %v8969 = vadd.f32 %v8745, %v450
        %v8970 = vadd.f32 %v8746, %v451
        %v8971 = vadd.f32 %v8747, %v452
        %v8972 = vadd.f32 %v8748, %v453
        %v8973 = vadd.f32 %v8749, %v454
        %v8974 = vadd.f32 %v8750, %v455
        %v8975 = vadd.f32 %v8751, %v456
        %v8976 = vadd.f32 %v8752, %v457
        %v8977 = vadd.f32 %v8753, %v458
        %v8978 = vadd.f32 %v8754, %v459
        %v8979 = vadd.f32 %v8755, %v460
        %v8980 = vadd.f32 %v8756, %v461
        %v8981 = vadd.f32 %v8757, %v462
        %v8982 = vadd.f32 %v8758, %v463
        %v8983 = vadd.f32 %v8759, %v464
        %v8984 = vadd.f32 %v8760, %v465
        %v8985 = vadd.f32 %v8761, %v466
        %v8986 = vadd.f32 %v8762, %v467
        %v8987 = vadd.f32 %v8763, %v468
        %v8988 = vadd.f32 %v8764, %v469
        %v8989 = vadd.f32 %v8765, %v470
        %v8990 = vadd.f32 %v8766, %v471
        %v8991 = vadd.f32 %v8767, %v472
        %v9040 = vrot.slane %v8944, 2
        %v9041 = vrot.slane %v8945, 2
        %v9042 = vsel %vm949, %v9040, %v9041
        %v9043 = vrot.slane %v8946, 2
        %v9044 = vsel %vm949, %v9041, %v9043
        %v9045 = vrot.slane %v8947, 2
        %v9046 = vrot.slane %v8948, 2
        %v9047 = vsel %vm949, %v9045, %v9046
        %v9048 = vrot.slane %v8949, 2
        %v9049 = vsel %vm949, %v9046, %v9048
        %v9050 = vrot.slane %v8950, 2
        %v9051 = vrot.slane %v8951, 2
        %v9052 = vsel %vm949, %v9050, %v9051
        %v9053 = vrot.slane %v8952, 2
        %v9054 = vsel %vm949, %v9051, %v9053
        %v9055 = vrot.slane %v8953, 2
        %v9056 = vrot.slane %v8954, 2
        %v9057 = vsel %vm949, %v9055, %v9056
        %v9058 = vrot.slane %v8955, 2
        %v9059 = vsel %vm949, %v9056, %v9058
        %v9060 = vrot.slane %v8956, 2
        %v9061 = vrot.slane %v8957, 2
        %v9062 = vsel %vm949, %v9060, %v9061
        %v9063 = vrot.slane %v8958, 2
        %v9064 = vsel %vm949, %v9061, %v9063
        %v9065 = vrot.slane %v8959, 2
        %v9066 = vrot.slane %v8960, 2
        %v9067 = vsel %vm949, %v9065, %v9066
        %v9068 = vrot.slane %v8961, 2
        %v9069 = vsel %vm949, %v9066, %v9068
        %v9070 = vrot.slane %v8962, 2
        %v9071 = vrot.slane %v8963, 2
        %v9072 = vsel %vm949, %v9070, %v9071
        %v9073 = vrot.slane %v8964, 2
        %v9074 = vsel %vm949, %v9071, %v9073
        %v9075 = vrot.slane %v8965, 2
        %v9076 = vrot.slane %v8966, 2
        %v9077 = vsel %vm949, %v9075, %v9076
        %v9078 = vrot.slane %v8967, 2
        %v9079 = vsel %vm949, %v9076, %v9078
        %v9080 = vrot.slane %v8968, 2
        %v9081 = vrot.slane %v8969, 2
        %v9082 = vsel %vm949, %v9080, %v9081
        %v9083 = vrot.slane %v8970, 2
        %v9084 = vsel %vm949, %v9081, %v9083
        %v9085 = vrot.slane %v8971, 2
        %v9086 = vrot.slane %v8972, 2
        %v9087 = vsel %vm949, %v9085, %v9086
        %v9088 = vrot.slane %v8973, 2
        %v9089 = vsel %vm949, %v9086, %v9088
        %v9090 = vrot.slane %v8974, 2
        %v9091 = vrot.slane %v8975, 2
        %v9092 = vsel %vm949, %v9090, %v9091
        %v9093 = vrot.slane %v8976, 2
        %v9094 = vsel %vm949, %v9091, %v9093
        %v9095 = vrot.slane %v8977, 2
        %v9096 = vrot.slane %v8978, 2
        %v9097 = vsel %vm949, %v9095, %v9096
        %v9098 = vrot.slane %v8979, 2
        %v9099 = vsel %vm949, %v9096, %v9098
        %v9100 = vrot.slane %v8980, 2
        %v9101 = vrot.slane %v8981, 2
        %v9102 = vsel %vm949, %v9100, %v9101
        %v9103 = vrot.slane %v8982, 2
        %v9104 = vsel %vm949, %v9101, %v9103
        %v9105 = vrot.slane %v8983, 2
        %v9106 = vrot.slane %v8984, 2
        %v9107 = vsel %vm949, %v9105, %v9106
        %v9108 = vrot.slane %v8985, 2
        %v9109 = vsel %vm949, %v9106, %v9108
        %v9110 = vrot.slane %v8986, 2
        %v9111 = vrot.slane %v8987, 2
        %v9112 = vsel %vm949, %v9110, %v9111
        %v9113 = vrot.slane %v8988, 2
        %v9114 = vsel %vm949, %v9111, %v9113
        %v9115 = vrot.slane %v8989, 2
        %v9116 = vrot.slane %v8990, 2
        %v9117 = vsel %vm949, %v9115, %v9116
        %v9118 = vrot.slane %v8991, 2
        %v9119 = vsel %vm949, %v9116, %v9118
        %v9120 = vld [vmem:[%s6] sm:$0xff]
        %v9121 = vld [vmem:[%s6 + $0x8] sm:$0xff]
        %v9122 = vld [vmem:[%s6 + $0x10] sm:$0xff]
        %v9123 = vld [vmem:[%s6 + $0x18] sm:$0xff]
        %v9124 = vld [vmem:[%s7] sm:$0xff]
        %v9125 = vld [vmem:[%s7 + $0x8] sm:$0xff]
        %v9126 = vld [vmem:[%s7 + $0x10] sm:$0xff]
        %v9127 = vld [vmem:[%s7 + $0x18] sm:$0xff]
        %v9128 = vsel %vm4458, %v9042, 0
        %v9130 = vsel %vm4458, %v9044, 0
        %v9132 = vsel %vm4458, %v9047, 0
        %v9134 = vsel %vm4458, %v9049, 0
        %v9136 = vsel %vm4458, %v9052, 0
        %v9138 = vsel %vm4458, %v9054, 0
        %v9140 = vsel %vm4458, %v9057, 0
        %v9142 = vsel %vm4458, %v9059, 0
        %v9144 = vsel %vm4458, %v9062, 0
        %v9146 = vsel %vm4458, %v9064, 0
        %v9148 = vsel %vm4458, %v9067, 0
        %v9150 = vsel %vm4458, %v9069, 0
        %v9152 = vsel %vm4458, %v9072, 0
        %v9154 = vsel %vm4458, %v9074, 0
        %v9156 = vsel %vm4458, %v9077, 0
        %v9158 = vsel %vm4458, %v9079, 0
        %v9160 = vsel %vm4458, %v9082, 0
        %v9162 = vsel %vm4458, %v9084, 0
        %v9164 = vsel %vm4458, %v9087, 0
        %v9166 = vsel %vm4458, %v9089, 0
        %v9168 = vsel %vm4458, %v9092, 0
        %v9170 = vsel %vm4458, %v9094, 0
        %v9172 = vsel %vm4458, %v9097, 0
        %v9174 = vsel %vm4458, %v9099, 0
        %v9176 = vsel %vm4458, %v9102, 0
        %v9178 = vsel %vm4458, %v9104, 0
        %v9180 = vsel %vm4458, %v9107, 0
        %v9182 = vsel %vm4458, %v9109, 0
        %v9184 = vsel %vm4458, %v9112, 0
        %v9186 = vsel %vm4458, %v9114, 0
        %v9188 = vsel %vm4458, %v9117, 0
        %v9190 = vsel %vm4458, %v9119, 0
        %9192 = vmatpush.msra.mxu0 0.0
        %9193 = vmatpush.msra.mxu0 0.0
        %9194 = vmatpush.msra.mxu0 0.0
        %9195 = vmatpush.msra.mxu0 0.0
        %9196 = vmatpush.msra.mxu0 0.0
        %9197 = vmatpush.msra.mxu0 0.0
        %9198 = vmatpush.msra.mxu0 0.0
        %9199 = vmatpush.msra.mxu0 0.0
        %9200 = vmatpush.msra.mxu0 0.0
        %9201 = vmatpush.msra.mxu0 0.0
        %9202 = vmatpush.msra.mxu0 0.0
        %9203 = vmatpush.msra.mxu0 0.0
        %9204 = vmatpush.msra.mxu0 %v9127
        %9205 = vmatpush.msra.mxu0 %v9126
        %9206 = vmatpush.msra.mxu0 %v9125
        %9207 = vmatpush.msra.mxu0 %v9124
        %9208 = vmatmul.f32.gmra.mxu0 %v9128
        %v9209 = vpop.f32.mrf.mxu0
        %v9210 = vadd.f32 0.0, %v9209
        %9211 = vmatmul.f32.gmra.mxu0 %v9130
        %v9212 = vpop.f32.mrf.mxu0
        %v9213 = vadd.f32 0.0, %v9212
        %9214 = vmatmul.f32.gmra.mxu0 %v9132
        %v9215 = vpop.f32.mrf.mxu0
        %v9216 = vadd.f32 0.0, %v9215
        %9217 = vmatmul.f32.gmra.mxu0 %v9134
        %v9218 = vpop.f32.mrf.mxu0
        %v9219 = vadd.f32 0.0, %v9218
        %9220 = vmatmul.f32.gmra.mxu0 %v9136
        %v9221 = vpop.f32.mrf.mxu0
        %v9222 = vadd.f32 0.0, %v9221
        %9223 = vmatmul.f32.gmra.mxu0 %v9138
        %v9224 = vpop.f32.mrf.mxu0
        %v9225 = vadd.f32 0.0, %v9224
        %9226 = vmatmul.f32.gmra.mxu0 %v9140
        %v9227 = vpop.f32.mrf.mxu0
        %v9228 = vadd.f32 0.0, %v9227
        %9229 = vmatmul.f32.gmra.mxu0 %v9142
        %v9230 = vpop.f32.mrf.mxu0
        %v9231 = vadd.f32 0.0, %v9230
        %9232 = vmatmul.f32.gmra.mxu0 %v9144
        %v9233 = vpop.f32.mrf.mxu0
        %v9234 = vadd.f32 0.0, %v9233
        %9235 = vmatmul.f32.gmra.mxu0 %v9146
        %v9236 = vpop.f32.mrf.mxu0
        %v9237 = vadd.f32 0.0, %v9236
        %9238 = vmatmul.f32.gmra.mxu0 %v9148
        %v9239 = vpop.f32.mrf.mxu0
        %v9240 = vadd.f32 0.0, %v9239
        %9241 = vmatmul.f32.gmra.mxu0 %v9150
        %v9242 = vpop.f32.mrf.mxu0
        %v9243 = vadd.f32 0.0, %v9242
        %9244 = vmatmul.f32.gmra.mxu0 %v9152
        %v9245 = vpop.f32.mrf.mxu0
        %v9246 = vadd.f32 0.0, %v9245
        %9247 = vmatmul.f32.gmra.mxu0 %v9154
        %v9248 = vpop.f32.mrf.mxu0
        %v9249 = vadd.f32 0.0, %v9248
        %9250 = vmatmul.f32.gmra.mxu0 %v9156
        %v9251 = vpop.f32.mrf.mxu0
        %v9252 = vadd.f32 0.0, %v9251
        %9253 = vmatmul.f32.gmra.mxu0 %v9158
        %v9254 = vpop.f32.mrf.mxu0
        %v9255 = vadd.f32 0.0, %v9254
        %9256 = vmatmul.f32.gmra.mxu0 %v9160
        %v9257 = vpop.f32.mrf.mxu0
        %v9258 = vadd.f32 0.0, %v9257
        %9259 = vmatmul.f32.gmra.mxu0 %v9162
        %v9260 = vpop.f32.mrf.mxu0
        %v9261 = vadd.f32 0.0, %v9260
        %9262 = vmatmul.f32.gmra.mxu0 %v9164
        %v9263 = vpop.f32.mrf.mxu0
        %v9264 = vadd.f32 0.0, %v9263
        %9265 = vmatmul.f32.gmra.mxu0 %v9166
        %v9266 = vpop.f32.mrf.mxu0
        %v9267 = vadd.f32 0.0, %v9266
        %9268 = vmatmul.f32.gmra.mxu0 %v9168
        %v9269 = vpop.f32.mrf.mxu0
        %v9270 = vadd.f32 0.0, %v9269
        %9271 = vmatmul.f32.gmra.mxu0 %v9170
        %v9272 = vpop.f32.mrf.mxu0
        %v9273 = vadd.f32 0.0, %v9272
        %9274 = vmatmul.f32.gmra.mxu0 %v9172
        %v9275 = vpop.f32.mrf.mxu0
        %v9276 = vadd.f32 0.0, %v9275
        %9277 = vmatmul.f32.gmra.mxu0 %v9174
        %v9278 = vpop.f32.mrf.mxu0
        %v9279 = vadd.f32 0.0, %v9278
        %9280 = vmatmul.f32.gmra.mxu0 %v9176
        %v9281 = vpop.f32.mrf.mxu0
        %v9282 = vadd.f32 0.0, %v9281
        %9283 = vmatmul.f32.gmra.mxu0 %v9178
        %v9284 = vpop.f32.mrf.mxu0
        %v9285 = vadd.f32 0.0, %v9284
        %9286 = vmatmul.f32.gmra.mxu0 %v9180
        %v9287 = vpop.f32.mrf.mxu0
        %v9288 = vadd.f32 0.0, %v9287
        %9289 = vmatmul.f32.gmra.mxu0 %v9182
        %v9290 = vpop.f32.mrf.mxu0
        %v9291 = vadd.f32 0.0, %v9290
        %9292 = vmatmul.f32.gmra.mxu0 %v9184
        %v9293 = vpop.f32.mrf.mxu0
        %v9294 = vadd.f32 0.0, %v9293
        %9295 = vmatmul.f32.gmra.mxu0 %v9186
        %v9296 = vpop.f32.mrf.mxu0
        %v9297 = vadd.f32 0.0, %v9296
        %9298 = vmatmul.f32.gmra.mxu0 %v9188
        %v9299 = vpop.f32.mrf.mxu0
        %v9300 = vadd.f32 0.0, %v9299
        %9301 = vmatmul.f32.gmra.mxu0 %v9190
        %v9302 = vpop.f32.mrf.mxu0
        %v9303 = vadd.f32 0.0, %v9302
        %9304 = vdwg.mxu0
        %v9305 = vsel %vm4458, %v8866, 0
        %v9307 = vsel %vm4458, %v8868, 0
        %v9309 = vsel %vm4458, %v8871, 0
        %v9311 = vsel %vm4458, %v8873, 0
        %v9313 = vsel %vm4458, %v8876, 0
        %v9315 = vsel %vm4458, %v8878, 0
        %v9317 = vsel %vm4458, %v8881, 0
        %v9319 = vsel %vm4458, %v8883, 0
        %v9321 = vsel %vm4458, %v8886, 0
        %v9323 = vsel %vm4458, %v8888, 0
        %v9325 = vsel %vm4458, %v8891, 0
        %v9327 = vsel %vm4458, %v8893, 0
        %v9329 = vsel %vm4458, %v8896, 0
        %v9331 = vsel %vm4458, %v8898, 0
        %v9333 = vsel %vm4458, %v8901, 0
        %v9335 = vsel %vm4458, %v8903, 0
        %v9337 = vsel %vm4458, %v8906, 0
        %v9339 = vsel %vm4458, %v8908, 0
        %v9341 = vsel %vm4458, %v8911, 0
        %v9343 = vsel %vm4458, %v8913, 0
        %v9345 = vsel %vm4458, %v8916, 0
        %v9347 = vsel %vm4458, %v8918, 0
        %v9349 = vsel %vm4458, %v8921, 0
        %v9351 = vsel %vm4458, %v8923, 0
        %v9353 = vsel %vm4458, %v8926, 0
        %v9355 = vsel %vm4458, %v8928, 0
        %v9357 = vsel %vm4458, %v8931, 0
        %v9359 = vsel %vm4458, %v8933, 0
        %v9361 = vsel %vm4458, %v8936, 0
        %v9363 = vsel %vm4458, %v8938, 0
        %v9365 = vsel %vm4458, %v8941, 0
        %v9367 = vsel %vm4458, %v8943, 0
        %9369 = vmatpush.msra.mxu0 0.0
        %9370 = vmatpush.msra.mxu0 0.0
        %9371 = vmatpush.msra.mxu0 0.0
        %9372 = vmatpush.msra.mxu0 0.0
        %9373 = vmatpush.msra.mxu0 0.0
        %9374 = vmatpush.msra.mxu0 0.0
        %9375 = vmatpush.msra.mxu0 0.0
        %9376 = vmatpush.msra.mxu0 0.0
        %9377 = vmatpush.msra.mxu0 0.0
        %9378 = vmatpush.msra.mxu0 0.0
        %9379 = vmatpush.msra.mxu0 0.0
        %9380 = vmatpush.msra.mxu0 0.0
        %9381 = vmatpush.msra.mxu0 %v9123
        %9382 = vmatpush.msra.mxu0 %v9122
        %9383 = vmatpush.msra.mxu0 %v9121
        %9384 = vmatpush.msra.mxu0 %v9120
        %9385 = vmatmul.f32.gmra.mxu0 %v9305
        %v9386 = vpop.f32.mrf.mxu0
        %v9387 = vadd.f32 %v9210, %v9386
        %9388 = vmatmul.f32.gmra.mxu0 %v9307
        %v9389 = vpop.f32.mrf.mxu0
        %v9390 = vadd.f32 %v9213, %v9389
        %9391 = vmatmul.f32.gmra.mxu0 %v9309
        %v9392 = vpop.f32.mrf.mxu0
        %v9393 = vadd.f32 %v9216, %v9392
        %9394 = vmatmul.f32.gmra.mxu0 %v9311
        %v9395 = vpop.f32.mrf.mxu0
        %v9396 = vadd.f32 %v9219, %v9395
        %9397 = vmatmul.f32.gmra.mxu0 %v9313
        %v9398 = vpop.f32.mrf.mxu0
        %v9399 = vadd.f32 %v9222, %v9398
        %9400 = vmatmul.f32.gmra.mxu0 %v9315
        %v9401 = vpop.f32.mrf.mxu0
        %v9402 = vadd.f32 %v9225, %v9401
        %9403 = vmatmul.f32.gmra.mxu0 %v9317
        %v9404 = vpop.f32.mrf.mxu0
        %v9405 = vadd.f32 %v9228, %v9404
        %9406 = vmatmul.f32.gmra.mxu0 %v9319
        %v9407 = vpop.f32.mrf.mxu0
        %v9408 = vadd.f32 %v9231, %v9407
        %9409 = vmatmul.f32.gmra.mxu0 %v9321
        %v9410 = vpop.f32.mrf.mxu0
        %v9411 = vadd.f32 %v9234, %v9410
        %9412 = vmatmul.f32.gmra.mxu0 %v9323
        %v9413 = vpop.f32.mrf.mxu0
        %v9414 = vadd.f32 %v9237, %v9413
        %9415 = vmatmul.f32.gmra.mxu0 %v9325
        %v9416 = vpop.f32.mrf.mxu0
        %v9417 = vadd.f32 %v9240, %v9416
        %9418 = vmatmul.f32.gmra.mxu0 %v9327
        %v9419 = vpop.f32.mrf.mxu0
        %v9420 = vadd.f32 %v9243, %v9419
        %9421 = vmatmul.f32.gmra.mxu0 %v9329
        %v9422 = vpop.f32.mrf.mxu0
        %v9423 = vadd.f32 %v9246, %v9422
        %9424 = vmatmul.f32.gmra.mxu0 %v9331
        %v9425 = vpop.f32.mrf.mxu0
        %v9426 = vadd.f32 %v9249, %v9425
        %9427 = vmatmul.f32.gmra.mxu0 %v9333
        %v9428 = vpop.f32.mrf.mxu0
        %v9429 = vadd.f32 %v9252, %v9428
        %9430 = vmatmul.f32.gmra.mxu0 %v9335
        %v9431 = vpop.f32.mrf.mxu0
        %v9432 = vadd.f32 %v9255, %v9431
        %9433 = vmatmul.f32.gmra.mxu0 %v9337
        %v9434 = vpop.f32.mrf.mxu0
        %v9435 = vadd.f32 %v9258, %v9434
        %9436 = vmatmul.f32.gmra.mxu0 %v9339
        %v9437 = vpop.f32.mrf.mxu0
        %v9438 = vadd.f32 %v9261, %v9437
        %9439 = vmatmul.f32.gmra.mxu0 %v9341
        %v9440 = vpop.f32.mrf.mxu0
        %v9441 = vadd.f32 %v9264, %v9440
        %9442 = vmatmul.f32.gmra.mxu0 %v9343
        %v9443 = vpop.f32.mrf.mxu0
        %v9444 = vadd.f32 %v9267, %v9443
        %9445 = vmatmul.f32.gmra.mxu0 %v9345
        %v9446 = vpop.f32.mrf.mxu0
        %v9447 = vadd.f32 %v9270, %v9446
        %9448 = vmatmul.f32.gmra.mxu0 %v9347
        %v9449 = vpop.f32.mrf.mxu0
        %v9450 = vadd.f32 %v9273, %v9449
        %9451 = vmatmul.f32.gmra.mxu0 %v9349
        %v9452 = vpop.f32.mrf.mxu0
        %v9453 = vadd.f32 %v9276, %v9452
        %9454 = vmatmul.f32.gmra.mxu0 %v9351
        %v9455 = vpop.f32.mrf.mxu0
        %v9456 = vadd.f32 %v9279, %v9455
        %9457 = vmatmul.f32.gmra.mxu0 %v9353
        %v9458 = vpop.f32.mrf.mxu0
        %v9459 = vadd.f32 %v9282, %v9458
        %9460 = vmatmul.f32.gmra.mxu0 %v9355
        %v9461 = vpop.f32.mrf.mxu0
        %v9462 = vadd.f32 %v9285, %v9461
        %9463 = vmatmul.f32.gmra.mxu0 %v9357
        %v9464 = vpop.f32.mrf.mxu0
        %v9465 = vadd.f32 %v9288, %v9464
        %9466 = vmatmul.f32.gmra.mxu0 %v9359
        %v9467 = vpop.f32.mrf.mxu0
        %v9468 = vadd.f32 %v9291, %v9467
        %9469 = vmatmul.f32.gmra.mxu0 %v9361
        %v9470 = vpop.f32.mrf.mxu0
        %v9471 = vadd.f32 %v9294, %v9470
        %9472 = vmatmul.f32.gmra.mxu0 %v9363
        %v9473 = vpop.f32.mrf.mxu0
        %v9474 = vadd.f32 %v9297, %v9473
        %9475 = vmatmul.f32.gmra.mxu0 %v9365
        %v9476 = vpop.f32.mrf.mxu0
        %v9477 = vadd.f32 %v9300, %v9476
        %9478 = vmatmul.f32.gmra.mxu0 %v9367
        %v9479 = vpop.f32.mrf.mxu0
        %v9480 = vadd.f32 %v9303, %v9479
        %9481 = vdwg.mxu0
        %v9482 = vld [vmem:[%s8] sm:$0x1]
        %v9484 = vperm.slane %v9482, 0
        %v9486 = vadd.f32 %v9387, %v9484
        %v9487 = vadd.f32 %v9390, %v9484
        %v9488 = vadd.f32 %v9393, %v9484
        %v9489 = vadd.f32 %v9396, %v9484
        %v9490 = vadd.f32 %v9399, %v9484
        %v9491 = vadd.f32 %v9402, %v9484
        %v9492 = vadd.f32 %v9405, %v9484
        %v9493 = vadd.f32 %v9408, %v9484
        %v9494 = vadd.f32 %v9411, %v9484
        %v9495 = vadd.f32 %v9414, %v9484
        %v9496 = vadd.f32 %v9417, %v9484
        %v9497 = vadd.f32 %v9420, %v9484
        %v9498 = vadd.f32 %v9423, %v9484
        %v9499 = vadd.f32 %v9426, %v9484
        %v9500 = vadd.f32 %v9429, %v9484
        %v9501 = vadd.f32 %v9432, %v9484
        %v9502 = vadd.f32 %v9435, %v9484
        %v9503 = vadd.f32 %v9438, %v9484
        %v9504 = vadd.f32 %v9441, %v9484
        %v9505 = vadd.f32 %v9444, %v9484
        %v9506 = vadd.f32 %v9447, %v9484
        %v9507 = vadd.f32 %v9450, %v9484
        %v9508 = vadd.f32 %v9453, %v9484
        %v9509 = vadd.f32 %v9456, %v9484
        %v9510 = vadd.f32 %v9459, %v9484
        %v9511 = vadd.f32 %v9462, %v9484
        %v9512 = vadd.f32 %v9465, %v9484
        %v9513 = vadd.f32 %v9468, %v9484
        %v9514 = vadd.f32 %v9471, %v9484
        %v9515 = vadd.f32 %v9474, %v9484
        %v9516 = vadd.f32 %v9477, %v9484
        %v9517 = vadd.f32 %v9480, %v9484
        %v9518 = vmax.f32 %v9486, 0.0
        %v9519 = vmax.f32 %v9487, 0.0
        %v9520 = vmax.f32 %v9488, 0.0
        %v9521 = vmax.f32 %v9489, 0.0
        %v9522 = vmax.f32 %v9490, 0.0
        %v9523 = vmax.f32 %v9491, 0.0
        %v9524 = vmax.f32 %v9492, 0.0
        %v9525 = vmax.f32 %v9493, 0.0
        %v9526 = vmax.f32 %v9494, 0.0
        %v9527 = vmax.f32 %v9495, 0.0
        %v9528 = vmax.f32 %v9496, 0.0
        %v9529 = vmax.f32 %v9497, 0.0
        %v9530 = vmax.f32 %v9498, 0.0
        %v9531 = vmax.f32 %v9499, 0.0
        %v9532 = vmax.f32 %v9500, 0.0
        %v9533 = vmax.f32 %v9501, 0.0
        %v9534 = vmax.f32 %v9502, 0.0
        %v9535 = vmax.f32 %v9503, 0.0
        %v9536 = vmax.f32 %v9504, 0.0
        %v9537 = vmax.f32 %v9505, 0.0
        %v9538 = vmax.f32 %v9506, 0.0
        %v9539 = vmax.f32 %v9507, 0.0
        %v9540 = vmax.f32 %v9508, 0.0
        %v9541 = vmax.f32 %v9509, 0.0
        %v9542 = vmax.f32 %v9510, 0.0
        %v9543 = vmax.f32 %v9511, 0.0
        %v9544 = vmax.f32 %v9512, 0.0
        %v9545 = vmax.f32 %v9513, 0.0
        %v9546 = vmax.f32 %v9514, 0.0
        %v9547 = vmax.f32 %v9515, 0.0
        %v9548 = vmax.f32 %v9516, 0.0
        %v9549 = vmax.f32 %v9517, 0.0
        %vm9550 = vcmask 523264
        %9551 = vst.msk [vmem:[%s340] sm:$0xff] %vm9550, %v9518
        %9552 = vst.msk [vmem:[%s340 + $0x8] sm:$0xff] %vm9550, %v9519
        %9553 = vst.msk [vmem:[%s340 + $0x10] sm:$0xff] %vm9550, %v9520
        %9554 = vst.msk [vmem:[%s340 + $0x18] sm:$0xff] %vm9550, %v9521
        %9555 = vst.msk [vmem:[%s340 + $0x20] sm:$0xff] %vm9550, %v9522
        %9556 = vst.msk [vmem:[%s340 + $0x28] sm:$0xff] %vm9550, %v9523
        %9557 = vst.msk [vmem:[%s340 + $0x30] sm:$0xff] %vm9550, %v9524
        %9558 = vst.msk [vmem:[%s340 + $0x38] sm:$0xff] %vm9550, %v9525
        %9559 = vst.msk [vmem:[%s340 + $0x40] sm:$0xff] %vm9550, %v9526
        %9560 = vst.msk [vmem:[%s340 + $0x48] sm:$0xff] %vm9550, %v9527
        %9561 = vst.msk [vmem:[%s340 + $0x50] sm:$0xff] %vm9550, %v9528
        %9562 = vst.msk [vmem:[%s340 + $0x58] sm:$0xff] %vm9550, %v9529
        %9563 = vst.msk [vmem:[%s340 + $0x60] sm:$0xff] %vm9550, %v9530
        %9564 = vst.msk [vmem:[%s340 + $0x68] sm:$0xff] %vm9550, %v9531
        %9565 = vst.msk [vmem:[%s340 + $0x70] sm:$0xff] %vm9550, %v9532
        %9566 = vst.msk [vmem:[%s340 + $0x78] sm:$0xff] %vm9550, %v9533
        %9567 = vst.msk [vmem:[%s340 + $0x80] sm:$0xff] %vm9550, %v9534
        %9568 = vst.msk [vmem:[%s340 + $0x88] sm:$0xff] %vm9550, %v9535
        %9569 = vst.msk [vmem:[%s340 + $0x90] sm:$0xff] %vm9550, %v9536
        %9570 = vst.msk [vmem:[%s340 + $0x98] sm:$0xff] %vm9550, %v9537
        %9571 = vst.msk [vmem:[%s340 + $0xa0] sm:$0xff] %vm9550, %v9538
        %9572 = vst.msk [vmem:[%s340 + $0xa8] sm:$0xff] %vm9550, %v9539
        %9573 = vst.msk [vmem:[%s340 + $0xb0] sm:$0xff] %vm9550, %v9540
        %9574 = vst.msk [vmem:[%s340 + $0xb8] sm:$0xff] %vm9550, %v9541
        %9575 = vst.msk [vmem:[%s340 + $0xc0] sm:$0xff] %vm9550, %v9542
        %9576 = vst.msk [vmem:[%s340 + $0xc8] sm:$0xff] %vm9550, %v9543
        %9577 = vst.msk [vmem:[%s340 + $0xd0] sm:$0xff] %vm9550, %v9544
        %9578 = vst.msk [vmem:[%s340 + $0xd8] sm:$0xff] %vm9550, %v9545
        %9579 = vst.msk [vmem:[%s340 + $0xe0] sm:$0xff] %vm9550, %v9546
        %9580 = vst.msk [vmem:[%s340 + $0xe8] sm:$0xff] %vm9550, %v9547
        %9581 = vst.msk [vmem:[%s340 + $0xf0] sm:$0xff] %vm9550, %v9548
        %9582 = vst.msk [vmem:[%s340 + $0xf8] sm:$0xff] %vm9550, %v9549
        %s9583 = sand.u32 %s230, 1
        %s9584 = scalar_lea.sflag [#allocation5], %s9583
        %s9585 = sand.u32 %s230, 1
        %s9586 = smul.addr %s9585, 256
        %s9587 = scalar_lea.vmem [#allocation4], %s9586
        // Predicated region
        $region57: #{msrb_forward.1} parent=55 // pred_check
          %p9588 = pneg %p240
        $region58: #{msrb_forward.1} parent=55 // pred_check_branch
          %9590 = sbr.rel (%p9588) target = $region60
        $region59: #{msrb_forward.1} parent=55 // pred_region
          %9592 = vsyncadd %s9584, 0
          %s9593 = smul.addr %s23, 32
          %s9594 = smul.addr %s9593, 8
          %s9595 = scalar_lea.hbm %s9, %s9594
          %s9596 = sshll.u32 %s9587, 4
          %s9597 = int_to_ptr.vmem [resolvable:$true] %s9596
          %s9598 = sshll.u32 %s9595, 4
          %s9599 = int_to_ptr.hbm [resolvable:$true] %s9598
          %9604 = dma.vmem_to_hbm [thread:$0]  %s9597, 4096, %s9599, %s9584, 128, 128, 8
        $region60: #{msrb_forward.1} parent=55 // pred_fallthru
          _
      $region56: #{msrb_forward.1} parent=5 // pred_fallthru
        _
      %p9605 = scmp.le.s32.totalorder 2, %s18
      // Predicated region
      $region61: #{msrb_forward.1} parent=5 // pred_check
        %p9606 = pneg %p9605
      $region62: #{msrb_forward.1} parent=5 // pred_check_branch
        %9608 = sbr.rel (%p9606) target = $region64
      $region63: #{msrb_forward.1} parent=5 // pred_region
        %s9609 = ssub.s32 %s18, 2
        // Predicated region
        $region65: #{msrb_forward.1} parent=63 // pred_check
          %p9610 = pneg %p246
        $region66: #{msrb_forward.1} parent=63 // pred_check_branch
          %9612 = sbr.rel (%p9610) target = $region68
        $region67: #{msrb_forward.1} parent=63 // pred_region
          %s9613 = sand.u32 %s231, 1
          %s9614 = scalar_lea.sflag [#allocation5], %s9613
          %s9615 = sand.u32 %s231, 1
          %s9616 = smul.addr %s9615, 256
          %s9617 = scalar_lea.vmem [#allocation4], %s9616
          %9619 = dma.done %s9614, 4096
        $region68: #{msrb_forward.1} parent=63 // pred_fallthru
          _
      $region64: #{msrb_forward.1} parent=5 // pred_fallthru
        _
    $region6: #{msrb_forward.1} parent=1 // loop_footer
      %s22 = sadd.s32 1, %s18
    $region7: #{msrb_forward.1} parent=1 // loop_footer_branch
      %17 = sbr.rel target = $region3
    $region8: #{msrb_forward.1} parent=1 // loop_exit
      _
    %9620 = vsyncpa [#allocation5], 1
    %s9621 = scalar_lea.sflag [#allocation5], 1
    %9622 = vsyncpa %s9621, 1

</llo_original>
